<compile_context>
chip_gen: v6e
topology: v6e:2x2x1
jax: 0.10.0
libtpu: 0.0.40
codegen_flags: <defaults>
</compile_context>

<pallas_src>
import functools
import math

import jax
import jax.numpy as jnp
from jax import lax
from jax.experimental import pallas as pl
from jax.experimental.pallas import tpu as pltpu


# --------------------------- in-kernel math helpers ---------------------------

_SQRT1_2 = 0.7071067811865476


def _erf_approx(x):
    # Abramowitz & Stegun 7.1.26 rational approximation, |err| < 1.5e-7.
    # TODO(synk): replaces lax.erf inside the kernel; matches exact-GELU
    # semantics to ~float32 precision using only guaranteed-lowerable ops.
    a1, a2, a3, a4, a5 = 0.254829592, -0.284496736, 1.421413741, -1.453152027, 1.061405429
    p = 0.3275911
    sign = jnp.where(x >= 0.0, 1.0, -1.0)
    z = jnp.abs(x)
    t = 1.0 / (1.0 + p * z)
    poly = ((((a5 * t + a4) * t + a3) * t + a2) * t + a1) * t
    return sign * (1.0 - poly * jnp.exp(-z * z))


def _gelu(x):
    # exact (erf) GELU, matching torch nn.GELU() default
    return 0.5 * x * (1.0 + _erf_approx(x * _SQRT1_2))


def _ln(x, g, b, eps=1e-5):
    mu = jnp.mean(x, axis=-1, keepdims=True)
    xc = x - mu
    var = jnp.mean(xc * xc, axis=-1, keepdims=True)
    return xc * lax.rsqrt(var + eps) * g + b


def _mlp(y, w1, b1, w2, b2):
    # lin2(gelu(lin1(y))) fused; weights are bf16, accumulate in f32.
    h = jnp.dot(y.astype(jnp.bfloat16), w1, preferred_element_type=jnp.float32) + b1
    h = _gelu(h)
    return jnp.dot(h.astype(jnp.bfloat16), w2, preferred_element_type=jnp.float32) + b2


def _mha_heads(q2, k2, v2, w_out, b_out, n_head):
    """Per-head softmax attention + fused output projection (heads unrolled)."""
    Lq = q2.shape[0]
    E = w_out.shape[1]
    dh = q2.shape[1] // n_head
    scale = 1.0 / math.sqrt(dh)
    out = jnp.zeros((Lq, E), jnp.float32)
    for h in range(n_head):
        lo = h * dh
        qh = q2[:, lo:lo + dh]
        kh = k2[:, lo:lo + dh]
        vh = v2[:, lo:lo + dh]
        s = lax.dot_general(qh.astype(jnp.bfloat16), kh.astype(jnp.bfloat16),
                            (((1,), (1,)), ((), ())),
                            preferred_element_type=jnp.float32) * scale
        s = s - jnp.max(s, axis=-1, keepdims=True)
        p = jnp.exp(s)
        p = p * pl.reciprocal(jnp.sum(p, axis=-1, keepdims=True), approx=True)
        oh = jnp.dot(p.astype(jnp.bfloat16), vh.astype(jnp.bfloat16),
                     preferred_element_type=jnp.float32)
        out = out + jnp.dot(oh.astype(jnp.bfloat16), w_out[lo:lo + dh, :],
                            preferred_element_type=jnp.float32)
    return out + b_out


def _mha_self(x, w_in, b_in, w_out, b_out, n_head):
    # query == key == value: single (E, 3E) in-projection matmul, then slice.
    E = x.shape[-1]
    qkv = jnp.dot(x.astype(jnp.bfloat16), w_in, preferred_element_type=jnp.float32) + b_in
    return _mha_heads(qkv[:, :E], qkv[:, E:2 * E], qkv[:, 2 * E:], w_out, b_out, n_head)


def _mha_cross(xq, xkv, w_in, b_in, w_out, b_out, n_head):
    E = xq.shape[-1]
    q2 = jnp.dot(xq.astype(jnp.bfloat16), w_in[:, :E],
                 preferred_element_type=jnp.float32) + b_in[:, :E]
    kv = jnp.dot(xkv.astype(jnp.bfloat16), w_in[:, E:],
                 preferred_element_type=jnp.float32) + b_in[:, E:]
    return _mha_heads(q2, kv[:, :E], kv[:, E:], w_out, b_out, n_head)


# ------------------------------- Pallas kernels -------------------------------

def _embed_kernel(cnt_ref, gene_ref, w_ref, b_ref, o_ref):
    # Conv1d(1, E, 1) count-embedding (channels-last) fused with gene-embedding add.
    o_ref[...] = cnt_ref[...] * w_ref[...] + b_ref[...] + gene_ref[...]


def _performer_block_kernel(pw_ref, ctx_ref, wq_ref, wk_ref, wv_ref, wout_ref, bout_ref,
                            projt_ref, g0_ref, be0_ref, w1_ref, bb1_ref, w2_ref, bb2_ref,
                            g1_ref, be1_ref, o_ref, *, n_head, dim_head, eps):
    """CrossUpdateBlock (bidirectional=False): Performer cross-attn + LN + MLP + LN."""
    x = pw_ref[...]                                  # (P, E) f32, shared across batch
    ctx = ctx_ref[0]                                 # (N, E) f32
    wout = wout_ref[...]                             # (inner, E) bf16
    proj_t = projt_ref[...]                          # (dh, m) bf16
    P, E = x.shape
    m = proj_t.shape[1]
    normalizer = dim_head ** -0.25
    ratio = m ** -0.5

    xb = x.astype(jnp.bfloat16)
    cb = ctx.astype(jnp.bfloat16)
    q2 = jnp.dot(xb, wq_ref[...], preferred_element_type=jnp.float32)   # (P, inner)
    k2 = jnp.dot(cb, wk_ref[...], preferred_element_type=jnp.float32)   # (N, inner)
    v2 = jnp.dot(cb, wv_ref[...], preferred_element_type=jnp.float32)   # (N, inner)

    attn_o = jnp.zeros((P, E), jnp.float32)
    for h in range(n_head):
        lo = h * dim_head
        qh = q2[:, lo:lo + dim_head]
        kh = k2[:, lo:lo + dim_head]
        vh = v2[:, lo:lo + dim_head]
        # softmax_kernel feature maps (FAVOR+)
        qd = jnp.dot((qh * normalizer).astype(jnp.bfloat16), proj_t,
                     preferred_element_type=jnp.float32)                # (P, m)
        kd = jnp.dot((kh * normalizer).astype(jnp.bfloat16), proj_t,
                     preferred_element_type=jnp.float32)                # (N, m)
        q_diag = jnp.sum(qh * qh, axis=-1, keepdims=True) * (0.5 * normalizer * normalizer)
        k_diag = jnp.sum(kh * kh, axis=-1, keepdims=True) * (0.5 * normalizer * normalizer)
        qp = ratio * (jnp.exp(qd - q_diag - jnp.max(qd, axis=-1, keepdims=True)) + eps)
        k_max = jnp.max(jnp.max(kd, axis=-1, keepdims=True), axis=-2, keepdims=True)
        kp = ratio * (jnp.exp(kd - k_diag - k_max) + eps)
        # linear (non-causal) attention
        k_sum = jnp.sum(kp, axis=0, keepdims=True)                      # (1, m)
        denom = jnp.sum(qp * k_sum, axis=-1, keepdims=True)             # (P, 1)
        context = lax.dot_general(kp.astype(jnp.bfloat16), vh.astype(jnp.bfloat16),
                                  (((0,), (0,)), ((), ())),
                                  preferred_element_type=jnp.float32)   # (m, dh)
        out_h = jnp.dot(qp.astype(jnp.bfloat16), context.astype(jnp.bfloat16),
                        preferred_element_type=jnp.float32)             # (P, dh)
        out_h = out_h * pl.reciprocal(denom, approx=True)
        # fused out-projection for this head (avoids concat/transpose)
        attn_o = attn_o + jnp.dot(out_h.astype(jnp.bfloat16), wout[lo:lo + dim_head, :],
                                  preferred_element_type=jnp.float32)
    attn_o = attn_o + bout_ref[...]

    y = _ln(x + attn_o, g0_ref[...], be0_ref[...])
    y = _ln(y + _mlp(y, w1_ref[...], bb1_ref[...], w2_ref[...], bb2_ref[...]),
            g1_ref[...], be1_ref[...])
    o_ref[0] = y


def _mha_self_block_kernel(x_ref, win_ref, bin_ref, wout_ref, bout_ref,
                           g0_ref, be0_ref, w1_ref, bb1_ref, w2_ref, bb2_ref,
                           g1_ref, be1_ref, o_ref, *, n_head):
    """SelfAttentionBLock (fast=False): nn.MultiheadAttention + LN + MLP + LN."""
    x = x_ref[0]                                     # (P, E)
    attn = _mha_self(x, win_ref[...], bin_ref[...], wout_ref[...], bout_ref[...], n_head)
    y = _ln(x + attn, g0_ref[...], be0_ref[...])
    y = _ln(y + _mlp(y, w1_ref[...], bb1_ref[...], w2_ref[...], bb2_ref[...]),
            g1_ref[...], be1_ref[...])
    o_ref[0] = y


def _decoder_block_kernel(ct_ref, pw_ref, wproj_ref, bproj_ref, win_ref, bin_ref,
                          wout_ref, bout_ref, g0_ref, be0_ref, w1_ref, bb1_ref,
                          w2_ref, bb2_ref, g1_ref, be1_ref, wpred_ref, bpred_ref,
                          o_ref, *, n_head):
    """projector(Conv1d 1x1) + Annotation_decoder (cross-MHA, LN, MLP, LN, predictor)."""
    ct = ct_ref[...]                                 # (1, E), shared across batch
    pw = pw_ref[0]                                   # (P, E)
    ctx = jnp.dot(pw.astype(jnp.bfloat16), wproj_ref[...],
                  preferred_element_type=jnp.float32) + bproj_ref[...]
    attn = _mha_cross(ct, ctx, win_ref[...], bin_ref[...], wout_ref[...], bout_ref[...],
                      n_head)
    y = _ln(ct + attn, g0_ref[...], be0_ref[...])
    y = _ln(y + _mlp(y, w1_ref[...], bb1_ref[...], w2_ref[...], bb2_ref[...]),
            g1_ref[...], be1_ref[...])
    # dropout(p=0.2): identity at inference
    o_ref[0] = jnp.dot(y.astype(jnp.bfloat16), wpred_ref[...],
                       preferred_element_type=jnp.float32) + bpred_ref[...]


# ------------------------------ call wrappers ---------------------------------

def _build_specs(args):
    """args: list of (array, batched) -> BlockSpecs for a 1-D batch grid."""
    specs = []
    for arr, batched in args:
        if batched:
            rest = arr.ndim - 1
            specs.append(pl.BlockSpec((1,) + arr.shape[1:],
                                      lambda b, _r=rest: (b,) + (0,) * _r))
        else:
            nd = arr.ndim
            specs.append(pl.BlockSpec(arr.shape, lambda b, _n=nd: (0,) * _n))
    return specs


def embed_block(params, count_x, gene_x):
    """Embedding_block: count2vector (Conv1d(1,E,1)) + gene2vector gather, fused add."""
    B, N = count_x.shape
    E = params["c2v_w"].shape[1]
    # embedding-table gather stays in XLA (glue); everything else is one kernel.
    gene_e = jnp.take(params["gene_emb"], gene_x.reshape(-1), axis=0)   # (B*N, E)
    out = pl.pallas_call(
        _embed_kernel,
        out_shape=jax.ShapeDtypeStruct((B * N, E), jnp.float32),
    )(count_x.reshape(B * N, 1).astype(jnp.float32),
      gene_e.astype(jnp.float32),
      params["c2v_w"].astype(jnp.float32),
      params["c2v_b"].astype(jnp.float32))
    return out.reshape(B, N, E)


def performer_cross_block(cp, pathway_emb, count_emb, *, n_head, dim_head):
    B, N, E = count_emb.shape
    P = pathway_emb.shape[0]
    ap = cp["attn"]
    bf, f32 = jnp.bfloat16, jnp.float32
    args = [
        (pathway_emb.astype(f32), False),               # (P, E) shared query
        (count_emb.astype(f32), True),                  # (B, N, E) context
        (ap["to_q_w"].T.astype(bf), False),             # (E, inner)
        (ap["to_k_w"].T.astype(bf), False),
        (ap["to_v_w"].T.astype(bf), False),
        (ap["to_out_w"].T.astype(bf), False),           # (inner, E)
        (ap["to_out_b"].reshape(1, E).astype(f32), False),
        (ap["proj_mat"].T.astype(bf), False),           # (dh, m)
        (cp["norm0"]["g"].reshape(1, E).astype(f32), False),
        (cp["norm0"]["b"].reshape(1, E).astype(f32), False),
        (cp["mlp0"]["w1"].T.astype(bf), False),
        (cp["mlp0"]["b1"].reshape(1, -1).astype(f32), False),
        (cp["mlp0"]["w2"].T.astype(bf), False),
        (cp["mlp0"]["b2"].reshape(1, E).astype(f32), False),
        (cp["norm1"]["g"].reshape(1, E).astype(f32), False),
        (cp["norm1"]["b"].reshape(1, E).astype(f32), False),
    ]
    arrays = [a for a, _ in args]
    return pl.pallas_call(
        functools.partial(_performer_block_kernel, n_head=n_head,
                          dim_head=dim_head, eps=1e-4),
        grid=(B,),
        in_specs=_build_specs(args),
        out_specs=pl.BlockSpec((1, P, E), lambda b: (b, 0, 0)),
        out_shape=jax.ShapeDtypeStruct((B, P, E), f32),
        compiler_params=pltpu.CompilerParams(dimension_semantics=("parallel",)),
    )(*arrays)


def mha_self_block(sp, x, *, n_head):
    B, P, E = x.shape
    mp = sp["mha"]
    bf, f32 = jnp.bfloat16, jnp.float32
    args = [
        (x.astype(f32), True),
        (mp["in_proj_w"].T.astype(bf), False),          # (E, 3E)
        (mp["in_proj_b"].reshape(1, 3 * E).astype(f32), False),
        (mp["out_proj_w"].T.astype(bf), False),         # (E, E)
        (mp["out_proj_b"].reshape(1, E).astype(f32), False),
        (sp["norm0"]["g"].reshape(1, E).astype(f32), False),
        (sp["norm0"]["b"].reshape(1, E).astype(f32), False),
        (sp["mlp0"]["w1"].T.astype(bf), False),
        (sp["mlp0"]["b1"].reshape(1, -1).astype(f32), False),
        (sp["mlp0"]["w2"].T.astype(bf), False),
        (sp["mlp0"]["b2"].reshape(1, E).astype(f32), False),
        (sp["norm1"]["g"].reshape(1, E).astype(f32), False),
        (sp["norm1"]["b"].reshape(1, E).astype(f32), False),
    ]
    arrays = [a for a, _ in args]
    return pl.pallas_call(
        functools.partial(_mha_self_block_kernel, n_head=n_head),
        grid=(B,),
        in_specs=_build_specs(args),
        out_specs=pl.BlockSpec((1, P, E), lambda b: (b, 0, 0)),
        out_shape=jax.ShapeDtypeStruct((B, P, E), f32),
        compiler_params=pltpu.CompilerParams(dimension_semantics=("parallel",)),
    )(*arrays)


def decoder_block(params, pathway, *, n_head):
    dp = params["dec"]
    B, P, E = pathway.shape
    C = dp["pred_w"].shape[0]
    mp = dp["mha"]
    bf, f32 = jnp.bfloat16, jnp.float32
    args = [
        (dp["class_token"].reshape(1, E).astype(f32), False),
        (pathway.astype(f32), True),
        (params["projector_w"].T.astype(bf), False),    # Conv1d(E,E,1) as linear
        (params["projector_b"].reshape(1, E).astype(f32), False),
        (mp["in_proj_w"].T.astype(bf), False),
        (mp["in_proj_b"].reshape(1, 3 * E).astype(f32), False),
        (mp["out_proj_w"].T.astype(bf), False),
        (mp["out_proj_b"].reshape(1, E).astype(f32), False),
        (dp["norm0"]["g"].reshape(1, E).astype(f32), False),
        (dp["norm0"]["b"].reshape(1, E).astype(f32), False),
        (dp["mlp0"]["w1"].T.astype(bf), False),
        (dp["mlp0"]["b1"].reshape(1, -1).astype(f32), False),
        (dp["mlp0"]["w2"].T.astype(bf), False),
        (dp["mlp0"]["b2"].reshape(1, E).astype(f32), False),
        (dp["norm1"]["g"].reshape(1, E).astype(f32), False),
        (dp["norm1"]["b"].reshape(1, E).astype(f32), False),
        (dp["pred_w"].T.astype(bf), False),             # (E, C)
        (dp["pred_b"].reshape(1, C).astype(f32), False),
    ]
    arrays = [a for a, _ in args]
    return pl.pallas_call(
        functools.partial(_decoder_block_kernel, n_head=n_head),
        grid=(B,),
        in_specs=_build_specs(args),
        out_specs=pl.BlockSpec((1, 1, C), lambda b: (b, 0, 0)),
        out_shape=jax.ShapeDtypeStruct((B, 1, C), f32),
        compiler_params=pltpu.CompilerParams(dimension_semantics=("parallel",)),
    )(*arrays)


# ------------------------------ full forward -----------------------------------

def pathformer_forward(params, count_x, gene_x, *, n_head, dim_head):
    # Embedding_block + (count_emb + gene_emb) fusion
    count_emb = embed_block(params, count_x, gene_x)                    # (B, N, E)
    # Pathway_encoder: CrossUpdateBlock (depth=1, bidirectional=False)
    pathway = performer_cross_block(params["enc_cross"], params["pathway_emb"],
                                    count_emb, n_head=n_head, dim_head=dim_head)
    # Pathway_encoder: SelfAttentionBLock (fast=False, depth=1)
    pathway = mha_self_block(params["enc_self"], pathway, n_head=n_head)
    # projector + Annotation_decoder (fused)
    return decoder_block(params, pathway, n_head=n_head)                # (B, 1, C)


# ------------------------------ parameter init ----------------------------------

def init_params(key, *, max_gene_num, embedding_dim, num_class, n_pathway, n_head):
    E = embedding_dim
    mlp_dim = 2 * E                      # default(mlp_dim, embedding_dim * 2)
    dim_head = 64                        # performer_pytorch nAttention default
    inner = dim_head * n_head
    nb_features = int(dim_head * math.log(dim_head))   # FastAttention default (=266)
    keys = iter(jax.random.split(key, 64))

    def w(shape, scale=0.02):
        return (scale * jax.random.normal(next(keys), shape)).astype(jnp.float32)

    def zeros(shape):
        return jnp.zeros(shape, jnp.float32)

    def ln():
        return {"g": jnp.ones((E,), jnp.float32), "b": zeros((E,))}

    def mlp():
        return {"w1": w((mlp_dim, E)), "b1": zeros((mlp_dim,)),
                "w2": w((E, mlp_dim)), "b2": zeros((E,))}

    def mha():
        return {"in_proj_w": w((3 * E, E)), "in_proj_b": zeros((3 * E,)),
                "out_proj_w": w((E, E)), "out_proj_b": zeros((E,))}

    params = {
        # Embedding_block
        "c2v_w": w((1, E)),                       # Conv1d(1, E, 1) weight (E,1,1) -> (1,E)
        "c2v_b": zeros((1, E)),
        "gene_emb": w((max_gene_num, E), scale=0.1),
        # Pathway_encoder
        "pathway_emb": w((n_pathway, E), scale=0.1),
        "enc_cross": {
            "attn": {
                "to_q_w": w((inner, E)), "to_k_w": w((inner, E)), "to_v_w": w((inner, E)),
                "to_out_w": w((E, inner)), "to_out_b": zeros((E,)),
                # TODO(synk): torch uses a Gaussian-orthogonal (QR-based) projection;
                # a plain Gaussian matrix of the same shape is used for synthetic init.
                "proj_mat": jax.random.normal(next(keys),
                                              (nb_features, dim_head)).astype(jnp.float32),
            },
            "norm0": ln(), "mlp0": mlp(), "norm1": ln(),
        },
        "enc_self": {"mha": mha(), "norm0": ln(), "mlp0": mlp(), "norm1": ln()},
        "projector_w": w((E, E)), "projector_b": zeros((E,)),
        # Annotation_decoder
        "dec": {"class_token": w((1, E), scale=0.1),
                "mha": mha(), "norm0": ln(), "mlp0": mlp(), "norm1": ln(),
                "pred_w": w((num_class, E)), "pred_b": zeros((num_class,))},
    }
    return params, dim_head


# ---------------------------------- main -----------------------------------------

if __name__ == "__main__":
    cfg = dict(max_gene_num=100, embedding_dim=32, num_class=8, n_pathway=16, n_head=4)
    B, N = 2, 16

    key = jax.random.PRNGKey(0)
    pkey, ckey, gkey = jax.random.split(key, 3)
    params, dim_head = init_params(pkey, **cfg)

    count_x = jax.random.uniform(ckey, (B, N), dtype=jnp.float32)        # gene counts
    gene_x = jax.random.randint(gkey, (B, N), 0, cfg["max_gene_num"])    # gene ids

    fwd = jax.jit(functools.partial(pathformer_forward,
                                    n_head=cfg["n_head"], dim_head=dim_head))
    pred = fwd(params, count_x, gene_x)
    jax.block_until_ready(pred)

    assert pred.shape == (B, 1, cfg["num_class"]), pred.shape
    assert bool(jnp.all(jnp.isfinite(pred)))
    print("KERNEL_OK")
</pallas_src>

<mosaic_0001>
module attributes {stable_mosaic.version = 11 : i64} {
  func.func @_embed_kernel(%arg0: memref<32x1xf32, #tpu.memory_space<vmem>>, %arg1: memref<32x32xf32, #tpu.memory_space<vmem>>, %arg2: memref<1x32xf32, #tpu.memory_space<vmem>>, %arg3: memref<1x32xf32, #tpu.memory_space<vmem>>, %arg4: memref<32x32xf32, #tpu.memory_space<vmem>>) attributes {dimension_semantics = [], scalar_prefetch = 0 : i64, scratch_operands = 0 : i64, tpu.core_type = #tpu.core_type<tc>} {
    %c0 = arith.constant 0 : index
    %c0_0 = arith.constant 0 : index
    %0 = vector.load %arg0[%c0, %c0_0] : memref<32x1xf32, #tpu.memory_space<vmem>>, vector<32x1xf32>
    %c0_1 = arith.constant 0 : index
    %c0_2 = arith.constant 0 : index
    %1 = vector.load %arg2[%c0_1, %c0_2] : memref<1x32xf32, #tpu.memory_space<vmem>>, vector<1x32xf32>
    %2 = vector.broadcast %0 : vector<32x1xf32> to vector<32x32xf32>
    %3 = vector.broadcast %1 : vector<1x32xf32> to vector<32x32xf32>
    %4 = arith.mulf %2, %3 : vector<32x32xf32>
    %c0_3 = arith.constant 0 : index
    %c0_4 = arith.constant 0 : index
    %5 = vector.load %arg3[%c0_3, %c0_4] : memref<1x32xf32, #tpu.memory_space<vmem>>, vector<1x32xf32>
    %6 = vector.broadcast %5 : vector<1x32xf32> to vector<32x32xf32>
    %7 = arith.addf %4, %6 : vector<32x32xf32>
    %c0_5 = arith.constant 0 : index
    %c0_6 = arith.constant 0 : index
    %8 = vector.load %arg1[%c0_5, %c0_6] : memref<32x32xf32, #tpu.memory_space<vmem>>, vector<32x32xf32>
    %9 = arith.addf %7, %8 : vector<32x32xf32>
    %c0_7 = arith.constant 0 : index
    %c0_8 = arith.constant 0 : index
    %10 = vector.load %arg4[%c0_7, %c0_8] : memref<32x32xf32, #tpu.memory_space<vmem>>, vector<32x32xf32>
    tpu.vector_store %arg4[%c0_7, %c0_8], %9 {strides = array<i32>} : memref<32x32xf32, #tpu.memory_space<vmem>>, vector<32x32xf32>,
    return
  }
}

module attributes {stable_mosaic.version = 11 : i64} {
  func.func @_performer_block_kernel(%arg0: i32, %arg1: memref<16x32xf32, #tpu.memory_space<vmem>>, %arg2: memref<1x16x32xf32, #tpu.memory_space<vmem>>, %arg3: memref<32x256xbf16, #tpu.memory_space<vmem>>, %arg4: memref<32x256xbf16, #tpu.memory_space<vmem>>, %arg5: memref<32x256xbf16, #tpu.memory_space<vmem>>, %arg6: memref<256x32xbf16, #tpu.memory_space<vmem>>, %arg7: memref<1x32xf32, #tpu.memory_space<vmem>>, %arg8: memref<64x266xbf16, #tpu.memory_space<vmem>>, %arg9: memref<1x32xf32, #tpu.memory_space<vmem>>, %arg10: memref<1x32xf32, #tpu.memory_space<vmem>>, %arg11: memref<32x64xbf16, #tpu.memory_space<vmem>>, %arg12: memref<1x64xf32, #tpu.memory_space<vmem>>, %arg13: memref<64x32xbf16, #tpu.memory_space<vmem>>, %arg14: memref<1x32xf32, #tpu.memory_space<vmem>>, %arg15: memref<1x32xf32, #tpu.memory_space<vmem>>, %arg16: memref<1x32xf32, #tpu.memory_space<vmem>>, %arg17: memref<1x16x32xf32, #tpu.memory_space<vmem>>) attributes {dimension_semantics = [#tpu.dimension_semantics<parallel>], iteration_bounds = array<i64: 2>, scalar_prefetch = 0 : i64, scratch_operands = 0 : i64, tpu.core_type = #tpu.core_type<tc>, window_params = [{pipeline_mode = #tpu.pipeline_mode<synchronous>, transform_indices = @transform_0, window_bounds = array<i64: 16, 32>}, {transform_indices = @transform_1, window_bounds = array<i64: 1, 16, 32>}, {pipeline_mode = #tpu.pipeline_mode<synchronous>, transform_indices = @transform_2, window_bounds = array<i64: 32, 256>}, {pipeline_mode = #tpu.pipeline_mode<synchronous>, transform_indices = @transform_3, window_bounds = array<i64: 32, 256>}, {pipeline_mode = #tpu.pipeline_mode<synchronous>, transform_indices = @transform_4, window_bounds = array<i64: 32, 256>}, {pipeline_mode = #tpu.pipeline_mode<synchronous>, transform_indices = @transform_5, window_bounds = array<i64: 256, 32>}, {pipeline_mode = #tpu.pipeline_mode<synchronous>, transform_indices = @transform_6, window_bounds = array<i64: 1, 32>}, {pipeline_mode = #tpu.pipeline_mode<synchronous>, transform_indices = @transform_7, window_bounds = array<i64: 64, 266>}, {pipeline_mode = #tpu.pipeline_mode<synchronous>, transform_indices = @transform_8, window_bounds = array<i64: 1, 32>}, {pipeline_mode = #tpu.pipeline_mode<synchronous>, transform_indices = @transform_9, window_bounds = array<i64: 1, 32>}, {pipeline_mode = #tpu.pipeline_mode<synchronous>, transform_indices = @transform_10, window_bounds = array<i64: 32, 64>}, {pipeline_mode = #tpu.pipeline_mode<synchronous>, transform_indices = @transform_11, window_bounds = array<i64: 1, 64>}, {pipeline_mode = #tpu.pipeline_mode<synchronous>, transform_indices = @transform_12, window_bounds = array<i64: 64, 32>}, {pipeline_mode = #tpu.pipeline_mode<synchronous>, transform_indices = @transform_13, window_bounds = array<i64: 1, 32>}, {pipeline_mode = #tpu.pipeline_mode<synchronous>, transform_indices = @transform_14, window_bounds = array<i64: 1, 32>}, {pipeline_mode = #tpu.pipeline_mode<synchronous>, transform_indices = @transform_15, window_bounds = array<i64: 1, 32>}, {transform_indices = @transform_16, window_bounds = array<i64: 1, 16, 32>}]} {
    %c0 = arith.constant 0 : index
    %c0_0 = arith.constant 0 : index
    %0 = vector.load %arg1[%c0, %c0_0] : memref<16x32xf32, #tpu.memory_space<vmem>>, vector<16x32xf32>
    %c0_1 = arith.constant 0 : index
    %c0_2 = arith.constant 0 : index
    %c0_3 = arith.constant 0 : index
    %1 = vector.load %arg2[%c0_1, %c0_2, %c0_3] : memref<1x16x32xf32, #tpu.memory_space<vmem>>, vector<1x16x32xf32>
    %2 = vector.shape_cast %1 : vector<1x16x32xf32> to vector<16x32xf32>
    %c0_4 = arith.constant 0 : index
    %c0_5 = arith.constant 0 : index
    %3 = vector.load %arg6[%c0_4, %c0_5] : memref<256x32xbf16, #tpu.memory_space<vmem>>, vector<256x32xbf16>
    %c0_6 = arith.constant 0 : index
    %c0_7 = arith.constant 0 : index
    %4 = vector.load %arg8[%c0_6, %c0_7] : memref<64x266xbf16, #tpu.memory_space<vmem>>, vector<64x266xbf16>
    %5 = arith.truncf %0 : vector<16x32xf32> to vector<16x32xbf16>
    %6 = arith.truncf %2 : vector<16x32xf32> to vector<16x32xbf16>
    %c0_8 = arith.constant 0 : index
    %c0_9 = arith.constant 0 : index
    %7 = vector.load %arg3[%c0_8, %c0_9] : memref<32x256xbf16, #tpu.memory_space<vmem>>, vector<32x256xbf16>
    %cst = arith.constant dense<0.000000e+00> : vector<16x256xf32>
    %8 = tpu.matmul %5, %7, %cst {dimension_numbers = #tpu.dot_dimension_numbers<[1], [0], [0], [1], [0, 0, 1, 1], [], []>} : vector<16x32xbf16>, vector<32x256xbf16>, vector<16x256xf32> -> vector<16x256xf32>
    %c0_10 = arith.constant 0 : index
    %c0_11 = arith.constant 0 : index
    %9 = vector.load %arg4[%c0_10, %c0_11] : memref<32x256xbf16, #tpu.memory_space<vmem>>, vector<32x256xbf16>
    %cst_12 = arith.constant dense<0.000000e+00> : vector<16x256xf32>
    %10 = tpu.matmul %6, %9, %cst_12 {dimension_numbers = #tpu.dot_dimension_numbers<[1], [0], [0], [1], [0, 0, 1, 1], [], []>} : vector<16x32xbf16>, vector<32x256xbf16>, vector<16x256xf32> -> vector<16x256xf32>
    %c0_13 = arith.constant 0 : index
    %c0_14 = arith.constant 0 : index
    %11 = vector.load %arg5[%c0_13, %c0_14] : memref<32x256xbf16, #tpu.memory_space<vmem>>, vector<32x256xbf16>
    %cst_15 = arith.constant dense<0.000000e+00> : vector<16x256xf32>
    %12 = tpu.matmul %6, %11, %cst_15 {dimension_numbers = #tpu.dot_dimension_numbers<[1], [0], [0], [1], [0, 0, 1, 1], [], []>} : vector<16x32xbf16>, vector<32x256xbf16>, vector<16x256xf32> -> vector<16x256xf32>
    %cst_16 = arith.constant 0.000000e+00 : f32
    %13 = vector.broadcast %cst_16 : f32 to vector<16x32xf32>
    %14 = vector.extract_strided_slice %8 {offsets = [0, 0], sizes = [16, 64], strides = [1, 1]} : vector<16x256xf32> to vector<16x64xf32>
    %15 = vector.extract_strided_slice %10 {offsets = [0, 0], sizes = [16, 64], strides = [1, 1]} : vector<16x256xf32> to vector<16x64xf32>
    %16 = vector.extract_strided_slice %12 {offsets = [0, 0], sizes = [16, 64], strides = [1, 1]} : vector<16x256xf32> to vector<16x64xf32>
    %cst_17 = arith.constant 0.353553385 : f32
    %17 = vector.broadcast %cst_17 : f32 to vector<16x64xf32>
    %18 = arith.mulf %14, %17 : vector<16x64xf32>
    %19 = arith.truncf %18 : vector<16x64xf32> to vector<16x64xbf16>
    %cst_18 = arith.constant dense<0.000000e+00> : vector<16x266xf32>
    %20 = tpu.matmul %19, %4, %cst_18 {dimension_numbers = #tpu.dot_dimension_numbers<[1], [0], [0], [1], [0, 0, 1, 1], [], []>} : vector<16x64xbf16>, vector<64x266xbf16>, vector<16x266xf32> -> vector<16x266xf32>
    %cst_19 = arith.constant 0.353553385 : f32
    %21 = vector.broadcast %cst_19 : f32 to vector<16x64xf32>
    %22 = arith.mulf %15, %21 : vector<16x64xf32>
    %23 = arith.truncf %22 : vector<16x64xf32> to vector<16x64xbf16>
    %cst_20 = arith.constant dense<0.000000e+00> : vector<16x266xf32>
    %24 = tpu.matmul %23, %4, %cst_20 {dimension_numbers = #tpu.dot_dimension_numbers<[1], [0], [0], [1], [0, 0, 1, 1], [], []>} : vector<16x64xbf16>, vector<64x266xbf16>, vector<16x266xf32> -> vector<16x266xf32>
    %25 = arith.mulf %14, %14 : vector<16x64xf32>
    %cst_21 = arith.constant dense<0.000000e+00> : vector<16xf32>
    %26 = vector.multi_reduction <add>, %25, %cst_21 [1] : vector<16x64xf32> to vector<16xf32>
    %27 = vector.shape_cast %26 : vector<16xf32> to vector<16x1xf32>
    %cst_22 = arith.constant 6.250000e-02 : f32
    %28 = vector.broadcast %cst_22 : f32 to vector<16x1xf32>
    %29 = arith.mulf %27, %28 : vector<16x1xf32>
    %30 = arith.mulf %15, %15 : vector<16x64xf32>
    %cst_23 = arith.constant dense<0.000000e+00> : vector<16xf32>
    %31 = vector.multi_reduction <add>, %30, %cst_23 [1] : vector<16x64xf32> to vector<16xf32>
    %32 = vector.shape_cast %31 : vector<16xf32> to vector<16x1xf32>
    %cst_24 = arith.constant 6.250000e-02 : f32
    %33 = vector.broadcast %cst_24 : f32 to vector<16x1xf32>
    %34 = arith.mulf %32, %33 : vector<16x1xf32>
    %35 = vector.broadcast %29 : vector<16x1xf32> to vector<16x266xf32>
    %36 = arith.subf %20, %35 : vector<16x266xf32>
    %cst_25 = arith.constant dense<0xFF800000> : vector<16xf32>
    %37 = vector.multi_reduction <maximumf>, %20, %cst_25 [1] : vector<16x266xf32> to vector<16xf32>
    %38 = vector.shape_cast %37 : vector<16xf32> to vector<16x1xf32>
    %39 = vector.broadcast %38 : vector<16x1xf32> to vector<16x266xf32>
    %40 = arith.subf %36, %39 : vector<16x266xf32>
    %41 = math.exp %40 : vector<16x266xf32>
    %cst_26 = arith.constant 9.99999974E-5 : f32
    %42 = vector.broadcast %cst_26 : f32 to vector<16x266xf32>
    %43 = arith.addf %41, %42 : vector<16x266xf32>
    %cst_27 = arith.constant 0.0613139346 : f32
    %44 = vector.broadcast %cst_27 : f32 to vector<16x266xf32>
    %45 = arith.mulf %44, %43 : vector<16x266xf32>
    %cst_28 = arith.constant dense<0xFF800000> : vector<16xf32>
    %46 = vector.multi_reduction <maximumf>, %24, %cst_28 [1] : vector<16x266xf32> to vector<16xf32>
    %47 = vector.shape_cast %46 : vector<16xf32> to vector<16x1xf32>
    %cst_29 = arith.constant dense<0xFF800000> : vector<1xf32>
    %48 = vector.multi_reduction <maximumf>, %47, %cst_29 [0] : vector<16x1xf32> to vector<1xf32>
    %49 = vector.shape_cast %48 : vector<1xf32> to vector<1x1xf32>
    %50 = vector.broadcast %34 : vector<16x1xf32> to vector<16x266xf32>
    %51 = arith.subf %24, %50 : vector<16x266xf32>
    %52 = vector.broadcast %49 : vector<1x1xf32> to vector<16x266xf32>
    %53 = arith.subf %51, %52 : vector<16x266xf32>
    %54 = math.exp %53 : vector<16x266xf32>
    %cst_30 = arith.constant 9.99999974E-5 : f32
    %55 = vector.broadcast %cst_30 : f32 to vector<16x266xf32>
    %56 = arith.addf %54, %55 : vector<16x266xf32>
    %cst_31 = arith.constant 0.0613139346 : f32
    %57 = vector.broadcast %cst_31 : f32 to vector<16x266xf32>
    %58 = arith.mulf %57, %56 : vector<16x266xf32>
    %cst_32 = arith.constant dense<0.000000e+00> : vector<266xf32>
    %59 = vector.multi_reduction <add>, %58, %cst_32 [0] : vector<16x266xf32> to vector<266xf32>
    %60 = vector.shape_cast %59 : vector<266xf32> to vector<1x266xf32>
    %61 = vector.broadcast %60 : vector<1x266xf32> to vector<16x266xf32>
    %62 = arith.mulf %45, %61 : vector<16x266xf32>
    %cst_33 = arith.constant dense<0.000000e+00> : vector<16xf32>
    %63 = vector.multi_reduction <add>, %62, %cst_33 [1] : vector<16x266xf32> to vector<16xf32>
    %64 = vector.shape_cast %63 : vector<16xf32> to vector<16x1xf32>
    %65 = arith.truncf %58 : vector<16x266xf32> to vector<16x266xbf16>
    %66 = arith.truncf %16 : vector<16x64xf32> to vector<16x64xbf16>
    %cst_34 = arith.constant dense<0.000000e+00> : vector<266x64xf32>
    %67 = tpu.matmul %65, %66, %cst_34 {dimension_numbers = #tpu.dot_dimension_numbers<[0], [0], [1], [1], [0, 1, 1, 1], [], []>} : vector<16x266xbf16>, vector<16x64xbf16>, vector<266x64xf32> -> vector<266x64xf32>
    %68 = arith.truncf %45 : vector<16x266xf32> to vector<16x266xbf16>
    %69 = arith.truncf %67 : vector<266x64xf32> to vector<266x64xbf16>
    %cst_35 = arith.constant dense<0.000000e+00> : vector<16x64xf32>
    %70 = tpu.matmul %68, %69, %cst_35 {dimension_numbers = #tpu.dot_dimension_numbers<[1], [0], [0], [1], [0, 0, 1, 1], [], []>} : vector<16x266xbf16>, vector<266x64xbf16>, vector<16x64xf32> -> vector<16x64xf32>
    %71 = tpu.reciprocal %64 {approx = true} : vector<16x1xf32> -> vector<16x1xf32>
    %72 = vector.broadcast %71 : vector<16x1xf32> to vector<16x64xf32>
    %73 = arith.mulf %70, %72 : vector<16x64xf32>
    %74 = arith.truncf %73 : vector<16x64xf32> to vector<16x64xbf16>
    %75 = vector.extract_strided_slice %3 {offsets = [0, 0], sizes = [64, 32], strides = [1, 1]} : vector<256x32xbf16> to vector<64x32xbf16>
    %cst_36 = arith.constant dense<0.000000e+00> : vector<16x32xf32>
    %76 = tpu.matmul %74, %75, %cst_36 {dimension_numbers = #tpu.dot_dimension_numbers<[1], [0], [0], [1], [0, 0, 1, 1], [], []>} : vector<16x64xbf16>, vector<64x32xbf16>, vector<16x32xf32> -> vector<16x32xf32>
    %77 = arith.addf %13, %76 : vector<16x32xf32>
    %78 = vector.extract_strided_slice %8 {offsets = [0, 64], sizes = [16, 64], strides = [1, 1]} : vector<16x256xf32> to vector<16x64xf32>
    %79 = vector.extract_strided_slice %10 {offsets = [0, 64], sizes = [16, 64], strides = [1, 1]} : vector<16x256xf32> to vector<16x64xf32>
    %80 = vector.extract_strided_slice %12 {offsets = [0, 64], sizes = [16, 64], strides = [1, 1]} : vector<16x256xf32> to vector<16x64xf32>
    %cst_37 = arith.constant 0.353553385 : f32
    %81 = vector.broadcast %cst_37 : f32 to vector<16x64xf32>
    %82 = arith.mulf %78, %81 : vector<16x64xf32>
    %83 = arith.truncf %82 : vector<16x64xf32> to vector<16x64xbf16>
    %cst_38 = arith.constant dense<0.000000e+00> : vector<16x266xf32>
    %84 = tpu.matmul %83, %4, %cst_38 {dimension_numbers = #tpu.dot_dimension_numbers<[1], [0], [0], [1], [0, 0, 1, 1], [], []>} : vector<16x64xbf16>, vector<64x266xbf16>, vector<16x266xf32> -> vector<16x266xf32>
    %cst_39 = arith.constant 0.353553385 : f32
    %85 = vector.broadcast %cst_39 : f32 to vector<16x64xf32>
    %86 = arith.mulf %79, %85 : vector<16x64xf32>
    %87 = arith.truncf %86 : vector<16x64xf32> to vector<16x64xbf16>
    %cst_40 = arith.constant dense<0.000000e+00> : vector<16x266xf32>
    %88 = tpu.matmul %87, %4, %cst_40 {dimension_numbers = #tpu.dot_dimension_numbers<[1], [0], [0], [1], [0, 0, 1, 1], [], []>} : vector<16x64xbf16>, vector<64x266xbf16>, vector<16x266xf32> -> vector<16x266xf32>
    %89 = arith.mulf %78, %78 : vector<16x64xf32>
    %cst_41 = arith.constant dense<0.000000e+00> : vector<16xf32>
    %90 = vector.multi_reduction <add>, %89, %cst_41 [1] : vector<16x64xf32> to vector<16xf32>
    %91 = vector.shape_cast %90 : vector<16xf32> to vector<16x1xf32>
    %cst_42 = arith.constant 6.250000e-02 : f32
    %92 = vector.broadcast %cst_42 : f32 to vector<16x1xf32>
    %93 = arith.mulf %91, %92 : vector<16x1xf32>
    %94 = arith.mulf %79, %79 : vector<16x64xf32>
    %cst_43 = arith.constant dense<0.000000e+00> : vector<16xf32>
    %95 = vector.multi_reduction <add>, %94, %cst_43 [1] : vector<16x64xf32> to vector<16xf32>
    %96 = vector.shape_cast %95 : vector<16xf32> to vector<16x1xf32>
    %cst_44 = arith.constant 6.250000e-02 : f32
    %97 = vector.broadcast %cst_44 : f32 to vector<16x1xf32>
    %98 = arith.mulf %96, %97 : vector<16x1xf32>
    %99 = vector.broadcast %93 : vector<16x1xf32> to vector<16x266xf32>
    %100 = arith.subf %84, %99 : vector<16x266xf32>
    %cst_45 = arith.constant dense<0xFF800000> : vector<16xf32>
    %101 = vector.multi_reduction <maximumf>, %84, %cst_45 [1] : vector<16x266xf32> to vector<16xf32>
    %102 = vector.shape_cast %101 : vector<16xf32> to vector<16x1xf32>
    %103 = vector.broadcast %102 : vector<16x1xf32> to vector<16x266xf32>
    %104 = arith.subf %100, %103 : vector<16x266xf32>
    %105 = math.exp %104 : vector<16x266xf32>
    %cst_46 = arith.constant 9.99999974E-5 : f32
    %106 = vector.broadcast %cst_46 : f32 to vector<16x266xf32>
    %107 = arith.addf %105, %106 : vector<16x266xf32>
    %cst_47 = arith.constant 0.0613139346 : f32
    %108 = vector.broadcast %cst_47 : f32 to vector<16x266xf32>
    %109 = arith.mulf %108, %107 : vector<16x266xf32>
    %cst_48 = arith.constant dense<0xFF800000> : vector<16xf32>
    %110 = vector.multi_reduction <maximumf>, %88, %cst_48 [1] : vector<16x266xf32> to vector<16xf32>
    %111 = vector.shape_cast %110 : vector<16xf32> to vector<16x1xf32>
    %cst_49 = arith.constant dense<0xFF800000> : vector<1xf32>
    %112 = vector.multi_reduction <maximumf>, %111, %cst_49 [0] : vector<16x1xf32> to vector<1xf32>
    %113 = vector.shape_cast %112 : vector<1xf32> to vector<1x1xf32>
    %114 = vector.broadcast %98 : vector<16x1xf32> to vector<16x266xf32>
    %115 = arith.subf %88, %114 : vector<16x266xf32>
    %116 = vector.broadcast %113 : vector<1x1xf32> to vector<16x266xf32>
    %117 = arith.subf %115, %116 : vector<16x266xf32>
    %118 = math.exp %117 : vector<16x266xf32>
    %cst_50 = arith.constant 9.99999974E-5 : f32
    %119 = vector.broadcast %cst_50 : f32 to vector<16x266xf32>
    %120 = arith.addf %118, %119 : vector<16x266xf32>
    %cst_51 = arith.constant 0.0613139346 : f32
    %121 = vector.broadcast %cst_51 : f32 to vector<16x266xf32>
    %122 = arith.mulf %121, %120 : vector<16x266xf32>
    %cst_52 = arith.constant dense<0.000000e+00> : vector<266xf32>
    %123 = vector.multi_reduction <add>, %122, %cst_52 [0] : vector<16x266xf32> to vector<266xf32>
    %124 = vector.shape_cast %123 : vector<266xf32> to vector<1x266xf32>
    %125 = vector.broadcast %124 : vector<1x266xf32> to vector<16x266xf32>
    %126 = arith.mulf %109, %125 : vector<16x266xf32>
    %cst_53 = arith.constant dense<0.000000e+00> : vector<16xf32>
    %127 = vector.multi_reduction <add>, %126, %cst_53 [1] : vector<16x266xf32> to vector<16xf32>
    %128 = vector.shape_cast %127 : vector<16xf32> to vector<16x1xf32>
    %129 = arith.truncf %122 : vector<16x266xf32> to vector<16x266xbf16>
    %130 = arith.truncf %80 : vector<16x64xf32> to vector<16x64xbf16>
    %cst_54 = arith.constant dense<0.000000e+00> : vector<266x64xf32>
    %131 = tpu.matmul %129, %130, %cst_54 {dimension_numbers = #tpu.dot_dimension_numbers<[0], [0], [1], [1], [0, 1, 1, 1], [], []>} : vector<16x266xbf16>, vector<16x64xbf16>, vector<266x64xf32> -> vector<266x64xf32>
    %132 = arith.truncf %109 : vector<16x266xf32> to vector<16x266xbf16>
    %133 = arith.truncf %131 : vector<266x64xf32> to vector<266x64xbf16>
    %cst_55 = arith.constant dense<0.000000e+00> : vector<16x64xf32>
    %134 = tpu.matmul %132, %133, %cst_55 {dimension_numbers = #tpu.dot_dimension_numbers<[1], [0], [0], [1], [0, 0, 1, 1], [], []>} : vector<16x266xbf16>, vector<266x64xbf16>, vector<16x64xf32> -> vector<16x64xf32>
    %135 = tpu.reciprocal %128 {approx = true} : vector<16x1xf32> -> vector<16x1xf32>
    %136 = vector.broadcast %135 : vector<16x1xf32> to vector<16x64xf32>
    %137 = arith.mulf %134, %136 : vector<16x64xf32>
    %138 = arith.truncf %137 : vector<16x64xf32> to vector<16x64xbf16>
    %139 = vector.extract_strided_slice %3 {offsets = [64, 0], sizes = [64, 32], strides = [1, 1]} : vector<256x32xbf16> to vector<64x32xbf16>
    %cst_56 = arith.constant dense<0.000000e+00> : vector<16x32xf32>
    %140 = tpu.matmul %138, %139, %cst_56 {dimension_numbers = #tpu.dot_dimension_numbers<[1], [0], [0], [1], [0, 0, 1, 1], [], []>} : vector<16x64xbf16>, vector<64x32xbf16>, vector<16x32xf32> -> vector<16x32xf32>
    %141 = arith.addf %77, %140 : vector<16x32xf32>
    %142 = vector.extract_strided_slice %8 {offsets = [0, 128], sizes = [16, 64], strides = [1, 1]} : vector<16x256xf32> to vector<16x64xf32>
    %143 = vector.extract_strided_slice %10 {offsets = [0, 128], sizes = [16, 64], strides = [1, 1]} : vector<16x256xf32> to vector<16x64xf32>
    %144 = vector.extract_strided_slice %12 {offsets = [0, 128], sizes = [16, 64], strides = [1, 1]} : vector<16x256xf32> to vector<16x64xf32>
    %cst_57 = arith.constant 0.353553385 : f32
    %145 = vector.broadcast %cst_57 : f32 to vector<16x64xf32>
    %146 = arith.mulf %142, %145 : vector<16x64xf32>
    %147 = arith.truncf %146 : vector<16x64xf32> to vector<16x64xbf16>
    %cst_58 = arith.constant dense<0.000000e+00> : vector<16x266xf32>
    %148 = tpu.matmul %147, %4, %cst_58 {dimension_numbers = #tpu.dot_dimension_numbers<[1], [0], [0], [1], [0, 0, 1, 1], [], []>} : vector<16x64xbf16>, vector<64x266xbf16>, vector<16x266xf32> -> vector<16x266xf32>
    %cst_59 = arith.constant 0.353553385 : f32
    %149 = vector.broadcast %cst_59 : f32 to vector<16x64xf32>
    %150 = arith.mulf %143, %149 : vector<16x64xf32>
    %151 = arith.truncf %150 : vector<16x64xf32> to vector<16x64xbf16>
    %cst_60 = arith.constant dense<0.000000e+00> : vector<16x266xf32>
    %152 = tpu.matmul %151, %4, %cst_60 {dimension_numbers = #tpu.dot_dimension_numbers<[1], [0], [0], [1], [0, 0, 1, 1], [], []>} : vector<16x64xbf16>, vector<64x266xbf16>, vector<16x266xf32> -> vector<16x266xf32>
    %153 = arith.mulf %142, %142 : vector<16x64xf32>
    %cst_61 = arith.constant dense<0.000000e+00> : vector<16xf32>
    %154 = vector.multi_reduction <add>, %153, %cst_61 [1] : vector<16x64xf32> to vector<16xf32>
    %155 = vector.shape_cast %154 : vector<16xf32> to vector<16x1xf32>
    %cst_62 = arith.constant 6.250000e-02 : f32
    %156 = vector.broadcast %cst_62 : f32 to vector<16x1xf32>
    %157 = arith.mulf %155, %156 : vector<16x1xf32>
    %158 = arith.mulf %143, %143 : vector<16x64xf32>
    %cst_63 = arith.constant dense<0.000000e+00> : vector<16xf32>
    %159 = vector.multi_reduction <add>, %158, %cst_63 [1] : vector<16x64xf32> to vector<16xf32>
    %160 = vector.shape_cast %159 : vector<16xf32> to vector<16x1xf32>
    %cst_64 = arith.constant 6.250000e-02 : f32
    %161 = vector.broadcast %cst_64 : f32 to vector<16x1xf32>
    %162 = arith.mulf %160, %161 : vector<16x1xf32>
    %163 = vector.broadcast %157 : vector<16x1xf32> to vector<16x266xf32>
    %164 = arith.subf %148, %163 : vector<16x266xf32>
    %cst_65 = arith.constant dense<0xFF800000> : vector<16xf32>
    %165 = vector.multi_reduction <maximumf>, %148, %cst_65 [1] : vector<16x266xf32> to vector<16xf32>
    %166 = vector.shape_cast %165 : vector<16xf32> to vector<16x1xf32>
    %167 = vector.broadcast %166 : vector<16x1xf32> to vector<16x266xf32>
    %168 = arith.subf %164, %167 : vector<16x266xf32>
    %169 = math.exp %168 : vector<16x266xf32>
    %cst_66 = arith.constant 9.99999974E-5 : f32
    %170 = vector.broadcast %cst_66 : f32 to vector<16x266xf32>
    %171 = arith.addf %169, %170 : vector<16x266xf32>
    %cst_67 = arith.constant 0.0613139346 : f32
    %172 = vector.broadcast %cst_67 : f32 to vector<16x266xf32>
    %173 = arith.mulf %172, %171 : vector<16x266xf32>
    %cst_68 = arith.constant dense<0xFF800000> : vector<16xf32>
    %174 = vector.multi_reduction <maximumf>, %152, %cst_68 [1] : vector<16x266xf32> to vector<16xf32>
    %175 = vector.shape_cast %174 : vector<16xf32> to vector<16x1xf32>
    %cst_69 = arith.constant dense<0xFF800000> : vector<1xf32>
    %176 = vector.multi_reduction <maximumf>, %175, %cst_69 [0] : vector<16x1xf32> to vector<1xf32>
    %177 = vector.shape_cast %176 : vector<1xf32> to vector<1x1xf32>
    %178 = vector.broadcast %162 : vector<16x1xf32> to vector<16x266xf32>
    %179 = arith.subf %152, %178 : vector<16x266xf32>
    %180 = vector.broadcast %177 : vector<1x1xf32> to vector<16x266xf32>
    %181 = arith.subf %179, %180 : vector<16x266xf32>
    %182 = math.exp %181 : vector<16x266xf32>
    %cst_70 = arith.constant 9.99999974E-5 : f32
    %183 = vector.broadcast %cst_70 : f32 to vector<16x266xf32>
    %184 = arith.addf %182, %183 : vector<16x266xf32>
    %cst_71 = arith.constant 0.0613139346 : f32
    %185 = vector.broadcast %cst_71 : f32 to vector<16x266xf32>
    %186 = arith.mulf %185, %184 : vector<16x266xf32>
    %cst_72 = arith.constant dense<0.000000e+00> : vector<266xf32>
    %187 = vector.multi_reduction <add>, %186, %cst_72 [0] : vector<16x266xf32> to vector<266xf32>
    %188 = vector.shape_cast %187 : vector<266xf32> to vector<1x266xf32>
    %189 = vector.broadcast %188 : vector<1x266xf32> to vector<16x266xf32>
    %190 = arith.mulf %173, %189 : vector<16x266xf32>
    %cst_73 = arith.constant dense<0.000000e+00> : vector<16xf32>
    %191 = vector.multi_reduction <add>, %190, %cst_73 [1] : vector<16x266xf32> to vector<16xf32>
    %192 = vector.shape_cast %191 : vector<16xf32> to vector<16x1xf32>
    %193 = arith.truncf %186 : vector<16x266xf32> to vector<16x266xbf16>
    %194 = arith.truncf %144 : vector<16x64xf32> to vector<16x64xbf16>
    %cst_74 = arith.constant dense<0.000000e+00> : vector<266x64xf32>
    %195 = tpu.matmul %193, %194, %cst_74 {dimension_numbers = #tpu.dot_dimension_numbers<[0], [0], [1], [1], [0, 1, 1, 1], [], []>} : vector<16x266xbf16>, vector<16x64xbf16>, vector<266x64xf32> -> vector<266x64xf32>
    %196 = arith.truncf %173 : vector<16x266xf32> to vector<16x266xbf16>
    %197 = arith.truncf %195 : vector<266x64xf32> to vector<266x64xbf16>
    %cst_75 = arith.constant dense<0.000000e+00> : vector<16x64xf32>
    %198 = tpu.matmul %196, %197, %cst_75 {dimension_numbers = #tpu.dot_dimension_numbers<[1], [0], [0], [1], [0, 0, 1, 1], [], []>} : vector<16x266xbf16>, vector<266x64xbf16>, vector<16x64xf32> -> vector<16x64xf32>
    %199 = tpu.reciprocal %192 {approx = true} : vector<16x1xf32> -> vector<16x1xf32>
    %200 = vector.broadcast %199 : vector<16x1xf32> to vector<16x64xf32>
    %201 = arith.mulf %198, %200 : vector<16x64xf32>
    %202 = arith.truncf %201 : vector<16x64xf32> to vector<16x64xbf16>
    %203 = vector.extract_strided_slice %3 {offsets = [128, 0], sizes = [64, 32], strides = [1, 1]} : vector<256x32xbf16> to vector<64x32xbf16>
    %cst_76 = arith.constant dense<0.000000e+00> : vector<16x32xf32>
    %204 = tpu.matmul %202, %203, %cst_76 {dimension_numbers = #tpu.dot_dimension_numbers<[1], [0], [0], [1], [0, 0, 1, 1], [], []>} : vector<16x64xbf16>, vector<64x32xbf16>, vector<16x32xf32> -> vector<16x32xf32>
    %205 = arith.addf %141, %204 : vector<16x32xf32>
    %206 = vector.extract_strided_slice %8 {offsets = [0, 192], sizes = [16, 64], strides = [1, 1]} : vector<16x256xf32> to vector<16x64xf32>
    %207 = vector.extract_strided_slice %10 {offsets = [0, 192], sizes = [16, 64], strides = [1, 1]} : vector<16x256xf32> to vector<16x64xf32>
    %208 = vector.extract_strided_slice %12 {offsets = [0, 192], sizes = [16, 64], strides = [1, 1]} : vector<16x256xf32> to vector<16x64xf32>
    %cst_77 = arith.constant 0.353553385 : f32
    %209 = vector.broadcast %cst_77 : f32 to vector<16x64xf32>
    %210 = arith.mulf %206, %209 : vector<16x64xf32>
    %211 = arith.truncf %210 : vector<16x64xf32> to vector<16x64xbf16>
    %cst_78 = arith.constant dense<0.000000e+00> : vector<16x266xf32>
    %212 = tpu.matmul %211, %4, %cst_78 {dimension_numbers = #tpu.dot_dimension_numbers<[1], [0], [0], [1], [0, 0, 1, 1], [], []>} : vector<16x64xbf16>, vector<64x266xbf16>, vector<16x266xf32> -> vector<16x266xf32>
    %cst_79 = arith.constant 0.353553385 : f32
    %213 = vector.broadcast %cst_79 : f32 to vector<16x64xf32>
    %214 = arith.mulf %207, %213 : vector<16x64xf32>
    %215 = arith.truncf %214 : vector<16x64xf32> to vector<16x64xbf16>
    %cst_80 = arith.constant dense<0.000000e+00> : vector<16x266xf32>
    %216 = tpu.matmul %215, %4, %cst_80 {dimension_numbers = #tpu.dot_dimension_numbers<[1], [0], [0], [1], [0, 0, 1, 1], [], []>} : vector<16x64xbf16>, vector<64x266xbf16>, vector<16x266xf32> -> vector<16x266xf32>
    %217 = arith.mulf %206, %206 : vector<16x64xf32>
    %cst_81 = arith.constant dense<0.000000e+00> : vector<16xf32>
    %218 = vector.multi_reduction <add>, %217, %cst_81 [1] : vector<16x64xf32> to vector<16xf32>
    %219 = vector.shape_cast %218 : vector<16xf32> to vector<16x1xf32>
    %cst_82 = arith.constant 6.250000e-02 : f32
    %220 = vector.broadcast %cst_82 : f32 to vector<16x1xf32>
    %221 = arith.mulf %219, %220 : vector<16x1xf32>
    %222 = arith.mulf %207, %207 : vector<16x64xf32>
    %cst_83 = arith.constant dense<0.000000e+00> : vector<16xf32>
    %223 = vector.multi_reduction <add>, %222, %cst_83 [1] : vector<16x64xf32> to vector<16xf32>
    %224 = vector.shape_cast %223 : vector<16xf32> to vector<16x1xf32>
    %cst_84 = arith.constant 6.250000e-02 : f32
    %225 = vector.broadcast %cst_84 : f32 to vector<16x1xf32>
    %226 = arith.mulf %224, %225 : vector<16x1xf32>
    %227 = vector.broadcast %221 : vector<16x1xf32> to vector<16x266xf32>
    %228 = arith.subf %212, %227 : vector<16x266xf32>
    %cst_85 = arith.constant dense<0xFF800000> : vector<16xf32>
    %229 = vector.multi_reduction <maximumf>, %212, %cst_85 [1] : vector<16x266xf32> to vector<16xf32>
    %230 = vector.shape_cast %229 : vector<16xf32> to vector<16x1xf32>
    %231 = vector.broadcast %230 : vector<16x1xf32> to vector<16x266xf32>
    %232 = arith.subf %228, %231 : vector<16x266xf32>
    %233 = math.exp %232 : vector<16x266xf32>
    %cst_86 = arith.constant 9.99999974E-5 : f32
    %234 = vector.broadcast %cst_86 : f32 to vector<16x266xf32>
    %235 = arith.addf %233, %234 : vector<16x266xf32>
    %cst_87 = arith.constant 0.0613139346 : f32
    %236 = vector.broadcast %cst_87 : f32 to vector<16x266xf32>
    %237 = arith.mulf %236, %235 : vector<16x266xf32>
    %cst_88 = arith.constant dense<0xFF800000> : vector<16xf32>
    %238 = vector.multi_reduction <maximumf>, %216, %cst_88 [1] : vector<16x266xf32> to vector<16xf32>
    %239 = vector.shape_cast %238 : vector<16xf32> to vector<16x1xf32>
    %cst_89 = arith.constant dense<0xFF800000> : vector<1xf32>
    %240 = vector.multi_reduction <maximumf>, %239, %cst_89 [0] : vector<16x1xf32> to vector<1xf32>
    %241 = vector.shape_cast %240 : vector<1xf32> to vector<1x1xf32>
    %242 = vector.broadcast %226 : vector<16x1xf32> to vector<16x266xf32>
    %243 = arith.subf %216, %242 : vector<16x266xf32>
    %244 = vector.broadcast %241 : vector<1x1xf32> to vector<16x266xf32>
    %245 = arith.subf %243, %244 : vector<16x266xf32>
    %246 = math.exp %245 : vector<16x266xf32>
    %cst_90 = arith.constant 9.99999974E-5 : f32
    %247 = vector.broadcast %cst_90 : f32 to vector<16x266xf32>
    %248 = arith.addf %246, %247 : vector<16x266xf32>
    %cst_91 = arith.constant 0.0613139346 : f32
    %249 = vector.broadcast %cst_91 : f32 to vector<16x266xf32>
    %250 = arith.mulf %249, %248 : vector<16x266xf32>
    %cst_92 = arith.constant dense<0.000000e+00> : vector<266xf32>
    %251 = vector.multi_reduction <add>, %250, %cst_92 [0] : vector<16x266xf32> to vector<266xf32>
    %252 = vector.shape_cast %251 : vector<266xf32> to vector<1x266xf32>
    %253 = vector.broadcast %252 : vector<1x266xf32> to vector<16x266xf32>
    %254 = arith.mulf %237, %253 : vector<16x266xf32>
    %cst_93 = arith.constant dense<0.000000e+00> : vector<16xf32>
    %255 = vector.multi_reduction <add>, %254, %cst_93 [1] : vector<16x266xf32> to vector<16xf32>
    %256 = vector.shape_cast %255 : vector<16xf32> to vector<16x1xf32>
    %257 = arith.truncf %250 : vector<16x266xf32> to vector<16x266xbf16>
    %258 = arith.truncf %208 : vector<16x64xf32> to vector<16x64xbf16>
    %cst_94 = arith.constant dense<0.000000e+00> : vector<266x64xf32>
    %259 = tpu.matmul %257, %258, %cst_94 {dimension_numbers = #tpu.dot_dimension_numbers<[0], [0], [1], [1], [0, 1, 1, 1], [], []>} : vector<16x266xbf16>, vector<16x64xbf16>, vector<266x64xf32> -> vector<266x64xf32>
    %260 = arith.truncf %237 : vector<16x266xf32> to vector<16x266xbf16>
    %261 = arith.truncf %259 : vector<266x64xf32> to vector<266x64xbf16>
    %cst_95 = arith.constant dense<0.000000e+00> : vector<16x64xf32>
    %262 = tpu.matmul %260, %261, %cst_95 {dimension_numbers = #tpu.dot_dimension_numbers<[1], [0], [0], [1], [0, 0, 1, 1], [], []>} : vector<16x266xbf16>, vector<266x64xbf16>, vector<16x64xf32> -> vector<16x64xf32>
    %263 = tpu.reciprocal %256 {approx = true} : vector<16x1xf32> -> vector<16x1xf32>
    %264 = vector.broadcast %263 : vector<16x1xf32> to vector<16x64xf32>
    %265 = arith.mulf %262, %264 : vector<16x64xf32>
    %266 = arith.truncf %265 : vector<16x64xf32> to vector<16x64xbf16>
    %267 = vector.extract_strided_slice %3 {offsets = [192, 0], sizes = [64, 32], strides = [1, 1]} : vector<256x32xbf16> to vector<64x32xbf16>
    %cst_96 = arith.constant dense<0.000000e+00> : vector<16x32xf32>
    %268 = tpu.matmul %266, %267, %cst_96 {dimension_numbers = #tpu.dot_dimension_numbers<[1], [0], [0], [1], [0, 0, 1, 1], [], []>} : vector<16x64xbf16>, vector<64x32xbf16>, vector<16x32xf32> -> vector<16x32xf32>
    %269 = arith.addf %205, %268 : vector<16x32xf32>
    %c0_97 = arith.constant 0 : index
    %c0_98 = arith.constant 0 : index
    %270 = vector.load %arg7[%c0_97, %c0_98] : memref<1x32xf32, #tpu.memory_space<vmem>>, vector<1x32xf32>
    %271 = vector.broadcast %270 : vector<1x32xf32> to vector<16x32xf32>
    %272 = arith.addf %269, %271 : vector<16x32xf32>
    %273 = arith.addf %0, %272 : vector<16x32xf32>
    %c0_99 = arith.constant 0 : index
    %c0_100 = arith.constant 0 : index
    %274 = vector.load %arg9[%c0_99, %c0_100] : memref<1x32xf32, #tpu.memory_space<vmem>>, vector<1x32xf32>
    %c0_101 = arith.constant 0 : index
    %c0_102 = arith.constant 0 : index
    %275 = vector.load %arg10[%c0_101, %c0_102] : memref<1x32xf32, #tpu.memory_space<vmem>>, vector<1x32xf32>
    %cst_103 = arith.constant dense<0.000000e+00> : vector<16xf32>
    %276 = vector.multi_reduction <add>, %273, %cst_103 [1] : vector<16x32xf32> to vector<16xf32>
    %277 = vector.shape_cast %276 : vector<16xf32> to vector<16x1xf32>
    %cst_104 = arith.constant 3.200000e+01 : f32
    %278 = vector.broadcast %cst_104 : f32 to vector<16x1xf32>
    %279 = arith.divf %277, %278 : vector<16x1xf32>
    %280 = vector.broadcast %279 : vector<16x1xf32> to vector<16x32xf32>
    %281 = arith.subf %273, %280 : vector<16x32xf32>
    %282 = arith.mulf %281, %281 : vector<16x32xf32>
    %cst_105 = arith.constant dense<0.000000e+00> : vector<16xf32>
    %283 = vector.multi_reduction <add>, %282, %cst_105 [1] : vector<16x32xf32> to vector<16xf32>
    %284 = vector.shape_cast %283 : vector<16xf32> to vector<16x1xf32>
    %cst_106 = arith.constant 3.200000e+01 : f32
    %285 = vector.broadcast %cst_106 : f32 to vector<16x1xf32>
    %286 = arith.divf %284, %285 : vector<16x1xf32>
    %cst_107 = arith.constant 9.99999974E-6 : f32
    %287 = vector.broadcast %cst_107 : f32 to vector<16x1xf32>
    %288 = arith.addf %286, %287 : vector<16x1xf32>
    %289 = math.rsqrt %288 : vector<16x1xf32>
    %290 = vector.broadcast %289 : vector<16x1xf32> to vector<16x32xf32>
    %291 = arith.mulf %281, %290 : vector<16x32xf32>
    %292 = vector.broadcast %274 : vector<1x32xf32> to vector<16x32xf32>
    %293 = arith.mulf %291, %292 : vector<16x32xf32>
    %294 = vector.broadcast %275 : vector<1x32xf32> to vector<16x32xf32>
    %295 = arith.addf %293, %294 : vector<16x32xf32>
    %c0_108 = arith.constant 0 : index
    %c0_109 = arith.constant 0 : index
    %296 = vector.load %arg11[%c0_108, %c0_109] : memref<32x64xbf16, #tpu.memory_space<vmem>>, vector<32x64xbf16>
    %c0_110 = arith.constant 0 : index
    %c0_111 = arith.constant 0 : index
    %297 = vector.load %arg12[%c0_110, %c0_111] : memref<1x64xf32, #tpu.memory_space<vmem>>, vector<1x64xf32>
    %c0_112 = arith.constant 0 : index
    %c0_113 = arith.constant 0 : index
    %298 = vector.load %arg13[%c0_112, %c0_113] : memref<64x32xbf16, #tpu.memory_space<vmem>>, vector<64x32xbf16>
    %c0_114 = arith.constant 0 : index
    %c0_115 = arith.constant 0 : index
    %299 = vector.load %arg14[%c0_114, %c0_115] : memref<1x32xf32, #tpu.memory_space<vmem>>, vector<1x32xf32>
    %300 = arith.truncf %295 : vector<16x32xf32> to vector<16x32xbf16>
    %cst_116 = arith.constant dense<0.000000e+00> : vector<16x64xf32>
    %301 = tpu.matmul %300, %296, %cst_116 {dimension_numbers = #tpu.dot_dimension_numbers<[1], [0], [0], [1], [0, 0, 1, 1], [], []>} : vector<16x32xbf16>, vector<32x64xbf16>, vector<16x64xf32> -> vector<16x64xf32>
    %302 = vector.broadcast %297 : vector<1x64xf32> to vector<16x64xf32>
    %303 = arith.addf %301, %302 : vector<16x64xf32>
    %cst_117 = arith.constant 5.000000e-01 : f32
    %304 = vector.broadcast %cst_117 : f32 to vector<16x64xf32>
    %305 = arith.mulf %304, %303 : vector<16x64xf32>
    %cst_118 = arith.constant 0.707106769 : f32
    %306 = vector.broadcast %cst_118 : f32 to vector<16x64xf32>
    %307 = arith.mulf %303, %306 : vector<16x64xf32>
    %cst_119 = arith.constant 0.000000e+00 : f32
    %308 = vector.broadcast %cst_119 : f32 to vector<16x64xf32>
    %309 = arith.cmpf oge, %307, %308 : vector<16x64xf32>
    %cst_120 = arith.constant 1.000000e+00 : f32
    %cst_121 = arith.constant -1.000000e+00 : f32
    %310 = vector.broadcast %cst_120 : f32 to vector<16x64xf32>
    %311 = vector.broadcast %cst_121 : f32 to vector<16x64xf32>
    %312 = arith.select %309, %310, %311 : vector<16x64xi1>, vector<16x64xf32>
    %313 = math.absf %307 : vector<16x64xf32>
    %cst_122 = arith.constant 0.327591091 : f32
    %314 = vector.broadcast %cst_122 : f32 to vector<16x64xf32>
    %315 = arith.mulf %314, %313 : vector<16x64xf32>
    %cst_123 = arith.constant 1.000000e+00 : f32
    %316 = vector.broadcast %cst_123 : f32 to vector<16x64xf32>
    %317 = arith.addf %316, %315 : vector<16x64xf32>
    %cst_124 = arith.constant 1.000000e+00 : f32
    %318 = vector.broadcast %cst_124 : f32 to vector<16x64xf32>
    %319 = arith.divf %318, %317 : vector<16x64xf32>
    %cst_125 = arith.constant 1.06140542 : f32
    %320 = vector.broadcast %cst_125 : f32 to vector<16x64xf32>
    %321 = arith.mulf %320, %319 : vector<16x64xf32>
    %cst_126 = arith.constant -1.45315206 : f32
    %322 = vector.broadcast %cst_126 : f32 to vector<16x64xf32>
    %323 = arith.addf %321, %322 : vector<16x64xf32>
    %324 = arith.mulf %323, %319 : vector<16x64xf32>
    %cst_127 = arith.constant 1.42141378 : f32
    %325 = vector.broadcast %cst_127 : f32 to vector<16x64xf32>
    %326 = arith.addf %324, %325 : vector<16x64xf32>
    %327 = arith.mulf %326, %319 : vector<16x64xf32>
    %cst_128 = arith.constant -0.284496725 : f32
    %328 = vector.broadcast %cst_128 : f32 to vector<16x64xf32>
    %329 = arith.addf %327, %328 : vector<16x64xf32>
    %330 = arith.mulf %329, %319 : vector<16x64xf32>
    %cst_129 = arith.constant 0.254829586 : f32
    %331 = vector.broadcast %cst_129 : f32 to vector<16x64xf32>
    %332 = arith.addf %330, %331 : vector<16x64xf32>
    %333 = arith.mulf %332, %319 : vector<16x64xf32>
    %cst_130 = arith.constant 0.000000e+00 : f32
    %334 = vector.broadcast %cst_130 : f32 to vector<16x64xf32>
    %335 = arith.subf %334, %313 : vector<16x64xf32>
    %336 = arith.mulf %335, %313 : vector<16x64xf32>
    %337 = math.exp %336 : vector<16x64xf32>
    %338 = arith.mulf %333, %337 : vector<16x64xf32>
    %cst_131 = arith.constant 1.000000e+00 : f32
    %339 = vector.broadcast %cst_131 : f32 to vector<16x64xf32>
    %340 = arith.subf %339, %338 : vector<16x64xf32>
    %341 = arith.mulf %312, %340 : vector<16x64xf32>
    %cst_132 = arith.constant 1.000000e+00 : f32
    %342 = vector.broadcast %cst_132 : f32 to vector<16x64xf32>
    %343 = arith.addf %342, %341 : vector<16x64xf32>
    %344 = arith.mulf %305, %343 : vector<16x64xf32>
    %345 = arith.truncf %344 : vector<16x64xf32> to vector<16x64xbf16>
    %cst_133 = arith.constant dense<0.000000e+00> : vector<16x32xf32>
    %346 = tpu.matmul %345, %298, %cst_133 {dimension_numbers = #tpu.dot_dimension_numbers<[1], [0], [0], [1], [0, 0, 1, 1], [], []>} : vector<16x64xbf16>, vector<64x32xbf16>, vector<16x32xf32> -> vector<16x32xf32>
    %347 = vector.broadcast %299 : vector<1x32xf32> to vector<16x32xf32>
    %348 = arith.addf %346, %347 : vector<16x32xf32>
    %349 = arith.addf %295, %348 : vector<16x32xf32>
    %c0_134 = arith.constant 0 : index
    %c0_135 = arith.constant 0 : index
    %350 = vector.load %arg15[%c0_134, %c0_135] : memref<1x32xf32, #tpu.memory_space<vmem>>, vector<1x32xf32>
    %c0_136 = arith.constant 0 : index
    %c0_137 = arith.constant 0 : index
    %351 = vector.load %arg16[%c0_136, %c0_137] : memref<1x32xf32, #tpu.memory_space<vmem>>, vector<1x32xf32>
    %cst_138 = arith.constant dense<0.000000e+00> : vector<16xf32>
    %352 = vector.multi_reduction <add>, %349, %cst_138 [1] : vector<16x32xf32> to vector<16xf32>
    %353 = vector.shape_cast %352 : vector<16xf32> to vector<16x1xf32>
    %cst_139 = arith.constant 3.200000e+01 : f32
    %354 = vector.broadcast %cst_139 : f32 to vector<16x1xf32>
    %355 = arith.divf %353, %354 : vector<16x1xf32>
    %356 = vector.broadcast %355 : vector<16x1xf32> to vector<16x32xf32>
    %357 = arith.subf %349, %356 : vector<16x32xf32>
    %358 = arith.mulf %357, %357 : vector<16x32xf32>
    %cst_140 = arith.constant dense<0.000000e+00> : vector<16xf32>
    %359 = vector.multi_reduction <add>, %358, %cst_140 [1] : vector<16x32xf32> to vector<16xf32>
    %360 = vector.shape_cast %359 : vector<16xf32> to vector<16x1xf32>
    %cst_141 = arith.constant 3.200000e+01 : f32
    %361 = vector.broadcast %cst_141 : f32 to vector<16x1xf32>
    %362 = arith.divf %360, %361 : vector<16x1xf32>
    %cst_142 = arith.constant 9.99999974E-6 : f32
    %363 = vector.broadcast %cst_142 : f32 to vector<16x1xf32>
    %364 = arith.addf %362, %363 : vector<16x1xf32>
    %365 = math.rsqrt %364 : vector<16x1xf32>
    %366 = vector.broadcast %365 : vector<16x1xf32> to vector<16x32xf32>
    %367 = arith.mulf %357, %366 : vector<16x32xf32>
    %368 = vector.broadcast %350 : vector<1x32xf32> to vector<16x32xf32>
    %369 = arith.mulf %367, %368 : vector<16x32xf32>
    %370 = vector.broadcast %351 : vector<1x32xf32> to vector<16x32xf32>
    %371 = arith.addf %369, %370 : vector<16x32xf32>
    %c0_143 = arith.constant 0 : index
    %c0_144 = arith.constant 0 : index
    %c0_145 = arith.constant 0 : index
    %372 = vector.load %arg17[%c0_143, %c0_144, %c0_145] : memref<1x16x32xf32, #tpu.memory_space<vmem>>, vector<1x16x32xf32>
    %373 = vector.shape_cast %372 : vector<1x16x32xf32> to vector<16x32xf32>
    %374 = vector.shape_cast %371 : vector<16x32xf32> to vector<1x16x32xf32>
    tpu.vector_store %arg17[%c0_143, %c0_144, %c0_145], %374 {strides = array<i32>} : memref<1x16x32xf32, #tpu.memory_space<vmem>>, vector<1x16x32xf32>,
    return
  }
  func.func @transform_0(%arg0: i32) -> (i32, i32) {
    %c0_i32 = arith.constant 0 : i32
    %c0_i32_0 = arith.constant 0 : i32
    %c0_i32_1 = arith.constant 0 : i32
    return %c0_i32, %c0_i32_0 : i32, i32
  }
  func.func @transform_1(%arg0: i32) -> (i32, i32, i32) {
    %c0_i32 = arith.constant 0 : i32
    %c0_i32_0 = arith.constant 0 : i32
    %c0_i32_1 = arith.constant 0 : i32
    return %arg0, %c0_i32, %c0_i32_0 : i32, i32, i32
  }
  func.func @transform_2(%arg0: i32) -> (i32, i32) {
    %c0_i32 = arith.constant 0 : i32
    %c0_i32_0 = arith.constant 0 : i32
    %c0_i32_1 = arith.constant 0 : i32
    return %c0_i32, %c0_i32_0 : i32, i32
  }
  func.func @transform_3(%arg0: i32) -> (i32, i32) {
    %c0_i32 = arith.constant 0 : i32
    %c0_i32_0 = arith.constant 0 : i32
    %c0_i32_1 = arith.constant 0 : i32
    return %c0_i32, %c0_i32_0 : i32, i32
  }
  func.func @transform_4(%arg0: i32) -> (i32, i32) {
    %c0_i32 = arith.constant 0 : i32
    %c0_i32_0 = arith.constant 0 : i32
    %c0_i32_1 = arith.constant 0 : i32
    return %c0_i32, %c0_i32_0 : i32, i32
  }
  func.func @transform_5(%arg0: i32) -> (i32, i32) {
    %c0_i32 = arith.constant 0 : i32
    %c0_i32_0 = arith.constant 0 : i32
    %c0_i32_1 = arith.constant 0 : i32
    return %c0_i32, %c0_i32_0 : i32, i32
  }
  func.func @transform_6(%arg0: i32) -> (i32, i32) {
    %c0_i32 = arith.constant 0 : i32
    %c0_i32_0 = arith.constant 0 : i32
    %c0_i32_1 = arith.constant 0 : i32
    return %c0_i32, %c0_i32_0 : i32, i32
  }
  func.func @transform_7(%arg0: i32) -> (i32, i32) {
    %c0_i32 = arith.constant 0 : i32
    %c0_i32_0 = arith.constant 0 : i32
    %c0_i32_1 = arith.constant 0 : i32
    return %c0_i32, %c0_i32_0 : i32, i32
  }
  func.func @transform_8(%arg0: i32) -> (i32, i32) {
    %c0_i32 = arith.constant 0 : i32
    %c0_i32_0 = arith.constant 0 : i32
    %c0_i32_1 = arith.constant 0 : i32
    return %c0_i32, %c0_i32_0 : i32, i32
  }
  func.func @transform_9(%arg0: i32) -> (i32, i32) {
    %c0_i32 = arith.constant 0 : i32
    %c0_i32_0 = arith.constant 0 : i32
    %c0_i32_1 = arith.constant 0 : i32
    return %c0_i32, %c0_i32_0 : i32, i32
  }
  func.func @transform_10(%arg0: i32) -> (i32, i32) {
    %c0_i32 = arith.constant 0 : i32
    %c0_i32_0 = arith.constant 0 : i32
    %c0_i32_1 = arith.constant 0 : i32
    return %c0_i32, %c0_i32_0 : i32, i32
  }
  func.func @transform_11(%arg0: i32) -> (i32, i32) {
    %c0_i32 = arith.constant 0 : i32
    %c0_i32_0 = arith.constant 0 : i32
    %c0_i32_1 = arith.constant 0 : i32
    return %c0_i32, %c0_i32_0 : i32, i32
  }
  func.func @transform_12(%arg0: i32) -> (i32, i32) {
    %c0_i32 = arith.constant 0 : i32
    %c0_i32_0 = arith.constant 0 : i32
    %c0_i32_1 = arith.constant 0 : i32
    return %c0_i32, %c0_i32_0 : i32, i32
  }
  func.func @transform_13(%arg0: i32) -> (i32, i32) {
    %c0_i32 = arith.constant 0 : i32
    %c0_i32_0 = arith.constant 0 : i32
    %c0_i32_1 = arith.constant 0 : i32
    return %c0_i32, %c0_i32_0 : i32, i32
  }
  func.func @transform_14(%arg0: i32) -> (i32, i32) {
    %c0_i32 = arith.constant 0 : i32
    %c0_i32_0 = arith.constant 0 : i32
    %c0_i32_1 = arith.constant 0 : i32
    return %c0_i32, %c0_i32_0 : i32, i32
  }
  func.func @transform_15(%arg0: i32) -> (i32, i32) {
    %c0_i32 = arith.constant 0 : i32
    %c0_i32_0 = arith.constant 0 : i32
    %c0_i32_1 = arith.constant 0 : i32
    return %c0_i32, %c0_i32_0 : i32, i32
  }
  func.func @transform_16(%arg0: i32) -> (i32, i32, i32) {
    %c0_i32 = arith.constant 0 : i32
    %c0_i32_0 = arith.constant 0 : i32
    %c0_i32_1 = arith.constant 0 : i32
    return %arg0, %c0_i32, %c0_i32_0 : i32, i32, i32
  }
}

module attributes {stable_mosaic.version = 11 : i64} {
  func.func @_mha_self_block_kernel(%arg0: i32, %arg1: memref<1x16x32xf32, #tpu.memory_space<vmem>>, %arg2: memref<32x96xbf16, #tpu.memory_space<vmem>>, %arg3: memref<1x96xf32, #tpu.memory_space<vmem>>, %arg4: memref<32x32xbf16, #tpu.memory_space<vmem>>, %arg5: memref<1x32xf32, #tpu.memory_space<vmem>>, %arg6: memref<1x32xf32, #tpu.memory_space<vmem>>, %arg7: memref<1x32xf32, #tpu.memory_space<vmem>>, %arg8: memref<32x64xbf16, #tpu.memory_space<vmem>>, %arg9: memref<1x64xf32, #tpu.memory_space<vmem>>, %arg10: memref<64x32xbf16, #tpu.memory_space<vmem>>, %arg11: memref<1x32xf32, #tpu.memory_space<vmem>>, %arg12: memref<1x32xf32, #tpu.memory_space<vmem>>, %arg13: memref<1x32xf32, #tpu.memory_space<vmem>>, %arg14: memref<1x16x32xf32, #tpu.memory_space<vmem>>) attributes {dimension_semantics = [#tpu.dimension_semantics<parallel>], iteration_bounds = array<i64: 2>, scalar_prefetch = 0 : i64, scratch_operands = 0 : i64, tpu.core_type = #tpu.core_type<tc>, window_params = [{transform_indices = @transform_0, window_bounds = array<i64: 1, 16, 32>}, {pipeline_mode = #tpu.pipeline_mode<synchronous>, transform_indices = @transform_1, window_bounds = array<i64: 32, 96>}, {pipeline_mode = #tpu.pipeline_mode<synchronous>, transform_indices = @transform_2, window_bounds = array<i64: 1, 96>}, {pipeline_mode = #tpu.pipeline_mode<synchronous>, transform_indices = @transform_3, window_bounds = array<i64: 32, 32>}, {pipeline_mode = #tpu.pipeline_mode<synchronous>, transform_indices = @transform_4, window_bounds = array<i64: 1, 32>}, {pipeline_mode = #tpu.pipeline_mode<synchronous>, transform_indices = @transform_5, window_bounds = array<i64: 1, 32>}, {pipeline_mode = #tpu.pipeline_mode<synchronous>, transform_indices = @transform_6, window_bounds = array<i64: 1, 32>}, {pipeline_mode = #tpu.pipeline_mode<synchronous>, transform_indices = @transform_7, window_bounds = array<i64: 32, 64>}, {pipeline_mode = #tpu.pipeline_mode<synchronous>, transform_indices = @transform_8, window_bounds = array<i64: 1, 64>}, {pipeline_mode = #tpu.pipeline_mode<synchronous>, transform_indices = @transform_9, window_bounds = array<i64: 64, 32>}, {pipeline_mode = #tpu.pipeline_mode<synchronous>, transform_indices = @transform_10, window_bounds = array<i64: 1, 32>}, {pipeline_mode = #tpu.pipeline_mode<synchronous>, transform_indices = @transform_11, window_bounds = array<i64: 1, 32>}, {pipeline_mode = #tpu.pipeline_mode<synchronous>, transform_indices = @transform_12, window_bounds = array<i64: 1, 32>}, {transform_indices = @transform_13, window_bounds = array<i64: 1, 16, 32>}]} {
    %c0 = arith.constant 0 : index
    %c0_0 = arith.constant 0 : index
    %c0_1 = arith.constant 0 : index
    %0 = vector.load %arg1[%c0, %c0_0, %c0_1] : memref<1x16x32xf32, #tpu.memory_space<vmem>>, vector<1x16x32xf32>
    %1 = vector.shape_cast %0 : vector<1x16x32xf32> to vector<16x32xf32>
    %c0_2 = arith.constant 0 : index
    %c0_3 = arith.constant 0 : index
    %2 = vector.load %arg2[%c0_2, %c0_3] : memref<32x96xbf16, #tpu.memory_space<vmem>>, vector<32x96xbf16>
    %c0_4 = arith.constant 0 : index
    %c0_5 = arith.constant 0 : index
    %3 = vector.load %arg3[%c0_4, %c0_5] : memref<1x96xf32, #tpu.memory_space<vmem>>, vector<1x96xf32>
    %c0_6 = arith.constant 0 : index
    %c0_7 = arith.constant 0 : index
    %4 = vector.load %arg4[%c0_6, %c0_7] : memref<32x32xbf16, #tpu.memory_space<vmem>>, vector<32x32xbf16>
    %c0_8 = arith.constant 0 : index
    %c0_9 = arith.constant 0 : index
    %5 = vector.load %arg5[%c0_8, %c0_9] : memref<1x32xf32, #tpu.memory_space<vmem>>, vector<1x32xf32>
    %6 = arith.truncf %1 : vector<16x32xf32> to vector<16x32xbf16>
    %cst = arith.constant dense<0.000000e+00> : vector<16x96xf32>
    %7 = tpu.matmul %6, %2, %cst {dimension_numbers = #tpu.dot_dimension_numbers<[1], [0], [0], [1], [0, 0, 1, 1], [], []>} : vector<16x32xbf16>, vector<32x96xbf16>, vector<16x96xf32> -> vector<16x96xf32>
    %8 = vector.broadcast %3 : vector<1x96xf32> to vector<16x96xf32>
    %9 = arith.addf %7, %8 : vector<16x96xf32>
    %10 = vector.extract_strided_slice %9 {offsets = [0, 0], sizes = [16, 32], strides = [1, 1]} : vector<16x96xf32> to vector<16x32xf32>
    %11 = vector.extract_strided_slice %9 {offsets = [0, 32], sizes = [16, 32], strides = [1, 1]} : vector<16x96xf32> to vector<16x32xf32>
    %12 = vector.extract_strided_slice %9 {offsets = [0, 64], sizes = [16, 32], strides = [1, 1]} : vector<16x96xf32> to vector<16x32xf32>
    %cst_10 = arith.constant 0.000000e+00 : f32
    %13 = vector.broadcast %cst_10 : f32 to vector<16x32xf32>
    %14 = vector.extract_strided_slice %10 {offsets = [0, 0], sizes = [16, 8], strides = [1, 1]} : vector<16x32xf32> to vector<16x8xf32>
    %15 = vector.extract_strided_slice %11 {offsets = [0, 0], sizes = [16, 8], strides = [1, 1]} : vector<16x32xf32> to vector<16x8xf32>
    %16 = vector.extract_strided_slice %12 {offsets = [0, 0], sizes = [16, 8], strides = [1, 1]} : vector<16x32xf32> to vector<16x8xf32>
    %17 = arith.truncf %14 : vector<16x8xf32> to vector<16x8xbf16>
    %18 = arith.truncf %15 : vector<16x8xf32> to vector<16x8xbf16>
    %cst_11 = arith.constant dense<0.000000e+00> : vector<16x16xf32>
    %19 = tpu.matmul %17, %18, %cst_11 {dimension_numbers = #tpu.dot_dimension_numbers<[1], [1], [0], [0], [0, 0, 1, 0], [], []>} : vector<16x8xbf16>, vector<16x8xbf16>, vector<16x16xf32> -> vector<16x16xf32>
    %cst_12 = arith.constant 0.353553385 : f32
    %20 = vector.broadcast %cst_12 : f32 to vector<16x16xf32>
    %21 = arith.mulf %19, %20 : vector<16x16xf32>
    %cst_13 = arith.constant dense<0xFF800000> : vector<16xf32>
    %22 = vector.multi_reduction <maximumf>, %21, %cst_13 [1] : vector<16x16xf32> to vector<16xf32>
    %23 = vector.shape_cast %22 : vector<16xf32> to vector<16x1xf32>
    %24 = vector.broadcast %23 : vector<16x1xf32> to vector<16x16xf32>
    %25 = arith.subf %21, %24 : vector<16x16xf32>
    %26 = math.exp %25 : vector<16x16xf32>
    %cst_14 = arith.constant dense<0.000000e+00> : vector<16xf32>
    %27 = vector.multi_reduction <add>, %26, %cst_14 [1] : vector<16x16xf32> to vector<16xf32>
    %28 = vector.shape_cast %27 : vector<16xf32> to vector<16x1xf32>
    %29 = tpu.reciprocal %28 {approx = true} : vector<16x1xf32> -> vector<16x1xf32>
    %30 = vector.broadcast %29 : vector<16x1xf32> to vector<16x16xf32>
    %31 = arith.mulf %26, %30 : vector<16x16xf32>
    %32 = arith.truncf %31 : vector<16x16xf32> to vector<16x16xbf16>
    %33 = arith.truncf %16 : vector<16x8xf32> to vector<16x8xbf16>
    %cst_15 = arith.constant dense<0.000000e+00> : vector<16x8xf32>
    %34 = tpu.matmul %32, %33, %cst_15 {dimension_numbers = #tpu.dot_dimension_numbers<[1], [0], [0], [1], [0, 0, 1, 1], [], []>} : vector<16x16xbf16>, vector<16x8xbf16>, vector<16x8xf32> -> vector<16x8xf32>
    %35 = arith.truncf %34 : vector<16x8xf32> to vector<16x8xbf16>
    %36 = vector.extract_strided_slice %4 {offsets = [0, 0], sizes = [8, 32], strides = [1, 1]} : vector<32x32xbf16> to vector<8x32xbf16>
    %cst_16 = arith.constant dense<0.000000e+00> : vector<16x32xf32>
    %37 = tpu.matmul %35, %36, %cst_16 {dimension_numbers = #tpu.dot_dimension_numbers<[1], [0], [0], [1], [0, 0, 1, 1], [], []>} : vector<16x8xbf16>, vector<8x32xbf16>, vector<16x32xf32> -> vector<16x32xf32>
    %38 = arith.addf %13, %37 : vector<16x32xf32>
    %39 = vector.extract_strided_slice %10 {offsets = [0, 8], sizes = [16, 8], strides = [1, 1]} : vector<16x32xf32> to vector<16x8xf32>
    %40 = vector.extract_strided_slice %11 {offsets = [0, 8], sizes = [16, 8], strides = [1, 1]} : vector<16x32xf32> to vector<16x8xf32>
    %41 = vector.extract_strided_slice %12 {offsets = [0, 8], sizes = [16, 8], strides = [1, 1]} : vector<16x32xf32> to vector<16x8xf32>
    %42 = arith.truncf %39 : vector<16x8xf32> to vector<16x8xbf16>
    %43 = arith.truncf %40 : vector<16x8xf32> to vector<16x8xbf16>
    %cst_17 = arith.constant dense<0.000000e+00> : vector<16x16xf32>
    %44 = tpu.matmul %42, %43, %cst_17 {dimension_numbers = #tpu.dot_dimension_numbers<[1], [1], [0], [0], [0, 0, 1, 0], [], []>} : vector<16x8xbf16>, vector<16x8xbf16>, vector<16x16xf32> -> vector<16x16xf32>
    %cst_18 = arith.constant 0.353553385 : f32
    %45 = vector.broadcast %cst_18 : f32 to vector<16x16xf32>
    %46 = arith.mulf %44, %45 : vector<16x16xf32>
    %cst_19 = arith.constant dense<0xFF800000> : vector<16xf32>
    %47 = vector.multi_reduction <maximumf>, %46, %cst_19 [1] : vector<16x16xf32> to vector<16xf32>
    %48 = vector.shape_cast %47 : vector<16xf32> to vector<16x1xf32>
    %49 = vector.broadcast %48 : vector<16x1xf32> to vector<16x16xf32>
    %50 = arith.subf %46, %49 : vector<16x16xf32>
    %51 = math.exp %50 : vector<16x16xf32>
    %cst_20 = arith.constant dense<0.000000e+00> : vector<16xf32>
    %52 = vector.multi_reduction <add>, %51, %cst_20 [1] : vector<16x16xf32> to vector<16xf32>
    %53 = vector.shape_cast %52 : vector<16xf32> to vector<16x1xf32>
    %54 = tpu.reciprocal %53 {approx = true} : vector<16x1xf32> -> vector<16x1xf32>
    %55 = vector.broadcast %54 : vector<16x1xf32> to vector<16x16xf32>
    %56 = arith.mulf %51, %55 : vector<16x16xf32>
    %57 = arith.truncf %56 : vector<16x16xf32> to vector<16x16xbf16>
    %58 = arith.truncf %41 : vector<16x8xf32> to vector<16x8xbf16>
    %cst_21 = arith.constant dense<0.000000e+00> : vector<16x8xf32>
    %59 = tpu.matmul %57, %58, %cst_21 {dimension_numbers = #tpu.dot_dimension_numbers<[1], [0], [0], [1], [0, 0, 1, 1], [], []>} : vector<16x16xbf16>, vector<16x8xbf16>, vector<16x8xf32> -> vector<16x8xf32>
    %60 = arith.truncf %59 : vector<16x8xf32> to vector<16x8xbf16>
    %61 = vector.extract_strided_slice %4 {offsets = [8, 0], sizes = [8, 32], strides = [1, 1]} : vector<32x32xbf16> to vector<8x32xbf16>
    %cst_22 = arith.constant dense<0.000000e+00> : vector<16x32xf32>
    %62 = tpu.matmul %60, %61, %cst_22 {dimension_numbers = #tpu.dot_dimension_numbers<[1], [0], [0], [1], [0, 0, 1, 1], [], []>} : vector<16x8xbf16>, vector<8x32xbf16>, vector<16x32xf32> -> vector<16x32xf32>
    %63 = arith.addf %38, %62 : vector<16x32xf32>
    %64 = vector.extract_strided_slice %10 {offsets = [0, 16], sizes = [16, 8], strides = [1, 1]} : vector<16x32xf32> to vector<16x8xf32>
    %65 = vector.extract_strided_slice %11 {offsets = [0, 16], sizes = [16, 8], strides = [1, 1]} : vector<16x32xf32> to vector<16x8xf32>
    %66 = vector.extract_strided_slice %12 {offsets = [0, 16], sizes = [16, 8], strides = [1, 1]} : vector<16x32xf32> to vector<16x8xf32>
    %67 = arith.truncf %64 : vector<16x8xf32> to vector<16x8xbf16>
    %68 = arith.truncf %65 : vector<16x8xf32> to vector<16x8xbf16>
    %cst_23 = arith.constant dense<0.000000e+00> : vector<16x16xf32>
    %69 = tpu.matmul %67, %68, %cst_23 {dimension_numbers = #tpu.dot_dimension_numbers<[1], [1], [0], [0], [0, 0, 1, 0], [], []>} : vector<16x8xbf16>, vector<16x8xbf16>, vector<16x16xf32> -> vector<16x16xf32>
    %cst_24 = arith.constant 0.353553385 : f32
    %70 = vector.broadcast %cst_24 : f32 to vector<16x16xf32>
    %71 = arith.mulf %69, %70 : vector<16x16xf32>
    %cst_25 = arith.constant dense<0xFF800000> : vector<16xf32>
    %72 = vector.multi_reduction <maximumf>, %71, %cst_25 [1] : vector<16x16xf32> to vector<16xf32>
    %73 = vector.shape_cast %72 : vector<16xf32> to vector<16x1xf32>
    %74 = vector.broadcast %73 : vector<16x1xf32> to vector<16x16xf32>
    %75 = arith.subf %71, %74 : vector<16x16xf32>
    %76 = math.exp %75 : vector<16x16xf32>
    %cst_26 = arith.constant dense<0.000000e+00> : vector<16xf32>
    %77 = vector.multi_reduction <add>, %76, %cst_26 [1] : vector<16x16xf32> to vector<16xf32>
    %78 = vector.shape_cast %77 : vector<16xf32> to vector<16x1xf32>
    %79 = tpu.reciprocal %78 {approx = true} : vector<16x1xf32> -> vector<16x1xf32>
    %80 = vector.broadcast %79 : vector<16x1xf32> to vector<16x16xf32>
    %81 = arith.mulf %76, %80 : vector<16x16xf32>
    %82 = arith.truncf %81 : vector<16x16xf32> to vector<16x16xbf16>
    %83 = arith.truncf %66 : vector<16x8xf32> to vector<16x8xbf16>
    %cst_27 = arith.constant dense<0.000000e+00> : vector<16x8xf32>
    %84 = tpu.matmul %82, %83, %cst_27 {dimension_numbers = #tpu.dot_dimension_numbers<[1], [0], [0], [1], [0, 0, 1, 1], [], []>} : vector<16x16xbf16>, vector<16x8xbf16>, vector<16x8xf32> -> vector<16x8xf32>
    %85 = arith.truncf %84 : vector<16x8xf32> to vector<16x8xbf16>
    %86 = vector.extract_strided_slice %4 {offsets = [16, 0], sizes = [8, 32], strides = [1, 1]} : vector<32x32xbf16> to vector<8x32xbf16>
    %cst_28 = arith.constant dense<0.000000e+00> : vector<16x32xf32>
    %87 = tpu.matmul %85, %86, %cst_28 {dimension_numbers = #tpu.dot_dimension_numbers<[1], [0], [0], [1], [0, 0, 1, 1], [], []>} : vector<16x8xbf16>, vector<8x32xbf16>, vector<16x32xf32> -> vector<16x32xf32>
    %88 = arith.addf %63, %87 : vector<16x32xf32>
    %89 = vector.extract_strided_slice %10 {offsets = [0, 24], sizes = [16, 8], strides = [1, 1]} : vector<16x32xf32> to vector<16x8xf32>
    %90 = vector.extract_strided_slice %11 {offsets = [0, 24], sizes = [16, 8], strides = [1, 1]} : vector<16x32xf32> to vector<16x8xf32>
    %91 = vector.extract_strided_slice %12 {offsets = [0, 24], sizes = [16, 8], strides = [1, 1]} : vector<16x32xf32> to vector<16x8xf32>
    %92 = arith.truncf %89 : vector<16x8xf32> to vector<16x8xbf16>
    %93 = arith.truncf %90 : vector<16x8xf32> to vector<16x8xbf16>
    %cst_29 = arith.constant dense<0.000000e+00> : vector<16x16xf32>
    %94 = tpu.matmul %92, %93, %cst_29 {dimension_numbers = #tpu.dot_dimension_numbers<[1], [1], [0], [0], [0, 0, 1, 0], [], []>} : vector<16x8xbf16>, vector<16x8xbf16>, vector<16x16xf32> -> vector<16x16xf32>
    %cst_30 = arith.constant 0.353553385 : f32
    %95 = vector.broadcast %cst_30 : f32 to vector<16x16xf32>
    %96 = arith.mulf %94, %95 : vector<16x16xf32>
    %cst_31 = arith.constant dense<0xFF800000> : vector<16xf32>
    %97 = vector.multi_reduction <maximumf>, %96, %cst_31 [1] : vector<16x16xf32> to vector<16xf32>
    %98 = vector.shape_cast %97 : vector<16xf32> to vector<16x1xf32>
    %99 = vector.broadcast %98 : vector<16x1xf32> to vector<16x16xf32>
    %100 = arith.subf %96, %99 : vector<16x16xf32>
    %101 = math.exp %100 : vector<16x16xf32>
    %cst_32 = arith.constant dense<0.000000e+00> : vector<16xf32>
    %102 = vector.multi_reduction <add>, %101, %cst_32 [1] : vector<16x16xf32> to vector<16xf32>
    %103 = vector.shape_cast %102 : vector<16xf32> to vector<16x1xf32>
    %104 = tpu.reciprocal %103 {approx = true} : vector<16x1xf32> -> vector<16x1xf32>
    %105 = vector.broadcast %104 : vector<16x1xf32> to vector<16x16xf32>
    %106 = arith.mulf %101, %105 : vector<16x16xf32>
    %107 = arith.truncf %106 : vector<16x16xf32> to vector<16x16xbf16>
    %108 = arith.truncf %91 : vector<16x8xf32> to vector<16x8xbf16>
    %cst_33 = arith.constant dense<0.000000e+00> : vector<16x8xf32>
    %109 = tpu.matmul %107, %108, %cst_33 {dimension_numbers = #tpu.dot_dimension_numbers<[1], [0], [0], [1], [0, 0, 1, 1], [], []>} : vector<16x16xbf16>, vector<16x8xbf16>, vector<16x8xf32> -> vector<16x8xf32>
    %110 = arith.truncf %109 : vector<16x8xf32> to vector<16x8xbf16>
    %111 = vector.extract_strided_slice %4 {offsets = [24, 0], sizes = [8, 32], strides = [1, 1]} : vector<32x32xbf16> to vector<8x32xbf16>
    %cst_34 = arith.constant dense<0.000000e+00> : vector<16x32xf32>
    %112 = tpu.matmul %110, %111, %cst_34 {dimension_numbers = #tpu.dot_dimension_numbers<[1], [0], [0], [1], [0, 0, 1, 1], [], []>} : vector<16x8xbf16>, vector<8x32xbf16>, vector<16x32xf32> -> vector<16x32xf32>
    %113 = arith.addf %88, %112 : vector<16x32xf32>
    %114 = vector.broadcast %5 : vector<1x32xf32> to vector<16x32xf32>
    %115 = arith.addf %113, %114 : vector<16x32xf32>
    %116 = arith.addf %1, %115 : vector<16x32xf32>
    %c0_35 = arith.constant 0 : index
    %c0_36 = arith.constant 0 : index
    %117 = vector.load %arg6[%c0_35, %c0_36] : memref<1x32xf32, #tpu.memory_space<vmem>>, vector<1x32xf32>
    %c0_37 = arith.constant 0 : index
    %c0_38 = arith.constant 0 : index
    %118 = vector.load %arg7[%c0_37, %c0_38] : memref<1x32xf32, #tpu.memory_space<vmem>>, vector<1x32xf32>
    %cst_39 = arith.constant dense<0.000000e+00> : vector<16xf32>
    %119 = vector.multi_reduction <add>, %116, %cst_39 [1] : vector<16x32xf32> to vector<16xf32>
    %120 = vector.shape_cast %119 : vector<16xf32> to vector<16x1xf32>
    %cst_40 = arith.constant 3.200000e+01 : f32
    %121 = vector.broadcast %cst_40 : f32 to vector<16x1xf32>
    %122 = arith.divf %120, %121 : vector<16x1xf32>
    %123 = vector.broadcast %122 : vector<16x1xf32> to vector<16x32xf32>
    %124 = arith.subf %116, %123 : vector<16x32xf32>
    %125 = arith.mulf %124, %124 : vector<16x32xf32>
    %cst_41 = arith.constant dense<0.000000e+00> : vector<16xf32>
    %126 = vector.multi_reduction <add>, %125, %cst_41 [1] : vector<16x32xf32> to vector<16xf32>
    %127 = vector.shape_cast %126 : vector<16xf32> to vector<16x1xf32>
    %cst_42 = arith.constant 3.200000e+01 : f32
    %128 = vector.broadcast %cst_42 : f32 to vector<16x1xf32>
    %129 = arith.divf %127, %128 : vector<16x1xf32>
    %cst_43 = arith.constant 9.99999974E-6 : f32
    %130 = vector.broadcast %cst_43 : f32 to vector<16x1xf32>
    %131 = arith.addf %129, %130 : vector<16x1xf32>
    %132 = math.rsqrt %131 : vector<16x1xf32>
    %133 = vector.broadcast %132 : vector<16x1xf32> to vector<16x32xf32>
    %134 = arith.mulf %124, %133 : vector<16x32xf32>
    %135 = vector.broadcast %117 : vector<1x32xf32> to vector<16x32xf32>
    %136 = arith.mulf %134, %135 : vector<16x32xf32>
    %137 = vector.broadcast %118 : vector<1x32xf32> to vector<16x32xf32>
    %138 = arith.addf %136, %137 : vector<16x32xf32>
    %c0_44 = arith.constant 0 : index
    %c0_45 = arith.constant 0 : index
    %139 = vector.load %arg8[%c0_44, %c0_45] : memref<32x64xbf16, #tpu.memory_space<vmem>>, vector<32x64xbf16>
    %c0_46 = arith.constant 0 : index
    %c0_47 = arith.constant 0 : index
    %140 = vector.load %arg9[%c0_46, %c0_47] : memref<1x64xf32, #tpu.memory_space<vmem>>, vector<1x64xf32>
    %c0_48 = arith.constant 0 : index
    %c0_49 = arith.constant 0 : index
    %141 = vector.load %arg10[%c0_48, %c0_49] : memref<64x32xbf16, #tpu.memory_space<vmem>>, vector<64x32xbf16>
    %c0_50 = arith.constant 0 : index
    %c0_51 = arith.constant 0 : index
    %142 = vector.load %arg11[%c0_50, %c0_51] : memref<1x32xf32, #tpu.memory_space<vmem>>, vector<1x32xf32>
    %143 = arith.truncf %138 : vector<16x32xf32> to vector<16x32xbf16>
    %cst_52 = arith.constant dense<0.000000e+00> : vector<16x64xf32>
    %144 = tpu.matmul %143, %139, %cst_52 {dimension_numbers = #tpu.dot_dimension_numbers<[1], [0], [0], [1], [0, 0, 1, 1], [], []>} : vector<16x32xbf16>, vector<32x64xbf16>, vector<16x64xf32> -> vector<16x64xf32>
    %145 = vector.broadcast %140 : vector<1x64xf32> to vector<16x64xf32>
    %146 = arith.addf %144, %145 : vector<16x64xf32>
    %cst_53 = arith.constant 5.000000e-01 : f32
    %147 = vector.broadcast %cst_53 : f32 to vector<16x64xf32>
    %148 = arith.mulf %147, %146 : vector<16x64xf32>
    %cst_54 = arith.constant 0.707106769 : f32
    %149 = vector.broadcast %cst_54 : f32 to vector<16x64xf32>
    %150 = arith.mulf %146, %149 : vector<16x64xf32>
    %cst_55 = arith.constant 0.000000e+00 : f32
    %151 = vector.broadcast %cst_55 : f32 to vector<16x64xf32>
    %152 = arith.cmpf oge, %150, %151 : vector<16x64xf32>
    %cst_56 = arith.constant 1.000000e+00 : f32
    %cst_57 = arith.constant -1.000000e+00 : f32
    %153 = vector.broadcast %cst_56 : f32 to vector<16x64xf32>
    %154 = vector.broadcast %cst_57 : f32 to vector<16x64xf32>
    %155 = arith.select %152, %153, %154 : vector<16x64xi1>, vector<16x64xf32>
    %156 = math.absf %150 : vector<16x64xf32>
    %cst_58 = arith.constant 0.327591091 : f32
    %157 = vector.broadcast %cst_58 : f32 to vector<16x64xf32>
    %158 = arith.mulf %157, %156 : vector<16x64xf32>
    %cst_59 = arith.constant 1.000000e+00 : f32
    %159 = vector.broadcast %cst_59 : f32 to vector<16x64xf32>
    %160 = arith.addf %159, %158 : vector<16x64xf32>
    %cst_60 = arith.constant 1.000000e+00 : f32
    %161 = vector.broadcast %cst_60 : f32 to vector<16x64xf32>
    %162 = arith.divf %161, %160 : vector<16x64xf32>
    %cst_61 = arith.constant 1.06140542 : f32
    %163 = vector.broadcast %cst_61 : f32 to vector<16x64xf32>
    %164 = arith.mulf %163, %162 : vector<16x64xf32>
    %cst_62 = arith.constant -1.45315206 : f32
    %165 = vector.broadcast %cst_62 : f32 to vector<16x64xf32>
    %166 = arith.addf %164, %165 : vector<16x64xf32>
    %167 = arith.mulf %166, %162 : vector<16x64xf32>
    %cst_63 = arith.constant 1.42141378 : f32
    %168 = vector.broadcast %cst_63 : f32 to vector<16x64xf32>
    %169 = arith.addf %167, %168 : vector<16x64xf32>
    %170 = arith.mulf %169, %162 : vector<16x64xf32>
    %cst_64 = arith.constant -0.284496725 : f32
    %171 = vector.broadcast %cst_64 : f32 to vector<16x64xf32>
    %172 = arith.addf %170, %171 : vector<16x64xf32>
    %173 = arith.mulf %172, %162 : vector<16x64xf32>
    %cst_65 = arith.constant 0.254829586 : f32
    %174 = vector.broadcast %cst_65 : f32 to vector<16x64xf32>
    %175 = arith.addf %173, %174 : vector<16x64xf32>
    %176 = arith.mulf %175, %162 : vector<16x64xf32>
    %cst_66 = arith.constant 0.000000e+00 : f32
    %177 = vector.broadcast %cst_66 : f32 to vector<16x64xf32>
    %178 = arith.subf %177, %156 : vector<16x64xf32>
    %179 = arith.mulf %178, %156 : vector<16x64xf32>
    %180 = math.exp %179 : vector<16x64xf32>
    %181 = arith.mulf %176, %180 : vector<16x64xf32>
    %cst_67 = arith.constant 1.000000e+00 : f32
    %182 = vector.broadcast %cst_67 : f32 to vector<16x64xf32>
    %183 = arith.subf %182, %181 : vector<16x64xf32>
    %184 = arith.mulf %155, %183 : vector<16x64xf32>
    %cst_68 = arith.constant 1.000000e+00 : f32
    %185 = vector.broadcast %cst_68 : f32 to vector<16x64xf32>
    %186 = arith.addf %185, %184 : vector<16x64xf32>
    %187 = arith.mulf %148, %186 : vector<16x64xf32>
    %188 = arith.truncf %187 : vector<16x64xf32> to vector<16x64xbf16>
    %cst_69 = arith.constant dense<0.000000e+00> : vector<16x32xf32>
    %189 = tpu.matmul %188, %141, %cst_69 {dimension_numbers = #tpu.dot_dimension_numbers<[1], [0], [0], [1], [0, 0, 1, 1], [], []>} : vector<16x64xbf16>, vector<64x32xbf16>, vector<16x32xf32> -> vector<16x32xf32>
    %190 = vector.broadcast %142 : vector<1x32xf32> to vector<16x32xf32>
    %191 = arith.addf %189, %190 : vector<16x32xf32>
    %192 = arith.addf %138, %191 : vector<16x32xf32>
    %c0_70 = arith.constant 0 : index
    %c0_71 = arith.constant 0 : index
    %193 = vector.load %arg12[%c0_70, %c0_71] : memref<1x32xf32, #tpu.memory_space<vmem>>, vector<1x32xf32>
    %c0_72 = arith.constant 0 : index
    %c0_73 = arith.constant 0 : index
    %194 = vector.load %arg13[%c0_72, %c0_73] : memref<1x32xf32, #tpu.memory_space<vmem>>, vector<1x32xf32>
    %cst_74 = arith.constant dense<0.000000e+00> : vector<16xf32>
    %195 = vector.multi_reduction <add>, %192, %cst_74 [1] : vector<16x32xf32> to vector<16xf32>
    %196 = vector.shape_cast %195 : vector<16xf32> to vector<16x1xf32>
    %cst_75 = arith.constant 3.200000e+01 : f32
    %197 = vector.broadcast %cst_75 : f32 to vector<16x1xf32>
    %198 = arith.divf %196, %197 : vector<16x1xf32>
    %199 = vector.broadcast %198 : vector<16x1xf32> to vector<16x32xf32>
    %200 = arith.subf %192, %199 : vector<16x32xf32>
    %201 = arith.mulf %200, %200 : vector<16x32xf32>
    %cst_76 = arith.constant dense<0.000000e+00> : vector<16xf32>
    %202 = vector.multi_reduction <add>, %201, %cst_76 [1] : vector<16x32xf32> to vector<16xf32>
    %203 = vector.shape_cast %202 : vector<16xf32> to vector<16x1xf32>
    %cst_77 = arith.constant 3.200000e+01 : f32
    %204 = vector.broadcast %cst_77 : f32 to vector<16x1xf32>
    %205 = arith.divf %203, %204 : vector<16x1xf32>
    %cst_78 = arith.constant 9.99999974E-6 : f32
    %206 = vector.broadcast %cst_78 : f32 to vector<16x1xf32>
    %207 = arith.addf %205, %206 : vector<16x1xf32>
    %208 = math.rsqrt %207 : vector<16x1xf32>
    %209 = vector.broadcast %208 : vector<16x1xf32> to vector<16x32xf32>
    %210 = arith.mulf %200, %209 : vector<16x32xf32>
    %211 = vector.broadcast %193 : vector<1x32xf32> to vector<16x32xf32>
    %212 = arith.mulf %210, %211 : vector<16x32xf32>
    %213 = vector.broadcast %194 : vector<1x32xf32> to vector<16x32xf32>
    %214 = arith.addf %212, %213 : vector<16x32xf32>
    %c0_79 = arith.constant 0 : index
    %c0_80 = arith.constant 0 : index
    %c0_81 = arith.constant 0 : index
    %215 = vector.load %arg14[%c0_79, %c0_80, %c0_81] : memref<1x16x32xf32, #tpu.memory_space<vmem>>, vector<1x16x32xf32>
    %216 = vector.shape_cast %215 : vector<1x16x32xf32> to vector<16x32xf32>
    %217 = vector.shape_cast %214 : vector<16x32xf32> to vector<1x16x32xf32>
    tpu.vector_store %arg14[%c0_79, %c0_80, %c0_81], %217 {strides = array<i32>} : memref<1x16x32xf32, #tpu.memory_space<vmem>>, vector<1x16x32xf32>,
    return
  }
  func.func @transform_0(%arg0: i32) -> (i32, i32, i32) {
    %c0_i32 = arith.constant 0 : i32
    %c0_i32_0 = arith.constant 0 : i32
    %c0_i32_1 = arith.constant 0 : i32
    return %arg0, %c0_i32, %c0_i32_0 : i32, i32, i32
  }
  func.func @transform_1(%arg0: i32) -> (i32, i32) {
    %c0_i32 = arith.constant 0 : i32
    %c0_i32_0 = arith.constant 0 : i32
    %c0_i32_1 = arith.constant 0 : i32
    return %c0_i32, %c0_i32_0 : i32, i32
  }
  func.func @transform_2(%arg0: i32) -> (i32, i32) {
    %c0_i32 = arith.constant 0 : i32
    %c0_i32_0 = arith.constant 0 : i32
    %c0_i32_1 = arith.constant 0 : i32
    return %c0_i32, %c0_i32_0 : i32, i32
  }
  func.func @transform_3(%arg0: i32) -> (i32, i32) {
    %c0_i32 = arith.constant 0 : i32
    %c0_i32_0 = arith.constant 0 : i32
    %c0_i32_1 = arith.constant 0 : i32
    return %c0_i32, %c0_i32_0 : i32, i32
  }
  func.func @transform_4(%arg0: i32) -> (i32, i32) {
    %c0_i32 = arith.constant 0 : i32
    %c0_i32_0 = arith.constant 0 : i32
    %c0_i32_1 = arith.constant 0 : i32
    return %c0_i32, %c0_i32_0 : i32, i32
  }
  func.func @transform_5(%arg0: i32) -> (i32, i32) {
    %c0_i32 = arith.constant 0 : i32
    %c0_i32_0 = arith.constant 0 : i32
    %c0_i32_1 = arith.constant 0 : i32
    return %c0_i32, %c0_i32_0 : i32, i32
  }
  func.func @transform_6(%arg0: i32) -> (i32, i32) {
    %c0_i32 = arith.constant 0 : i32
    %c0_i32_0 = arith.constant 0 : i32
    %c0_i32_1 = arith.constant 0 : i32
    return %c0_i32, %c0_i32_0 : i32, i32
  }
  func.func @transform_7(%arg0: i32) -> (i32, i32) {
    %c0_i32 = arith.constant 0 : i32
    %c0_i32_0 = arith.constant 0 : i32
    %c0_i32_1 = arith.constant 0 : i32
    return %c0_i32, %c0_i32_0 : i32, i32
  }
  func.func @transform_8(%arg0: i32) -> (i32, i32) {
    %c0_i32 = arith.constant 0 : i32
    %c0_i32_0 = arith.constant 0 : i32
    %c0_i32_1 = arith.constant 0 : i32
    return %c0_i32, %c0_i32_0 : i32, i32
  }
  func.func @transform_9(%arg0: i32) -> (i32, i32) {
    %c0_i32 = arith.constant 0 : i32
    %c0_i32_0 = arith.constant 0 : i32
    %c0_i32_1 = arith.constant 0 : i32
    return %c0_i32, %c0_i32_0 : i32, i32
  }
  func.func @transform_10(%arg0: i32) -> (i32, i32) {
    %c0_i32 = arith.constant 0 : i32
    %c0_i32_0 = arith.constant 0 : i32
    %c0_i32_1 = arith.constant 0 : i32
    return %c0_i32, %c0_i32_0 : i32, i32
  }
  func.func @transform_11(%arg0: i32) -> (i32, i32) {
    %c0_i32 = arith.constant 0 : i32
    %c0_i32_0 = arith.constant 0 : i32
    %c0_i32_1 = arith.constant 0 : i32
    return %c0_i32, %c0_i32_0 : i32, i32
  }
  func.func @transform_12(%arg0: i32) -> (i32, i32) {
    %c0_i32 = arith.constant 0 : i32
    %c0_i32_0 = arith.constant 0 : i32
    %c0_i32_1 = arith.constant 0 : i32
    return %c0_i32, %c0_i32_0 : i32, i32
  }
  func.func @transform_13(%arg0: i32) -> (i32, i32, i32) {
    %c0_i32 = arith.constant 0 : i32
    %c0_i32_0 = arith.constant 0 : i32
    %c0_i32_1 = arith.constant 0 : i32
    return %arg0, %c0_i32, %c0_i32_0 : i32, i32, i32
  }
}

module attributes {stable_mosaic.version = 11 : i64} {
  func.func @_decoder_block_kernel(%arg0: i32, %arg1: memref<1x32xf32, #tpu.memory_space<vmem>>, %arg2: memref<1x16x32xf32, #tpu.memory_space<vmem>>, %arg3: memref<32x32xbf16, #tpu.memory_space<vmem>>, %arg4: memref<1x32xf32, #tpu.memory_space<vmem>>, %arg5: memref<32x96xbf16, #tpu.memory_space<vmem>>, %arg6: memref<1x96xf32, #tpu.memory_space<vmem>>, %arg7: memref<32x32xbf16, #tpu.memory_space<vmem>>, %arg8: memref<1x32xf32, #tpu.memory_space<vmem>>, %arg9: memref<1x32xf32, #tpu.memory_space<vmem>>, %arg10: memref<1x32xf32, #tpu.memory_space<vmem>>, %arg11: memref<32x64xbf16, #tpu.memory_space<vmem>>, %arg12: memref<1x64xf32, #tpu.memory_space<vmem>>, %arg13: memref<64x32xbf16, #tpu.memory_space<vmem>>, %arg14: memref<1x32xf32, #tpu.memory_space<vmem>>, %arg15: memref<1x32xf32, #tpu.memory_space<vmem>>, %arg16: memref<1x32xf32, #tpu.memory_space<vmem>>, %arg17: memref<32x8xbf16, #tpu.memory_space<vmem>>, %arg18: memref<1x8xf32, #tpu.memory_space<vmem>>, %arg19: memref<1x1x8xf32, #tpu.memory_space<vmem>>) attributes {dimension_semantics = [#tpu.dimension_semantics<parallel>], iteration_bounds = array<i64: 2>, scalar_prefetch = 0 : i64, scratch_operands = 0 : i64, tpu.core_type = #tpu.core_type<tc>, window_params = [{pipeline_mode = #tpu.pipeline_mode<synchronous>, transform_indices = @transform_0, window_bounds = array<i64: 1, 32>}, {transform_indices = @transform_1, window_bounds = array<i64: 1, 16, 32>}, {pipeline_mode = #tpu.pipeline_mode<synchronous>, transform_indices = @transform_2, window_bounds = array<i64: 32, 32>}, {pipeline_mode = #tpu.pipeline_mode<synchronous>, transform_indices = @transform_3, window_bounds = array<i64: 1, 32>}, {pipeline_mode = #tpu.pipeline_mode<synchronous>, transform_indices = @transform_4, window_bounds = array<i64: 32, 96>}, {pipeline_mode = #tpu.pipeline_mode<synchronous>, transform_indices = @transform_5, window_bounds = array<i64: 1, 96>}, {pipeline_mode = #tpu.pipeline_mode<synchronous>, transform_indices = @transform_6, window_bounds = array<i64: 32, 32>}, {pipeline_mode = #tpu.pipeline_mode<synchronous>, transform_indices = @transform_7, window_bounds = array<i64: 1, 32>}, {pipeline_mode = #tpu.pipeline_mode<synchronous>, transform_indices = @transform_8, window_bounds = array<i64: 1, 32>}, {pipeline_mode = #tpu.pipeline_mode<synchronous>, transform_indices = @transform_9, window_bounds = array<i64: 1, 32>}, {pipeline_mode = #tpu.pipeline_mode<synchronous>, transform_indices = @transform_10, window_bounds = array<i64: 32, 64>}, {pipeline_mode = #tpu.pipeline_mode<synchronous>, transform_indices = @transform_11, window_bounds = array<i64: 1, 64>}, {pipeline_mode = #tpu.pipeline_mode<synchronous>, transform_indices = @transform_12, window_bounds = array<i64: 64, 32>}, {pipeline_mode = #tpu.pipeline_mode<synchronous>, transform_indices = @transform_13, window_bounds = array<i64: 1, 32>}, {pipeline_mode = #tpu.pipeline_mode<synchronous>, transform_indices = @transform_14, window_bounds = array<i64: 1, 32>}, {pipeline_mode = #tpu.pipeline_mode<synchronous>, transform_indices = @transform_15, window_bounds = array<i64: 1, 32>}, {pipeline_mode = #tpu.pipeline_mode<synchronous>, transform_indices = @transform_16, window_bounds = array<i64: 32, 8>}, {pipeline_mode = #tpu.pipeline_mode<synchronous>, transform_indices = @transform_17, window_bounds = array<i64: 1, 8>}, {transform_indices = @transform_18, window_bounds = array<i64: 1, 1, 8>}]} {
    %c0 = arith.constant 0 : index
    %c0_0 = arith.constant 0 : index
    %0 = vector.load %arg1[%c0, %c0_0] : memref<1x32xf32, #tpu.memory_space<vmem>>, vector<1x32xf32>
    %c0_1 = arith.constant 0 : index
    %c0_2 = arith.constant 0 : index
    %c0_3 = arith.constant 0 : index
    %1 = vector.load %arg2[%c0_1, %c0_2, %c0_3] : memref<1x16x32xf32, #tpu.memory_space<vmem>>, vector<1x16x32xf32>
    %2 = vector.shape_cast %1 : vector<1x16x32xf32> to vector<16x32xf32>
    %3 = arith.truncf %2 : vector<16x32xf32> to vector<16x32xbf16>
    %c0_4 = arith.constant 0 : index
    %c0_5 = arith.constant 0 : index
    %4 = vector.load %arg3[%c0_4, %c0_5] : memref<32x32xbf16, #tpu.memory_space<vmem>>, vector<32x32xbf16>
    %cst = arith.constant dense<0.000000e+00> : vector<16x32xf32>
    %5 = tpu.matmul %3, %4, %cst {dimension_numbers = #tpu.dot_dimension_numbers<[1], [0], [0], [1], [0, 0, 1, 1], [], []>} : vector<16x32xbf16>, vector<32x32xbf16>, vector<16x32xf32> -> vector<16x32xf32>
    %c0_6 = arith.constant 0 : index
    %c0_7 = arith.constant 0 : index
    %6 = vector.load %arg4[%c0_6, %c0_7] : memref<1x32xf32, #tpu.memory_space<vmem>>, vector<1x32xf32>
    %7 = vector.broadcast %6 : vector<1x32xf32> to vector<16x32xf32>
    %8 = arith.addf %5, %7 : vector<16x32xf32>
    %c0_8 = arith.constant 0 : index
    %c0_9 = arith.constant 0 : index
    %9 = vector.load %arg5[%c0_8, %c0_9] : memref<32x96xbf16, #tpu.memory_space<vmem>>, vector<32x96xbf16>
    %c0_10 = arith.constant 0 : index
    %c0_11 = arith.constant 0 : index
    %10 = vector.load %arg6[%c0_10, %c0_11] : memref<1x96xf32, #tpu.memory_space<vmem>>, vector<1x96xf32>
    %c0_12 = arith.constant 0 : index
    %c0_13 = arith.constant 0 : index
    %11 = vector.load %arg7[%c0_12, %c0_13] : memref<32x32xbf16, #tpu.memory_space<vmem>>, vector<32x32xbf16>
    %c0_14 = arith.constant 0 : index
    %c0_15 = arith.constant 0 : index
    %12 = vector.load %arg8[%c0_14, %c0_15] : memref<1x32xf32, #tpu.memory_space<vmem>>, vector<1x32xf32>
    %13 = arith.truncf %0 : vector<1x32xf32> to vector<1x32xbf16>
    %14 = vector.extract_strided_slice %9 {offsets = [0, 0], sizes = [32, 32], strides = [1, 1]} : vector<32x96xbf16> to vector<32x32xbf16>
    %cst_16 = arith.constant dense<0.000000e+00> : vector<1x32xf32>
    %15 = tpu.matmul %13, %14, %cst_16 {dimension_numbers = #tpu.dot_dimension_numbers<[1], [0], [0], [1], [0, 0, 1, 1], [], []>} : vector<1x32xbf16>, vector<32x32xbf16>, vector<1x32xf32> -> vector<1x32xf32>
    %16 = vector.extract_strided_slice %10 {offsets = [0, 0], sizes = [1, 32], strides = [1, 1]} : vector<1x96xf32> to vector<1x32xf32>
    %17 = arith.addf %15, %16 : vector<1x32xf32>
    %18 = arith.truncf %8 : vector<16x32xf32> to vector<16x32xbf16>
    %19 = vector.extract_strided_slice %9 {offsets = [0, 32], sizes = [32, 64], strides = [1, 1]} : vector<32x96xbf16> to vector<32x64xbf16>
    %cst_17 = arith.constant dense<0.000000e+00> : vector<16x64xf32>
    %20 = tpu.matmul %18, %19, %cst_17 {dimension_numbers = #tpu.dot_dimension_numbers<[1], [0], [0], [1], [0, 0, 1, 1], [], []>} : vector<16x32xbf16>, vector<32x64xbf16>, vector<16x64xf32> -> vector<16x64xf32>
    %21 = vector.extract_strided_slice %10 {offsets = [0, 32], sizes = [1, 64], strides = [1, 1]} : vector<1x96xf32> to vector<1x64xf32>
    %22 = vector.broadcast %21 : vector<1x64xf32> to vector<16x64xf32>
    %23 = arith.addf %20, %22 : vector<16x64xf32>
    %24 = vector.extract_strided_slice %23 {offsets = [0, 0], sizes = [16, 32], strides = [1, 1]} : vector<16x64xf32> to vector<16x32xf32>
    %25 = vector.extract_strided_slice %23 {offsets = [0, 32], sizes = [16, 32], strides = [1, 1]} : vector<16x64xf32> to vector<16x32xf32>
    %cst_18 = arith.constant 0.000000e+00 : f32
    %26 = vector.broadcast %cst_18 : f32 to vector<1x32xf32>
    %27 = vector.extract_strided_slice %17 {offsets = [0, 0], sizes = [1, 8], strides = [1, 1]} : vector<1x32xf32> to vector<1x8xf32>
    %28 = vector.extract_strided_slice %24 {offsets = [0, 0], sizes = [16, 8], strides = [1, 1]} : vector<16x32xf32> to vector<16x8xf32>
    %29 = vector.extract_strided_slice %25 {offsets = [0, 0], sizes = [16, 8], strides = [1, 1]} : vector<16x32xf32> to vector<16x8xf32>
    %30 = arith.truncf %27 : vector<1x8xf32> to vector<1x8xbf16>
    %31 = arith.truncf %28 : vector<16x8xf32> to vector<16x8xbf16>
    %cst_19 = arith.constant dense<0.000000e+00> : vector<1x16xf32>
    %32 = tpu.matmul %30, %31, %cst_19 {dimension_numbers = #tpu.dot_dimension_numbers<[1], [1], [0], [0], [0, 0, 1, 0], [], []>} : vector<1x8xbf16>, vector<16x8xbf16>, vector<1x16xf32> -> vector<1x16xf32>
    %cst_20 = arith.constant 0.353553385 : f32
    %33 = vector.broadcast %cst_20 : f32 to vector<1x16xf32>
    %34 = arith.mulf %32, %33 : vector<1x16xf32>
    %cst_21 = arith.constant dense<0xFF800000> : vector<1xf32>
    %35 = vector.multi_reduction <maximumf>, %34, %cst_21 [1] : vector<1x16xf32> to vector<1xf32>
    %36 = vector.shape_cast %35 : vector<1xf32> to vector<1x1xf32>
    %37 = vector.broadcast %36 : vector<1x1xf32> to vector<1x16xf32>
    %38 = arith.subf %34, %37 : vector<1x16xf32>
    %39 = math.exp %38 : vector<1x16xf32>
    %cst_22 = arith.constant dense<0.000000e+00> : vector<1xf32>
    %40 = vector.multi_reduction <add>, %39, %cst_22 [1] : vector<1x16xf32> to vector<1xf32>
    %41 = vector.shape_cast %40 : vector<1xf32> to vector<1x1xf32>
    %42 = tpu.reciprocal %41 {approx = true} : vector<1x1xf32> -> vector<1x1xf32>
    %43 = vector.broadcast %42 : vector<1x1xf32> to vector<1x16xf32>
    %44 = arith.mulf %39, %43 : vector<1x16xf32>
    %45 = arith.truncf %44 : vector<1x16xf32> to vector<1x16xbf16>
    %46 = arith.truncf %29 : vector<16x8xf32> to vector<16x8xbf16>
    %cst_23 = arith.constant dense<0.000000e+00> : vector<1x8xf32>
    %47 = tpu.matmul %45, %46, %cst_23 {dimension_numbers = #tpu.dot_dimension_numbers<[1], [0], [0], [1], [0, 0, 1, 1], [], []>} : vector<1x16xbf16>, vector<16x8xbf16>, vector<1x8xf32> -> vector<1x8xf32>
    %48 = arith.truncf %47 : vector<1x8xf32> to vector<1x8xbf16>
    %49 = vector.extract_strided_slice %11 {offsets = [0, 0], sizes = [8, 32], strides = [1, 1]} : vector<32x32xbf16> to vector<8x32xbf16>
    %cst_24 = arith.constant dense<0.000000e+00> : vector<1x32xf32>
    %50 = tpu.matmul %48, %49, %cst_24 {dimension_numbers = #tpu.dot_dimension_numbers<[1], [0], [0], [1], [0, 0, 1, 1], [], []>} : vector<1x8xbf16>, vector<8x32xbf16>, vector<1x32xf32> -> vector<1x32xf32>
    %51 = arith.addf %26, %50 : vector<1x32xf32>
    %52 = vector.extract_strided_slice %17 {offsets = [0, 8], sizes = [1, 8], strides = [1, 1]} : vector<1x32xf32> to vector<1x8xf32>
    %53 = vector.extract_strided_slice %24 {offsets = [0, 8], sizes = [16, 8], strides = [1, 1]} : vector<16x32xf32> to vector<16x8xf32>
    %54 = vector.extract_strided_slice %25 {offsets = [0, 8], sizes = [16, 8], strides = [1, 1]} : vector<16x32xf32> to vector<16x8xf32>
    %55 = arith.truncf %52 : vector<1x8xf32> to vector<1x8xbf16>
    %56 = arith.truncf %53 : vector<16x8xf32> to vector<16x8xbf16>
    %cst_25 = arith.constant dense<0.000000e+00> : vector<1x16xf32>
    %57 = tpu.matmul %55, %56, %cst_25 {dimension_numbers = #tpu.dot_dimension_numbers<[1], [1], [0], [0], [0, 0, 1, 0], [], []>} : vector<1x8xbf16>, vector<16x8xbf16>, vector<1x16xf32> -> vector<1x16xf32>
    %cst_26 = arith.constant 0.353553385 : f32
    %58 = vector.broadcast %cst_26 : f32 to vector<1x16xf32>
    %59 = arith.mulf %57, %58 : vector<1x16xf32>
    %cst_27 = arith.constant dense<0xFF800000> : vector<1xf32>
    %60 = vector.multi_reduction <maximumf>, %59, %cst_27 [1] : vector<1x16xf32> to vector<1xf32>
    %61 = vector.shape_cast %60 : vector<1xf32> to vector<1x1xf32>
    %62 = vector.broadcast %61 : vector<1x1xf32> to vector<1x16xf32>
    %63 = arith.subf %59, %62 : vector<1x16xf32>
    %64 = math.exp %63 : vector<1x16xf32>
    %cst_28 = arith.constant dense<0.000000e+00> : vector<1xf32>
    %65 = vector.multi_reduction <add>, %64, %cst_28 [1] : vector<1x16xf32> to vector<1xf32>
    %66 = vector.shape_cast %65 : vector<1xf32> to vector<1x1xf32>
    %67 = tpu.reciprocal %66 {approx = true} : vector<1x1xf32> -> vector<1x1xf32>
    %68 = vector.broadcast %67 : vector<1x1xf32> to vector<1x16xf32>
    %69 = arith.mulf %64, %68 : vector<1x16xf32>
    %70 = arith.truncf %69 : vector<1x16xf32> to vector<1x16xbf16>
    %71 = arith.truncf %54 : vector<16x8xf32> to vector<16x8xbf16>
    %cst_29 = arith.constant dense<0.000000e+00> : vector<1x8xf32>
    %72 = tpu.matmul %70, %71, %cst_29 {dimension_numbers = #tpu.dot_dimension_numbers<[1], [0], [0], [1], [0, 0, 1, 1], [], []>} : vector<1x16xbf16>, vector<16x8xbf16>, vector<1x8xf32> -> vector<1x8xf32>
    %73 = arith.truncf %72 : vector<1x8xf32> to vector<1x8xbf16>
    %74 = vector.extract_strided_slice %11 {offsets = [8, 0], sizes = [8, 32], strides = [1, 1]} : vector<32x32xbf16> to vector<8x32xbf16>
    %cst_30 = arith.constant dense<0.000000e+00> : vector<1x32xf32>
    %75 = tpu.matmul %73, %74, %cst_30 {dimension_numbers = #tpu.dot_dimension_numbers<[1], [0], [0], [1], [0, 0, 1, 1], [], []>} : vector<1x8xbf16>, vector<8x32xbf16>, vector<1x32xf32> -> vector<1x32xf32>
    %76 = arith.addf %51, %75 : vector<1x32xf32>
    %77 = vector.extract_strided_slice %17 {offsets = [0, 16], sizes = [1, 8], strides = [1, 1]} : vector<1x32xf32> to vector<1x8xf32>
    %78 = vector.extract_strided_slice %24 {offsets = [0, 16], sizes = [16, 8], strides = [1, 1]} : vector<16x32xf32> to vector<16x8xf32>
    %79 = vector.extract_strided_slice %25 {offsets = [0, 16], sizes = [16, 8], strides = [1, 1]} : vector<16x32xf32> to vector<16x8xf32>
    %80 = arith.truncf %77 : vector<1x8xf32> to vector<1x8xbf16>
    %81 = arith.truncf %78 : vector<16x8xf32> to vector<16x8xbf16>
    %cst_31 = arith.constant dense<0.000000e+00> : vector<1x16xf32>
    %82 = tpu.matmul %80, %81, %cst_31 {dimension_numbers = #tpu.dot_dimension_numbers<[1], [1], [0], [0], [0, 0, 1, 0], [], []>} : vector<1x8xbf16>, vector<16x8xbf16>, vector<1x16xf32> -> vector<1x16xf32>
    %cst_32 = arith.constant 0.353553385 : f32
    %83 = vector.broadcast %cst_32 : f32 to vector<1x16xf32>
    %84 = arith.mulf %82, %83 : vector<1x16xf32>
    %cst_33 = arith.constant dense<0xFF800000> : vector<1xf32>
    %85 = vector.multi_reduction <maximumf>, %84, %cst_33 [1] : vector<1x16xf32> to vector<1xf32>
    %86 = vector.shape_cast %85 : vector<1xf32> to vector<1x1xf32>
    %87 = vector.broadcast %86 : vector<1x1xf32> to vector<1x16xf32>
    %88 = arith.subf %84, %87 : vector<1x16xf32>
    %89 = math.exp %88 : vector<1x16xf32>
    %cst_34 = arith.constant dense<0.000000e+00> : vector<1xf32>
    %90 = vector.multi_reduction <add>, %89, %cst_34 [1] : vector<1x16xf32> to vector<1xf32>
    %91 = vector.shape_cast %90 : vector<1xf32> to vector<1x1xf32>
    %92 = tpu.reciprocal %91 {approx = true} : vector<1x1xf32> -> vector<1x1xf32>
    %93 = vector.broadcast %92 : vector<1x1xf32> to vector<1x16xf32>
    %94 = arith.mulf %89, %93 : vector<1x16xf32>
    %95 = arith.truncf %94 : vector<1x16xf32> to vector<1x16xbf16>
    %96 = arith.truncf %79 : vector<16x8xf32> to vector<16x8xbf16>
    %cst_35 = arith.constant dense<0.000000e+00> : vector<1x8xf32>
    %97 = tpu.matmul %95, %96, %cst_35 {dimension_numbers = #tpu.dot_dimension_numbers<[1], [0], [0], [1], [0, 0, 1, 1], [], []>} : vector<1x16xbf16>, vector<16x8xbf16>, vector<1x8xf32> -> vector<1x8xf32>
    %98 = arith.truncf %97 : vector<1x8xf32> to vector<1x8xbf16>
    %99 = vector.extract_strided_slice %11 {offsets = [16, 0], sizes = [8, 32], strides = [1, 1]} : vector<32x32xbf16> to vector<8x32xbf16>
    %cst_36 = arith.constant dense<0.000000e+00> : vector<1x32xf32>
    %100 = tpu.matmul %98, %99, %cst_36 {dimension_numbers = #tpu.dot_dimension_numbers<[1], [0], [0], [1], [0, 0, 1, 1], [], []>} : vector<1x8xbf16>, vector<8x32xbf16>, vector<1x32xf32> -> vector<1x32xf32>
    %101 = arith.addf %76, %100 : vector<1x32xf32>
    %102 = vector.extract_strided_slice %17 {offsets = [0, 24], sizes = [1, 8], strides = [1, 1]} : vector<1x32xf32> to vector<1x8xf32>
    %103 = vector.extract_strided_slice %24 {offsets = [0, 24], sizes = [16, 8], strides = [1, 1]} : vector<16x32xf32> to vector<16x8xf32>
    %104 = vector.extract_strided_slice %25 {offsets = [0, 24], sizes = [16, 8], strides = [1, 1]} : vector<16x32xf32> to vector<16x8xf32>
    %105 = arith.truncf %102 : vector<1x8xf32> to vector<1x8xbf16>
    %106 = arith.truncf %103 : vector<16x8xf32> to vector<16x8xbf16>
    %cst_37 = arith.constant dense<0.000000e+00> : vector<1x16xf32>
    %107 = tpu.matmul %105, %106, %cst_37 {dimension_numbers = #tpu.dot_dimension_numbers<[1], [1], [0], [0], [0, 0, 1, 0], [], []>} : vector<1x8xbf16>, vector<16x8xbf16>, vector<1x16xf32> -> vector<1x16xf32>
    %cst_38 = arith.constant 0.353553385 : f32
    %108 = vector.broadcast %cst_38 : f32 to vector<1x16xf32>
    %109 = arith.mulf %107, %108 : vector<1x16xf32>
    %cst_39 = arith.constant dense<0xFF800000> : vector<1xf32>
    %110 = vector.multi_reduction <maximumf>, %109, %cst_39 [1] : vector<1x16xf32> to vector<1xf32>
    %111 = vector.shape_cast %110 : vector<1xf32> to vector<1x1xf32>
    %112 = vector.broadcast %111 : vector<1x1xf32> to vector<1x16xf32>
    %113 = arith.subf %109, %112 : vector<1x16xf32>
    %114 = math.exp %113 : vector<1x16xf32>
    %cst_40 = arith.constant dense<0.000000e+00> : vector<1xf32>
    %115 = vector.multi_reduction <add>, %114, %cst_40 [1] : vector<1x16xf32> to vector<1xf32>
    %116 = vector.shape_cast %115 : vector<1xf32> to vector<1x1xf32>
    %117 = tpu.reciprocal %116 {approx = true} : vector<1x1xf32> -> vector<1x1xf32>
    %118 = vector.broadcast %117 : vector<1x1xf32> to vector<1x16xf32>
    %119 = arith.mulf %114, %118 : vector<1x16xf32>
    %120 = arith.truncf %119 : vector<1x16xf32> to vector<1x16xbf16>
    %121 = arith.truncf %104 : vector<16x8xf32> to vector<16x8xbf16>
    %cst_41 = arith.constant dense<0.000000e+00> : vector<1x8xf32>
    %122 = tpu.matmul %120, %121, %cst_41 {dimension_numbers = #tpu.dot_dimension_numbers<[1], [0], [0], [1], [0, 0, 1, 1], [], []>} : vector<1x16xbf16>, vector<16x8xbf16>, vector<1x8xf32> -> vector<1x8xf32>
    %123 = arith.truncf %122 : vector<1x8xf32> to vector<1x8xbf16>
    %124 = vector.extract_strided_slice %11 {offsets = [24, 0], sizes = [8, 32], strides = [1, 1]} : vector<32x32xbf16> to vector<8x32xbf16>
    %cst_42 = arith.constant dense<0.000000e+00> : vector<1x32xf32>
    %125 = tpu.matmul %123, %124, %cst_42 {dimension_numbers = #tpu.dot_dimension_numbers<[1], [0], [0], [1], [0, 0, 1, 1], [], []>} : vector<1x8xbf16>, vector<8x32xbf16>, vector<1x32xf32> -> vector<1x32xf32>
    %126 = arith.addf %101, %125 : vector<1x32xf32>
    %127 = arith.addf %126, %12 : vector<1x32xf32>
    %128 = arith.addf %0, %127 : vector<1x32xf32>
    %c0_43 = arith.constant 0 : index
    %c0_44 = arith.constant 0 : index
    %129 = vector.load %arg9[%c0_43, %c0_44] : memref<1x32xf32, #tpu.memory_space<vmem>>, vector<1x32xf32>
    %c0_45 = arith.constant 0 : index
    %c0_46 = arith.constant 0 : index
    %130 = vector.load %arg10[%c0_45, %c0_46] : memref<1x32xf32, #tpu.memory_space<vmem>>, vector<1x32xf32>
    %cst_47 = arith.constant dense<0.000000e+00> : vector<1xf32>
    %131 = vector.multi_reduction <add>, %128, %cst_47 [1] : vector<1x32xf32> to vector<1xf32>
    %132 = vector.shape_cast %131 : vector<1xf32> to vector<1x1xf32>
    %cst_48 = arith.constant 3.200000e+01 : f32
    %133 = vector.broadcast %cst_48 : f32 to vector<1x1xf32>
    %134 = arith.divf %132, %133 : vector<1x1xf32>
    %135 = vector.broadcast %134 : vector<1x1xf32> to vector<1x32xf32>
    %136 = arith.subf %128, %135 : vector<1x32xf32>
    %137 = arith.mulf %136, %136 : vector<1x32xf32>
    %cst_49 = arith.constant dense<0.000000e+00> : vector<1xf32>
    %138 = vector.multi_reduction <add>, %137, %cst_49 [1] : vector<1x32xf32> to vector<1xf32>
    %139 = vector.shape_cast %138 : vector<1xf32> to vector<1x1xf32>
    %cst_50 = arith.constant 3.200000e+01 : f32
    %140 = vector.broadcast %cst_50 : f32 to vector<1x1xf32>
    %141 = arith.divf %139, %140 : vector<1x1xf32>
    %cst_51 = arith.constant 9.99999974E-6 : f32
    %142 = vector.broadcast %cst_51 : f32 to vector<1x1xf32>
    %143 = arith.addf %141, %142 : vector<1x1xf32>
    %144 = math.rsqrt %143 : vector<1x1xf32>
    %145 = vector.broadcast %144 : vector<1x1xf32> to vector<1x32xf32>
    %146 = arith.mulf %136, %145 : vector<1x32xf32>
    %147 = arith.mulf %146, %129 : vector<1x32xf32>
    %148 = arith.addf %147, %130 : vector<1x32xf32>
    %c0_52 = arith.constant 0 : index
    %c0_53 = arith.constant 0 : index
    %149 = vector.load %arg11[%c0_52, %c0_53] : memref<32x64xbf16, #tpu.memory_space<vmem>>, vector<32x64xbf16>
    %c0_54 = arith.constant 0 : index
    %c0_55 = arith.constant 0 : index
    %150 = vector.load %arg12[%c0_54, %c0_55] : memref<1x64xf32, #tpu.memory_space<vmem>>, vector<1x64xf32>
    %c0_56 = arith.constant 0 : index
    %c0_57 = arith.constant 0 : index
    %151 = vector.load %arg13[%c0_56, %c0_57] : memref<64x32xbf16, #tpu.memory_space<vmem>>, vector<64x32xbf16>
    %c0_58 = arith.constant 0 : index
    %c0_59 = arith.constant 0 : index
    %152 = vector.load %arg14[%c0_58, %c0_59] : memref<1x32xf32, #tpu.memory_space<vmem>>, vector<1x32xf32>
    %153 = arith.truncf %148 : vector<1x32xf32> to vector<1x32xbf16>
    %cst_60 = arith.constant dense<0.000000e+00> : vector<1x64xf32>
    %154 = tpu.matmul %153, %149, %cst_60 {dimension_numbers = #tpu.dot_dimension_numbers<[1], [0], [0], [1], [0, 0, 1, 1], [], []>} : vector<1x32xbf16>, vector<32x64xbf16>, vector<1x64xf32> -> vector<1x64xf32>
    %155 = arith.addf %154, %150 : vector<1x64xf32>
    %cst_61 = arith.constant 5.000000e-01 : f32
    %156 = vector.broadcast %cst_61 : f32 to vector<1x64xf32>
    %157 = arith.mulf %156, %155 : vector<1x64xf32>
    %cst_62 = arith.constant 0.707106769 : f32
    %158 = vector.broadcast %cst_62 : f32 to vector<1x64xf32>
    %159 = arith.mulf %155, %158 : vector<1x64xf32>
    %cst_63 = arith.constant 0.000000e+00 : f32
    %160 = vector.broadcast %cst_63 : f32 to vector<1x64xf32>
    %161 = arith.cmpf oge, %159, %160 : vector<1x64xf32>
    %cst_64 = arith.constant 1.000000e+00 : f32
    %cst_65 = arith.constant -1.000000e+00 : f32
    %162 = vector.broadcast %cst_64 : f32 to vector<1x64xf32>
    %163 = vector.broadcast %cst_65 : f32 to vector<1x64xf32>
    %164 = arith.select %161, %162, %163 : vector<1x64xi1>, vector<1x64xf32>
    %165 = math.absf %159 : vector<1x64xf32>
    %cst_66 = arith.constant 0.327591091 : f32
    %166 = vector.broadcast %cst_66 : f32 to vector<1x64xf32>
    %167 = arith.mulf %166, %165 : vector<1x64xf32>
    %cst_67 = arith.constant 1.000000e+00 : f32
    %168 = vector.broadcast %cst_67 : f32 to vector<1x64xf32>
    %169 = arith.addf %168, %167 : vector<1x64xf32>
    %cst_68 = arith.constant 1.000000e+00 : f32
    %170 = vector.broadcast %cst_68 : f32 to vector<1x64xf32>
    %171 = arith.divf %170, %169 : vector<1x64xf32>
    %cst_69 = arith.constant 1.06140542 : f32
    %172 = vector.broadcast %cst_69 : f32 to vector<1x64xf32>
    %173 = arith.mulf %172, %171 : vector<1x64xf32>
    %cst_70 = arith.constant -1.45315206 : f32
    %174 = vector.broadcast %cst_70 : f32 to vector<1x64xf32>
    %175 = arith.addf %173, %174 : vector<1x64xf32>
    %176 = arith.mulf %175, %171 : vector<1x64xf32>
    %cst_71 = arith.constant 1.42141378 : f32
    %177 = vector.broadcast %cst_71 : f32 to vector<1x64xf32>
    %178 = arith.addf %176, %177 : vector<1x64xf32>
    %179 = arith.mulf %178, %171 : vector<1x64xf32>
    %cst_72 = arith.constant -0.284496725 : f32
    %180 = vector.broadcast %cst_72 : f32 to vector<1x64xf32>
    %181 = arith.addf %179, %180 : vector<1x64xf32>
    %182 = arith.mulf %181, %171 : vector<1x64xf32>
    %cst_73 = arith.constant 0.254829586 : f32
    %183 = vector.broadcast %cst_73 : f32 to vector<1x64xf32>
    %184 = arith.addf %182, %183 : vector<1x64xf32>
    %185 = arith.mulf %184, %171 : vector<1x64xf32>
    %cst_74 = arith.constant 0.000000e+00 : f32
    %186 = vector.broadcast %cst_74 : f32 to vector<1x64xf32>
    %187 = arith.subf %186, %165 : vector<1x64xf32>
    %188 = arith.mulf %187, %165 : vector<1x64xf32>
    %189 = math.exp %188 : vector<1x64xf32>
    %190 = arith.mulf %185, %189 : vector<1x64xf32>
    %cst_75 = arith.constant 1.000000e+00 : f32
    %191 = vector.broadcast %cst_75 : f32 to vector<1x64xf32>
    %192 = arith.subf %191, %190 : vector<1x64xf32>
    %193 = arith.mulf %164, %192 : vector<1x64xf32>
    %cst_76 = arith.constant 1.000000e+00 : f32
    %194 = vector.broadcast %cst_76 : f32 to vector<1x64xf32>
    %195 = arith.addf %194, %193 : vector<1x64xf32>
    %196 = arith.mulf %157, %195 : vector<1x64xf32>
    %197 = arith.truncf %196 : vector<1x64xf32> to vector<1x64xbf16>
    %cst_77 = arith.constant dense<0.000000e+00> : vector<1x32xf32>
    %198 = tpu.matmul %197, %151, %cst_77 {dimension_numbers = #tpu.dot_dimension_numbers<[1], [0], [0], [1], [0, 0, 1, 1], [], []>} : vector<1x64xbf16>, vector<64x32xbf16>, vector<1x32xf32> -> vector<1x32xf32>
    %199 = arith.addf %198, %152 : vector<1x32xf32>
    %200 = arith.addf %148, %199 : vector<1x32xf32>
    %c0_78 = arith.constant 0 : index
    %c0_79 = arith.constant 0 : index
    %201 = vector.load %arg15[%c0_78, %c0_79] : memref<1x32xf32, #tpu.memory_space<vmem>>, vector<1x32xf32>
    %c0_80 = arith.constant 0 : index
    %c0_81 = arith.constant 0 : index
    %202 = vector.load %arg16[%c0_80, %c0_81] : memref<1x32xf32, #tpu.memory_space<vmem>>, vector<1x32xf32>
    %cst_82 = arith.constant dense<0.000000e+00> : vector<1xf32>
    %203 = vector.multi_reduction <add>, %200, %cst_82 [1] : vector<1x32xf32> to vector<1xf32>
    %204 = vector.shape_cast %203 : vector<1xf32> to vector<1x1xf32>
    %cst_83 = arith.constant 3.200000e+01 : f32
    %205 = vector.broadcast %cst_83 : f32 to vector<1x1xf32>
    %206 = arith.divf %204, %205 : vector<1x1xf32>
    %207 = vector.broadcast %206 : vector<1x1xf32> to vector<1x32xf32>
    %208 = arith.subf %200, %207 : vector<1x32xf32>
    %209 = arith.mulf %208, %208 : vector<1x32xf32>
    %cst_84 = arith.constant dense<0.000000e+00> : vector<1xf32>
    %210 = vector.multi_reduction <add>, %209, %cst_84 [1] : vector<1x32xf32> to vector<1xf32>
    %211 = vector.shape_cast %210 : vector<1xf32> to vector<1x1xf32>
    %cst_85 = arith.constant 3.200000e+01 : f32
    %212 = vector.broadcast %cst_85 : f32 to vector<1x1xf32>
    %213 = arith.divf %211, %212 : vector<1x1xf32>
    %cst_86 = arith.constant 9.99999974E-6 : f32
    %214 = vector.broadcast %cst_86 : f32 to vector<1x1xf32>
    %215 = arith.addf %213, %214 : vector<1x1xf32>
    %216 = math.rsqrt %215 : vector<1x1xf32>
    %217 = vector.broadcast %216 : vector<1x1xf32> to vector<1x32xf32>
    %218 = arith.mulf %208, %217 : vector<1x32xf32>
    %219 = arith.mulf %218, %201 : vector<1x32xf32>
    %220 = arith.addf %219, %202 : vector<1x32xf32>
    %221 = arith.truncf %220 : vector<1x32xf32> to vector<1x32xbf16>
    %c0_87 = arith.constant 0 : index
    %c0_88 = arith.constant 0 : index
    %222 = vector.load %arg17[%c0_87, %c0_88] : memref<32x8xbf16, #tpu.memory_space<vmem>>, vector<32x8xbf16>
    %cst_89 = arith.constant dense<0.000000e+00> : vector<1x8xf32>
    %223 = tpu.matmul %221, %222, %cst_89 {dimension_numbers = #tpu.dot_dimension_numbers<[1], [0], [0], [1], [0, 0, 1, 1], [], []>} : vector<1x32xbf16>, vector<32x8xbf16>, vector<1x8xf32> -> vector<1x8xf32>
    %c0_90 = arith.constant 0 : index
    %c0_91 = arith.constant 0 : index
    %224 = vector.load %arg18[%c0_90, %c0_91] : memref<1x8xf32, #tpu.memory_space<vmem>>, vector<1x8xf32>
    %225 = arith.addf %223, %224 : vector<1x8xf32>
    %c0_92 = arith.constant 0 : index
    %c0_93 = arith.constant 0 : index
    %c0_94 = arith.constant 0 : index
    %226 = vector.load %arg19[%c0_92, %c0_93, %c0_94] : memref<1x1x8xf32, #tpu.memory_space<vmem>>, vector<1x1x8xf32>
    %227 = vector.shape_cast %226 : vector<1x1x8xf32> to vector<1x8xf32>
    %228 = vector.shape_cast %225 : vector<1x8xf32> to vector<1x1x8xf32>
    tpu.vector_store %arg19[%c0_92, %c0_93, %c0_94], %228 {strides = array<i32>} : memref<1x1x8xf32, #tpu.memory_space<vmem>>, vector<1x1x8xf32>,
    return
  }
  func.func @transform_0(%arg0: i32) -> (i32, i32) {
    %c0_i32 = arith.constant 0 : i32
    %c0_i32_0 = arith.constant 0 : i32
    %c0_i32_1 = arith.constant 0 : i32
    return %c0_i32, %c0_i32_0 : i32, i32
  }
  func.func @transform_1(%arg0: i32) -> (i32, i32, i32) {
    %c0_i32 = arith.constant 0 : i32
    %c0_i32_0 = arith.constant 0 : i32
    %c0_i32_1 = arith.constant 0 : i32
    return %arg0, %c0_i32, %c0_i32_0 : i32, i32, i32
  }
  func.func @transform_2(%arg0: i32) -> (i32, i32) {
    %c0_i32 = arith.constant 0 : i32
    %c0_i32_0 = arith.constant 0 : i32
    %c0_i32_1 = arith.constant 0 : i32
    return %c0_i32, %c0_i32_0 : i32, i32
  }
  func.func @transform_3(%arg0: i32) -> (i32, i32) {
    %c0_i32 = arith.constant 0 : i32
    %c0_i32_0 = arith.constant 0 : i32
    %c0_i32_1 = arith.constant 0 : i32
    return %c0_i32, %c0_i32_0 : i32, i32
  }
  func.func @transform_4(%arg0: i32) -> (i32, i32) {
    %c0_i32 = arith.constant 0 : i32
    %c0_i32_0 = arith.constant 0 : i32
    %c0_i32_1 = arith.constant 0 : i32
    return %c0_i32, %c0_i32_0 : i32, i32
  }
  func.func @transform_5(%arg0: i32) -> (i32, i32) {
    %c0_i32 = arith.constant 0 : i32
    %c0_i32_0 = arith.constant 0 : i32
    %c0_i32_1 = arith.constant 0 : i32
    return %c0_i32, %c0_i32_0 : i32, i32
  }
  func.func @transform_6(%arg0: i32) -> (i32, i32) {
    %c0_i32 = arith.constant 0 : i32
    %c0_i32_0 = arith.constant 0 : i32
    %c0_i32_1 = arith.constant 0 : i32
    return %c0_i32, %c0_i32_0 : i32, i32
  }
  func.func @transform_7(%arg0: i32) -> (i32, i32) {
    %c0_i32 = arith.constant 0 : i32
    %c0_i32_0 = arith.constant 0 : i32
    %c0_i32_1 = arith.constant 0 : i32
    return %c0_i32, %c0_i32_0 : i32, i32
  }
  func.func @transform_8(%arg0: i32) -> (i32, i32) {
    %c0_i32 = arith.constant 0 : i32
    %c0_i32_0 = arith.constant 0 : i32
    %c0_i32_1 = arith.constant 0 : i32
    return %c0_i32, %c0_i32_0 : i32, i32
  }
  func.func @transform_9(%arg0: i32) -> (i32, i32) {
    %c0_i32 = arith.constant 0 : i32
    %c0_i32_0 = arith.constant 0 : i32
    %c0_i32_1 = arith.constant 0 : i32
    return %c0_i32, %c0_i32_0 : i32, i32
  }
  func.func @transform_10(%arg0: i32) -> (i32, i32) {
    %c0_i32 = arith.constant 0 : i32
    %c0_i32_0 = arith.constant 0 : i32
    %c0_i32_1 = arith.constant 0 : i32
    return %c0_i32, %c0_i32_0 : i32, i32
  }
  func.func @transform_11(%arg0: i32) -> (i32, i32) {
    %c0_i32 = arith.constant 0 : i32
    %c0_i32_0 = arith.constant 0 : i32
    %c0_i32_1 = arith.constant 0 : i32
    return %c0_i32, %c0_i32_0 : i32, i32
  }
  func.func @transform_12(%arg0: i32) -> (i32, i32) {
    %c0_i32 = arith.constant 0 : i32
    %c0_i32_0 = arith.constant 0 : i32
    %c0_i32_1 = arith.constant 0 : i32
    return %c0_i32, %c0_i32_0 : i32, i32
  }
  func.func @transform_13(%arg0: i32) -> (i32, i32) {
    %c0_i32 = arith.constant 0 : i32
    %c0_i32_0 = arith.constant 0 : i32
    %c0_i32_1 = arith.constant 0 : i32
    return %c0_i32, %c0_i32_0 : i32, i32
  }
  func.func @transform_14(%arg0: i32) -> (i32, i32) {
    %c0_i32 = arith.constant 0 : i32
    %c0_i32_0 = arith.constant 0 : i32
    %c0_i32_1 = arith.constant 0 : i32
    return %c0_i32, %c0_i32_0 : i32, i32
  }
  func.func @transform_15(%arg0: i32) -> (i32, i32) {
    %c0_i32 = arith.constant 0 : i32
    %c0_i32_0 = arith.constant 0 : i32
    %c0_i32_1 = arith.constant 0 : i32
    return %c0_i32, %c0_i32_0 : i32, i32
  }
  func.func @transform_16(%arg0: i32) -> (i32, i32) {
    %c0_i32 = arith.constant 0 : i32
    %c0_i32_0 = arith.constant 0 : i32
    %c0_i32_1 = arith.constant 0 : i32
    return %c0_i32, %c0_i32_0 : i32, i32
  }
  func.func @transform_17(%arg0: i32) -> (i32, i32) {
    %c0_i32 = arith.constant 0 : i32
    %c0_i32_0 = arith.constant 0 : i32
    %c0_i32_1 = arith.constant 0 : i32
    return %c0_i32, %c0_i32_0 : i32, i32
  }
  func.func @transform_18(%arg0: i32) -> (i32, i32, i32) {
    %c0_i32 = arith.constant 0 : i32
    %c0_i32_0 = arith.constant 0 : i32
    %c0_i32_1 = arith.constant 0 : i32
    return %arg0, %c0_i32, %c0_i32_0 : i32, i32, i32
  }
}

</mosaic_0001>

<llo_original>
// kernel: pathformer_forward.4
$region0: #{pathformer_forward.4}
  #allocation0 [shape = 'u32[]', space=smem, size = 0x4, offset = 0x4, fixed_abs, tag = 'smem constant byte address 0x4 - core index']
  #allocation1 [shape = 'u32[144,128]{1,0:T(1,128)}', space=vmem, size = 0x12000, scoped, tag = 'internal scratch']
  %s0 = inlined_call_operand.vmem [shape: f32[32,1], index: 0, kind: input, shape index: {}]
  %s1 = inlined_call_operand.vmem [shape: f32[32,32], index: 1, kind: input, shape index: {}]
  %s2 = inlined_call_operand.vmem [shape: f32[1,32], index: 2, kind: input, shape index: {}]
  %s3 = inlined_call_operand.vmem [shape: f32[1,32], index: 3, kind: input, shape index: {}]
  %s4 = inlined_call_operand.vmem [shape: f32[32,32], index: 4, kind: output, shape index: {}]
  %s5 = sld [smem:[#allocation0]]
  $region26: #{pathformer_forward.4} parent=0
    _
  %s7 = ssub.s32 1, %s5
  %s8 = scalar_select 0, %s7, %s5
  // Predicated region
  $region2: #{pathformer_forward.4} parent=0 // pred_check
    _
  $region3: #{pathformer_forward.4} parent=0 // pred_check_branch
    %10 = sbr.rel (0) target = $region5
  $region4: #{pathformer_forward.4} parent=0 // pred_region
    _
  $region5: #{pathformer_forward.4} parent=0 // pred_fallthru
    _
  // Predicated region
  $region6: #{pathformer_forward.4} parent=0 // pred_check
    _
  $region7: #{pathformer_forward.4} parent=0 // pred_check_branch
    %12 = sbr.rel (0) target = $region9
  $region8: #{pathformer_forward.4} parent=0 // pred_region
    _
  $region9: #{pathformer_forward.4} parent=0 // pred_fallthru
    _
  // Predicated region
  $region10: #{pathformer_forward.4} parent=0 // pred_check
    _
  $region11: #{pathformer_forward.4} parent=0 // pred_check_branch
    %14 = sbr.rel (0) target = $region13
  $region12: #{pathformer_forward.4} parent=0 // pred_region
    _
  $region13: #{pathformer_forward.4} parent=0 // pred_fallthru
    _
  // Predicated region
  $region14: #{pathformer_forward.4} parent=0 // pred_check
    _
  $region15: #{pathformer_forward.4} parent=0 // pred_check_branch
    %16 = sbr.rel (0) target = $region17
  $region16: #{pathformer_forward.4} parent=0 // pred_region
    _
  $region17: #{pathformer_forward.4} parent=0 // pred_fallthru
    _
  %v17 = vld [vmem:[%s0] sm:$0xff]
  %v18 = vld [vmem:[%s0 + $0x8] sm:$0xff]
  %v19 = vld [vmem:[%s0 + $0x10] sm:$0xff]
  %v20 = vld [vmem:[%s0 + $0x18] sm:$0xff]
  %v21 = vld [vmem:[%s2] sm:$0x1]
  %23 = vset.pattern.permute.xlu0 0
  %24 = vperm.xlu0 %23, %v17
  %v25 = vpop.permute.xlu0 %24
  %28 = vset.pattern.permute.xlu0 0
  %29 = vperm.xlu0 %28, %v18
  %v30 = vpop.permute.xlu0 %29
  %33 = vset.pattern.permute.xlu0 0
  %34 = vperm.xlu0 %33, %v19
  %v35 = vpop.permute.xlu0 %34
  %38 = vset.pattern.permute.xlu0 0
  %39 = vperm.xlu0 %38, %v20
  %v40 = vpop.permute.xlu0 %39
  %v43 = vlaneseq
  %v44 = vshrl.u32 %v43, 7
  %v45 = vsub.s32 0, %v44
  %v46 = vrot.slane %v21, %v45
  %v48 = vmul.f32 %v25, %v46
  %v49 = vmul.f32 %v30, %v46
  %v50 = vmul.f32 %v35, %v46
  %v51 = vmul.f32 %v40, %v46
  %v52 = vld [vmem:[%s3] sm:$0x1]
  %v54 = vlaneseq
  %v55 = vshrl.u32 %v54, 7
  %v56 = vsub.s32 0, %v55
  %v57 = vrot.slane %v52, %v56
  %v59 = vadd.f32 %v48, %v57
  %v60 = vadd.f32 %v49, %v57
  %v61 = vadd.f32 %v50, %v57
  %v62 = vadd.f32 %v51, %v57
  %v63 = vld [vmem:[%s1] sm:$0xff]
  %v64 = vld [vmem:[%s1 + $0x8] sm:$0xff]
  %v65 = vld [vmem:[%s1 + $0x10] sm:$0xff]
  %v66 = vld [vmem:[%s1 + $0x18] sm:$0xff]
  %v67 = vadd.f32 %v59, %v63
  %v68 = vadd.f32 %v60, %v64
  %v69 = vadd.f32 %v61, %v65
  %v70 = vadd.f32 %v62, %v66
  %vm71 = vcmask 261120
  %72 = vst.msk [vmem:[%s4] sm:$0xff] %vm71, %v67
  %73 = vst.msk [vmem:[%s4 + $0x8] sm:$0xff] %vm71, %v68
  %74 = vst.msk [vmem:[%s4 + $0x10] sm:$0xff] %vm71, %v69
  %75 = vst.msk [vmem:[%s4 + $0x18] sm:$0xff] %vm71, %v70
  // Predicated region
  $region18: #{pathformer_forward.4} parent=0 // pred_check
    _
  $region19: #{pathformer_forward.4} parent=0 // pred_check_branch
    %77 = sbr.rel (0) target = $region21
  $region20: #{pathformer_forward.4} parent=0 // pred_region
    _
  $region21: #{pathformer_forward.4} parent=0 // pred_fallthru
    _
  // Predicated region
  $region22: #{pathformer_forward.4} parent=0 // pred_check
    _
  $region23: #{pathformer_forward.4} parent=0 // pred_check_branch
    %79 = sbr.rel (0) target = $region25
  $region24: #{pathformer_forward.4} parent=0 // pred_region
    _
  $region25: #{pathformer_forward.4} parent=0 // pred_fallthru
    _

// kernel: pathformer_forward.6
$region0: #{pathformer_forward.6}
  #allocation0 [shape = 'u32[]', space=smem, size = 0x4, offset = 0x4, fixed_abs, tag = 'smem constant byte address 0x4 - core index']
  #allocation1 [shape = 'u32[144,128]{1,0:T(1,128)}', space=vmem, size = 0x12000, scoped, tag = 'internal scratch']
  %s0 = inlined_call_operand.vmem [shape: f32[2,16,32], index: 0, kind: input, shape index: {}]
  %s1 = inlined_call_operand.vmem [shape: bf16[32,96], index: 1, kind: input, shape index: {}]
  %s2 = inlined_call_operand.vmem [shape: f32[1,96], index: 2, kind: input, shape index: {}]
  %s3 = inlined_call_operand.vmem [shape: bf16[32,32], index: 3, kind: input, shape index: {}]
  %s4 = inlined_call_operand.vmem [shape: f32[1,32], index: 4, kind: input, shape index: {}]
  %s5 = inlined_call_operand.vmem [shape: f32[1,32], index: 5, kind: input, shape index: {}]
  %s6 = inlined_call_operand.vmem [shape: f32[1,32], index: 6, kind: input, shape index: {}]
  %s7 = inlined_call_operand.vmem [shape: bf16[32,64], index: 7, kind: input, shape index: {}]
  %s8 = inlined_call_operand.vmem [shape: f32[1,64], index: 8, kind: input, shape index: {}]
  %s9 = inlined_call_operand.vmem [shape: bf16[64,32], index: 9, kind: input, shape index: {}]
  %s10 = inlined_call_operand.vmem [shape: f32[1,32], index: 10, kind: input, shape index: {}]
  %s11 = inlined_call_operand.vmem [shape: f32[1,32], index: 11, kind: input, shape index: {}]
  %s12 = inlined_call_operand.vmem [shape: f32[1,32], index: 12, kind: input, shape index: {}]
  %s13 = inlined_call_operand.vmem [shape: f32[2,16,32], index: 13, kind: output, shape index: {}]
  %s14 = sld [smem:[#allocation0]]
  $region85: #{pathformer_forward.6} parent=0
    _
  %s16 = ssub.s32 1, %s14
  %s17 = scalar_select 0, %s16, %s14
  loop: start=0, step=1, limit=4
  $region2: #{pathformer_forward.6} parent=0 // loop_pre_header
    _
  $region3: #{pathformer_forward.6} parent=0 // loop_header
    %s19 = sphi 0, %s23
    %p20 = scmp.ge.s32.totalorder %s19, 4
    %s29 = sphi 0, %s31
    %s32 = sphi 0, %s29
    %s33 = sphi 0, %s32
    %s49 = sphi 0, %s33
    %s53 = sphi 0, %s53
    %s55 = sphi 0, %s53
    %s56 = sphi 0, %s55
    %s70 = sphi 0, %s56
    %s74 = sphi 0, %s74
    %s76 = sphi 0, %s74
    %s77 = sphi 0, %s76
    %s91 = sphi 0, %s77
    %s95 = sphi 0, %s95
    %s97 = sphi 0, %s95
    %s98 = sphi 0, %s97
    %s112 = sphi 0, %s98
    %s116 = sphi 0, %s116
    %s118 = sphi 0, %s116
    %s119 = sphi 0, %s118
    %s133 = sphi 0, %s119
    %s137 = sphi 0, %s137
    %s139 = sphi 0, %s137
    %s140 = sphi 0, %s139
    %s154 = sphi 0, %s140
    %s158 = sphi 0, %s158
    %s160 = sphi 0, %s158
    %s161 = sphi 0, %s160
    %s175 = sphi 0, %s161
    %s179 = sphi 0, %s179
    %s181 = sphi 0, %s179
    %s182 = sphi 0, %s181
    %s196 = sphi 0, %s182
    %s200 = sphi 0, %s200
    %s202 = sphi 0, %s200
    %s203 = sphi 0, %s202
    %s217 = sphi 0, %s203
    %s221 = sphi 0, %s221
    %s223 = sphi 0, %s221
    %s224 = sphi 0, %s223
    %s238 = sphi 0, %s224
    %s242 = sphi 0, %s242
    %s244 = sphi 0, %s242
    %s245 = sphi 0, %s244
    %s259 = sphi 0, %s245
    %s263 = sphi 0, %s263
    %s265 = sphi 0, %s263
    %s266 = sphi 0, %s265
    %s280 = sphi 0, %s266
    %s284 = sphi 0, %s284
    %s286 = sphi 0, %s284
    %s287 = sphi 0, %s286
    %s301 = sphi 0, %s287
    %s307 = sphi 0, %s309
    %s310 = sphi 0, %s307
    %s311 = sphi 0, %s310
    %s327 = sphi 0, %s311
  $region4: #{pathformer_forward.6} parent=0 // loop_header_branch
    %22 = sbr.rel (%p20) target = $region8
  $region5: #{pathformer_forward.6} parent=0 // loop_body
    %s24 = ssub.s32 %s19, 1
    %s25 = ssub.s32 %s19, 2
    %s26 = sadd.s32 %s19, 1
    %s27 = ssub.s32 %s19, %s26
    %p28 = scmp.eq.s32.totalorder %s27, 0
    %s30 = sadd.s32 %s29, 1
    %s31 = scalar_select %p28, %s29, %s30
    %p34 = pneg %p28
    %p35 = scmp.eq.s32.totalorder %s19, 1
    %p36 = por %p34, %p35
    %p37 = scmp.ne.s32.totalorder %s29, %s32
    %p38 = scmp.eq.s32.totalorder %s19, 0
    %p39 = por %p37, %p38
    %p40 = scmp.ne.s32.totalorder %s29, %s32
    %p41 = scmp.eq.s32.totalorder %s24, 1
    %p42 = por %p40, %p41
    %p43 = scmp.ne.s32.totalorder %s32, %s33
    %p44 = scmp.eq.s32.totalorder %s24, 0
    %p45 = por %p43, %p44
    %p46 = scmp.ne.s32.totalorder %s32, %s33
    %p47 = scmp.eq.s32.totalorder %s25, 1
    %p48 = por %p46, %p47
    %p50 = scmp.ne.s32.totalorder %s33, %s49
    %p51 = scmp.eq.s32.totalorder %s25, 0
    %p52 = por %p50, %p51
    %s54 = sadd.s32 %s53, 1
    %p57 = scmp.eq.s32.totalorder %s19, 1
    %p58 = scmp.ne.s32.totalorder %s53, %s55
    %p59 = scmp.eq.s32.totalorder %s19, 0
    %p60 = por %p58, %p59
    %p61 = scmp.ne.s32.totalorder %s53, %s55
    %p62 = scmp.eq.s32.totalorder %s24, 1
    %p63 = por %p61, %p62
    %p64 = scmp.ne.s32.totalorder %s55, %s56
    %p65 = scmp.eq.s32.totalorder %s24, 0
    %p66 = por %p64, %p65
    %p67 = scmp.ne.s32.totalorder %s55, %s56
    %p68 = scmp.eq.s32.totalorder %s25, 1
    %p69 = por %p67, %p68
    %p71 = scmp.ne.s32.totalorder %s56, %s70
    %p72 = scmp.eq.s32.totalorder %s25, 0
    %p73 = por %p71, %p72
    %s75 = sadd.s32 %s74, 1
    %p78 = scmp.eq.s32.totalorder %s19, 1
    %p79 = scmp.ne.s32.totalorder %s74, %s76
    %p80 = scmp.eq.s32.totalorder %s19, 0
    %p81 = por %p79, %p80
    %p82 = scmp.ne.s32.totalorder %s74, %s76
    %p83 = scmp.eq.s32.totalorder %s24, 1
    %p84 = por %p82, %p83
    %p85 = scmp.ne.s32.totalorder %s76, %s77
    %p86 = scmp.eq.s32.totalorder %s24, 0
    %p87 = por %p85, %p86
    %p88 = scmp.ne.s32.totalorder %s76, %s77
    %p89 = scmp.eq.s32.totalorder %s25, 1
    %p90 = por %p88, %p89
    %p92 = scmp.ne.s32.totalorder %s77, %s91
    %p93 = scmp.eq.s32.totalorder %s25, 0
    %p94 = por %p92, %p93
    %s96 = sadd.s32 %s95, 1
    %p99 = scmp.eq.s32.totalorder %s19, 1
    %p100 = scmp.ne.s32.totalorder %s95, %s97
    %p101 = scmp.eq.s32.totalorder %s19, 0
    %p102 = por %p100, %p101
    %p103 = scmp.ne.s32.totalorder %s95, %s97
    %p104 = scmp.eq.s32.totalorder %s24, 1
    %p105 = por %p103, %p104
    %p106 = scmp.ne.s32.totalorder %s97, %s98
    %p107 = scmp.eq.s32.totalorder %s24, 0
    %p108 = por %p106, %p107
    %p109 = scmp.ne.s32.totalorder %s97, %s98
    %p110 = scmp.eq.s32.totalorder %s25, 1
    %p111 = por %p109, %p110
    %p113 = scmp.ne.s32.totalorder %s98, %s112
    %p114 = scmp.eq.s32.totalorder %s25, 0
    %p115 = por %p113, %p114
    %s117 = sadd.s32 %s116, 1
    %p120 = scmp.eq.s32.totalorder %s19, 1
    %p121 = scmp.ne.s32.totalorder %s116, %s118
    %p122 = scmp.eq.s32.totalorder %s19, 0
    %p123 = por %p121, %p122
    %p124 = scmp.ne.s32.totalorder %s116, %s118
    %p125 = scmp.eq.s32.totalorder %s24, 1
    %p126 = por %p124, %p125
    %p127 = scmp.ne.s32.totalorder %s118, %s119
    %p128 = scmp.eq.s32.totalorder %s24, 0
    %p129 = por %p127, %p128
    %p130 = scmp.ne.s32.totalorder %s118, %s119
    %p131 = scmp.eq.s32.totalorder %s25, 1
    %p132 = por %p130, %p131
    %p134 = scmp.ne.s32.totalorder %s119, %s133
    %p135 = scmp.eq.s32.totalorder %s25, 0
    %p136 = por %p134, %p135
    %s138 = sadd.s32 %s137, 1
    %p141 = scmp.eq.s32.totalorder %s19, 1
    %p142 = scmp.ne.s32.totalorder %s137, %s139
    %p143 = scmp.eq.s32.totalorder %s19, 0
    %p144 = por %p142, %p143
    %p145 = scmp.ne.s32.totalorder %s137, %s139
    %p146 = scmp.eq.s32.totalorder %s24, 1
    %p147 = por %p145, %p146
    %p148 = scmp.ne.s32.totalorder %s139, %s140
    %p149 = scmp.eq.s32.totalorder %s24, 0
    %p150 = por %p148, %p149
    %p151 = scmp.ne.s32.totalorder %s139, %s140
    %p152 = scmp.eq.s32.totalorder %s25, 1
    %p153 = por %p151, %p152
    %p155 = scmp.ne.s32.totalorder %s140, %s154
    %p156 = scmp.eq.s32.totalorder %s25, 0
    %p157 = por %p155, %p156
    %s159 = sadd.s32 %s158, 1
    %p162 = scmp.eq.s32.totalorder %s19, 1
    %p163 = scmp.ne.s32.totalorder %s158, %s160
    %p164 = scmp.eq.s32.totalorder %s19, 0
    %p165 = por %p163, %p164
    %p166 = scmp.ne.s32.totalorder %s158, %s160
    %p167 = scmp.eq.s32.totalorder %s24, 1
    %p168 = por %p166, %p167
    %p169 = scmp.ne.s32.totalorder %s160, %s161
    %p170 = scmp.eq.s32.totalorder %s24, 0
    %p171 = por %p169, %p170
    %p172 = scmp.ne.s32.totalorder %s160, %s161
    %p173 = scmp.eq.s32.totalorder %s25, 1
    %p174 = por %p172, %p173
    %p176 = scmp.ne.s32.totalorder %s161, %s175
    %p177 = scmp.eq.s32.totalorder %s25, 0
    %p178 = por %p176, %p177
    %s180 = sadd.s32 %s179, 1
    %p183 = scmp.eq.s32.totalorder %s19, 1
    %p184 = scmp.ne.s32.totalorder %s179, %s181
    %p185 = scmp.eq.s32.totalorder %s19, 0
    %p186 = por %p184, %p185
    %p187 = scmp.ne.s32.totalorder %s179, %s181
    %p188 = scmp.eq.s32.totalorder %s24, 1
    %p189 = por %p187, %p188
    %p190 = scmp.ne.s32.totalorder %s181, %s182
    %p191 = scmp.eq.s32.totalorder %s24, 0
    %p192 = por %p190, %p191
    %p193 = scmp.ne.s32.totalorder %s181, %s182
    %p194 = scmp.eq.s32.totalorder %s25, 1
    %p195 = por %p193, %p194
    %p197 = scmp.ne.s32.totalorder %s182, %s196
    %p198 = scmp.eq.s32.totalorder %s25, 0
    %p199 = por %p197, %p198
    %s201 = sadd.s32 %s200, 1
    %p204 = scmp.eq.s32.totalorder %s19, 1
    %p205 = scmp.ne.s32.totalorder %s200, %s202
    %p206 = scmp.eq.s32.totalorder %s19, 0
    %p207 = por %p205, %p206
    %p208 = scmp.ne.s32.totalorder %s200, %s202
    %p209 = scmp.eq.s32.totalorder %s24, 1
    %p210 = por %p208, %p209
    %p211 = scmp.ne.s32.totalorder %s202, %s203
    %p212 = scmp.eq.s32.totalorder %s24, 0
    %p213 = por %p211, %p212
    %p214 = scmp.ne.s32.totalorder %s202, %s203
    %p215 = scmp.eq.s32.totalorder %s25, 1
    %p216 = por %p214, %p215
    %p218 = scmp.ne.s32.totalorder %s203, %s217
    %p219 = scmp.eq.s32.totalorder %s25, 0
    %p220 = por %p218, %p219
    %s222 = sadd.s32 %s221, 1
    %p225 = scmp.eq.s32.totalorder %s19, 1
    %p226 = scmp.ne.s32.totalorder %s221, %s223
    %p227 = scmp.eq.s32.totalorder %s19, 0
    %p228 = por %p226, %p227
    %p229 = scmp.ne.s32.totalorder %s221, %s223
    %p230 = scmp.eq.s32.totalorder %s24, 1
    %p231 = por %p229, %p230
    %p232 = scmp.ne.s32.totalorder %s223, %s224
    %p233 = scmp.eq.s32.totalorder %s24, 0
    %p234 = por %p232, %p233
    %p235 = scmp.ne.s32.totalorder %s223, %s224
    %p236 = scmp.eq.s32.totalorder %s25, 1
    %p237 = por %p235, %p236
    %p239 = scmp.ne.s32.totalorder %s224, %s238
    %p240 = scmp.eq.s32.totalorder %s25, 0
    %p241 = por %p239, %p240
    %s243 = sadd.s32 %s242, 1
    %p246 = scmp.eq.s32.totalorder %s19, 1
    %p247 = scmp.ne.s32.totalorder %s242, %s244
    %p248 = scmp.eq.s32.totalorder %s19, 0
    %p249 = por %p247, %p248
    %p250 = scmp.ne.s32.totalorder %s242, %s244
    %p251 = scmp.eq.s32.totalorder %s24, 1
    %p252 = por %p250, %p251
    %p253 = scmp.ne.s32.totalorder %s244, %s245
    %p254 = scmp.eq.s32.totalorder %s24, 0
    %p255 = por %p253, %p254
    %p256 = scmp.ne.s32.totalorder %s244, %s245
    %p257 = scmp.eq.s32.totalorder %s25, 1
    %p258 = por %p256, %p257
    %p260 = scmp.ne.s32.totalorder %s245, %s259
    %p261 = scmp.eq.s32.totalorder %s25, 0
    %p262 = por %p260, %p261
    %s264 = sadd.s32 %s263, 1
    %p267 = scmp.eq.s32.totalorder %s19, 1
    %p268 = scmp.ne.s32.totalorder %s263, %s265
    %p269 = scmp.eq.s32.totalorder %s19, 0
    %p270 = por %p268, %p269
    %p271 = scmp.ne.s32.totalorder %s263, %s265
    %p272 = scmp.eq.s32.totalorder %s24, 1
    %p273 = por %p271, %p272
    %p274 = scmp.ne.s32.totalorder %s265, %s266
    %p275 = scmp.eq.s32.totalorder %s24, 0
    %p276 = por %p274, %p275
    %p277 = scmp.ne.s32.totalorder %s265, %s266
    %p278 = scmp.eq.s32.totalorder %s25, 1
    %p279 = por %p277, %p278
    %p281 = scmp.ne.s32.totalorder %s266, %s280
    %p282 = scmp.eq.s32.totalorder %s25, 0
    %p283 = por %p281, %p282
    %s285 = sadd.s32 %s284, 1
    %p288 = scmp.eq.s32.totalorder %s19, 1
    %p289 = scmp.ne.s32.totalorder %s284, %s286
    %p290 = scmp.eq.s32.totalorder %s19, 0
    %p291 = por %p289, %p290
    %p292 = scmp.ne.s32.totalorder %s284, %s286
    %p293 = scmp.eq.s32.totalorder %s24, 1
    %p294 = por %p292, %p293
    %p295 = scmp.ne.s32.totalorder %s286, %s287
    %p296 = scmp.eq.s32.totalorder %s24, 0
    %p297 = por %p295, %p296
    %p298 = scmp.ne.s32.totalorder %s286, %s287
    %p299 = scmp.eq.s32.totalorder %s25, 1
    %p300 = por %p298, %p299
    %p302 = scmp.ne.s32.totalorder %s287, %s301
    %p303 = scmp.eq.s32.totalorder %s25, 0
    %p304 = por %p302, %p303
    %s305 = ssub.s32 %s19, %s26
    %p306 = scmp.eq.s32.totalorder %s305, 0
    %s308 = sadd.s32 %s307, 1
    %s309 = scalar_select %p306, %s307, %s308
    %p312 = pneg %p306
    %p313 = scmp.eq.s32.totalorder %s19, 1
    %p314 = por %p312, %p313
    %p315 = scmp.ne.s32.totalorder %s307, %s310
    %p316 = scmp.eq.s32.totalorder %s19, 0
    %p317 = por %p315, %p316
    %p318 = scmp.ne.s32.totalorder %s307, %s310
    %p319 = scmp.eq.s32.totalorder %s24, 1
    %p320 = por %p318, %p319
    %p321 = scmp.ne.s32.totalorder %s310, %s311
    %p322 = scmp.eq.s32.totalorder %s24, 0
    %p323 = por %p321, %p322
    %p324 = scmp.ne.s32.totalorder %s310, %s311
    %p325 = scmp.eq.s32.totalorder %s25, 1
    %p326 = por %p324, %p325
    %p328 = scmp.ne.s32.totalorder %s311, %s327
    %p329 = scmp.eq.s32.totalorder %s25, 0
    %p330 = por %p328, %p329
    %p331 = scmp.le.s32.totalorder 1, %s19
    %p332 = scmp.lt.s32.totalorder %s19, 3
    %p333 = pnand %p331, %p332
    %p334 = pneg %p333
    // Predicated region
    $region9: #{pathformer_forward.6} parent=5 // pred_check
      _
    $region10: #{pathformer_forward.6} parent=5 // pred_check_branch
      %336 = sbr.rel (%p333) target = $region12
    $region11: #{pathformer_forward.6} parent=5 // pred_region
      %s337 = ssub.s32 %s19, 1
      // Predicated region
      $region13: #{pathformer_forward.6} parent=11 // pred_check
        %p338 = pneg %p66
      $region14: #{pathformer_forward.6} parent=11 // pred_check_branch
        %340 = sbr.rel (%p338) target = $region16
      $region15: #{pathformer_forward.6} parent=11 // pred_region
        _
      $region16: #{pathformer_forward.6} parent=11 // pred_fallthru
        _
      // Predicated region
      $region17: #{pathformer_forward.6} parent=11 // pred_check
        %p341 = pneg %p87
      $region18: #{pathformer_forward.6} parent=11 // pred_check_branch
        %343 = sbr.rel (%p341) target = $region20
      $region19: #{pathformer_forward.6} parent=11 // pred_region
        _
      $region20: #{pathformer_forward.6} parent=11 // pred_fallthru
        _
      // Predicated region
      $region21: #{pathformer_forward.6} parent=11 // pred_check
        %p344 = pneg %p108
      $region22: #{pathformer_forward.6} parent=11 // pred_check_branch
        %346 = sbr.rel (%p344) target = $region24
      $region23: #{pathformer_forward.6} parent=11 // pred_region
        _
      $region24: #{pathformer_forward.6} parent=11 // pred_fallthru
        _
      // Predicated region
      $region25: #{pathformer_forward.6} parent=11 // pred_check
        %p347 = pneg %p129
      $region26: #{pathformer_forward.6} parent=11 // pred_check_branch
        %349 = sbr.rel (%p347) target = $region28
      $region27: #{pathformer_forward.6} parent=11 // pred_region
        _
      $region28: #{pathformer_forward.6} parent=11 // pred_fallthru
        _
      // Predicated region
      $region29: #{pathformer_forward.6} parent=11 // pred_check
        %p350 = pneg %p150
      $region30: #{pathformer_forward.6} parent=11 // pred_check_branch
        %352 = sbr.rel (%p350) target = $region32
      $region31: #{pathformer_forward.6} parent=11 // pred_region
        _
      $region32: #{pathformer_forward.6} parent=11 // pred_fallthru
        _
      // Predicated region
      $region33: #{pathformer_forward.6} parent=11 // pred_check
        %p353 = pneg %p171
      $region34: #{pathformer_forward.6} parent=11 // pred_check_branch
        %355 = sbr.rel (%p353) target = $region36
      $region35: #{pathformer_forward.6} parent=11 // pred_region
        _
      $region36: #{pathformer_forward.6} parent=11 // pred_fallthru
        _
      // Predicated region
      $region37: #{pathformer_forward.6} parent=11 // pred_check
        %p356 = pneg %p192
      $region38: #{pathformer_forward.6} parent=11 // pred_check_branch
        %358 = sbr.rel (%p356) target = $region40
      $region39: #{pathformer_forward.6} parent=11 // pred_region
        _
      $region40: #{pathformer_forward.6} parent=11 // pred_fallthru
        _
      // Predicated region
      $region41: #{pathformer_forward.6} parent=11 // pred_check
        %p359 = pneg %p213
      $region42: #{pathformer_forward.6} parent=11 // pred_check_branch
        %361 = sbr.rel (%p359) target = $region44
      $region43: #{pathformer_forward.6} parent=11 // pred_region
        _
      $region44: #{pathformer_forward.6} parent=11 // pred_fallthru
        _
      // Predicated region
      $region45: #{pathformer_forward.6} parent=11 // pred_check
        %p362 = pneg %p234
      $region46: #{pathformer_forward.6} parent=11 // pred_check_branch
        %364 = sbr.rel (%p362) target = $region48
      $region47: #{pathformer_forward.6} parent=11 // pred_region
        _
      $region48: #{pathformer_forward.6} parent=11 // pred_fallthru
        _
      // Predicated region
      $region49: #{pathformer_forward.6} parent=11 // pred_check
        %p365 = pneg %p255
      $region50: #{pathformer_forward.6} parent=11 // pred_check_branch
        %367 = sbr.rel (%p365) target = $region52
      $region51: #{pathformer_forward.6} parent=11 // pred_region
        _
      $region52: #{pathformer_forward.6} parent=11 // pred_fallthru
        _
      // Predicated region
      $region53: #{pathformer_forward.6} parent=11 // pred_check
        %p368 = pneg %p276
      $region54: #{pathformer_forward.6} parent=11 // pred_check_branch
        %370 = sbr.rel (%p368) target = $region56
      $region55: #{pathformer_forward.6} parent=11 // pred_region
        _
      $region56: #{pathformer_forward.6} parent=11 // pred_fallthru
        _
      // Predicated region
      $region57: #{pathformer_forward.6} parent=11 // pred_check
        %p371 = pneg %p297
      $region58: #{pathformer_forward.6} parent=11 // pred_check_branch
        %373 = sbr.rel (%p371) target = $region60
      $region59: #{pathformer_forward.6} parent=11 // pred_region
        _
      $region60: #{pathformer_forward.6} parent=11 // pred_fallthru
        _
    $region12: #{pathformer_forward.6} parent=5 // pred_fallthru
      _
    %p374 = scmp.lt.s32.totalorder %s19, 2
    // Predicated region
    $region61: #{pathformer_forward.6} parent=5 // pred_check
      %p375 = pneg %p374
    $region62: #{pathformer_forward.6} parent=5 // pred_check_branch
      %377 = sbr.rel (%p375) target = $region64
    $region63: #{pathformer_forward.6} parent=5 // pred_region
      // Predicated region
      $region65: #{pathformer_forward.6} parent=63 // pred_check
        %p378 = pneg %p39
      $region66: #{pathformer_forward.6} parent=63 // pred_check_branch
        %380 = sbr.rel (%p378) target = $region68
      $region67: #{pathformer_forward.6} parent=63 // pred_region
        %p381 = scmp.lt.s32.totalorder %s19, 1
        %s382 = scalar_select %p381, %s19, 1
        %s383 = smul.addr %s382, 2
        %s384 = smul.addr %s383, 8
        %s385 = scalar_lea.vmem %s0, %s384
      $region68: #{pathformer_forward.6} parent=63 // pred_fallthru
        _
    $region64: #{pathformer_forward.6} parent=5 // pred_fallthru
      _
    %p386 = scmp.le.s32.totalorder 1, %s19
    %p387 = scmp.lt.s32.totalorder %s19, 3
    %p388 = pnand %p386, %p387
    %p389 = pneg %p388
    // Predicated region
    $region69: #{pathformer_forward.6} parent=5 // pred_check
      _
    $region70: #{pathformer_forward.6} parent=5 // pred_check_branch
      %391 = sbr.rel (%p388) target = $region72
    $region71: #{pathformer_forward.6} parent=5 // pred_region
      %s392 = ssub.s32 %s19, 1
      %p393 = scmp.lt.s32.totalorder %s24, 1
      %s394 = scalar_select %p393, %s24, 1
      %s395 = smul.addr %s394, 2
      %s396 = smul.addr %s395, 8
      %s397 = scalar_lea.vmem %s0, %s396
      %p398 = pneg %p45
      %p399 = pneg %p42
      %p400 = pneg %p66
      %p401 = pneg %p63
      %p402 = pneg %p87
      %p403 = pneg %p84
      %p404 = pneg %p108
      %p405 = pneg %p105
      %p406 = pneg %p129
      %p407 = pneg %p126
      %p408 = pneg %p150
      %p409 = pneg %p147
      %p410 = pneg %p171
      %p411 = pneg %p168
      %p412 = pneg %p192
      %p413 = pneg %p189
      %p414 = pneg %p213
      %p415 = pneg %p210
      %p416 = pneg %p234
      %p417 = pneg %p231
      %p418 = pneg %p255
      %p419 = pneg %p252
      %p420 = pneg %p276
      %p421 = pneg %p273
      %p422 = pneg %p297
      %p423 = pneg %p294
      %p424 = pneg %p323
      %p425 = pneg %p320
      %p426 = scmp.lt.s32.totalorder %s24, 1
      %s427 = scalar_select %p426, %s24, 1
      %s428 = smul.addr %s427, 2
      %s429 = smul.addr %s428, 8
      %s430 = scalar_lea.vmem %s13, %s429
      %p431 = scmp.lt.s32.totalorder %s24, 1
      %s432 = scalar_select %p431, %s24, 1
      %s433 = smul.addr %s432, 2
      %s434 = smul.addr %s433, 8
      %s435 = scalar_lea.vmem %s0, %s434
      %p436 = scmp.lt.s32.totalorder %s24, 1
      %s437 = scalar_select %p436, %s24, 1
      %s438 = smul.addr %s437, 2
      %s439 = smul.addr %s438, 8
      %s440 = scalar_lea.vmem %s13, %s439
      %v442 = vld [vmem:[%s435] sm:$0xff]
      %v443 = vld [vmem:[%s435 + $0x8] sm:$0xff]
      %v444 = vld [vmem:[%s1] sm:$0xf]
      %v445 = vld [vmem:[%s1 + $0x4] sm:$0xf]
      %v446 = vld [vmem:[%s1 + $0x8] sm:$0xf]
      %v447 = vld [vmem:[%s1 + $0xc] sm:$0xf]
      %v448 = vld [vmem:[%s2] sm:$0x1]
      %v449 = vld [vmem:[%s3] sm:$0xf]
      %v450 = vld [vmem:[%s3 + $0x4] sm:$0xf]
      %v451 = vld [vmem:[%s3 + $0x8] sm:$0xf]
      %v452 = vld [vmem:[%s3 + $0xc] sm:$0xf]
      %v453 = vld [vmem:[%s4] sm:$0x1]
      %v454 = vpack.c.bf16 %v443, %v442
      %v456 = vlaneseq
      %v457 = vshrl.u32 %v456, 7
      %v458 = vsub.s32 0, %v457
      %v459 = vrot.slane %v448, %v458
      %v465 = vunpack.c.l.b16 %v444
      %v466 = vunpack.c.l.b16 %v445
      %v467 = vunpack.c.l.b16 %v446
      %v468 = vunpack.c.l.b16 %v447
      %v469 = vpack.c.b16 %v466, %v465
      %v470 = vpack.c.b16 %v468, %v467
      %vm473 = vcmask 261120
      %v475 = vsel %vm473, %v454, 0
      %477 = vmatprep.subr.bf16.mxu0 0
      %478 = vmatpush1.bf16.msra.mxu0 0
      %479 = vmatprep.subr.bf16.mxu0 0
      %480 = vmatpush1.bf16.msra.mxu0 0
      %481 = vmatprep.subr.bf16.mxu0 0
      %482 = vmatpush1.bf16.msra.mxu0 0
      %483 = vmatprep.subr.bf16.mxu0 0
      %484 = vmatpush1.bf16.msra.mxu0 0
      %485 = vmatprep.subr.bf16.mxu0 0
      %486 = vmatpush1.bf16.msra.mxu0 0
      %487 = vmatprep.subr.bf16.mxu0 0
      %488 = vmatpush1.bf16.msra.mxu0 0
      %489 = vmatprep.subr.bf16.mxu0 0
      %490 = vmatpush1.bf16.msra.mxu0 %v470
      %491 = vmatprep.subr.bf16.mxu0 0
      %492 = vmatpush1.bf16.msra.mxu0 %v469
      %493 = vmatprep.subr.bf16.mxu0 0
      %494 = vmatpush2.bf16.msra.mxu0 0
      %495 = vmatprep.subr.bf16.mxu0 0
      %496 = vmatpush2.bf16.msra.mxu0 0
      %497 = vmatprep.subr.bf16.mxu0 0
      %498 = vmatpush2.bf16.msra.mxu0 0
      %499 = vmatprep.subr.bf16.mxu0 0
      %500 = vmatpush2.bf16.msra.mxu0 0
      %501 = vmatprep.subr.bf16.mxu0 0
      %502 = vmatpush2.bf16.msra.mxu0 0
      %503 = vmatprep.subr.bf16.mxu0 0
      %504 = vmatpush2.bf16.msra.mxu0 0
      %505 = vmatprep.subr.bf16.mxu0 0
      %506 = vmatpush2.bf16.msra.mxu0 0
      %507 = vmatprep.subr.bf16.mxu0 0
      %508 = vmatpush2.bf16.msra.mxu0 0
      %509 = vmatprep.mubr.bf16.mxu0 0
      %510 = vmatmul.mubr.bf16.gmra.mxu0 %v475
      %v511 = vpop.f32.mrf.mxu0
      %v512 = vadd.f32 %v459, %v511
      %v513 = vpop.f32.mrf.mxu0
      %v514 = vpop.f32.mrf.mxu0
      %v515 = vadd.f32 %v459, %v514
      %v516 = vpop.f32.mrf.mxu0
      %517 = vdwg.mxu0
      %v518 = vpack.c.bf16 %v515, %v512
      %520 = vrot.lane.b32.xlu0 %v518, 96
      %v521 = vpop.permute.xlu0 %520
      %vm522 = vcmask 64512
      %v524 = vsel %vm522, %v518, 0
      %v527 = vsel %vm522, %v521, 0
      %529 = vmatprep.subr.bf16.mxu0 0
      %530 = vmatpush1.bf16.xpose.msra.mxu0 0
      %531 = vmatprep.subr.bf16.mxu0 0
      %532 = vmatpush1.bf16.xpose.msra.mxu0 0
      %533 = vmatprep.subr.bf16.mxu0 0
      %534 = vmatpush1.bf16.xpose.msra.mxu0 0
      %535 = vmatprep.subr.bf16.mxu0 0
      %536 = vmatpush1.bf16.xpose.msra.mxu0 0
      %537 = vmatprep.subr.bf16.mxu0 0
      %538 = vmatpush1.bf16.xpose.msra.mxu0 0
      %539 = vmatprep.subr.bf16.mxu0 0
      %540 = vmatpush1.bf16.xpose.msra.mxu0 0
      %541 = vmatprep.subr.bf16.mxu0 0
      %542 = vmatpush1.bf16.xpose.msra.mxu0 0
      %543 = vmatprep.subr.bf16.mxu0 0
      %544 = vmatpush1.bf16.xpose.msra.mxu0 %v527
      %545 = vmatprep.subr.bf16.mxu0 0
      %546 = vmatpush2.bf16.xpose.msra.mxu0 0
      %547 = vmatprep.subr.bf16.mxu0 0
      %548 = vmatpush2.bf16.xpose.msra.mxu0 0
      %549 = vmatprep.subr.bf16.mxu0 0
      %550 = vmatpush2.bf16.xpose.msra.mxu0 0
      %551 = vmatprep.subr.bf16.mxu0 0
      %552 = vmatpush2.bf16.xpose.msra.mxu0 0
      %553 = vmatprep.subr.bf16.mxu0 0
      %554 = vmatpush2.bf16.xpose.msra.mxu0 0
      %555 = vmatprep.subr.bf16.mxu0 0
      %556 = vmatpush2.bf16.xpose.msra.mxu0 0
      %557 = vmatprep.subr.bf16.mxu0 0
      %558 = vmatpush2.bf16.xpose.msra.mxu0 0
      %559 = vmatprep.subr.bf16.mxu0 0
      %560 = vmatpush2.bf16.xpose.msra.mxu0 0
      %561 = vmatprep.mubr.bf16.mxu0 0
      %562 = vmatmul.mubr.bf16.gmra.mxu0 %v524
      %v563 = vpop.f32.mrf.mxu0
      %v564 = vadd.f32 0.0, %v563
      %v565 = vpop.f32.mrf.mxu0
      %v566 = vpop.f32.mrf.mxu0
      %v567 = vadd.f32 0.0, %v566
      %v568 = vpop.f32.mrf.mxu0
      %569 = vdwg.mxu0
      %v570 = vmul.f32 %v564, 0.35355338
      %v571 = vmul.f32 %v567, 0.35355338
      %vm572 = vcmask 130048
      %v573 = vsel %vm572, %v570, -inf
      %574 = vmax.xlane.f32.xlu0 %v573
      %v575 = vpop.xlane.xlu0 %574
      %v576 = vsel %vm572, %v571, -inf
      %577 = vmax.xlane.f32.xlu0 %v576
      %v578 = vpop.xlane.xlu0 %577
      %v579 = vsub.f32 %v570, %v575
      %v580 = vsub.f32 %v571, %v578
      %v581 = vmul.f32 %v579, 1.442695
      %v582 = vpow.pop %v581
      %v583 = vmul.f32 %v580, 1.442695
      %v584 = vpow.pop %v583
      %v585 = vsel %vm572, %v582, 0.0
      %586 = vadd.xlane.f32.xlu0 %v585
      %v587 = vpop.xlane.xlu0 %586
      %v588 = vsel %vm572, %v584, 0.0
      %589 = vadd.xlane.f32.xlu0 %v588
      %v590 = vpop.xlane.xlu0 %589
      %v591 = vrcp.pop %v587
      %v592 = vrcp.pop %v590
      %v593 = vmul.f32 %v582, %v591
      %v594 = vmul.f32 %v584, %v592
      %v595 = vpack.c.bf16 %v594, %v593
      %596 = vrot.lane.b32.xlu0 %v518, 64
      %v597 = vpop.permute.xlu0 %596
      %v600 = vsel %vm572, %v595, 0
      %602 = vmatprep.subr.bf16.mxu0 0
      %603 = vmatpush1.bf16.msra.mxu0 0
      %604 = vmatprep.subr.bf16.mxu0 0
      %605 = vmatpush1.bf16.msra.mxu0 0
      %606 = vmatprep.subr.bf16.mxu0 0
      %607 = vmatpush1.bf16.msra.mxu0 0
      %608 = vmatprep.subr.bf16.mxu0 0
      %609 = vmatpush1.bf16.msra.mxu0 0
      %610 = vmatprep.subr.bf16.mxu0 0
      %611 = vmatpush1.bf16.msra.mxu0 0
      %612 = vmatprep.subr.bf16.mxu0 0
      %613 = vmatpush1.bf16.msra.mxu0 0
      %614 = vmatprep.subr.bf16.mxu0 0
      %615 = vmatpush1.bf16.msra.mxu0 0
      %616 = vmatprep.subr.bf16.mxu0 0
      %617 = vmatpush1.bf16.msra.mxu0 %v597
      %618 = vmatprep.subr.bf16.mxu0 0
      %619 = vmatpush2.bf16.msra.mxu0 0
      %620 = vmatprep.subr.bf16.mxu0 0
      %621 = vmatpush2.bf16.msra.mxu0 0
      %622 = vmatprep.subr.bf16.mxu0 0
      %623 = vmatpush2.bf16.msra.mxu0 0
      %624 = vmatprep.subr.bf16.mxu0 0
      %625 = vmatpush2.bf16.msra.mxu0 0
      %626 = vmatprep.subr.bf16.mxu0 0
      %627 = vmatpush2.bf16.msra.mxu0 0
      %628 = vmatprep.subr.bf16.mxu0 0
      %629 = vmatpush2.bf16.msra.mxu0 0
      %630 = vmatprep.subr.bf16.mxu0 0
      %631 = vmatpush2.bf16.msra.mxu0 0
      %632 = vmatprep.subr.bf16.mxu0 0
      %633 = vmatpush2.bf16.msra.mxu0 0
      %634 = vmatprep.mubr.bf16.mxu0 0
      %635 = vmatmul.mubr.bf16.gmra.mxu0 %v600
      %v636 = vpop.f32.mrf.mxu0
      %v637 = vadd.f32 0.0, %v636
      %v638 = vpop.f32.mrf.mxu0
      %v639 = vpop.f32.mrf.mxu0
      %v640 = vadd.f32 0.0, %v639
      %v641 = vpop.f32.mrf.mxu0
      %642 = vdwg.mxu0
      %v643 = vpack.c.bf16 %v640, %v637
      %644 = vrot.lane.b32.xlu0 %v518, 120
      %v645 = vpop.permute.xlu0 %644
      %646 = vrot.lane.b32.xlu0 %v518, 88
      %v647 = vpop.permute.xlu0 %646
      %v649 = vsel %vm522, %v645, 0
      %v652 = vsel %vm522, %v647, 0
      %654 = vmatprep.subr.bf16.mxu0 0
      %655 = vmatpush1.bf16.xpose.msra.mxu0 0
      %656 = vmatprep.subr.bf16.mxu0 0
      %657 = vmatpush1.bf16.xpose.msra.mxu0 0
      %658 = vmatprep.subr.bf16.mxu0 0
      %659 = vmatpush1.bf16.xpose.msra.mxu0 0
      %660 = vmatprep.subr.bf16.mxu0 0
      %661 = vmatpush1.bf16.xpose.msra.mxu0 0
      %662 = vmatprep.subr.bf16.mxu0 0
      %663 = vmatpush1.bf16.xpose.msra.mxu0 0
      %664 = vmatprep.subr.bf16.mxu0 0
      %665 = vmatpush1.bf16.xpose.msra.mxu0 0
      %666 = vmatprep.subr.bf16.mxu0 0
      %667 = vmatpush1.bf16.xpose.msra.mxu0 0
      %668 = vmatprep.subr.bf16.mxu0 0
      %669 = vmatpush1.bf16.xpose.msra.mxu0 %v652
      %670 = vmatprep.subr.bf16.mxu0 0
      %671 = vmatpush2.bf16.xpose.msra.mxu0 0
      %672 = vmatprep.subr.bf16.mxu0 0
      %673 = vmatpush2.bf16.xpose.msra.mxu0 0
      %674 = vmatprep.subr.bf16.mxu0 0
      %675 = vmatpush2.bf16.xpose.msra.mxu0 0
      %676 = vmatprep.subr.bf16.mxu0 0
      %677 = vmatpush2.bf16.xpose.msra.mxu0 0
      %678 = vmatprep.subr.bf16.mxu0 0
      %679 = vmatpush2.bf16.xpose.msra.mxu0 0
      %680 = vmatprep.subr.bf16.mxu0 0
      %681 = vmatpush2.bf16.xpose.msra.mxu0 0
      %682 = vmatprep.subr.bf16.mxu0 0
      %683 = vmatpush2.bf16.xpose.msra.mxu0 0
      %684 = vmatprep.subr.bf16.mxu0 0
      %685 = vmatpush2.bf16.xpose.msra.mxu0 0
      %686 = vmatprep.mubr.bf16.mxu0 0
      %687 = vmatmul.mubr.bf16.gmra.mxu0 %v649
      %v688 = vpop.f32.mrf.mxu0
      %v689 = vadd.f32 0.0, %v688
      %v690 = vpop.f32.mrf.mxu0
      %v691 = vpop.f32.mrf.mxu0
      %v692 = vadd.f32 0.0, %v691
      %v693 = vpop.f32.mrf.mxu0
      %694 = vdwg.mxu0
      %v695 = vmul.f32 %v689, 0.35355338
      %v696 = vmul.f32 %v692, 0.35355338
      %v697 = vsel %vm572, %v695, -inf
      %698 = vmax.xlane.f32.xlu0 %v697
      %v699 = vpop.xlane.xlu0 %698
      %v700 = vsel %vm572, %v696, -inf
      %701 = vmax.xlane.f32.xlu0 %v700
      %v702 = vpop.xlane.xlu0 %701
      %v703 = vsub.f32 %v695, %v699
      %v704 = vsub.f32 %v696, %v702
      %v705 = vmul.f32 %v703, 1.442695
      %v706 = vpow.pop %v705
      %v707 = vmul.f32 %v704, 1.442695
      %v708 = vpow.pop %v707
      %v709 = vsel %vm572, %v706, 0.0
      %710 = vadd.xlane.f32.xlu0 %v709
      %v711 = vpop.xlane.xlu0 %710
      %v712 = vsel %vm572, %v708, 0.0
      %713 = vadd.xlane.f32.xlu0 %v712
      %v714 = vpop.xlane.xlu0 %713
      %v715 = vrcp.pop %v711
      %v716 = vrcp.pop %v714
      %v717 = vmul.f32 %v706, %v715
      %v718 = vmul.f32 %v708, %v716
      %v719 = vpack.c.bf16 %v718, %v717
      %720 = vrot.lane.b32.xlu0 %v518, 56
      %v721 = vpop.permute.xlu0 %720
      %v724 = vsel %vm572, %v719, 0
      %726 = vmatprep.subr.bf16.mxu0 0
      %727 = vmatpush1.bf16.msra.mxu0 0
      %728 = vmatprep.subr.bf16.mxu0 0
      %729 = vmatpush1.bf16.msra.mxu0 0
      %730 = vmatprep.subr.bf16.mxu0 0
      %731 = vmatpush1.bf16.msra.mxu0 0
      %732 = vmatprep.subr.bf16.mxu0 0
      %733 = vmatpush1.bf16.msra.mxu0 0
      %734 = vmatprep.subr.bf16.mxu0 0
      %735 = vmatpush1.bf16.msra.mxu0 0
      %736 = vmatprep.subr.bf16.mxu0 0
      %737 = vmatpush1.bf16.msra.mxu0 0
      %738 = vmatprep.subr.bf16.mxu0 0
      %739 = vmatpush1.bf16.msra.mxu0 0
      %740 = vmatprep.subr.bf16.mxu0 0
      %741 = vmatpush1.bf16.msra.mxu0 %v721
      %742 = vmatprep.subr.bf16.mxu0 0
      %743 = vmatpush2.bf16.msra.mxu0 0
      %744 = vmatprep.subr.bf16.mxu0 0
      %745 = vmatpush2.bf16.msra.mxu0 0
      %746 = vmatprep.subr.bf16.mxu0 0
      %747 = vmatpush2.bf16.msra.mxu0 0
      %748 = vmatprep.subr.bf16.mxu0 0
      %749 = vmatpush2.bf16.msra.mxu0 0
      %750 = vmatprep.subr.bf16.mxu0 0
      %751 = vmatpush2.bf16.msra.mxu0 0
      %752 = vmatprep.subr.bf16.mxu0 0
      %753 = vmatpush2.bf16.msra.mxu0 0
      %754 = vmatprep.subr.bf16.mxu0 0
      %755 = vmatpush2.bf16.msra.mxu0 0
      %756 = vmatprep.subr.bf16.mxu0 0
      %757 = vmatpush2.bf16.msra.mxu0 0
      %758 = vmatprep.mubr.bf16.mxu0 0
      %759 = vmatmul.mubr.bf16.gmra.mxu0 %v724
      %v760 = vpop.f32.mrf.mxu0
      %v761 = vadd.f32 0.0, %v760
      %v762 = vpop.f32.mrf.mxu0
      %v763 = vpop.f32.mrf.mxu0
      %v764 = vadd.f32 0.0, %v763
      %v765 = vpop.f32.mrf.mxu0
      %766 = vdwg.mxu0
      %v767 = vpack.c.bf16 %v764, %v761
      %v769 = vsel %vm522, %v767, 0
      %vm771 = vcmask 1043456
      %v773 = vsel %vm771, %v450, 0
      %775 = vmatprep.subr.bf16.mxu0 0
      %776 = vmatpush1.bf16.msra.mxu0 0
      %777 = vmatprep.subr.bf16.mxu0 0
      %778 = vmatpush1.bf16.msra.mxu0 0
      %779 = vmatprep.subr.bf16.mxu0 0
      %780 = vmatpush1.bf16.msra.mxu0 0
      %781 = vmatprep.subr.bf16.mxu0 0
      %782 = vmatpush1.bf16.msra.mxu0 0
      %783 = vmatprep.subr.bf16.mxu0 0
      %784 = vmatpush1.bf16.msra.mxu0 0
      %785 = vmatprep.subr.bf16.mxu0 0
      %786 = vmatpush1.bf16.msra.mxu0 0
      %787 = vmatprep.subr.bf16.mxu0 0
      %788 = vmatpush1.bf16.msra.mxu0 0
      %789 = vmatprep.subr.bf16.mxu0 0
      %790 = vmatpush1.bf16.msra.mxu0 %v773
      %791 = vmatprep.subr.bf16.mxu0 0
      %792 = vmatpush2.bf16.msra.mxu0 0
      %793 = vmatprep.subr.bf16.mxu0 0
      %794 = vmatpush2.bf16.msra.mxu0 0
      %795 = vmatprep.subr.bf16.mxu0 0
      %796 = vmatpush2.bf16.msra.mxu0 0
      %797 = vmatprep.subr.bf16.mxu0 0
      %798 = vmatpush2.bf16.msra.mxu0 0
      %799 = vmatprep.subr.bf16.mxu0 0
      %800 = vmatpush2.bf16.msra.mxu0 0
      %801 = vmatprep.subr.bf16.mxu0 0
      %802 = vmatpush2.bf16.msra.mxu0 0
      %803 = vmatprep.subr.bf16.mxu0 0
      %804 = vmatpush2.bf16.msra.mxu0 0
      %805 = vmatprep.subr.bf16.mxu0 0
      %806 = vmatpush2.bf16.msra.mxu0 0
      %807 = vmatprep.mubr.bf16.mxu0 0
      %808 = vmatmul.mubr.bf16.gmra.mxu0 %v769
      %v809 = vpop.f32.mrf.mxu0
      %v810 = vadd.f32 0.0, %v809
      %v811 = vpop.f32.mrf.mxu0
      %v812 = vpop.f32.mrf.mxu0
      %v813 = vadd.f32 0.0, %v812
      %v814 = vpop.f32.mrf.mxu0
      %815 = vdwg.mxu0
      %v817 = vsel %vm522, %v643, 0
      %v820 = vsel %vm771, %v449, 0
      %822 = vmatprep.subr.bf16.mxu0 0
      %823 = vmatpush1.bf16.msra.mxu0 0
      %824 = vmatprep.subr.bf16.mxu0 0
      %825 = vmatpush1.bf16.msra.mxu0 0
      %826 = vmatprep.subr.bf16.mxu0 0
      %827 = vmatpush1.bf16.msra.mxu0 0
      %828 = vmatprep.subr.bf16.mxu0 0
      %829 = vmatpush1.bf16.msra.mxu0 0
      %830 = vmatprep.subr.bf16.mxu0 0
      %831 = vmatpush1.bf16.msra.mxu0 0
      %832 = vmatprep.subr.bf16.mxu0 0
      %833 = vmatpush1.bf16.msra.mxu0 0
      %834 = vmatprep.subr.bf16.mxu0 0
      %835 = vmatpush1.bf16.msra.mxu0 0
      %836 = vmatprep.subr.bf16.mxu0 0
      %837 = vmatpush1.bf16.msra.mxu0 %v820
      %838 = vmatprep.subr.bf16.mxu0 0
      %839 = vmatpush2.bf16.msra.mxu0 0
      %840 = vmatprep.subr.bf16.mxu0 0
      %841 = vmatpush2.bf16.msra.mxu0 0
      %842 = vmatprep.subr.bf16.mxu0 0
      %843 = vmatpush2.bf16.msra.mxu0 0
      %844 = vmatprep.subr.bf16.mxu0 0
      %845 = vmatpush2.bf16.msra.mxu0 0
      %846 = vmatprep.subr.bf16.mxu0 0
      %847 = vmatpush2.bf16.msra.mxu0 0
      %848 = vmatprep.subr.bf16.mxu0 0
      %849 = vmatpush2.bf16.msra.mxu0 0
      %850 = vmatprep.subr.bf16.mxu0 0
      %851 = vmatpush2.bf16.msra.mxu0 0
      %852 = vmatprep.subr.bf16.mxu0 0
      %853 = vmatpush2.bf16.msra.mxu0 0
      %854 = vmatprep.mubr.bf16.mxu0 0
      %855 = vmatmul.mubr.bf16.gmra.mxu0 %v817
      %v856 = vpop.f32.mrf.mxu0
      %v857 = vadd.f32 %v810, %v856
      %v858 = vpop.f32.mrf.mxu0
      %v859 = vpop.f32.mrf.mxu0
      %v860 = vadd.f32 %v813, %v859
      %v861 = vpop.f32.mrf.mxu0
      %862 = vdwg.mxu0
      %863 = vrot.lane.b32.xlu0 %v518, 112
      %v864 = vpop.permute.xlu0 %863
      %865 = vrot.lane.b32.xlu0 %v518, 80
      %v866 = vpop.permute.xlu0 %865
      %v868 = vsel %vm522, %v864, 0
      %v871 = vsel %vm522, %v866, 0
      %873 = vmatprep.subr.bf16.mxu0 0
      %874 = vmatpush1.bf16.xpose.msra.mxu0 0
      %875 = vmatprep.subr.bf16.mxu0 0
      %876 = vmatpush1.bf16.xpose.msra.mxu0 0
      %877 = vmatprep.subr.bf16.mxu0 0
      %878 = vmatpush1.bf16.xpose.msra.mxu0 0
      %879 = vmatprep.subr.bf16.mxu0 0
      %880 = vmatpush1.bf16.xpose.msra.mxu0 0
      %881 = vmatprep.subr.bf16.mxu0 0
      %882 = vmatpush1.bf16.xpose.msra.mxu0 0
      %883 = vmatprep.subr.bf16.mxu0 0
      %884 = vmatpush1.bf16.xpose.msra.mxu0 0
      %885 = vmatprep.subr.bf16.mxu0 0
      %886 = vmatpush1.bf16.xpose.msra.mxu0 0
      %887 = vmatprep.subr.bf16.mxu0 0
      %888 = vmatpush1.bf16.xpose.msra.mxu0 %v871
      %889 = vmatprep.subr.bf16.mxu0 0
      %890 = vmatpush2.bf16.xpose.msra.mxu0 0
      %891 = vmatprep.subr.bf16.mxu0 0
      %892 = vmatpush2.bf16.xpose.msra.mxu0 0
      %893 = vmatprep.subr.bf16.mxu0 0
      %894 = vmatpush2.bf16.xpose.msra.mxu0 0
      %895 = vmatprep.subr.bf16.mxu0 0
      %896 = vmatpush2.bf16.xpose.msra.mxu0 0
      %897 = vmatprep.subr.bf16.mxu0 0
      %898 = vmatpush2.bf16.xpose.msra.mxu0 0
      %899 = vmatprep.subr.bf16.mxu0 0
      %900 = vmatpush2.bf16.xpose.msra.mxu0 0
      %901 = vmatprep.subr.bf16.mxu0 0
      %902 = vmatpush2.bf16.xpose.msra.mxu0 0
      %903 = vmatprep.subr.bf16.mxu0 0
      %904 = vmatpush2.bf16.xpose.msra.mxu0 0
      %905 = vmatprep.mubr.bf16.mxu0 0
      %906 = vmatmul.mubr.bf16.gmra.mxu0 %v868
      %v907 = vpop.f32.mrf.mxu0
      %v908 = vadd.f32 0.0, %v907
      %v909 = vpop.f32.mrf.mxu0
      %v910 = vpop.f32.mrf.mxu0
      %v911 = vadd.f32 0.0, %v910
      %v912 = vpop.f32.mrf.mxu0
      %913 = vdwg.mxu0
      %v914 = vmul.f32 %v908, 0.35355338
      %v915 = vmul.f32 %v911, 0.35355338
      %v916 = vsel %vm572, %v914, -inf
      %917 = vmax.xlane.f32.xlu0 %v916
      %v918 = vpop.xlane.xlu0 %917
      %v919 = vsel %vm572, %v915, -inf
      %920 = vmax.xlane.f32.xlu0 %v919
      %v921 = vpop.xlane.xlu0 %920
      %v922 = vsub.f32 %v914, %v918
      %v923 = vsub.f32 %v915, %v921
      %v924 = vmul.f32 %v922, 1.442695
      %v925 = vpow.pop %v924
      %v926 = vmul.f32 %v923, 1.442695
      %v927 = vpow.pop %v926
      %v928 = vsel %vm572, %v925, 0.0
      %929 = vadd.xlane.f32.xlu0 %v928
      %v930 = vpop.xlane.xlu0 %929
      %v931 = vsel %vm572, %v927, 0.0
      %932 = vadd.xlane.f32.xlu0 %v931
      %v933 = vpop.xlane.xlu0 %932
      %v934 = vrcp.pop %v930
      %v935 = vrcp.pop %v933
      %v936 = vmul.f32 %v925, %v934
      %v937 = vmul.f32 %v927, %v935
      %v938 = vpack.c.bf16 %v937, %v936
      %939 = vrot.lane.b32.xlu0 %v518, 48
      %v940 = vpop.permute.xlu0 %939
      %v943 = vsel %vm572, %v938, 0
      %945 = vmatprep.subr.bf16.mxu0 0
      %946 = vmatpush1.bf16.msra.mxu0 0
      %947 = vmatprep.subr.bf16.mxu0 0
      %948 = vmatpush1.bf16.msra.mxu0 0
      %949 = vmatprep.subr.bf16.mxu0 0
      %950 = vmatpush1.bf16.msra.mxu0 0
      %951 = vmatprep.subr.bf16.mxu0 0
      %952 = vmatpush1.bf16.msra.mxu0 0
      %953 = vmatprep.subr.bf16.mxu0 0
      %954 = vmatpush1.bf16.msra.mxu0 0
      %955 = vmatprep.subr.bf16.mxu0 0
      %956 = vmatpush1.bf16.msra.mxu0 0
      %957 = vmatprep.subr.bf16.mxu0 0
      %958 = vmatpush1.bf16.msra.mxu0 0
      %959 = vmatprep.subr.bf16.mxu0 0
      %960 = vmatpush1.bf16.msra.mxu0 %v940
      %961 = vmatprep.subr.bf16.mxu0 0
      %962 = vmatpush2.bf16.msra.mxu0 0
      %963 = vmatprep.subr.bf16.mxu0 0
      %964 = vmatpush2.bf16.msra.mxu0 0
      %965 = vmatprep.subr.bf16.mxu0 0
      %966 = vmatpush2.bf16.msra.mxu0 0
      %967 = vmatprep.subr.bf16.mxu0 0
      %968 = vmatpush2.bf16.msra.mxu0 0
      %969 = vmatprep.subr.bf16.mxu0 0
      %970 = vmatpush2.bf16.msra.mxu0 0
      %971 = vmatprep.subr.bf16.mxu0 0
      %972 = vmatpush2.bf16.msra.mxu0 0
      %973 = vmatprep.subr.bf16.mxu0 0
      %974 = vmatpush2.bf16.msra.mxu0 0
      %975 = vmatprep.subr.bf16.mxu0 0
      %976 = vmatpush2.bf16.msra.mxu0 0
      %977 = vmatprep.mubr.bf16.mxu0 0
      %978 = vmatmul.mubr.bf16.gmra.mxu0 %v943
      %v979 = vpop.f32.mrf.mxu0
      %v980 = vadd.f32 0.0, %v979
      %v981 = vpop.f32.mrf.mxu0
      %v982 = vpop.f32.mrf.mxu0
      %v983 = vadd.f32 0.0, %v982
      %v984 = vpop.f32.mrf.mxu0
      %985 = vdwg.mxu0
      %v986 = vpack.c.bf16 %v983, %v980
      %v988 = vsel %vm522, %v986, 0
      %v991 = vsel %vm771, %v451, 0
      %993 = vmatprep.subr.bf16.mxu0 0
      %994 = vmatpush1.bf16.msra.mxu0 0
      %995 = vmatprep.subr.bf16.mxu0 0
      %996 = vmatpush1.bf16.msra.mxu0 0
      %997 = vmatprep.subr.bf16.mxu0 0
      %998 = vmatpush1.bf16.msra.mxu0 0
      %999 = vmatprep.subr.bf16.mxu0 0
      %1000 = vmatpush1.bf16.msra.mxu0 0
      %1001 = vmatprep.subr.bf16.mxu0 0
      %1002 = vmatpush1.bf16.msra.mxu0 0
      %1003 = vmatprep.subr.bf16.mxu0 0
      %1004 = vmatpush1.bf16.msra.mxu0 0
      %1005 = vmatprep.subr.bf16.mxu0 0
      %1006 = vmatpush1.bf16.msra.mxu0 0
      %1007 = vmatprep.subr.bf16.mxu0 0
      %1008 = vmatpush1.bf16.msra.mxu0 %v991
      %1009 = vmatprep.subr.bf16.mxu0 0
      %1010 = vmatpush2.bf16.msra.mxu0 0
      %1011 = vmatprep.subr.bf16.mxu0 0
      %1012 = vmatpush2.bf16.msra.mxu0 0
      %1013 = vmatprep.subr.bf16.mxu0 0
      %1014 = vmatpush2.bf16.msra.mxu0 0
      %1015 = vmatprep.subr.bf16.mxu0 0
      %1016 = vmatpush2.bf16.msra.mxu0 0
      %1017 = vmatprep.subr.bf16.mxu0 0
      %1018 = vmatpush2.bf16.msra.mxu0 0
      %1019 = vmatprep.subr.bf16.mxu0 0
      %1020 = vmatpush2.bf16.msra.mxu0 0
      %1021 = vmatprep.subr.bf16.mxu0 0
      %1022 = vmatpush2.bf16.msra.mxu0 0
      %1023 = vmatprep.subr.bf16.mxu0 0
      %1024 = vmatpush2.bf16.msra.mxu0 0
      %1025 = vmatprep.mubr.bf16.mxu0 0
      %1026 = vmatmul.mubr.bf16.gmra.mxu0 %v988
      %v1027 = vpop.f32.mrf.mxu0
      %v1028 = vadd.f32 0.0, %v1027
      %v1029 = vpop.f32.mrf.mxu0
      %v1030 = vpop.f32.mrf.mxu0
      %v1031 = vadd.f32 0.0, %v1030
      %v1032 = vpop.f32.mrf.mxu0
      %1033 = vdwg.mxu0
      %v1034 = vadd.f32 %v857, %v1028
      %v1035 = vadd.f32 %v860, %v1031
      %1036 = vrot.lane.b32.xlu0 %v518, 104
      %v1037 = vpop.permute.xlu0 %1036
      %1038 = vrot.lane.b32.xlu0 %v518, 72
      %v1039 = vpop.permute.xlu0 %1038
      %v1041 = vsel %vm522, %v1037, 0
      %v1044 = vsel %vm522, %v1039, 0
      %1046 = vmatprep.subr.bf16.mxu0 0
      %1047 = vmatpush1.bf16.xpose.msra.mxu0 0
      %1048 = vmatprep.subr.bf16.mxu0 0
      %1049 = vmatpush1.bf16.xpose.msra.mxu0 0
      %1050 = vmatprep.subr.bf16.mxu0 0
      %1051 = vmatpush1.bf16.xpose.msra.mxu0 0
      %1052 = vmatprep.subr.bf16.mxu0 0
      %1053 = vmatpush1.bf16.xpose.msra.mxu0 0
      %1054 = vmatprep.subr.bf16.mxu0 0
      %1055 = vmatpush1.bf16.xpose.msra.mxu0 0
      %1056 = vmatprep.subr.bf16.mxu0 0
      %1057 = vmatpush1.bf16.xpose.msra.mxu0 0
      %1058 = vmatprep.subr.bf16.mxu0 0
      %1059 = vmatpush1.bf16.xpose.msra.mxu0 0
      %1060 = vmatprep.subr.bf16.mxu0 0
      %1061 = vmatpush1.bf16.xpose.msra.mxu0 %v1044
      %1062 = vmatprep.subr.bf16.mxu0 0
      %1063 = vmatpush2.bf16.xpose.msra.mxu0 0
      %1064 = vmatprep.subr.bf16.mxu0 0
      %1065 = vmatpush2.bf16.xpose.msra.mxu0 0
      %1066 = vmatprep.subr.bf16.mxu0 0
      %1067 = vmatpush2.bf16.xpose.msra.mxu0 0
      %1068 = vmatprep.subr.bf16.mxu0 0
      %1069 = vmatpush2.bf16.xpose.msra.mxu0 0
      %1070 = vmatprep.subr.bf16.mxu0 0
      %1071 = vmatpush2.bf16.xpose.msra.mxu0 0
      %1072 = vmatprep.subr.bf16.mxu0 0
      %1073 = vmatpush2.bf16.xpose.msra.mxu0 0
      %1074 = vmatprep.subr.bf16.mxu0 0
      %1075 = vmatpush2.bf16.xpose.msra.mxu0 0
      %1076 = vmatprep.subr.bf16.mxu0 0
      %1077 = vmatpush2.bf16.xpose.msra.mxu0 0
      %1078 = vmatprep.mubr.bf16.mxu0 0
      %1079 = vmatmul.mubr.bf16.gmra.mxu0 %v1041
      %v1080 = vpop.f32.mrf.mxu0
      %v1081 = vadd.f32 0.0, %v1080
      %v1082 = vpop.f32.mrf.mxu0
      %v1083 = vpop.f32.mrf.mxu0
      %v1084 = vadd.f32 0.0, %v1083
      %v1085 = vpop.f32.mrf.mxu0
      %1086 = vdwg.mxu0
      %v1087 = vmul.f32 %v1081, 0.35355338
      %v1088 = vmul.f32 %v1084, 0.35355338
      %v1089 = vsel %vm572, %v1087, -inf
      %1090 = vmax.xlane.f32.xlu0 %v1089
      %v1091 = vpop.xlane.xlu0 %1090
      %v1092 = vsel %vm572, %v1088, -inf
      %1093 = vmax.xlane.f32.xlu0 %v1092
      %v1094 = vpop.xlane.xlu0 %1093
      %v1095 = vsub.f32 %v1087, %v1091
      %v1096 = vsub.f32 %v1088, %v1094
      %v1097 = vmul.f32 %v1095, 1.442695
      %v1098 = vpow.pop %v1097
      %v1099 = vmul.f32 %v1096, 1.442695
      %v1100 = vpow.pop %v1099
      %v1101 = vsel %vm572, %v1098, 0.0
      %1102 = vadd.xlane.f32.xlu0 %v1101
      %v1103 = vpop.xlane.xlu0 %1102
      %v1104 = vsel %vm572, %v1100, 0.0
      %1105 = vadd.xlane.f32.xlu0 %v1104
      %v1106 = vpop.xlane.xlu0 %1105
      %v1107 = vrcp.pop %v1103
      %v1108 = vrcp.pop %v1106
      %v1109 = vmul.f32 %v1098, %v1107
      %v1110 = vmul.f32 %v1100, %v1108
      %v1111 = vpack.c.bf16 %v1110, %v1109
      %1112 = vrot.lane.b32.xlu0 %v518, 40
      %v1113 = vpop.permute.xlu0 %1112
      %v1116 = vsel %vm572, %v1111, 0
      %1118 = vmatprep.subr.bf16.mxu0 0
      %1119 = vmatpush1.bf16.msra.mxu0 0
      %1120 = vmatprep.subr.bf16.mxu0 0
      %1121 = vmatpush1.bf16.msra.mxu0 0
      %1122 = vmatprep.subr.bf16.mxu0 0
      %1123 = vmatpush1.bf16.msra.mxu0 0
      %1124 = vmatprep.subr.bf16.mxu0 0
      %1125 = vmatpush1.bf16.msra.mxu0 0
      %1126 = vmatprep.subr.bf16.mxu0 0
      %1127 = vmatpush1.bf16.msra.mxu0 0
      %1128 = vmatprep.subr.bf16.mxu0 0
      %1129 = vmatpush1.bf16.msra.mxu0 0
      %1130 = vmatprep.subr.bf16.mxu0 0
      %1131 = vmatpush1.bf16.msra.mxu0 0
      %1132 = vmatprep.subr.bf16.mxu0 0
      %1133 = vmatpush1.bf16.msra.mxu0 %v1113
      %1134 = vmatprep.subr.bf16.mxu0 0
      %1135 = vmatpush2.bf16.msra.mxu0 0
      %1136 = vmatprep.subr.bf16.mxu0 0
      %1137 = vmatpush2.bf16.msra.mxu0 0
      %1138 = vmatprep.subr.bf16.mxu0 0
      %1139 = vmatpush2.bf16.msra.mxu0 0
      %1140 = vmatprep.subr.bf16.mxu0 0
      %1141 = vmatpush2.bf16.msra.mxu0 0
      %1142 = vmatprep.subr.bf16.mxu0 0
      %1143 = vmatpush2.bf16.msra.mxu0 0
      %1144 = vmatprep.subr.bf16.mxu0 0
      %1145 = vmatpush2.bf16.msra.mxu0 0
      %1146 = vmatprep.subr.bf16.mxu0 0
      %1147 = vmatpush2.bf16.msra.mxu0 0
      %1148 = vmatprep.subr.bf16.mxu0 0
      %1149 = vmatpush2.bf16.msra.mxu0 0
      %1150 = vmatprep.mubr.bf16.mxu0 0
      %1151 = vmatmul.mubr.bf16.gmra.mxu0 %v1116
      %v1152 = vpop.f32.mrf.mxu0
      %v1153 = vadd.f32 0.0, %v1152
      %v1154 = vpop.f32.mrf.mxu0
      %v1155 = vpop.f32.mrf.mxu0
      %v1156 = vadd.f32 0.0, %v1155
      %v1157 = vpop.f32.mrf.mxu0
      %1158 = vdwg.mxu0
      %v1159 = vpack.c.bf16 %v1156, %v1153
      %v1161 = vsel %vm522, %v1159, 0
      %v1164 = vsel %vm771, %v452, 0
      %1166 = vmatprep.subr.bf16.mxu0 0
      %1167 = vmatpush1.bf16.msra.mxu0 0
      %1168 = vmatprep.subr.bf16.mxu0 0
      %1169 = vmatpush1.bf16.msra.mxu0 0
      %1170 = vmatprep.subr.bf16.mxu0 0
      %1171 = vmatpush1.bf16.msra.mxu0 0
      %1172 = vmatprep.subr.bf16.mxu0 0
      %1173 = vmatpush1.bf16.msra.mxu0 0
      %1174 = vmatprep.subr.bf16.mxu0 0
      %1175 = vmatpush1.bf16.msra.mxu0 0
      %1176 = vmatprep.subr.bf16.mxu0 0
      %1177 = vmatpush1.bf16.msra.mxu0 0
      %1178 = vmatprep.subr.bf16.mxu0 0
      %1179 = vmatpush1.bf16.msra.mxu0 0
      %1180 = vmatprep.subr.bf16.mxu0 0
      %1181 = vmatpush1.bf16.msra.mxu0 %v1164
      %1182 = vmatprep.subr.bf16.mxu0 0
      %1183 = vmatpush2.bf16.msra.mxu0 0
      %1184 = vmatprep.subr.bf16.mxu0 0
      %1185 = vmatpush2.bf16.msra.mxu0 0
      %1186 = vmatprep.subr.bf16.mxu0 0
      %1187 = vmatpush2.bf16.msra.mxu0 0
      %1188 = vmatprep.subr.bf16.mxu0 0
      %1189 = vmatpush2.bf16.msra.mxu0 0
      %1190 = vmatprep.subr.bf16.mxu0 0
      %1191 = vmatpush2.bf16.msra.mxu0 0
      %1192 = vmatprep.subr.bf16.mxu0 0
      %1193 = vmatpush2.bf16.msra.mxu0 0
      %1194 = vmatprep.subr.bf16.mxu0 0
      %1195 = vmatpush2.bf16.msra.mxu0 0
      %1196 = vmatprep.subr.bf16.mxu0 0
      %1197 = vmatpush2.bf16.msra.mxu0 0
      %1198 = vmatprep.mubr.bf16.mxu0 0
      %1199 = vmatmul.mubr.bf16.gmra.mxu0 %v1161
      %v1200 = vpop.f32.mrf.mxu0
      %v1201 = vadd.f32 0.0, %v1200
      %v1202 = vpop.f32.mrf.mxu0
      %v1203 = vpop.f32.mrf.mxu0
      %v1204 = vadd.f32 0.0, %v1203
      %v1205 = vpop.f32.mrf.mxu0
      %1206 = vdwg.mxu0
      %v1207 = vadd.f32 %v1034, %v1201
      %v1208 = vadd.f32 %v1035, %v1204
      %v1210 = vlaneseq
      %v1211 = vshrl.u32 %v1210, 7
      %v1212 = vsub.s32 0, %v1211
      %v1213 = vrot.slane %v453, %v1212
      %v1215 = vadd.f32 %v1207, %v1213
      %v1216 = vadd.f32 %v1208, %v1213
      %v1217 = vadd.f32 %v442, %v1215
      %v1218 = vadd.f32 %v443, %v1216
      %v1219 = vld [vmem:[%s5] sm:$0x1]
      %v1220 = vld [vmem:[%s6] sm:$0x1]
      %v1221 = vsel %vm473, %v1217, 0.0
      %1222 = vadd.xlane.f32.xlu0 %v1221
      %v1223 = vpop.xlane.xlu0 %1222
      %v1224 = vsel %vm473, %v1218, 0.0
      %1225 = vadd.xlane.f32.xlu0 %v1224
      %v1226 = vpop.xlane.xlu0 %1225
      %v1227 = vrcp.pop 32.0
      %v1228 = vmul.f32 %v1223, %v1227
      %v1229 = vmul.f32 %v1226, %v1227
      %v1230 = vsub.f32 %v1217, %v1228
      %v1231 = vsub.f32 %v1218, %v1229
      %v1232 = vmul.f32 %v1230, %v1230
      %v1233 = vmul.f32 %v1231, %v1231
      %v1234 = vsel %vm473, %v1232, 0.0
      %1235 = vadd.xlane.f32.xlu0 %v1234
      %v1236 = vpop.xlane.xlu0 %1235
      %v1237 = vsel %vm473, %v1233, 0.0
      %1238 = vadd.xlane.f32.xlu0 %v1237
      %v1239 = vpop.xlane.xlu0 %1238
      %v1240 = vmul.f32 %v1236, %v1227
      %v1241 = vmul.f32 %v1239, %v1227
      %v1242 = vadd.f32 %v1240, 1e-05
      %v1243 = vadd.f32 %v1241, 1e-05
      %v1244 = vrsqrt.pop %v1242
      %v1245 = vrsqrt.pop %v1243
      %v1246 = vmul.f32 %v1230, %v1244
      %v1247 = vmul.f32 %v1231, %v1245
      %v1249 = vlaneseq
      %v1250 = vshrl.u32 %v1249, 7
      %v1251 = vsub.s32 0, %v1250
      %v1252 = vrot.slane %v1219, %v1251
      %v1254 = vmul.f32 %v1246, %v1252
      %v1255 = vmul.f32 %v1247, %v1252
      %v1257 = vlaneseq
      %v1258 = vshrl.u32 %v1257, 7
      %v1259 = vsub.s32 0, %v1258
      %v1260 = vrot.slane %v1220, %v1259
      %v1262 = vadd.f32 %v1254, %v1260
      %v1263 = vadd.f32 %v1255, %v1260
      %v1264 = vld [vmem:[%s7] sm:$0xf]
      %v1265 = vld [vmem:[%s7 + $0x4] sm:$0xf]
      %v1266 = vld [vmem:[%s7 + $0x8] sm:$0xf]
      %v1267 = vld [vmem:[%s7 + $0xc] sm:$0xf]
      %v1268 = vld [vmem:[%s8] sm:$0x1]
      %v1269 = vld [vmem:[%s9] sm:$0xf]
      %v1270 = vld [vmem:[%s9 + $0x4] sm:$0xf]
      %v1271 = vld [vmem:[%s9 + $0x8] sm:$0xf]
      %v1272 = vld [vmem:[%s9 + $0xc] sm:$0xf]
      %v1273 = vld [vmem:[%s9 + $0x10] sm:$0xf]
      %v1274 = vld [vmem:[%s9 + $0x14] sm:$0xf]
      %v1275 = vld [vmem:[%s9 + $0x18] sm:$0xf]
      %v1276 = vld [vmem:[%s9 + $0x1c] sm:$0xf]
      %v1277 = vld [vmem:[%s10] sm:$0x1]
      %v1278 = vpack.c.bf16 %v1263, %v1262
      %v1280 = vlaneseq
      %v1281 = vshrl.u32 %v1280, 7
      %v1282 = vsub.s32 0, %v1281
      %v1283 = vrot.slane %v1268, %v1282
      %v1289 = vunpack.c.l.b16 %v1264
      %v1290 = vunpack.c.l.b16 %v1265
      %v1291 = vunpack.c.l.b16 %v1266
      %v1292 = vunpack.c.l.b16 %v1267
      %v1293 = vpack.c.b16 %v1290, %v1289
      %v1294 = vpack.c.b16 %v1292, %v1291
      %v1298 = vsel %vm473, %v1278, 0
      %1300 = vmatprep.subr.bf16.mxu0 0
      %1301 = vmatpush1.bf16.msra.mxu0 0
      %1302 = vmatprep.subr.bf16.mxu0 0
      %1303 = vmatpush1.bf16.msra.mxu0 0
      %1304 = vmatprep.subr.bf16.mxu0 0
      %1305 = vmatpush1.bf16.msra.mxu0 0
      %1306 = vmatprep.subr.bf16.mxu0 0
      %1307 = vmatpush1.bf16.msra.mxu0 0
      %1308 = vmatprep.subr.bf16.mxu0 0
      %1309 = vmatpush1.bf16.msra.mxu0 0
      %1310 = vmatprep.subr.bf16.mxu0 0
      %1311 = vmatpush1.bf16.msra.mxu0 0
      %1312 = vmatprep.subr.bf16.mxu0 0
      %1313 = vmatpush1.bf16.msra.mxu0 %v1294
      %1314 = vmatprep.subr.bf16.mxu0 0
      %1315 = vmatpush1.bf16.msra.mxu0 %v1293
      %1316 = vmatprep.subr.bf16.mxu0 0
      %1317 = vmatpush2.bf16.msra.mxu0 0
      %1318 = vmatprep.subr.bf16.mxu0 0
      %1319 = vmatpush2.bf16.msra.mxu0 0
      %1320 = vmatprep.subr.bf16.mxu0 0
      %1321 = vmatpush2.bf16.msra.mxu0 0
      %1322 = vmatprep.subr.bf16.mxu0 0
      %1323 = vmatpush2.bf16.msra.mxu0 0
      %1324 = vmatprep.subr.bf16.mxu0 0
      %1325 = vmatpush2.bf16.msra.mxu0 0
      %1326 = vmatprep.subr.bf16.mxu0 0
      %1327 = vmatpush2.bf16.msra.mxu0 0
      %1328 = vmatprep.subr.bf16.mxu0 0
      %1329 = vmatpush2.bf16.msra.mxu0 0
      %1330 = vmatprep.subr.bf16.mxu0 0
      %1331 = vmatpush2.bf16.msra.mxu0 0
      %1332 = vmatprep.mubr.bf16.mxu0 0
      %1333 = vmatmul.mubr.bf16.gmra.mxu0 %v1298
      %v1334 = vpop.f32.mrf.mxu0
      %v1335 = vadd.f32 %v1283, %v1334
      %v1336 = vpop.f32.mrf.mxu0
      %v1337 = vpop.f32.mrf.mxu0
      %v1338 = vadd.f32 %v1283, %v1337
      %v1339 = vpop.f32.mrf.mxu0
      %1340 = vdwg.mxu0
      %v1341 = vmul.f32 %v1335, 0.5
      %v1342 = vmul.f32 %v1338, 0.5
      %v1343 = vmul.f32 %v1335, 0.70710677
      %v1344 = vmul.f32 %v1338, 0.70710677
      %vm1345 = vcmp.ge.f32.partialorder %v1343, 0.0
      %vm1346 = vcmp.ge.f32.partialorder %v1344, 0.0
      %v1347 = vsel %vm1345, 1.0, -1.0
      %v1348 = vsel %vm1346, 1.0, -1.0
      %v1349 = vand.u32 2147483647, %v1343
      %v1350 = vand.u32 2147483647, %v1344
      %v1351 = vmul.f32 %v1349, 0.3275911
      %v1352 = vmul.f32 %v1350, 0.3275911
      %v1353 = vadd.f32 %v1351, 1.0
      %v1354 = vadd.f32 %v1352, 1.0
      %v1355 = vrcp.pop %v1353
      %v1356 = vmul.f32 1.0, %v1355
      %v1357 = vrcp.pop %v1354
      %v1358 = vmul.f32 1.0, %v1357
      %v1359 = vmul.f32 %v1356, 1.0614054
      %v1360 = vmul.f32 %v1358, 1.0614054
      %v1361 = vadd.f32 %v1359, -1.4531521
      %v1362 = vadd.f32 %v1360, -1.4531521
      %v1363 = vmul.f32 %v1361, %v1356
      %v1364 = vmul.f32 %v1362, %v1358
      %v1365 = vadd.f32 %v1363, 1.4214138
      %v1366 = vadd.f32 %v1364, 1.4214138
      %v1367 = vmul.f32 %v1365, %v1356
      %v1368 = vmul.f32 %v1366, %v1358
      %v1369 = vadd.f32 %v1367, -0.28449672
      %v1370 = vadd.f32 %v1368, -0.28449672
      %v1371 = vmul.f32 %v1369, %v1356
      %v1372 = vmul.f32 %v1370, %v1358
      %v1373 = vadd.f32 %v1371, 0.2548296
      %v1374 = vadd.f32 %v1372, 0.2548296
      %v1375 = vmul.f32 %v1373, %v1356
      %v1376 = vmul.f32 %v1374, %v1358
      %v1377 = vsub.f32 0.0, %v1349
      %v1378 = vsub.f32 0.0, %v1350
      %v1379 = vmul.f32 %v1377, %v1349
      %v1380 = vmul.f32 %v1378, %v1350
      %v1381 = vmul.f32 %v1379, 1.442695
      %v1382 = vpow.pop %v1381
      %v1383 = vmul.f32 %v1380, 1.442695
      %v1384 = vpow.pop %v1383
      %v1385 = vmul.f32 %v1375, %v1382
      %v1386 = vmul.f32 %v1376, %v1384
      %v1387 = vsub.f32 1.0, %v1385
      %v1388 = vsub.f32 1.0, %v1386
      %v1389 = vmul.f32 %v1347, %v1387
      %v1390 = vmul.f32 %v1348, %v1388
      %v1391 = vadd.f32 %v1389, 1.0
      %v1392 = vadd.f32 %v1390, 1.0
      %v1393 = vmul.f32 %v1341, %v1391
      %v1394 = vmul.f32 %v1342, %v1392
      %v1395 = vpack.c.bf16 %v1394, %v1393
      %v1397 = vlaneseq
      %v1398 = vshrl.u32 %v1397, 7
      %v1399 = vsub.s32 0, %v1398
      %v1400 = vrot.slane %v1277, %v1399
      %v1410 = vunpack.c.l.b16 %v1269
      %v1411 = vunpack.c.l.b16 %v1270
      %v1412 = vunpack.c.l.b16 %v1271
      %v1413 = vunpack.c.l.b16 %v1272
      %v1414 = vunpack.c.l.b16 %v1273
      %v1415 = vunpack.c.l.b16 %v1274
      %v1416 = vunpack.c.l.b16 %v1275
      %v1417 = vunpack.c.l.b16 %v1276
      %v1418 = vpack.c.b16 %v1411, %v1410
      %v1419 = vpack.c.b16 %v1413, %v1412
      %v1420 = vpack.c.b16 %v1415, %v1414
      %v1421 = vpack.c.b16 %v1417, %v1416
      %vm1426 = vcmask 523264
      %v1428 = vsel %vm1426, %v1395, 0
      %1430 = vmatprep.subr.bf16.mxu0 0
      %1431 = vmatpush1.bf16.msra.mxu0 0
      %1432 = vmatprep.subr.bf16.mxu0 0
      %1433 = vmatpush1.bf16.msra.mxu0 0
      %1434 = vmatprep.subr.bf16.mxu0 0
      %1435 = vmatpush1.bf16.msra.mxu0 0
      %1436 = vmatprep.subr.bf16.mxu0 0
      %1437 = vmatpush1.bf16.msra.mxu0 0
      %1438 = vmatprep.subr.bf16.mxu0 0
      %1439 = vmatpush1.bf16.msra.mxu0 %v1421
      %1440 = vmatprep.subr.bf16.mxu0 0
      %1441 = vmatpush1.bf16.msra.mxu0 %v1420
      %1442 = vmatprep.subr.bf16.mxu0 0
      %1443 = vmatpush1.bf16.msra.mxu0 %v1419
      %1444 = vmatprep.subr.bf16.mxu0 0
      %1445 = vmatpush1.bf16.msra.mxu0 %v1418
      %1446 = vmatprep.subr.bf16.mxu0 0
      %1447 = vmatpush2.bf16.msra.mxu0 0
      %1448 = vmatprep.subr.bf16.mxu0 0
      %1449 = vmatpush2.bf16.msra.mxu0 0
      %1450 = vmatprep.subr.bf16.mxu0 0
      %1451 = vmatpush2.bf16.msra.mxu0 0
      %1452 = vmatprep.subr.bf16.mxu0 0
      %1453 = vmatpush2.bf16.msra.mxu0 0
      %1454 = vmatprep.subr.bf16.mxu0 0
      %1455 = vmatpush2.bf16.msra.mxu0 0
      %1456 = vmatprep.subr.bf16.mxu0 0
      %1457 = vmatpush2.bf16.msra.mxu0 0
      %1458 = vmatprep.subr.bf16.mxu0 0
      %1459 = vmatpush2.bf16.msra.mxu0 0
      %1460 = vmatprep.subr.bf16.mxu0 0
      %1461 = vmatpush2.bf16.msra.mxu0 0
      %1462 = vmatprep.mubr.bf16.mxu0 0
      %1463 = vmatmul.mubr.bf16.gmra.mxu0 %v1428
      %v1464 = vpop.f32.mrf.mxu0
      %v1465 = vadd.f32 %v1400, %v1464
      %v1466 = vpop.f32.mrf.mxu0
      %v1467 = vpop.f32.mrf.mxu0
      %v1468 = vadd.f32 %v1400, %v1467
      %v1469 = vpop.f32.mrf.mxu0
      %1470 = vdwg.mxu0
      %v1471 = vadd.f32 %v1262, %v1465
      %v1472 = vadd.f32 %v1263, %v1468
      %v1473 = vld [vmem:[%s11] sm:$0x1]
      %v1474 = vld [vmem:[%s12] sm:$0x1]
      %v1475 = vsel %vm473, %v1471, 0.0
      %1476 = vadd.xlane.f32.xlu0 %v1475
      %v1477 = vpop.xlane.xlu0 %1476
      %v1478 = vsel %vm473, %v1472, 0.0
      %1479 = vadd.xlane.f32.xlu0 %v1478
      %v1480 = vpop.xlane.xlu0 %1479
      %v1481 = vmul.f32 %v1477, %v1227
      %v1482 = vmul.f32 %v1480, %v1227
      %v1483 = vsub.f32 %v1471, %v1481
      %v1484 = vsub.f32 %v1472, %v1482
      %v1485 = vmul.f32 %v1483, %v1483
      %v1486 = vmul.f32 %v1484, %v1484
      %v1487 = vsel %vm473, %v1485, 0.0
      %1488 = vadd.xlane.f32.xlu0 %v1487
      %v1489 = vpop.xlane.xlu0 %1488
      %v1490 = vsel %vm473, %v1486, 0.0
      %1491 = vadd.xlane.f32.xlu0 %v1490
      %v1492 = vpop.xlane.xlu0 %1491
      %v1493 = vmul.f32 %v1489, %v1227
      %v1494 = vmul.f32 %v1492, %v1227
      %v1495 = vadd.f32 %v1493, 1e-05
      %v1496 = vadd.f32 %v1494, 1e-05
      %v1497 = vrsqrt.pop %v1495
      %v1498 = vrsqrt.pop %v1496
      %v1499 = vmul.f32 %v1483, %v1497
      %v1500 = vmul.f32 %v1484, %v1498
      %v1502 = vlaneseq
      %v1503 = vshrl.u32 %v1502, 7
      %v1504 = vsub.s32 0, %v1503
      %v1505 = vrot.slane %v1473, %v1504
      %v1507 = vmul.f32 %v1499, %v1505
      %v1508 = vmul.f32 %v1500, %v1505
      %v1510 = vlaneseq
      %v1511 = vshrl.u32 %v1510, 7
      %v1512 = vsub.s32 0, %v1511
      %v1513 = vrot.slane %v1474, %v1512
      %v1515 = vadd.f32 %v1507, %v1513
      %v1516 = vadd.f32 %v1508, %v1513
      %1517 = vst.msk [vmem:[%s440] sm:$0xff] %vm473, %v1515
      %1518 = vst.msk [vmem:[%s440 + $0x8] sm:$0xff] %vm473, %v1516
      %p1519 = scmp.lt.s32.totalorder %s24, 1
      %s1520 = scalar_select %p1519, %s24, 1
      %s1521 = smul.addr %s1520, 2
      %s1522 = smul.addr %s1521, 8
      %s1523 = scalar_lea.vmem %s13, %s1522
      // Predicated region
      $region73: #{pathformer_forward.6} parent=71 // pred_check
        %p1524 = pneg %p320
      $region74: #{pathformer_forward.6} parent=71 // pred_check_branch
        %1526 = sbr.rel (%p1524) target = $region76
      $region75: #{pathformer_forward.6} parent=71 // pred_region
        _
      $region76: #{pathformer_forward.6} parent=71 // pred_fallthru
        _
    $region72: #{pathformer_forward.6} parent=5 // pred_fallthru
      _
    %p1527 = scmp.le.s32.totalorder 2, %s19
    // Predicated region
    $region77: #{pathformer_forward.6} parent=5 // pred_check
      %p1528 = pneg %p1527
    $region78: #{pathformer_forward.6} parent=5 // pred_check_branch
      %1530 = sbr.rel (%p1528) target = $region80
    $region79: #{pathformer_forward.6} parent=5 // pred_region
      %s1531 = ssub.s32 %s19, 2
      // Predicated region
      $region81: #{pathformer_forward.6} parent=79 // pred_check
        %p1532 = pneg %p326
      $region82: #{pathformer_forward.6} parent=79 // pred_check_branch
        %1534 = sbr.rel (%p1532) target = $region84
      $region83: #{pathformer_forward.6} parent=79 // pred_region
        %p1535 = scmp.lt.s32.totalorder %s25, 1
        %s1536 = scalar_select %p1535, %s25, 1
        %s1537 = smul.addr %s1536, 2
        %s1538 = smul.addr %s1537, 8
        %s1539 = scalar_lea.vmem %s13, %s1538
      $region84: #{pathformer_forward.6} parent=79 // pred_fallthru
        _
    $region80: #{pathformer_forward.6} parent=5 // pred_fallthru
      _
  $region6: #{pathformer_forward.6} parent=0 // loop_footer
    %s23 = sadd.s32 1, %s19
  $region7: #{pathformer_forward.6} parent=0 // loop_footer_branch
    %18 = sbr.rel target = $region3
  $region8: #{pathformer_forward.6} parent=0 // loop_exit
    _

// kernel: pathformer_forward.7
$region0: #{pathformer_forward.7}
  #allocation0 [shape = 'u32[]', space=smem, size = 0x4, offset = 0x4, fixed_abs, tag = 'smem constant byte address 0x4 - core index']
  #allocation1 [shape = 'u32[144,128]{1,0:T(1,128)}', space=vmem, size = 0x12000, scoped, tag = 'internal scratch']
  %s0 = inlined_call_operand.vmem [shape: f32[1,32], index: 0, kind: input, shape index: {}]
  %s1 = inlined_call_operand.vmem [shape: f32[2,16,32], index: 1, kind: input, shape index: {}]
  %s2 = inlined_call_operand.vmem [shape: bf16[32,32], index: 2, kind: input, shape index: {}]
  %s3 = inlined_call_operand.vmem [shape: f32[1,32], index: 3, kind: input, shape index: {}]
  %s4 = inlined_call_operand.vmem [shape: bf16[32,96], index: 4, kind: input, shape index: {}]
  %s5 = inlined_call_operand.vmem [shape: f32[1,96], index: 5, kind: input, shape index: {}]
  %s6 = inlined_call_operand.vmem [shape: bf16[32,32], index: 6, kind: input, shape index: {}]
  %s7 = inlined_call_operand.vmem [shape: f32[1,32], index: 7, kind: input, shape index: {}]
  %s8 = inlined_call_operand.vmem [shape: f32[1,32], index: 8, kind: input, shape index: {}]
  %s9 = inlined_call_operand.vmem [shape: f32[1,32], index: 9, kind: input, shape index: {}]
  %s10 = inlined_call_operand.vmem [shape: bf16[32,64], index: 10, kind: input, shape index: {}]
  %s11 = inlined_call_operand.vmem [shape: f32[1,64], index: 11, kind: input, shape index: {}]
  %s12 = inlined_call_operand.vmem [shape: bf16[64,32], index: 12, kind: input, shape index: {}]
  %s13 = inlined_call_operand.vmem [shape: f32[1,32], index: 13, kind: input, shape index: {}]
  %s14 = inlined_call_operand.vmem [shape: f32[1,32], index: 14, kind: input, shape index: {}]
  %s15 = inlined_call_operand.vmem [shape: f32[1,32], index: 15, kind: input, shape index: {}]
  %s16 = inlined_call_operand.vmem [shape: bf16[32,8], index: 16, kind: input, shape index: {}]
  %s17 = inlined_call_operand.vmem [shape: f32[1,8], index: 17, kind: input, shape index: {}]
  %s18 = inlined_call_operand.hbm [shape: f32[2,1,8], index: 18, kind: output, shape index: {}]
  %s19 = sld [smem:[#allocation0]]
  $region105: #{pathformer_forward.7} parent=0
    _
  %s21 = ssub.s32 1, %s19
  %s22 = scalar_select 0, %s21, %s19
  $region1: #{pathformer_forward.7} parent=0
    #allocation2 [shape = 'u8[1024]{0}', space=vmem, size = 0x400, scoped, tag = 'output window, operand 0']
    #allocation3 [shape = 's32[2]{0}', space=sflag, size = 0x8, scoped, tag = 'scoped memory for pathformer_forward.7']
    %23 = vsyncpa [#allocation3], 0
    %s24 = scalar_lea.sflag [#allocation3], 1
    %25 = vsyncpa %s24, 0
    loop: start=0, step=1, limit=4
    $region2: #{pathformer_forward.7} parent=1 // loop_pre_header
      _
    $region3: #{pathformer_forward.7} parent=1 // loop_header
      %s27 = sphi 0, %s31
      %p28 = scmp.ge.s32.totalorder %s27, 4
      %s35 = sphi 0, %s35
      %s37 = sphi 0, %s35
      %s38 = sphi 0, %s37
      %s52 = sphi 0, %s38
      %s58 = sphi 0, %s60
      %s61 = sphi 0, %s58
      %s62 = sphi 0, %s61
      %s78 = sphi 0, %s62
      %s82 = sphi 0, %s82
      %s84 = sphi 0, %s82
      %s85 = sphi 0, %s84
      %s99 = sphi 0, %s85
      %s103 = sphi 0, %s103
      %s105 = sphi 0, %s103
      %s106 = sphi 0, %s105
      %s120 = sphi 0, %s106
      %s124 = sphi 0, %s124
      %s126 = sphi 0, %s124
      %s127 = sphi 0, %s126
      %s141 = sphi 0, %s127
      %s145 = sphi 0, %s145
      %s147 = sphi 0, %s145
      %s148 = sphi 0, %s147
      %s162 = sphi 0, %s148
      %s166 = sphi 0, %s166
      %s168 = sphi 0, %s166
      %s169 = sphi 0, %s168
      %s183 = sphi 0, %s169
      %s187 = sphi 0, %s187
      %s189 = sphi 0, %s187
      %s190 = sphi 0, %s189
      %s204 = sphi 0, %s190
      %s208 = sphi 0, %s208
      %s210 = sphi 0, %s208
      %s211 = sphi 0, %s210
      %s225 = sphi 0, %s211
      %s229 = sphi 0, %s229
      %s231 = sphi 0, %s229
      %s232 = sphi 0, %s231
      %s246 = sphi 0, %s232
      %s250 = sphi 0, %s250
      %s252 = sphi 0, %s250
      %s253 = sphi 0, %s252
      %s267 = sphi 0, %s253
      %s271 = sphi 0, %s271
      %s273 = sphi 0, %s271
      %s274 = sphi 0, %s273
      %s288 = sphi 0, %s274
      %s292 = sphi 0, %s292
      %s294 = sphi 0, %s292
      %s295 = sphi 0, %s294
      %s309 = sphi 0, %s295
      %s313 = sphi 0, %s313
      %s315 = sphi 0, %s313
      %s316 = sphi 0, %s315
      %s330 = sphi 0, %s316
      %s334 = sphi 0, %s334
      %s336 = sphi 0, %s334
      %s337 = sphi 0, %s336
      %s351 = sphi 0, %s337
      %s355 = sphi 0, %s355
      %s357 = sphi 0, %s355
      %s358 = sphi 0, %s357
      %s372 = sphi 0, %s358
      %s376 = sphi 0, %s376
      %s378 = sphi 0, %s376
      %s379 = sphi 0, %s378
      %s393 = sphi 0, %s379
      %s397 = sphi 0, %s397
      %s399 = sphi 0, %s397
      %s400 = sphi 0, %s399
      %s414 = sphi 0, %s400
      %s420 = sphi 0, %s422
      %s423 = sphi 0, %s420
      %s424 = sphi 0, %s423
      %s440 = sphi 0, %s424
    $region4: #{pathformer_forward.7} parent=1 // loop_header_branch
      %30 = sbr.rel (%p28) target = $region8
    $region5: #{pathformer_forward.7} parent=1 // loop_body
      %s32 = ssub.s32 %s27, 1
      %s33 = ssub.s32 %s27, 2
      %s34 = sadd.s32 %s27, 1
      %s36 = sadd.s32 %s35, 1
      %p39 = scmp.eq.s32.totalorder %s27, 1
      %p40 = scmp.ne.s32.totalorder %s35, %s37
      %p41 = scmp.eq.s32.totalorder %s27, 0
      %p42 = por %p40, %p41
      %p43 = scmp.ne.s32.totalorder %s35, %s37
      %p44 = scmp.eq.s32.totalorder %s32, 1
      %p45 = por %p43, %p44
      %p46 = scmp.ne.s32.totalorder %s37, %s38
      %p47 = scmp.eq.s32.totalorder %s32, 0
      %p48 = por %p46, %p47
      %p49 = scmp.ne.s32.totalorder %s37, %s38
      %p50 = scmp.eq.s32.totalorder %s33, 1
      %p51 = por %p49, %p50
      %p53 = scmp.ne.s32.totalorder %s38, %s52
      %p54 = scmp.eq.s32.totalorder %s33, 0
      %p55 = por %p53, %p54
      %s56 = ssub.s32 %s27, %s34
      %p57 = scmp.eq.s32.totalorder %s56, 0
      %s59 = sadd.s32 %s58, 1
      %s60 = scalar_select %p57, %s58, %s59
      %p63 = pneg %p57
      %p64 = scmp.eq.s32.totalorder %s27, 1
      %p65 = por %p63, %p64
      %p66 = scmp.ne.s32.totalorder %s58, %s61
      %p67 = scmp.eq.s32.totalorder %s27, 0
      %p68 = por %p66, %p67
      %p69 = scmp.ne.s32.totalorder %s58, %s61
      %p70 = scmp.eq.s32.totalorder %s32, 1
      %p71 = por %p69, %p70
      %p72 = scmp.ne.s32.totalorder %s61, %s62
      %p73 = scmp.eq.s32.totalorder %s32, 0
      %p74 = por %p72, %p73
      %p75 = scmp.ne.s32.totalorder %s61, %s62
      %p76 = scmp.eq.s32.totalorder %s33, 1
      %p77 = por %p75, %p76
      %p79 = scmp.ne.s32.totalorder %s62, %s78
      %p80 = scmp.eq.s32.totalorder %s33, 0
      %p81 = por %p79, %p80
      %s83 = sadd.s32 %s82, 1
      %p86 = scmp.eq.s32.totalorder %s27, 1
      %p87 = scmp.ne.s32.totalorder %s82, %s84
      %p88 = scmp.eq.s32.totalorder %s27, 0
      %p89 = por %p87, %p88
      %p90 = scmp.ne.s32.totalorder %s82, %s84
      %p91 = scmp.eq.s32.totalorder %s32, 1
      %p92 = por %p90, %p91
      %p93 = scmp.ne.s32.totalorder %s84, %s85
      %p94 = scmp.eq.s32.totalorder %s32, 0
      %p95 = por %p93, %p94
      %p96 = scmp.ne.s32.totalorder %s84, %s85
      %p97 = scmp.eq.s32.totalorder %s33, 1
      %p98 = por %p96, %p97
      %p100 = scmp.ne.s32.totalorder %s85, %s99
      %p101 = scmp.eq.s32.totalorder %s33, 0
      %p102 = por %p100, %p101
      %s104 = sadd.s32 %s103, 1
      %p107 = scmp.eq.s32.totalorder %s27, 1
      %p108 = scmp.ne.s32.totalorder %s103, %s105
      %p109 = scmp.eq.s32.totalorder %s27, 0
      %p110 = por %p108, %p109
      %p111 = scmp.ne.s32.totalorder %s103, %s105
      %p112 = scmp.eq.s32.totalorder %s32, 1
      %p113 = por %p111, %p112
      %p114 = scmp.ne.s32.totalorder %s105, %s106
      %p115 = scmp.eq.s32.totalorder %s32, 0
      %p116 = por %p114, %p115
      %p117 = scmp.ne.s32.totalorder %s105, %s106
      %p118 = scmp.eq.s32.totalorder %s33, 1
      %p119 = por %p117, %p118
      %p121 = scmp.ne.s32.totalorder %s106, %s120
      %p122 = scmp.eq.s32.totalorder %s33, 0
      %p123 = por %p121, %p122
      %s125 = sadd.s32 %s124, 1
      %p128 = scmp.eq.s32.totalorder %s27, 1
      %p129 = scmp.ne.s32.totalorder %s124, %s126
      %p130 = scmp.eq.s32.totalorder %s27, 0
      %p131 = por %p129, %p130
      %p132 = scmp.ne.s32.totalorder %s124, %s126
      %p133 = scmp.eq.s32.totalorder %s32, 1
      %p134 = por %p132, %p133
      %p135 = scmp.ne.s32.totalorder %s126, %s127
      %p136 = scmp.eq.s32.totalorder %s32, 0
      %p137 = por %p135, %p136
      %p138 = scmp.ne.s32.totalorder %s126, %s127
      %p139 = scmp.eq.s32.totalorder %s33, 1
      %p140 = por %p138, %p139
      %p142 = scmp.ne.s32.totalorder %s127, %s141
      %p143 = scmp.eq.s32.totalorder %s33, 0
      %p144 = por %p142, %p143
      %s146 = sadd.s32 %s145, 1
      %p149 = scmp.eq.s32.totalorder %s27, 1
      %p150 = scmp.ne.s32.totalorder %s145, %s147
      %p151 = scmp.eq.s32.totalorder %s27, 0
      %p152 = por %p150, %p151
      %p153 = scmp.ne.s32.totalorder %s145, %s147
      %p154 = scmp.eq.s32.totalorder %s32, 1
      %p155 = por %p153, %p154
      %p156 = scmp.ne.s32.totalorder %s147, %s148
      %p157 = scmp.eq.s32.totalorder %s32, 0
      %p158 = por %p156, %p157
      %p159 = scmp.ne.s32.totalorder %s147, %s148
      %p160 = scmp.eq.s32.totalorder %s33, 1
      %p161 = por %p159, %p160
      %p163 = scmp.ne.s32.totalorder %s148, %s162
      %p164 = scmp.eq.s32.totalorder %s33, 0
      %p165 = por %p163, %p164
      %s167 = sadd.s32 %s166, 1
      %p170 = scmp.eq.s32.totalorder %s27, 1
      %p171 = scmp.ne.s32.totalorder %s166, %s168
      %p172 = scmp.eq.s32.totalorder %s27, 0
      %p173 = por %p171, %p172
      %p174 = scmp.ne.s32.totalorder %s166, %s168
      %p175 = scmp.eq.s32.totalorder %s32, 1
      %p176 = por %p174, %p175
      %p177 = scmp.ne.s32.totalorder %s168, %s169
      %p178 = scmp.eq.s32.totalorder %s32, 0
      %p179 = por %p177, %p178
      %p180 = scmp.ne.s32.totalorder %s168, %s169
      %p181 = scmp.eq.s32.totalorder %s33, 1
      %p182 = por %p180, %p181
      %p184 = scmp.ne.s32.totalorder %s169, %s183
      %p185 = scmp.eq.s32.totalorder %s33, 0
      %p186 = por %p184, %p185
      %s188 = sadd.s32 %s187, 1
      %p191 = scmp.eq.s32.totalorder %s27, 1
      %p192 = scmp.ne.s32.totalorder %s187, %s189
      %p193 = scmp.eq.s32.totalorder %s27, 0
      %p194 = por %p192, %p193
      %p195 = scmp.ne.s32.totalorder %s187, %s189
      %p196 = scmp.eq.s32.totalorder %s32, 1
      %p197 = por %p195, %p196
      %p198 = scmp.ne.s32.totalorder %s189, %s190
      %p199 = scmp.eq.s32.totalorder %s32, 0
      %p200 = por %p198, %p199
      %p201 = scmp.ne.s32.totalorder %s189, %s190
      %p202 = scmp.eq.s32.totalorder %s33, 1
      %p203 = por %p201, %p202
      %p205 = scmp.ne.s32.totalorder %s190, %s204
      %p206 = scmp.eq.s32.totalorder %s33, 0
      %p207 = por %p205, %p206
      %s209 = sadd.s32 %s208, 1
      %p212 = scmp.eq.s32.totalorder %s27, 1
      %p213 = scmp.ne.s32.totalorder %s208, %s210
      %p214 = scmp.eq.s32.totalorder %s27, 0
      %p215 = por %p213, %p214
      %p216 = scmp.ne.s32.totalorder %s208, %s210
      %p217 = scmp.eq.s32.totalorder %s32, 1
      %p218 = por %p216, %p217
      %p219 = scmp.ne.s32.totalorder %s210, %s211
      %p220 = scmp.eq.s32.totalorder %s32, 0
      %p221 = por %p219, %p220
      %p222 = scmp.ne.s32.totalorder %s210, %s211
      %p223 = scmp.eq.s32.totalorder %s33, 1
      %p224 = por %p222, %p223
      %p226 = scmp.ne.s32.totalorder %s211, %s225
      %p227 = scmp.eq.s32.totalorder %s33, 0
      %p228 = por %p226, %p227
      %s230 = sadd.s32 %s229, 1
      %p233 = scmp.eq.s32.totalorder %s27, 1
      %p234 = scmp.ne.s32.totalorder %s229, %s231
      %p235 = scmp.eq.s32.totalorder %s27, 0
      %p236 = por %p234, %p235
      %p237 = scmp.ne.s32.totalorder %s229, %s231
      %p238 = scmp.eq.s32.totalorder %s32, 1
      %p239 = por %p237, %p238
      %p240 = scmp.ne.s32.totalorder %s231, %s232
      %p241 = scmp.eq.s32.totalorder %s32, 0
      %p242 = por %p240, %p241
      %p243 = scmp.ne.s32.totalorder %s231, %s232
      %p244 = scmp.eq.s32.totalorder %s33, 1
      %p245 = por %p243, %p244
      %p247 = scmp.ne.s32.totalorder %s232, %s246
      %p248 = scmp.eq.s32.totalorder %s33, 0
      %p249 = por %p247, %p248
      %s251 = sadd.s32 %s250, 1
      %p254 = scmp.eq.s32.totalorder %s27, 1
      %p255 = scmp.ne.s32.totalorder %s250, %s252
      %p256 = scmp.eq.s32.totalorder %s27, 0
      %p257 = por %p255, %p256
      %p258 = scmp.ne.s32.totalorder %s250, %s252
      %p259 = scmp.eq.s32.totalorder %s32, 1
      %p260 = por %p258, %p259
      %p261 = scmp.ne.s32.totalorder %s252, %s253
      %p262 = scmp.eq.s32.totalorder %s32, 0
      %p263 = por %p261, %p262
      %p264 = scmp.ne.s32.totalorder %s252, %s253
      %p265 = scmp.eq.s32.totalorder %s33, 1
      %p266 = por %p264, %p265
      %p268 = scmp.ne.s32.totalorder %s253, %s267
      %p269 = scmp.eq.s32.totalorder %s33, 0
      %p270 = por %p268, %p269
      %s272 = sadd.s32 %s271, 1
      %p275 = scmp.eq.s32.totalorder %s27, 1
      %p276 = scmp.ne.s32.totalorder %s271, %s273
      %p277 = scmp.eq.s32.totalorder %s27, 0
      %p278 = por %p276, %p277
      %p279 = scmp.ne.s32.totalorder %s271, %s273
      %p280 = scmp.eq.s32.totalorder %s32, 1
      %p281 = por %p279, %p280
      %p282 = scmp.ne.s32.totalorder %s273, %s274
      %p283 = scmp.eq.s32.totalorder %s32, 0
      %p284 = por %p282, %p283
      %p285 = scmp.ne.s32.totalorder %s273, %s274
      %p286 = scmp.eq.s32.totalorder %s33, 1
      %p287 = por %p285, %p286
      %p289 = scmp.ne.s32.totalorder %s274, %s288
      %p290 = scmp.eq.s32.totalorder %s33, 0
      %p291 = por %p289, %p290
      %s293 = sadd.s32 %s292, 1
      %p296 = scmp.eq.s32.totalorder %s27, 1
      %p297 = scmp.ne.s32.totalorder %s292, %s294
      %p298 = scmp.eq.s32.totalorder %s27, 0
      %p299 = por %p297, %p298
      %p300 = scmp.ne.s32.totalorder %s292, %s294
      %p301 = scmp.eq.s32.totalorder %s32, 1
      %p302 = por %p300, %p301
      %p303 = scmp.ne.s32.totalorder %s294, %s295
      %p304 = scmp.eq.s32.totalorder %s32, 0
      %p305 = por %p303, %p304
      %p306 = scmp.ne.s32.totalorder %s294, %s295
      %p307 = scmp.eq.s32.totalorder %s33, 1
      %p308 = por %p306, %p307
      %p310 = scmp.ne.s32.totalorder %s295, %s309
      %p311 = scmp.eq.s32.totalorder %s33, 0
      %p312 = por %p310, %p311
      %s314 = sadd.s32 %s313, 1
      %p317 = scmp.eq.s32.totalorder %s27, 1
      %p318 = scmp.ne.s32.totalorder %s313, %s315
      %p319 = scmp.eq.s32.totalorder %s27, 0
      %p320 = por %p318, %p319
      %p321 = scmp.ne.s32.totalorder %s313, %s315
      %p322 = scmp.eq.s32.totalorder %s32, 1
      %p323 = por %p321, %p322
      %p324 = scmp.ne.s32.totalorder %s315, %s316
      %p325 = scmp.eq.s32.totalorder %s32, 0
      %p326 = por %p324, %p325
      %p327 = scmp.ne.s32.totalorder %s315, %s316
      %p328 = scmp.eq.s32.totalorder %s33, 1
      %p329 = por %p327, %p328
      %p331 = scmp.ne.s32.totalorder %s316, %s330
      %p332 = scmp.eq.s32.totalorder %s33, 0
      %p333 = por %p331, %p332
      %s335 = sadd.s32 %s334, 1
      %p338 = scmp.eq.s32.totalorder %s27, 1
      %p339 = scmp.ne.s32.totalorder %s334, %s336
      %p340 = scmp.eq.s32.totalorder %s27, 0
      %p341 = por %p339, %p340
      %p342 = scmp.ne.s32.totalorder %s334, %s336
      %p343 = scmp.eq.s32.totalorder %s32, 1
      %p344 = por %p342, %p343
      %p345 = scmp.ne.s32.totalorder %s336, %s337
      %p346 = scmp.eq.s32.totalorder %s32, 0
      %p347 = por %p345, %p346
      %p348 = scmp.ne.s32.totalorder %s336, %s337
      %p349 = scmp.eq.s32.totalorder %s33, 1
      %p350 = por %p348, %p349
      %p352 = scmp.ne.s32.totalorder %s337, %s351
      %p353 = scmp.eq.s32.totalorder %s33, 0
      %p354 = por %p352, %p353
      %s356 = sadd.s32 %s355, 1
      %p359 = scmp.eq.s32.totalorder %s27, 1
      %p360 = scmp.ne.s32.totalorder %s355, %s357
      %p361 = scmp.eq.s32.totalorder %s27, 0
      %p362 = por %p360, %p361
      %p363 = scmp.ne.s32.totalorder %s355, %s357
      %p364 = scmp.eq.s32.totalorder %s32, 1
      %p365 = por %p363, %p364
      %p366 = scmp.ne.s32.totalorder %s357, %s358
      %p367 = scmp.eq.s32.totalorder %s32, 0
      %p368 = por %p366, %p367
      %p369 = scmp.ne.s32.totalorder %s357, %s358
      %p370 = scmp.eq.s32.totalorder %s33, 1
      %p371 = por %p369, %p370
      %p373 = scmp.ne.s32.totalorder %s358, %s372
      %p374 = scmp.eq.s32.totalorder %s33, 0
      %p375 = por %p373, %p374
      %s377 = sadd.s32 %s376, 1
      %p380 = scmp.eq.s32.totalorder %s27, 1
      %p381 = scmp.ne.s32.totalorder %s376, %s378
      %p382 = scmp.eq.s32.totalorder %s27, 0
      %p383 = por %p381, %p382
      %p384 = scmp.ne.s32.totalorder %s376, %s378
      %p385 = scmp.eq.s32.totalorder %s32, 1
      %p386 = por %p384, %p385
      %p387 = scmp.ne.s32.totalorder %s378, %s379
      %p388 = scmp.eq.s32.totalorder %s32, 0
      %p389 = por %p387, %p388
      %p390 = scmp.ne.s32.totalorder %s378, %s379
      %p391 = scmp.eq.s32.totalorder %s33, 1
      %p392 = por %p390, %p391
      %p394 = scmp.ne.s32.totalorder %s379, %s393
      %p395 = scmp.eq.s32.totalorder %s33, 0
      %p396 = por %p394, %p395
      %s398 = sadd.s32 %s397, 1
      %p401 = scmp.eq.s32.totalorder %s27, 1
      %p402 = scmp.ne.s32.totalorder %s397, %s399
      %p403 = scmp.eq.s32.totalorder %s27, 0
      %p404 = por %p402, %p403
      %p405 = scmp.ne.s32.totalorder %s397, %s399
      %p406 = scmp.eq.s32.totalorder %s32, 1
      %p407 = por %p405, %p406
      %p408 = scmp.ne.s32.totalorder %s399, %s400
      %p409 = scmp.eq.s32.totalorder %s32, 0
      %p410 = por %p408, %p409
      %p411 = scmp.ne.s32.totalorder %s399, %s400
      %p412 = scmp.eq.s32.totalorder %s33, 1
      %p413 = por %p411, %p412
      %p415 = scmp.ne.s32.totalorder %s400, %s414
      %p416 = scmp.eq.s32.totalorder %s33, 0
      %p417 = por %p415, %p416
      %s418 = ssub.s32 %s27, %s34
      %p419 = scmp.eq.s32.totalorder %s418, 0
      %s421 = sadd.s32 %s420, 1
      %s422 = scalar_select %p419, %s420, %s421
      %p425 = pneg %p419
      %p426 = scmp.eq.s32.totalorder %s27, 1
      %p427 = por %p425, %p426
      %p428 = scmp.ne.s32.totalorder %s420, %s423
      %p429 = scmp.eq.s32.totalorder %s27, 0
      %p430 = por %p428, %p429
      %p431 = scmp.ne.s32.totalorder %s420, %s423
      %p432 = scmp.eq.s32.totalorder %s32, 1
      %p433 = por %p431, %p432
      %p434 = scmp.ne.s32.totalorder %s423, %s424
      %p435 = scmp.eq.s32.totalorder %s32, 0
      %p436 = por %p434, %p435
      %p437 = scmp.ne.s32.totalorder %s423, %s424
      %p438 = scmp.eq.s32.totalorder %s33, 1
      %p439 = por %p437, %p438
      %p441 = scmp.ne.s32.totalorder %s424, %s440
      %p442 = scmp.eq.s32.totalorder %s33, 0
      %p443 = por %p441, %p442
      %p444 = scmp.le.s32.totalorder 1, %s27
      %p445 = scmp.lt.s32.totalorder %s27, 3
      %p446 = pnand %p444, %p445
      %p447 = pneg %p446
      // Predicated region
      $region9: #{pathformer_forward.7} parent=5 // pred_check
        _
      $region10: #{pathformer_forward.7} parent=5 // pred_check_branch
        %449 = sbr.rel (%p446) target = $region12
      $region11: #{pathformer_forward.7} parent=5 // pred_region
        %s450 = ssub.s32 %s27, 1
        // Predicated region
        $region13: #{pathformer_forward.7} parent=11 // pred_check
          %p451 = pneg %p48
        $region14: #{pathformer_forward.7} parent=11 // pred_check_branch
          %453 = sbr.rel (%p451) target = $region16
        $region15: #{pathformer_forward.7} parent=11 // pred_region
          _
        $region16: #{pathformer_forward.7} parent=11 // pred_fallthru
          _
        // Predicated region
        $region17: #{pathformer_forward.7} parent=11 // pred_check
          %p454 = pneg %p95
        $region18: #{pathformer_forward.7} parent=11 // pred_check_branch
          %456 = sbr.rel (%p454) target = $region20
        $region19: #{pathformer_forward.7} parent=11 // pred_region
          _
        $region20: #{pathformer_forward.7} parent=11 // pred_fallthru
          _
        // Predicated region
        $region21: #{pathformer_forward.7} parent=11 // pred_check
          %p457 = pneg %p116
        $region22: #{pathformer_forward.7} parent=11 // pred_check_branch
          %459 = sbr.rel (%p457) target = $region24
        $region23: #{pathformer_forward.7} parent=11 // pred_region
          _
        $region24: #{pathformer_forward.7} parent=11 // pred_fallthru
          _
        // Predicated region
        $region25: #{pathformer_forward.7} parent=11 // pred_check
          %p460 = pneg %p137
        $region26: #{pathformer_forward.7} parent=11 // pred_check_branch
          %462 = sbr.rel (%p460) target = $region28
        $region27: #{pathformer_forward.7} parent=11 // pred_region
          _
        $region28: #{pathformer_forward.7} parent=11 // pred_fallthru
          _
        // Predicated region
        $region29: #{pathformer_forward.7} parent=11 // pred_check
          %p463 = pneg %p158
        $region30: #{pathformer_forward.7} parent=11 // pred_check_branch
          %465 = sbr.rel (%p463) target = $region32
        $region31: #{pathformer_forward.7} parent=11 // pred_region
          _
        $region32: #{pathformer_forward.7} parent=11 // pred_fallthru
          _
        // Predicated region
        $region33: #{pathformer_forward.7} parent=11 // pred_check
          %p466 = pneg %p179
        $region34: #{pathformer_forward.7} parent=11 // pred_check_branch
          %468 = sbr.rel (%p466) target = $region36
        $region35: #{pathformer_forward.7} parent=11 // pred_region
          _
        $region36: #{pathformer_forward.7} parent=11 // pred_fallthru
          _
        // Predicated region
        $region37: #{pathformer_forward.7} parent=11 // pred_check
          %p469 = pneg %p200
        $region38: #{pathformer_forward.7} parent=11 // pred_check_branch
          %471 = sbr.rel (%p469) target = $region40
        $region39: #{pathformer_forward.7} parent=11 // pred_region
          _
        $region40: #{pathformer_forward.7} parent=11 // pred_fallthru
          _
        // Predicated region
        $region41: #{pathformer_forward.7} parent=11 // pred_check
          %p472 = pneg %p221
        $region42: #{pathformer_forward.7} parent=11 // pred_check_branch
          %474 = sbr.rel (%p472) target = $region44
        $region43: #{pathformer_forward.7} parent=11 // pred_region
          _
        $region44: #{pathformer_forward.7} parent=11 // pred_fallthru
          _
        // Predicated region
        $region45: #{pathformer_forward.7} parent=11 // pred_check
          %p475 = pneg %p242
        $region46: #{pathformer_forward.7} parent=11 // pred_check_branch
          %477 = sbr.rel (%p475) target = $region48
        $region47: #{pathformer_forward.7} parent=11 // pred_region
          _
        $region48: #{pathformer_forward.7} parent=11 // pred_fallthru
          _
        // Predicated region
        $region49: #{pathformer_forward.7} parent=11 // pred_check
          %p478 = pneg %p263
        $region50: #{pathformer_forward.7} parent=11 // pred_check_branch
          %480 = sbr.rel (%p478) target = $region52
        $region51: #{pathformer_forward.7} parent=11 // pred_region
          _
        $region52: #{pathformer_forward.7} parent=11 // pred_fallthru
          _
        // Predicated region
        $region53: #{pathformer_forward.7} parent=11 // pred_check
          %p481 = pneg %p284
        $region54: #{pathformer_forward.7} parent=11 // pred_check_branch
          %483 = sbr.rel (%p481) target = $region56
        $region55: #{pathformer_forward.7} parent=11 // pred_region
          _
        $region56: #{pathformer_forward.7} parent=11 // pred_fallthru
          _
        // Predicated region
        $region57: #{pathformer_forward.7} parent=11 // pred_check
          %p484 = pneg %p305
        $region58: #{pathformer_forward.7} parent=11 // pred_check_branch
          %486 = sbr.rel (%p484) target = $region60
        $region59: #{pathformer_forward.7} parent=11 // pred_region
          _
        $region60: #{pathformer_forward.7} parent=11 // pred_fallthru
          _
        // Predicated region
        $region61: #{pathformer_forward.7} parent=11 // pred_check
          %p487 = pneg %p326
        $region62: #{pathformer_forward.7} parent=11 // pred_check_branch
          %489 = sbr.rel (%p487) target = $region64
        $region63: #{pathformer_forward.7} parent=11 // pred_region
          _
        $region64: #{pathformer_forward.7} parent=11 // pred_fallthru
          _
        // Predicated region
        $region65: #{pathformer_forward.7} parent=11 // pred_check
          %p490 = pneg %p347
        $region66: #{pathformer_forward.7} parent=11 // pred_check_branch
          %492 = sbr.rel (%p490) target = $region68
        $region67: #{pathformer_forward.7} parent=11 // pred_region
          _
        $region68: #{pathformer_forward.7} parent=11 // pred_fallthru
          _
        // Predicated region
        $region69: #{pathformer_forward.7} parent=11 // pred_check
          %p493 = pneg %p368
        $region70: #{pathformer_forward.7} parent=11 // pred_check_branch
          %495 = sbr.rel (%p493) target = $region72
        $region71: #{pathformer_forward.7} parent=11 // pred_region
          _
        $region72: #{pathformer_forward.7} parent=11 // pred_fallthru
          _
        // Predicated region
        $region73: #{pathformer_forward.7} parent=11 // pred_check
          %p496 = pneg %p389
        $region74: #{pathformer_forward.7} parent=11 // pred_check_branch
          %498 = sbr.rel (%p496) target = $region76
        $region75: #{pathformer_forward.7} parent=11 // pred_region
          _
        $region76: #{pathformer_forward.7} parent=11 // pred_fallthru
          _
        // Predicated region
        $region77: #{pathformer_forward.7} parent=11 // pred_check
          %p499 = pneg %p410
        $region78: #{pathformer_forward.7} parent=11 // pred_check_branch
          %501 = sbr.rel (%p499) target = $region80
        $region79: #{pathformer_forward.7} parent=11 // pred_region
          _
        $region80: #{pathformer_forward.7} parent=11 // pred_fallthru
          _
      $region12: #{pathformer_forward.7} parent=5 // pred_fallthru
        _
      %p502 = scmp.lt.s32.totalorder %s27, 2
      // Predicated region
      $region81: #{pathformer_forward.7} parent=5 // pred_check
        %p503 = pneg %p502
      $region82: #{pathformer_forward.7} parent=5 // pred_check_branch
        %505 = sbr.rel (%p503) target = $region84
      $region83: #{pathformer_forward.7} parent=5 // pred_region
        // Predicated region
        $region85: #{pathformer_forward.7} parent=83 // pred_check
          %p506 = pneg %p68
        $region86: #{pathformer_forward.7} parent=83 // pred_check_branch
          %508 = sbr.rel (%p506) target = $region88
        $region87: #{pathformer_forward.7} parent=83 // pred_region
          %p509 = scmp.lt.s32.totalorder %s27, 1
          %s510 = scalar_select %p509, %s27, 1
          %s511 = smul.addr %s510, 2
          %s512 = smul.addr %s511, 8
          %s513 = scalar_lea.vmem %s1, %s512
        $region88: #{pathformer_forward.7} parent=83 // pred_fallthru
          _
      $region84: #{pathformer_forward.7} parent=5 // pred_fallthru
        _
      %p514 = scmp.le.s32.totalorder 1, %s27
      %p515 = scmp.lt.s32.totalorder %s27, 3
      %p516 = pnand %p514, %p515
      %p517 = pneg %p516
      // Predicated region
      $region89: #{pathformer_forward.7} parent=5 // pred_check
        _
      $region90: #{pathformer_forward.7} parent=5 // pred_check_branch
        %519 = sbr.rel (%p516) target = $region92
      $region91: #{pathformer_forward.7} parent=5 // pred_region
        %s520 = ssub.s32 %s27, 1
        %p521 = pneg %p48
        %p522 = pneg %p45
        %p523 = scmp.lt.s32.totalorder %s32, 1
        %s524 = scalar_select %p523, %s32, 1
        %s525 = smul.addr %s524, 2
        %s526 = smul.addr %s525, 8
        %s527 = scalar_lea.vmem %s1, %s526
        %p528 = pneg %p74
        %p529 = pneg %p71
        %p530 = pneg %p95
        %p531 = pneg %p92
        %p532 = pneg %p116
        %p533 = pneg %p113
        %p534 = pneg %p137
        %p535 = pneg %p134
        %p536 = pneg %p158
        %p537 = pneg %p155
        %p538 = pneg %p179
        %p539 = pneg %p176
        %p540 = pneg %p200
        %p541 = pneg %p197
        %p542 = pneg %p221
        %p543 = pneg %p218
        %p544 = pneg %p242
        %p545 = pneg %p239
        %p546 = pneg %p263
        %p547 = pneg %p260
        %p548 = pneg %p284
        %p549 = pneg %p281
        %p550 = pneg %p305
        %p551 = pneg %p302
        %p552 = pneg %p326
        %p553 = pneg %p323
        %p554 = pneg %p347
        %p555 = pneg %p344
        %p556 = pneg %p368
        %p557 = pneg %p365
        %p558 = pneg %p389
        %p559 = pneg %p386
        %p560 = pneg %p410
        %p561 = pneg %p407
        %p562 = pneg %p436
        %p563 = pneg %p433
        %s564 = sand.u32 %s423, 1
        %s565 = scalar_lea.sflag [#allocation3], %s564
        %s566 = sand.u32 %s423, 1
        %s567 = scalar_lea.vmem [#allocation2], %s566
        %p568 = scmp.lt.s32.totalorder %s32, 1
        %s569 = scalar_select %p568, %s32, 1
        %s570 = smul.addr %s569, 2
        %s571 = smul.addr %s570, 8
        %s572 = scalar_lea.vmem %s1, %s571
        %v574 = vld [vmem:[%s0] sm:$0x1]
        %v575 = vld [vmem:[%s572] sm:$0xff]
        %v576 = vld [vmem:[%s572 + $0x8] sm:$0xff]
        %v577 = vpack.c.bf16 %v576, %v575
        %v578 = vld [vmem:[%s2] sm:$0xf]
        %v579 = vld [vmem:[%s2 + $0x4] sm:$0xf]
        %v580 = vld [vmem:[%s2 + $0x8] sm:$0xf]
        %v581 = vld [vmem:[%s2 + $0xc] sm:$0xf]
        %v582 = vld [vmem:[%s3] sm:$0x1]
        %v584 = vlaneseq
        %v585 = vshrl.u32 %v584, 7
        %v586 = vsub.s32 0, %v585
        %v587 = vrot.slane %v582, %v586
        %v593 = vunpack.c.l.b16 %v578
        %v594 = vunpack.c.l.b16 %v579
        %v595 = vunpack.c.l.b16 %v580
        %v596 = vunpack.c.l.b16 %v581
        %v597 = vpack.c.b16 %v594, %v593
        %v598 = vpack.c.b16 %v596, %v595
        %vm601 = vcmask 261120
        %v603 = vsel %vm601, %v577, 0
        %605 = vmatprep.subr.bf16.mxu0 0
        %606 = vmatpush1.bf16.msra.mxu0 0
        %607 = vmatprep.subr.bf16.mxu0 0
        %608 = vmatpush1.bf16.msra.mxu0 0
        %609 = vmatprep.subr.bf16.mxu0 0
        %610 = vmatpush1.bf16.msra.mxu0 0
        %611 = vmatprep.subr.bf16.mxu0 0
        %612 = vmatpush1.bf16.msra.mxu0 0
        %613 = vmatprep.subr.bf16.mxu0 0
        %614 = vmatpush1.bf16.msra.mxu0 0
        %615 = vmatprep.subr.bf16.mxu0 0
        %616 = vmatpush1.bf16.msra.mxu0 0
        %617 = vmatprep.subr.bf16.mxu0 0
        %618 = vmatpush1.bf16.msra.mxu0 %v598
        %619 = vmatprep.subr.bf16.mxu0 0
        %620 = vmatpush1.bf16.msra.mxu0 %v597
        %621 = vmatprep.subr.bf16.mxu0 0
        %622 = vmatpush2.bf16.msra.mxu0 0
        %623 = vmatprep.subr.bf16.mxu0 0
        %624 = vmatpush2.bf16.msra.mxu0 0
        %625 = vmatprep.subr.bf16.mxu0 0
        %626 = vmatpush2.bf16.msra.mxu0 0
        %627 = vmatprep.subr.bf16.mxu0 0
        %628 = vmatpush2.bf16.msra.mxu0 0
        %629 = vmatprep.subr.bf16.mxu0 0
        %630 = vmatpush2.bf16.msra.mxu0 0
        %631 = vmatprep.subr.bf16.mxu0 0
        %632 = vmatpush2.bf16.msra.mxu0 0
        %633 = vmatprep.subr.bf16.mxu0 0
        %634 = vmatpush2.bf16.msra.mxu0 0
        %635 = vmatprep.subr.bf16.mxu0 0
        %636 = vmatpush2.bf16.msra.mxu0 0
        %637 = vmatprep.mubr.bf16.mxu0 0
        %638 = vmatmul.mubr.bf16.gmra.mxu0 %v603
        %v639 = vpop.f32.mrf.mxu0
        %v640 = vadd.f32 %v587, %v639
        %v641 = vpop.f32.mrf.mxu0
        %v642 = vpop.f32.mrf.mxu0
        %v643 = vadd.f32 %v587, %v642
        %v644 = vpop.f32.mrf.mxu0
        %645 = vdwg.mxu0
        %v646 = vld [vmem:[%s4] sm:$0xf]
        %v647 = vld [vmem:[%s4 + $0x4] sm:$0xf]
        %v648 = vld [vmem:[%s4 + $0x8] sm:$0xf]
        %v649 = vld [vmem:[%s4 + $0xc] sm:$0xf]
        %v650 = vld [vmem:[%s5] sm:$0x1]
        %v651 = vld [vmem:[%s6] sm:$0xf]
        %v652 = vld [vmem:[%s6 + $0x4] sm:$0xf]
        %v653 = vld [vmem:[%s6 + $0x8] sm:$0xf]
        %v654 = vld [vmem:[%s6 + $0xc] sm:$0xf]
        %v655 = vld [vmem:[%s7] sm:$0x1]
        %v656 = vpack.c.bf16 %v574, %v574
        %v661 = vunpack.c.l.b16 %v646
        %v662 = vunpack.c.l.b16 %v647
        %v663 = vunpack.c.l.b16 %v648
        %v664 = vunpack.c.l.b16 %v649
        %v665 = vpack.c.b16 %v662, %v661
        %v666 = vpack.c.b16 %v664, %v663
        %v670 = vsel %vm601, %v656, 0
        %672 = vmatprep.subr.bf16.mxu0 0
        %673 = vmatpush1.bf16.msra.mxu0 0
        %674 = vmatprep.subr.bf16.mxu0 0
        %675 = vmatpush1.bf16.msra.mxu0 0
        %676 = vmatprep.subr.bf16.mxu0 0
        %677 = vmatpush1.bf16.msra.mxu0 0
        %678 = vmatprep.subr.bf16.mxu0 0
        %679 = vmatpush1.bf16.msra.mxu0 0
        %680 = vmatprep.subr.bf16.mxu0 0
        %681 = vmatpush1.bf16.msra.mxu0 0
        %682 = vmatprep.subr.bf16.mxu0 0
        %683 = vmatpush1.bf16.msra.mxu0 0
        %684 = vmatprep.subr.bf16.mxu0 0
        %685 = vmatpush1.bf16.msra.mxu0 %v666
        %686 = vmatprep.subr.bf16.mxu0 0
        %687 = vmatpush1.bf16.msra.mxu0 %v665
        %688 = vmatprep.subr.bf16.mxu0 0
        %689 = vmatpush2.bf16.msra.mxu0 0
        %690 = vmatprep.subr.bf16.mxu0 0
        %691 = vmatpush2.bf16.msra.mxu0 0
        %692 = vmatprep.subr.bf16.mxu0 0
        %693 = vmatpush2.bf16.msra.mxu0 0
        %694 = vmatprep.subr.bf16.mxu0 0
        %695 = vmatpush2.bf16.msra.mxu0 0
        %696 = vmatprep.subr.bf16.mxu0 0
        %697 = vmatpush2.bf16.msra.mxu0 0
        %698 = vmatprep.subr.bf16.mxu0 0
        %699 = vmatpush2.bf16.msra.mxu0 0
        %700 = vmatprep.subr.bf16.mxu0 0
        %701 = vmatpush2.bf16.msra.mxu0 0
        %702 = vmatprep.subr.bf16.mxu0 0
        %703 = vmatpush2.bf16.msra.mxu0 0
        %704 = vmatprep.mubr.bf16.mxu0 0
        %705 = vmatmul.mubr.bf16.gmra.mxu0 %v670
        %v706 = vpop.f32.mrf.mxu0
        %v707 = vadd.f32 %v650, %v706
        %v708 = vpop.f32.mrf.mxu0
        %v709 = vpop.f32.mrf.mxu0
        %v710 = vpop.f32.mrf.mxu0
        %711 = vdwg.mxu0
        %v712 = vpack.c.bf16 %v643, %v640
        %v714 = vlaneseq
        %v715 = vshrl.u32 %v714, 7
        %v716 = vsub.s32 0, %v715
        %v717 = vrot.slane %v650, %v716
        %718 = vrot.lane.b32.xlu0 %v665, 96
        %v719 = vpop.permute.xlu0 %718
        %720 = vrot.lane.b32.xlu0 %v666, 96
        %v721 = vpop.permute.xlu0 %720
        %724 = vrot.lane.b32.xlu0 %v717, 96
        %v725 = vpop.permute.xlu0 %724
        %v728 = vsel %vm601, %v712, 0
        %730 = vmatprep.subr.bf16.mxu0 0
        %731 = vmatpush1.bf16.msra.mxu0 0
        %732 = vmatprep.subr.bf16.mxu0 0
        %733 = vmatpush1.bf16.msra.mxu0 0
        %734 = vmatprep.subr.bf16.mxu0 0
        %735 = vmatpush1.bf16.msra.mxu0 0
        %736 = vmatprep.subr.bf16.mxu0 0
        %737 = vmatpush1.bf16.msra.mxu0 0
        %738 = vmatprep.subr.bf16.mxu0 0
        %739 = vmatpush1.bf16.msra.mxu0 0
        %740 = vmatprep.subr.bf16.mxu0 0
        %741 = vmatpush1.bf16.msra.mxu0 0
        %742 = vmatprep.subr.bf16.mxu0 0
        %743 = vmatpush1.bf16.msra.mxu0 %v721
        %744 = vmatprep.subr.bf16.mxu0 0
        %745 = vmatpush1.bf16.msra.mxu0 %v719
        %746 = vmatprep.subr.bf16.mxu0 0
        %747 = vmatpush2.bf16.msra.mxu0 0
        %748 = vmatprep.subr.bf16.mxu0 0
        %749 = vmatpush2.bf16.msra.mxu0 0
        %750 = vmatprep.subr.bf16.mxu0 0
        %751 = vmatpush2.bf16.msra.mxu0 0
        %752 = vmatprep.subr.bf16.mxu0 0
        %753 = vmatpush2.bf16.msra.mxu0 0
        %754 = vmatprep.subr.bf16.mxu0 0
        %755 = vmatpush2.bf16.msra.mxu0 0
        %756 = vmatprep.subr.bf16.mxu0 0
        %757 = vmatpush2.bf16.msra.mxu0 0
        %758 = vmatprep.subr.bf16.mxu0 0
        %759 = vmatpush2.bf16.msra.mxu0 0
        %760 = vmatprep.subr.bf16.mxu0 0
        %761 = vmatpush2.bf16.msra.mxu0 0
        %762 = vmatprep.mubr.bf16.mxu0 0
        %763 = vmatmul.mubr.bf16.gmra.mxu0 %v728
        %v764 = vpop.f32.mrf.mxu0
        %v765 = vadd.f32 %v725, %v764
        %v766 = vpop.f32.mrf.mxu0
        %v767 = vpop.f32.mrf.mxu0
        %v768 = vadd.f32 %v725, %v767
        %v769 = vpop.f32.mrf.mxu0
        %770 = vdwg.mxu0
        %v771 = vpack.c.bf16 %v707, %v707
        %v772 = vpack.c.bf16 %v768, %v765
        %vm773 = vcmask 64512
        %v775 = vsel %vm773, %v771, 0
        %v778 = vsel %vm773, %v772, 0
        %780 = vmatprep.subr.bf16.mxu0 0
        %781 = vmatpush1.bf16.xpose.msra.mxu0 0
        %782 = vmatprep.subr.bf16.mxu0 0
        %783 = vmatpush1.bf16.xpose.msra.mxu0 0
        %784 = vmatprep.subr.bf16.mxu0 0
        %785 = vmatpush1.bf16.xpose.msra.mxu0 0
        %786 = vmatprep.subr.bf16.mxu0 0
        %787 = vmatpush1.bf16.xpose.msra.mxu0 0
        %788 = vmatprep.subr.bf16.mxu0 0
        %789 = vmatpush1.bf16.xpose.msra.mxu0 0
        %790 = vmatprep.subr.bf16.mxu0 0
        %791 = vmatpush1.bf16.xpose.msra.mxu0 0
        %792 = vmatprep.subr.bf16.mxu0 0
        %793 = vmatpush1.bf16.xpose.msra.mxu0 0
        %794 = vmatprep.subr.bf16.mxu0 0
        %795 = vmatpush1.bf16.xpose.msra.mxu0 %v778
        %796 = vmatprep.subr.bf16.mxu0 0
        %797 = vmatpush2.bf16.xpose.msra.mxu0 0
        %798 = vmatprep.subr.bf16.mxu0 0
        %799 = vmatpush2.bf16.xpose.msra.mxu0 0
        %800 = vmatprep.subr.bf16.mxu0 0
        %801 = vmatpush2.bf16.xpose.msra.mxu0 0
        %802 = vmatprep.subr.bf16.mxu0 0
        %803 = vmatpush2.bf16.xpose.msra.mxu0 0
        %804 = vmatprep.subr.bf16.mxu0 0
        %805 = vmatpush2.bf16.xpose.msra.mxu0 0
        %806 = vmatprep.subr.bf16.mxu0 0
        %807 = vmatpush2.bf16.xpose.msra.mxu0 0
        %808 = vmatprep.subr.bf16.mxu0 0
        %809 = vmatpush2.bf16.xpose.msra.mxu0 0
        %810 = vmatprep.subr.bf16.mxu0 0
        %811 = vmatpush2.bf16.xpose.msra.mxu0 0
        %812 = vmatprep.mubr.bf16.mxu0 0
        %813 = vmatmul.mubr.bf16.gmra.mxu0 %v775
        %v814 = vpop.f32.mrf.mxu0
        %v815 = vadd.f32 0.0, %v814
        %v816 = vpop.f32.mrf.mxu0
        %v817 = vpop.f32.mrf.mxu0
        %v818 = vpop.f32.mrf.mxu0
        %819 = vdwg.mxu0
        %v820 = vmul.f32 %v815, 0.35355338
        %vm821 = vcmask 122880
        %v822 = vsel %vm821, %v820, -inf
        %823 = vmax.xlane.f32.xlu0 %v822
        %v824 = vpop.xlane.xlu0 %823
        %v825 = vsub.f32 %v820, %v824
        %v826 = vmul.f32 %v825, 1.442695
        %v827 = vpow.pop %v826
        %v828 = vsel %vm821, %v827, 0.0
        %829 = vadd.xlane.f32.xlu0 %v828
        %v830 = vpop.xlane.xlu0 %829
        %v831 = vrcp.pop %v830
        %v832 = vmul.f32 %v827, %v831
        %v833 = vpack.c.bf16 %v832, %v832
        %835 = vrot.lane.b32.xlu0 %v772, 96
        %v836 = vpop.permute.xlu0 %835
        %vm838 = vcmask 130048
        %v840 = vsel %vm838, %v833, 0
        %842 = vmatprep.subr.bf16.mxu0 0
        %843 = vmatpush1.bf16.msra.mxu0 0
        %844 = vmatprep.subr.bf16.mxu0 0
        %845 = vmatpush1.bf16.msra.mxu0 0
        %846 = vmatprep.subr.bf16.mxu0 0
        %847 = vmatpush1.bf16.msra.mxu0 0
        %848 = vmatprep.subr.bf16.mxu0 0
        %849 = vmatpush1.bf16.msra.mxu0 0
        %850 = vmatprep.subr.bf16.mxu0 0
        %851 = vmatpush1.bf16.msra.mxu0 0
        %852 = vmatprep.subr.bf16.mxu0 0
        %853 = vmatpush1.bf16.msra.mxu0 0
        %854 = vmatprep.subr.bf16.mxu0 0
        %855 = vmatpush1.bf16.msra.mxu0 0
        %856 = vmatprep.subr.bf16.mxu0 0
        %857 = vmatpush1.bf16.msra.mxu0 %v836
        %858 = vmatprep.subr.bf16.mxu0 0
        %859 = vmatpush2.bf16.msra.mxu0 0
        %860 = vmatprep.subr.bf16.mxu0 0
        %861 = vmatpush2.bf16.msra.mxu0 0
        %862 = vmatprep.subr.bf16.mxu0 0
        %863 = vmatpush2.bf16.msra.mxu0 0
        %864 = vmatprep.subr.bf16.mxu0 0
        %865 = vmatpush2.bf16.msra.mxu0 0
        %866 = vmatprep.subr.bf16.mxu0 0
        %867 = vmatpush2.bf16.msra.mxu0 0
        %868 = vmatprep.subr.bf16.mxu0 0
        %869 = vmatpush2.bf16.msra.mxu0 0
        %870 = vmatprep.subr.bf16.mxu0 0
        %871 = vmatpush2.bf16.msra.mxu0 0
        %872 = vmatprep.subr.bf16.mxu0 0
        %873 = vmatpush2.bf16.msra.mxu0 0
        %874 = vmatprep.mubr.bf16.mxu0 0
        %875 = vmatmul.mubr.bf16.gmra.mxu0 %v840
        %v876 = vpop.f32.mrf.mxu0
        %v877 = vadd.f32 0.0, %v876
        %v878 = vpop.f32.mrf.mxu0
        %v879 = vpop.f32.mrf.mxu0
        %v880 = vpop.f32.mrf.mxu0
        %881 = vdwg.mxu0
        %v882 = vpack.c.bf16 %v877, %v877
        %884 = vrot.lane.b32.xlu0 %v771, 120
        %v885 = vpop.permute.xlu0 %884
        %886 = vrot.lane.b32.xlu0 %v772, 120
        %v887 = vpop.permute.xlu0 %886
        %v889 = vsel %vm773, %v885, 0
        %v892 = vsel %vm773, %v887, 0
        %894 = vmatprep.subr.bf16.mxu0 0
        %895 = vmatpush1.bf16.xpose.msra.mxu0 0
        %896 = vmatprep.subr.bf16.mxu0 0
        %897 = vmatpush1.bf16.xpose.msra.mxu0 0
        %898 = vmatprep.subr.bf16.mxu0 0
        %899 = vmatpush1.bf16.xpose.msra.mxu0 0
        %900 = vmatprep.subr.bf16.mxu0 0
        %901 = vmatpush1.bf16.xpose.msra.mxu0 0
        %902 = vmatprep.subr.bf16.mxu0 0
        %903 = vmatpush1.bf16.xpose.msra.mxu0 0
        %904 = vmatprep.subr.bf16.mxu0 0
        %905 = vmatpush1.bf16.xpose.msra.mxu0 0
        %906 = vmatprep.subr.bf16.mxu0 0
        %907 = vmatpush1.bf16.xpose.msra.mxu0 0
        %908 = vmatprep.subr.bf16.mxu0 0
        %909 = vmatpush1.bf16.xpose.msra.mxu0 %v892
        %910 = vmatprep.subr.bf16.mxu0 0
        %911 = vmatpush2.bf16.xpose.msra.mxu0 0
        %912 = vmatprep.subr.bf16.mxu0 0
        %913 = vmatpush2.bf16.xpose.msra.mxu0 0
        %914 = vmatprep.subr.bf16.mxu0 0
        %915 = vmatpush2.bf16.xpose.msra.mxu0 0
        %916 = vmatprep.subr.bf16.mxu0 0
        %917 = vmatpush2.bf16.xpose.msra.mxu0 0
        %918 = vmatprep.subr.bf16.mxu0 0
        %919 = vmatpush2.bf16.xpose.msra.mxu0 0
        %920 = vmatprep.subr.bf16.mxu0 0
        %921 = vmatpush2.bf16.xpose.msra.mxu0 0
        %922 = vmatprep.subr.bf16.mxu0 0
        %923 = vmatpush2.bf16.xpose.msra.mxu0 0
        %924 = vmatprep.subr.bf16.mxu0 0
        %925 = vmatpush2.bf16.xpose.msra.mxu0 0
        %926 = vmatprep.mubr.bf16.mxu0 0
        %927 = vmatmul.mubr.bf16.gmra.mxu0 %v889
        %v928 = vpop.f32.mrf.mxu0
        %v929 = vadd.f32 0.0, %v928
        %v930 = vpop.f32.mrf.mxu0
        %v931 = vpop.f32.mrf.mxu0
        %v932 = vpop.f32.mrf.mxu0
        %933 = vdwg.mxu0
        %v934 = vmul.f32 %v929, 0.35355338
        %v935 = vsel %vm821, %v934, -inf
        %936 = vmax.xlane.f32.xlu0 %v935
        %v937 = vpop.xlane.xlu0 %936
        %v938 = vsub.f32 %v934, %v937
        %v939 = vmul.f32 %v938, 1.442695
        %v940 = vpow.pop %v939
        %v941 = vsel %vm821, %v940, 0.0
        %942 = vadd.xlane.f32.xlu0 %v941
        %v943 = vpop.xlane.xlu0 %942
        %v944 = vrcp.pop %v943
        %v945 = vmul.f32 %v940, %v944
        %v946 = vpack.c.bf16 %v945, %v945
        %947 = vrot.lane.b32.xlu0 %v772, 88
        %v948 = vpop.permute.xlu0 %947
        %v951 = vsel %vm838, %v946, 0
        %953 = vmatprep.subr.bf16.mxu0 0
        %954 = vmatpush1.bf16.msra.mxu0 0
        %955 = vmatprep.subr.bf16.mxu0 0
        %956 = vmatpush1.bf16.msra.mxu0 0
        %957 = vmatprep.subr.bf16.mxu0 0
        %958 = vmatpush1.bf16.msra.mxu0 0
        %959 = vmatprep.subr.bf16.mxu0 0
        %960 = vmatpush1.bf16.msra.mxu0 0
        %961 = vmatprep.subr.bf16.mxu0 0
        %962 = vmatpush1.bf16.msra.mxu0 0
        %963 = vmatprep.subr.bf16.mxu0 0
        %964 = vmatpush1.bf16.msra.mxu0 0
        %965 = vmatprep.subr.bf16.mxu0 0
        %966 = vmatpush1.bf16.msra.mxu0 0
        %967 = vmatprep.subr.bf16.mxu0 0
        %968 = vmatpush1.bf16.msra.mxu0 %v948
        %969 = vmatprep.subr.bf16.mxu0 0
        %970 = vmatpush2.bf16.msra.mxu0 0
        %971 = vmatprep.subr.bf16.mxu0 0
        %972 = vmatpush2.bf16.msra.mxu0 0
        %973 = vmatprep.subr.bf16.mxu0 0
        %974 = vmatpush2.bf16.msra.mxu0 0
        %975 = vmatprep.subr.bf16.mxu0 0
        %976 = vmatpush2.bf16.msra.mxu0 0
        %977 = vmatprep.subr.bf16.mxu0 0
        %978 = vmatpush2.bf16.msra.mxu0 0
        %979 = vmatprep.subr.bf16.mxu0 0
        %980 = vmatpush2.bf16.msra.mxu0 0
        %981 = vmatprep.subr.bf16.mxu0 0
        %982 = vmatpush2.bf16.msra.mxu0 0
        %983 = vmatprep.subr.bf16.mxu0 0
        %984 = vmatpush2.bf16.msra.mxu0 0
        %985 = vmatprep.mubr.bf16.mxu0 0
        %986 = vmatmul.mubr.bf16.gmra.mxu0 %v951
        %v987 = vpop.f32.mrf.mxu0
        %v988 = vadd.f32 0.0, %v987
        %v989 = vpop.f32.mrf.mxu0
        %v990 = vpop.f32.mrf.mxu0
        %v991 = vpop.f32.mrf.mxu0
        %992 = vdwg.mxu0
        %v993 = vpack.c.bf16 %v988, %v988
        %v995 = vsel %vm773, %v993, 0
        %vm997 = vcmask 1043456
        %v999 = vsel %vm997, %v652, 0
        %1001 = vmatprep.subr.bf16.mxu0 0
        %1002 = vmatpush1.bf16.msra.mxu0 0
        %1003 = vmatprep.subr.bf16.mxu0 0
        %1004 = vmatpush1.bf16.msra.mxu0 0
        %1005 = vmatprep.subr.bf16.mxu0 0
        %1006 = vmatpush1.bf16.msra.mxu0 0
        %1007 = vmatprep.subr.bf16.mxu0 0
        %1008 = vmatpush1.bf16.msra.mxu0 0
        %1009 = vmatprep.subr.bf16.mxu0 0
        %1010 = vmatpush1.bf16.msra.mxu0 0
        %1011 = vmatprep.subr.bf16.mxu0 0
        %1012 = vmatpush1.bf16.msra.mxu0 0
        %1013 = vmatprep.subr.bf16.mxu0 0
        %1014 = vmatpush1.bf16.msra.mxu0 0
        %1015 = vmatprep.subr.bf16.mxu0 0
        %1016 = vmatpush1.bf16.msra.mxu0 %v999
        %1017 = vmatprep.subr.bf16.mxu0 0
        %1018 = vmatpush2.bf16.msra.mxu0 0
        %1019 = vmatprep.subr.bf16.mxu0 0
        %1020 = vmatpush2.bf16.msra.mxu0 0
        %1021 = vmatprep.subr.bf16.mxu0 0
        %1022 = vmatpush2.bf16.msra.mxu0 0
        %1023 = vmatprep.subr.bf16.mxu0 0
        %1024 = vmatpush2.bf16.msra.mxu0 0
        %1025 = vmatprep.subr.bf16.mxu0 0
        %1026 = vmatpush2.bf16.msra.mxu0 0
        %1027 = vmatprep.subr.bf16.mxu0 0
        %1028 = vmatpush2.bf16.msra.mxu0 0
        %1029 = vmatprep.subr.bf16.mxu0 0
        %1030 = vmatpush2.bf16.msra.mxu0 0
        %1031 = vmatprep.subr.bf16.mxu0 0
        %1032 = vmatpush2.bf16.msra.mxu0 0
        %1033 = vmatprep.mubr.bf16.mxu0 0
        %1034 = vmatmul.mubr.bf16.gmra.mxu0 %v995
        %v1035 = vpop.f32.mrf.mxu0
        %v1036 = vadd.f32 0.0, %v1035
        %v1037 = vpop.f32.mrf.mxu0
        %v1038 = vpop.f32.mrf.mxu0
        %v1039 = vpop.f32.mrf.mxu0
        %1040 = vdwg.mxu0
        %v1042 = vsel %vm773, %v882, 0
        %v1045 = vsel %vm997, %v651, 0
        %1047 = vmatprep.subr.bf16.mxu0 0
        %1048 = vmatpush1.bf16.msra.mxu0 0
        %1049 = vmatprep.subr.bf16.mxu0 0
        %1050 = vmatpush1.bf16.msra.mxu0 0
        %1051 = vmatprep.subr.bf16.mxu0 0
        %1052 = vmatpush1.bf16.msra.mxu0 0
        %1053 = vmatprep.subr.bf16.mxu0 0
        %1054 = vmatpush1.bf16.msra.mxu0 0
        %1055 = vmatprep.subr.bf16.mxu0 0
        %1056 = vmatpush1.bf16.msra.mxu0 0
        %1057 = vmatprep.subr.bf16.mxu0 0
        %1058 = vmatpush1.bf16.msra.mxu0 0
        %1059 = vmatprep.subr.bf16.mxu0 0
        %1060 = vmatpush1.bf16.msra.mxu0 0
        %1061 = vmatprep.subr.bf16.mxu0 0
        %1062 = vmatpush1.bf16.msra.mxu0 %v1045
        %1063 = vmatprep.subr.bf16.mxu0 0
        %1064 = vmatpush2.bf16.msra.mxu0 0
        %1065 = vmatprep.subr.bf16.mxu0 0
        %1066 = vmatpush2.bf16.msra.mxu0 0
        %1067 = vmatprep.subr.bf16.mxu0 0
        %1068 = vmatpush2.bf16.msra.mxu0 0
        %1069 = vmatprep.subr.bf16.mxu0 0
        %1070 = vmatpush2.bf16.msra.mxu0 0
        %1071 = vmatprep.subr.bf16.mxu0 0
        %1072 = vmatpush2.bf16.msra.mxu0 0
        %1073 = vmatprep.subr.bf16.mxu0 0
        %1074 = vmatpush2.bf16.msra.mxu0 0
        %1075 = vmatprep.subr.bf16.mxu0 0
        %1076 = vmatpush2.bf16.msra.mxu0 0
        %1077 = vmatprep.subr.bf16.mxu0 0
        %1078 = vmatpush2.bf16.msra.mxu0 0
        %1079 = vmatprep.mubr.bf16.mxu0 0
        %1080 = vmatmul.mubr.bf16.gmra.mxu0 %v1042
        %v1081 = vpop.f32.mrf.mxu0
        %v1082 = vadd.f32 %v1036, %v1081
        %v1083 = vpop.f32.mrf.mxu0
        %v1084 = vpop.f32.mrf.mxu0
        %v1085 = vpop.f32.mrf.mxu0
        %1086 = vdwg.mxu0
        %1087 = vrot.lane.b32.xlu0 %v771, 112
        %v1088 = vpop.permute.xlu0 %1087
        %1089 = vrot.lane.b32.xlu0 %v772, 112
        %v1090 = vpop.permute.xlu0 %1089
        %v1092 = vsel %vm773, %v1088, 0
        %v1095 = vsel %vm773, %v1090, 0
        %1097 = vmatprep.subr.bf16.mxu0 0
        %1098 = vmatpush1.bf16.xpose.msra.mxu0 0
        %1099 = vmatprep.subr.bf16.mxu0 0
        %1100 = vmatpush1.bf16.xpose.msra.mxu0 0
        %1101 = vmatprep.subr.bf16.mxu0 0
        %1102 = vmatpush1.bf16.xpose.msra.mxu0 0
        %1103 = vmatprep.subr.bf16.mxu0 0
        %1104 = vmatpush1.bf16.xpose.msra.mxu0 0
        %1105 = vmatprep.subr.bf16.mxu0 0
        %1106 = vmatpush1.bf16.xpose.msra.mxu0 0
        %1107 = vmatprep.subr.bf16.mxu0 0
        %1108 = vmatpush1.bf16.xpose.msra.mxu0 0
        %1109 = vmatprep.subr.bf16.mxu0 0
        %1110 = vmatpush1.bf16.xpose.msra.mxu0 0
        %1111 = vmatprep.subr.bf16.mxu0 0
        %1112 = vmatpush1.bf16.xpose.msra.mxu0 %v1095
        %1113 = vmatprep.subr.bf16.mxu0 0
        %1114 = vmatpush2.bf16.xpose.msra.mxu0 0
        %1115 = vmatprep.subr.bf16.mxu0 0
        %1116 = vmatpush2.bf16.xpose.msra.mxu0 0
        %1117 = vmatprep.subr.bf16.mxu0 0
        %1118 = vmatpush2.bf16.xpose.msra.mxu0 0
        %1119 = vmatprep.subr.bf16.mxu0 0
        %1120 = vmatpush2.bf16.xpose.msra.mxu0 0
        %1121 = vmatprep.subr.bf16.mxu0 0
        %1122 = vmatpush2.bf16.xpose.msra.mxu0 0
        %1123 = vmatprep.subr.bf16.mxu0 0
        %1124 = vmatpush2.bf16.xpose.msra.mxu0 0
        %1125 = vmatprep.subr.bf16.mxu0 0
        %1126 = vmatpush2.bf16.xpose.msra.mxu0 0
        %1127 = vmatprep.subr.bf16.mxu0 0
        %1128 = vmatpush2.bf16.xpose.msra.mxu0 0
        %1129 = vmatprep.mubr.bf16.mxu0 0
        %1130 = vmatmul.mubr.bf16.gmra.mxu0 %v1092
        %v1131 = vpop.f32.mrf.mxu0
        %v1132 = vadd.f32 0.0, %v1131
        %v1133 = vpop.f32.mrf.mxu0
        %v1134 = vpop.f32.mrf.mxu0
        %v1135 = vpop.f32.mrf.mxu0
        %1136 = vdwg.mxu0
        %v1137 = vmul.f32 %v1132, 0.35355338
        %v1138 = vsel %vm821, %v1137, -inf
        %1139 = vmax.xlane.f32.xlu0 %v1138
        %v1140 = vpop.xlane.xlu0 %1139
        %v1141 = vsub.f32 %v1137, %v1140
        %v1142 = vmul.f32 %v1141, 1.442695
        %v1143 = vpow.pop %v1142
        %v1144 = vsel %vm821, %v1143, 0.0
        %1145 = vadd.xlane.f32.xlu0 %v1144
        %v1146 = vpop.xlane.xlu0 %1145
        %v1147 = vrcp.pop %v1146
        %v1148 = vmul.f32 %v1143, %v1147
        %v1149 = vpack.c.bf16 %v1148, %v1148
        %1150 = vrot.lane.b32.xlu0 %v772, 80
        %v1151 = vpop.permute.xlu0 %1150
        %v1154 = vsel %vm838, %v1149, 0
        %1156 = vmatprep.subr.bf16.mxu0 0
        %1157 = vmatpush1.bf16.msra.mxu0 0
        %1158 = vmatprep.subr.bf16.mxu0 0
        %1159 = vmatpush1.bf16.msra.mxu0 0
        %1160 = vmatprep.subr.bf16.mxu0 0
        %1161 = vmatpush1.bf16.msra.mxu0 0
        %1162 = vmatprep.subr.bf16.mxu0 0
        %1163 = vmatpush1.bf16.msra.mxu0 0
        %1164 = vmatprep.subr.bf16.mxu0 0
        %1165 = vmatpush1.bf16.msra.mxu0 0
        %1166 = vmatprep.subr.bf16.mxu0 0
        %1167 = vmatpush1.bf16.msra.mxu0 0
        %1168 = vmatprep.subr.bf16.mxu0 0
        %1169 = vmatpush1.bf16.msra.mxu0 0
        %1170 = vmatprep.subr.bf16.mxu0 0
        %1171 = vmatpush1.bf16.msra.mxu0 %v1151
        %1172 = vmatprep.subr.bf16.mxu0 0
        %1173 = vmatpush2.bf16.msra.mxu0 0
        %1174 = vmatprep.subr.bf16.mxu0 0
        %1175 = vmatpush2.bf16.msra.mxu0 0
        %1176 = vmatprep.subr.bf16.mxu0 0
        %1177 = vmatpush2.bf16.msra.mxu0 0
        %1178 = vmatprep.subr.bf16.mxu0 0
        %1179 = vmatpush2.bf16.msra.mxu0 0
        %1180 = vmatprep.subr.bf16.mxu0 0
        %1181 = vmatpush2.bf16.msra.mxu0 0
        %1182 = vmatprep.subr.bf16.mxu0 0
        %1183 = vmatpush2.bf16.msra.mxu0 0
        %1184 = vmatprep.subr.bf16.mxu0 0
        %1185 = vmatpush2.bf16.msra.mxu0 0
        %1186 = vmatprep.subr.bf16.mxu0 0
        %1187 = vmatpush2.bf16.msra.mxu0 0
        %1188 = vmatprep.mubr.bf16.mxu0 0
        %1189 = vmatmul.mubr.bf16.gmra.mxu0 %v1154
        %v1190 = vpop.f32.mrf.mxu0
        %v1191 = vadd.f32 0.0, %v1190
        %v1192 = vpop.f32.mrf.mxu0
        %v1193 = vpop.f32.mrf.mxu0
        %v1194 = vpop.f32.mrf.mxu0
        %1195 = vdwg.mxu0
        %v1196 = vpack.c.bf16 %v1191, %v1191
        %v1198 = vsel %vm773, %v1196, 0
        %v1201 = vsel %vm997, %v653, 0
        %1203 = vmatprep.subr.bf16.mxu0 0
        %1204 = vmatpush1.bf16.msra.mxu0 0
        %1205 = vmatprep.subr.bf16.mxu0 0
        %1206 = vmatpush1.bf16.msra.mxu0 0
        %1207 = vmatprep.subr.bf16.mxu0 0
        %1208 = vmatpush1.bf16.msra.mxu0 0
        %1209 = vmatprep.subr.bf16.mxu0 0
        %1210 = vmatpush1.bf16.msra.mxu0 0
        %1211 = vmatprep.subr.bf16.mxu0 0
        %1212 = vmatpush1.bf16.msra.mxu0 0
        %1213 = vmatprep.subr.bf16.mxu0 0
        %1214 = vmatpush1.bf16.msra.mxu0 0
        %1215 = vmatprep.subr.bf16.mxu0 0
        %1216 = vmatpush1.bf16.msra.mxu0 0
        %1217 = vmatprep.subr.bf16.mxu0 0
        %1218 = vmatpush1.bf16.msra.mxu0 %v1201
        %1219 = vmatprep.subr.bf16.mxu0 0
        %1220 = vmatpush2.bf16.msra.mxu0 0
        %1221 = vmatprep.subr.bf16.mxu0 0
        %1222 = vmatpush2.bf16.msra.mxu0 0
        %1223 = vmatprep.subr.bf16.mxu0 0
        %1224 = vmatpush2.bf16.msra.mxu0 0
        %1225 = vmatprep.subr.bf16.mxu0 0
        %1226 = vmatpush2.bf16.msra.mxu0 0
        %1227 = vmatprep.subr.bf16.mxu0 0
        %1228 = vmatpush2.bf16.msra.mxu0 0
        %1229 = vmatprep.subr.bf16.mxu0 0
        %1230 = vmatpush2.bf16.msra.mxu0 0
        %1231 = vmatprep.subr.bf16.mxu0 0
        %1232 = vmatpush2.bf16.msra.mxu0 0
        %1233 = vmatprep.subr.bf16.mxu0 0
        %1234 = vmatpush2.bf16.msra.mxu0 0
        %1235 = vmatprep.mubr.bf16.mxu0 0
        %1236 = vmatmul.mubr.bf16.gmra.mxu0 %v1198
        %v1237 = vpop.f32.mrf.mxu0
        %v1238 = vadd.f32 0.0, %v1237
        %v1239 = vpop.f32.mrf.mxu0
        %v1240 = vpop.f32.mrf.mxu0
        %v1241 = vpop.f32.mrf.mxu0
        %1242 = vdwg.mxu0
        %v1243 = vadd.f32 %v1082, %v1238
        %1244 = vrot.lane.b32.xlu0 %v771, 104
        %v1245 = vpop.permute.xlu0 %1244
        %1246 = vrot.lane.b32.xlu0 %v772, 104
        %v1247 = vpop.permute.xlu0 %1246
        %v1249 = vsel %vm773, %v1245, 0
        %v1252 = vsel %vm773, %v1247, 0
        %1254 = vmatprep.subr.bf16.mxu0 0
        %1255 = vmatpush1.bf16.xpose.msra.mxu0 0
        %1256 = vmatprep.subr.bf16.mxu0 0
        %1257 = vmatpush1.bf16.xpose.msra.mxu0 0
        %1258 = vmatprep.subr.bf16.mxu0 0
        %1259 = vmatpush1.bf16.xpose.msra.mxu0 0
        %1260 = vmatprep.subr.bf16.mxu0 0
        %1261 = vmatpush1.bf16.xpose.msra.mxu0 0
        %1262 = vmatprep.subr.bf16.mxu0 0
        %1263 = vmatpush1.bf16.xpose.msra.mxu0 0
        %1264 = vmatprep.subr.bf16.mxu0 0
        %1265 = vmatpush1.bf16.xpose.msra.mxu0 0
        %1266 = vmatprep.subr.bf16.mxu0 0
        %1267 = vmatpush1.bf16.xpose.msra.mxu0 0
        %1268 = vmatprep.subr.bf16.mxu0 0
        %1269 = vmatpush1.bf16.xpose.msra.mxu0 %v1252
        %1270 = vmatprep.subr.bf16.mxu0 0
        %1271 = vmatpush2.bf16.xpose.msra.mxu0 0
        %1272 = vmatprep.subr.bf16.mxu0 0
        %1273 = vmatpush2.bf16.xpose.msra.mxu0 0
        %1274 = vmatprep.subr.bf16.mxu0 0
        %1275 = vmatpush2.bf16.xpose.msra.mxu0 0
        %1276 = vmatprep.subr.bf16.mxu0 0
        %1277 = vmatpush2.bf16.xpose.msra.mxu0 0
        %1278 = vmatprep.subr.bf16.mxu0 0
        %1279 = vmatpush2.bf16.xpose.msra.mxu0 0
        %1280 = vmatprep.subr.bf16.mxu0 0
        %1281 = vmatpush2.bf16.xpose.msra.mxu0 0
        %1282 = vmatprep.subr.bf16.mxu0 0
        %1283 = vmatpush2.bf16.xpose.msra.mxu0 0
        %1284 = vmatprep.subr.bf16.mxu0 0
        %1285 = vmatpush2.bf16.xpose.msra.mxu0 0
        %1286 = vmatprep.mubr.bf16.mxu0 0
        %1287 = vmatmul.mubr.bf16.gmra.mxu0 %v1249
        %v1288 = vpop.f32.mrf.mxu0
        %v1289 = vadd.f32 0.0, %v1288
        %v1290 = vpop.f32.mrf.mxu0
        %v1291 = vpop.f32.mrf.mxu0
        %v1292 = vpop.f32.mrf.mxu0
        %1293 = vdwg.mxu0
        %v1294 = vmul.f32 %v1289, 0.35355338
        %v1295 = vsel %vm821, %v1294, -inf
        %1296 = vmax.xlane.f32.xlu0 %v1295
        %v1297 = vpop.xlane.xlu0 %1296
        %v1298 = vsub.f32 %v1294, %v1297
        %v1299 = vmul.f32 %v1298, 1.442695
        %v1300 = vpow.pop %v1299
        %v1301 = vsel %vm821, %v1300, 0.0
        %1302 = vadd.xlane.f32.xlu0 %v1301
        %v1303 = vpop.xlane.xlu0 %1302
        %v1304 = vrcp.pop %v1303
        %v1305 = vmul.f32 %v1300, %v1304
        %v1306 = vpack.c.bf16 %v1305, %v1305
        %1307 = vrot.lane.b32.xlu0 %v772, 72
        %v1308 = vpop.permute.xlu0 %1307
        %v1311 = vsel %vm838, %v1306, 0
        %1313 = vmatprep.subr.bf16.mxu0 0
        %1314 = vmatpush1.bf16.msra.mxu0 0
        %1315 = vmatprep.subr.bf16.mxu0 0
        %1316 = vmatpush1.bf16.msra.mxu0 0
        %1317 = vmatprep.subr.bf16.mxu0 0
        %1318 = vmatpush1.bf16.msra.mxu0 0
        %1319 = vmatprep.subr.bf16.mxu0 0
        %1320 = vmatpush1.bf16.msra.mxu0 0
        %1321 = vmatprep.subr.bf16.mxu0 0
        %1322 = vmatpush1.bf16.msra.mxu0 0
        %1323 = vmatprep.subr.bf16.mxu0 0
        %1324 = vmatpush1.bf16.msra.mxu0 0
        %1325 = vmatprep.subr.bf16.mxu0 0
        %1326 = vmatpush1.bf16.msra.mxu0 0
        %1327 = vmatprep.subr.bf16.mxu0 0
        %1328 = vmatpush1.bf16.msra.mxu0 %v1308
        %1329 = vmatprep.subr.bf16.mxu0 0
        %1330 = vmatpush2.bf16.msra.mxu0 0
        %1331 = vmatprep.subr.bf16.mxu0 0
        %1332 = vmatpush2.bf16.msra.mxu0 0
        %1333 = vmatprep.subr.bf16.mxu0 0
        %1334 = vmatpush2.bf16.msra.mxu0 0
        %1335 = vmatprep.subr.bf16.mxu0 0
        %1336 = vmatpush2.bf16.msra.mxu0 0
        %1337 = vmatprep.subr.bf16.mxu0 0
        %1338 = vmatpush2.bf16.msra.mxu0 0
        %1339 = vmatprep.subr.bf16.mxu0 0
        %1340 = vmatpush2.bf16.msra.mxu0 0
        %1341 = vmatprep.subr.bf16.mxu0 0
        %1342 = vmatpush2.bf16.msra.mxu0 0
        %1343 = vmatprep.subr.bf16.mxu0 0
        %1344 = vmatpush2.bf16.msra.mxu0 0
        %1345 = vmatprep.mubr.bf16.mxu0 0
        %1346 = vmatmul.mubr.bf16.gmra.mxu0 %v1311
        %v1347 = vpop.f32.mrf.mxu0
        %v1348 = vadd.f32 0.0, %v1347
        %v1349 = vpop.f32.mrf.mxu0
        %v1350 = vpop.f32.mrf.mxu0
        %v1351 = vpop.f32.mrf.mxu0
        %1352 = vdwg.mxu0
        %v1353 = vpack.c.bf16 %v1348, %v1348
        %v1355 = vsel %vm773, %v1353, 0
        %v1358 = vsel %vm997, %v654, 0
        %1360 = vmatprep.subr.bf16.mxu0 0
        %1361 = vmatpush1.bf16.msra.mxu0 0
        %1362 = vmatprep.subr.bf16.mxu0 0
        %1363 = vmatpush1.bf16.msra.mxu0 0
        %1364 = vmatprep.subr.bf16.mxu0 0
        %1365 = vmatpush1.bf16.msra.mxu0 0
        %1366 = vmatprep.subr.bf16.mxu0 0
        %1367 = vmatpush1.bf16.msra.mxu0 0
        %1368 = vmatprep.subr.bf16.mxu0 0
        %1369 = vmatpush1.bf16.msra.mxu0 0
        %1370 = vmatprep.subr.bf16.mxu0 0
        %1371 = vmatpush1.bf16.msra.mxu0 0
        %1372 = vmatprep.subr.bf16.mxu0 0
        %1373 = vmatpush1.bf16.msra.mxu0 0
        %1374 = vmatprep.subr.bf16.mxu0 0
        %1375 = vmatpush1.bf16.msra.mxu0 %v1358
        %1376 = vmatprep.subr.bf16.mxu0 0
        %1377 = vmatpush2.bf16.msra.mxu0 0
        %1378 = vmatprep.subr.bf16.mxu0 0
        %1379 = vmatpush2.bf16.msra.mxu0 0
        %1380 = vmatprep.subr.bf16.mxu0 0
        %1381 = vmatpush2.bf16.msra.mxu0 0
        %1382 = vmatprep.subr.bf16.mxu0 0
        %1383 = vmatpush2.bf16.msra.mxu0 0
        %1384 = vmatprep.subr.bf16.mxu0 0
        %1385 = vmatpush2.bf16.msra.mxu0 0
        %1386 = vmatprep.subr.bf16.mxu0 0
        %1387 = vmatpush2.bf16.msra.mxu0 0
        %1388 = vmatprep.subr.bf16.mxu0 0
        %1389 = vmatpush2.bf16.msra.mxu0 0
        %1390 = vmatprep.subr.bf16.mxu0 0
        %1391 = vmatpush2.bf16.msra.mxu0 0
        %1392 = vmatprep.mubr.bf16.mxu0 0
        %1393 = vmatmul.mubr.bf16.gmra.mxu0 %v1355
        %v1394 = vpop.f32.mrf.mxu0
        %v1395 = vadd.f32 0.0, %v1394
        %v1396 = vpop.f32.mrf.mxu0
        %v1397 = vpop.f32.mrf.mxu0
        %v1398 = vpop.f32.mrf.mxu0
        %1399 = vdwg.mxu0
        %v1400 = vadd.f32 %v1243, %v1395
        %v1401 = vadd.f32 %v1400, %v655
        %v1402 = vadd.f32 %v574, %v1401
        %v1403 = vld [vmem:[%s8] sm:$0x1]
        %v1404 = vld [vmem:[%s9] sm:$0x1]
        %vm1405 = vcmask 253952
        %v1406 = vsel %vm1405, %v1402, 0.0
        %1407 = vadd.xlane.f32.xlu0 %v1406
        %v1408 = vpop.xlane.xlu0 %1407
        %v1409 = vrcp.pop 32.0
        %v1410 = vmul.f32 %v1408, %v1409
        %v1411 = vsub.f32 %v1402, %v1410
        %v1412 = vmul.f32 %v1411, %v1411
        %v1413 = vsel %vm1405, %v1412, 0.0
        %1414 = vadd.xlane.f32.xlu0 %v1413
        %v1415 = vpop.xlane.xlu0 %1414
        %v1416 = vmul.f32 %v1415, %v1409
        %v1417 = vadd.f32 %v1416, 1e-05
        %v1418 = vrsqrt.pop %v1417
        %v1419 = vmul.f32 %v1411, %v1418
        %v1420 = vmul.f32 %v1419, %v1403
        %v1421 = vadd.f32 %v1420, %v1404
        %v1422 = vld [vmem:[%s10] sm:$0xf]
        %v1423 = vld [vmem:[%s10 + $0x4] sm:$0xf]
        %v1424 = vld [vmem:[%s10 + $0x8] sm:$0xf]
        %v1425 = vld [vmem:[%s10 + $0xc] sm:$0xf]
        %v1426 = vld [vmem:[%s11] sm:$0x1]
        %v1427 = vld [vmem:[%s12] sm:$0xf]
        %v1428 = vld [vmem:[%s12 + $0x4] sm:$0xf]
        %v1429 = vld [vmem:[%s12 + $0x8] sm:$0xf]
        %v1430 = vld [vmem:[%s12 + $0xc] sm:$0xf]
        %v1431 = vld [vmem:[%s12 + $0x10] sm:$0xf]
        %v1432 = vld [vmem:[%s12 + $0x14] sm:$0xf]
        %v1433 = vld [vmem:[%s12 + $0x18] sm:$0xf]
        %v1434 = vld [vmem:[%s12 + $0x1c] sm:$0xf]
        %v1435 = vld [vmem:[%s13] sm:$0x1]
        %v1436 = vpack.c.bf16 %v1421, %v1421
        %v1441 = vunpack.c.l.b16 %v1422
        %v1442 = vunpack.c.l.b16 %v1423
        %v1443 = vunpack.c.l.b16 %v1424
        %v1444 = vunpack.c.l.b16 %v1425
        %v1445 = vpack.c.b16 %v1442, %v1441
        %v1446 = vpack.c.b16 %v1444, %v1443
        %v1450 = vsel %vm601, %v1436, 0
        %1452 = vmatprep.subr.bf16.mxu0 0
        %1453 = vmatpush1.bf16.msra.mxu0 0
        %1454 = vmatprep.subr.bf16.mxu0 0
        %1455 = vmatpush1.bf16.msra.mxu0 0
        %1456 = vmatprep.subr.bf16.mxu0 0
        %1457 = vmatpush1.bf16.msra.mxu0 0
        %1458 = vmatprep.subr.bf16.mxu0 0
        %1459 = vmatpush1.bf16.msra.mxu0 0
        %1460 = vmatprep.subr.bf16.mxu0 0
        %1461 = vmatpush1.bf16.msra.mxu0 0
        %1462 = vmatprep.subr.bf16.mxu0 0
        %1463 = vmatpush1.bf16.msra.mxu0 0
        %1464 = vmatprep.subr.bf16.mxu0 0
        %1465 = vmatpush1.bf16.msra.mxu0 %v1446
        %1466 = vmatprep.subr.bf16.mxu0 0
        %1467 = vmatpush1.bf16.msra.mxu0 %v1445
        %1468 = vmatprep.subr.bf16.mxu0 0
        %1469 = vmatpush2.bf16.msra.mxu0 0
        %1470 = vmatprep.subr.bf16.mxu0 0
        %1471 = vmatpush2.bf16.msra.mxu0 0
        %1472 = vmatprep.subr.bf16.mxu0 0
        %1473 = vmatpush2.bf16.msra.mxu0 0
        %1474 = vmatprep.subr.bf16.mxu0 0
        %1475 = vmatpush2.bf16.msra.mxu0 0
        %1476 = vmatprep.subr.bf16.mxu0 0
        %1477 = vmatpush2.bf16.msra.mxu0 0
        %1478 = vmatprep.subr.bf16.mxu0 0
        %1479 = vmatpush2.bf16.msra.mxu0 0
        %1480 = vmatprep.subr.bf16.mxu0 0
        %1481 = vmatpush2.bf16.msra.mxu0 0
        %1482 = vmatprep.subr.bf16.mxu0 0
        %1483 = vmatpush2.bf16.msra.mxu0 0
        %1484 = vmatprep.mubr.bf16.mxu0 0
        %1485 = vmatmul.mubr.bf16.gmra.mxu0 %v1450
        %v1486 = vpop.f32.mrf.mxu0
        %v1487 = vadd.f32 %v1426, %v1486
        %v1488 = vpop.f32.mrf.mxu0
        %v1489 = vpop.f32.mrf.mxu0
        %v1490 = vpop.f32.mrf.mxu0
        %1491 = vdwg.mxu0
        %v1492 = vmul.f32 %v1487, 0.5
        %v1493 = vmul.f32 %v1487, 0.70710677
        %vm1494 = vcmp.ge.f32.partialorder %v1493, 0.0
        %v1495 = vsel %vm1494, 1.0, -1.0
        %v1496 = vand.u32 2147483647, %v1493
        %v1497 = vmul.f32 %v1496, 0.3275911
        %v1498 = vadd.f32 %v1497, 1.0
        %v1499 = vrcp.pop %v1498
        %v1500 = vmul.f32 1.0, %v1499
        %v1501 = vmul.f32 %v1500, 1.0614054
        %v1502 = vadd.f32 %v1501, -1.4531521
        %v1503 = vmul.f32 %v1502, %v1500
        %v1504 = vadd.f32 %v1503, 1.4214138
        %v1505 = vmul.f32 %v1504, %v1500
        %v1506 = vadd.f32 %v1505, -0.28449672
        %v1507 = vmul.f32 %v1506, %v1500
        %v1508 = vadd.f32 %v1507, 0.2548296
        %v1509 = vmul.f32 %v1508, %v1500
        %v1510 = vsub.f32 0.0, %v1496
        %v1511 = vmul.f32 %v1510, %v1496
        %v1512 = vmul.f32 %v1511, 1.442695
        %v1513 = vpow.pop %v1512
        %v1514 = vmul.f32 %v1509, %v1513
        %v1515 = vsub.f32 1.0, %v1514
        %v1516 = vmul.f32 %v1495, %v1515
        %v1517 = vadd.f32 %v1516, 1.0
        %v1518 = vmul.f32 %v1492, %v1517
        %v1519 = vpack.c.bf16 %v1518, %v1518
        %v1528 = vunpack.c.l.b16 %v1427
        %v1529 = vunpack.c.l.b16 %v1428
        %v1530 = vunpack.c.l.b16 %v1429
        %v1531 = vunpack.c.l.b16 %v1430
        %v1532 = vunpack.c.l.b16 %v1431
        %v1533 = vunpack.c.l.b16 %v1432
        %v1534 = vunpack.c.l.b16 %v1433
        %v1535 = vunpack.c.l.b16 %v1434
        %v1536 = vpack.c.b16 %v1529, %v1528
        %v1537 = vpack.c.b16 %v1531, %v1530
        %v1538 = vpack.c.b16 %v1533, %v1532
        %v1539 = vpack.c.b16 %v1535, %v1534
        %vm1544 = vcmask 523264
        %v1546 = vsel %vm1544, %v1519, 0
        %1548 = vmatprep.subr.bf16.mxu0 0
        %1549 = vmatpush1.bf16.msra.mxu0 0
        %1550 = vmatprep.subr.bf16.mxu0 0
        %1551 = vmatpush1.bf16.msra.mxu0 0
        %1552 = vmatprep.subr.bf16.mxu0 0
        %1553 = vmatpush1.bf16.msra.mxu0 0
        %1554 = vmatprep.subr.bf16.mxu0 0
        %1555 = vmatpush1.bf16.msra.mxu0 0
        %1556 = vmatprep.subr.bf16.mxu0 0
        %1557 = vmatpush1.bf16.msra.mxu0 %v1539
        %1558 = vmatprep.subr.bf16.mxu0 0
        %1559 = vmatpush1.bf16.msra.mxu0 %v1538
        %1560 = vmatprep.subr.bf16.mxu0 0
        %1561 = vmatpush1.bf16.msra.mxu0 %v1537
        %1562 = vmatprep.subr.bf16.mxu0 0
        %1563 = vmatpush1.bf16.msra.mxu0 %v1536
        %1564 = vmatprep.subr.bf16.mxu0 0
        %1565 = vmatpush2.bf16.msra.mxu0 0
        %1566 = vmatprep.subr.bf16.mxu0 0
        %1567 = vmatpush2.bf16.msra.mxu0 0
        %1568 = vmatprep.subr.bf16.mxu0 0
        %1569 = vmatpush2.bf16.msra.mxu0 0
        %1570 = vmatprep.subr.bf16.mxu0 0
        %1571 = vmatpush2.bf16.msra.mxu0 0
        %1572 = vmatprep.subr.bf16.mxu0 0
        %1573 = vmatpush2.bf16.msra.mxu0 0
        %1574 = vmatprep.subr.bf16.mxu0 0
        %1575 = vmatpush2.bf16.msra.mxu0 0
        %1576 = vmatprep.subr.bf16.mxu0 0
        %1577 = vmatpush2.bf16.msra.mxu0 0
        %1578 = vmatprep.subr.bf16.mxu0 0
        %1579 = vmatpush2.bf16.msra.mxu0 0
        %1580 = vmatprep.mubr.bf16.mxu0 0
        %1581 = vmatmul.mubr.bf16.gmra.mxu0 %v1546
        %v1582 = vpop.f32.mrf.mxu0
        %v1583 = vadd.f32 %v1435, %v1582
        %v1584 = vpop.f32.mrf.mxu0
        %v1585 = vpop.f32.mrf.mxu0
        %v1586 = vpop.f32.mrf.mxu0
        %1587 = vdwg.mxu0
        %v1588 = vadd.f32 %v1421, %v1583
        %v1589 = vld [vmem:[%s14] sm:$0x1]
        %v1590 = vld [vmem:[%s15] sm:$0x1]
        %v1591 = vsel %vm1405, %v1588, 0.0
        %1592 = vadd.xlane.f32.xlu0 %v1591
        %v1593 = vpop.xlane.xlu0 %1592
        %v1594 = vmul.f32 %v1593, %v1409
        %v1595 = vsub.f32 %v1588, %v1594
        %v1596 = vmul.f32 %v1595, %v1595
        %v1597 = vsel %vm1405, %v1596, 0.0
        %1598 = vadd.xlane.f32.xlu0 %v1597
        %v1599 = vpop.xlane.xlu0 %1598
        %v1600 = vmul.f32 %v1599, %v1409
        %v1601 = vadd.f32 %v1600, 1e-05
        %v1602 = vrsqrt.pop %v1601
        %v1603 = vmul.f32 %v1595, %v1602
        %v1604 = vmul.f32 %v1603, %v1589
        %v1605 = vadd.f32 %v1604, %v1590
        %v1606 = vpack.c.bf16 %v1605, %v1605
        %v1607 = vld [vmem:[%s16] sm:$0xf]
        %v1608 = vld [vmem:[%s16 + $0x4] sm:$0xf]
        %v1609 = vld [vmem:[%s16 + $0x8] sm:$0xf]
        %v1610 = vld [vmem:[%s16 + $0xc] sm:$0xf]
        %v1611 = vld [vmem:[%s17] sm:$0x1]
        %v1616 = vunpack.c.l.b16 %v1607
        %v1617 = vunpack.c.l.b16 %v1608
        %v1618 = vunpack.c.l.b16 %v1609
        %v1619 = vunpack.c.l.b16 %v1610
        %v1620 = vpack.c.b16 %v1617, %v1616
        %v1621 = vpack.c.b16 %v1619, %v1618
        %v1625 = vsel %vm601, %v1606, 0
        %1627 = vmatprep.subr.bf16.mxu0 0
        %1628 = vmatpush1.bf16.msra.mxu0 0
        %1629 = vmatprep.subr.bf16.mxu0 0
        %1630 = vmatpush1.bf16.msra.mxu0 0
        %1631 = vmatprep.subr.bf16.mxu0 0
        %1632 = vmatpush1.bf16.msra.mxu0 0
        %1633 = vmatprep.subr.bf16.mxu0 0
        %1634 = vmatpush1.bf16.msra.mxu0 0
        %1635 = vmatprep.subr.bf16.mxu0 0
        %1636 = vmatpush1.bf16.msra.mxu0 0
        %1637 = vmatprep.subr.bf16.mxu0 0
        %1638 = vmatpush1.bf16.msra.mxu0 0
        %1639 = vmatprep.subr.bf16.mxu0 0
        %1640 = vmatpush1.bf16.msra.mxu0 %v1621
        %1641 = vmatprep.subr.bf16.mxu0 0
        %1642 = vmatpush1.bf16.msra.mxu0 %v1620
        %1643 = vmatprep.subr.bf16.mxu0 0
        %1644 = vmatpush2.bf16.msra.mxu0 0
        %1645 = vmatprep.subr.bf16.mxu0 0
        %1646 = vmatpush2.bf16.msra.mxu0 0
        %1647 = vmatprep.subr.bf16.mxu0 0
        %1648 = vmatpush2.bf16.msra.mxu0 0
        %1649 = vmatprep.subr.bf16.mxu0 0
        %1650 = vmatpush2.bf16.msra.mxu0 0
        %1651 = vmatprep.subr.bf16.mxu0 0
        %1652 = vmatpush2.bf16.msra.mxu0 0
        %1653 = vmatprep.subr.bf16.mxu0 0
        %1654 = vmatpush2.bf16.msra.mxu0 0
        %1655 = vmatprep.subr.bf16.mxu0 0
        %1656 = vmatpush2.bf16.msra.mxu0 0
        %1657 = vmatprep.subr.bf16.mxu0 0
        %1658 = vmatpush2.bf16.msra.mxu0 0
        %1659 = vmatprep.mubr.bf16.mxu0 0
        %1660 = vmatmul.mubr.bf16.gmra.mxu0 %v1625
        %v1661 = vpop.f32.mrf.mxu0
        %v1662 = vadd.f32 %v1611, %v1661
        %v1663 = vpop.f32.mrf.mxu0
        %v1664 = vpop.f32.mrf.mxu0
        %v1665 = vpop.f32.mrf.mxu0
        %1666 = vdwg.mxu0
        %vm1667 = vcmask 57344
        %1668 = vst.msk [vmem:[%s567] sm:$0x1] %vm1667, %v1662
        %s1669 = sand.u32 %s423, 1
        %s1670 = scalar_lea.sflag [#allocation3], %s1669
        %s1671 = sand.u32 %s423, 1
        %s1672 = scalar_lea.vmem [#allocation2], %s1671
        // Predicated region
        $region93: #{pathformer_forward.7} parent=91 // pred_check
          %p1673 = pneg %p433
        $region94: #{pathformer_forward.7} parent=91 // pred_check_branch
          %1675 = sbr.rel (%p1673) target = $region96
        $region95: #{pathformer_forward.7} parent=91 // pred_region
          %s1677 = ssub.s32 16, 16
          %1678 = vsyncadd %s1670, %s1677
          %s1679 = smul.addr %s32, 16
          %s1680 = scalar_lea.hbm %s18, %s1679
          %s1682 = sshll.u32 %s1672, 4
          %s1683 = int_to_ptr.vmem [resolvable:$true] %s1682
          %1685 = dma.vmem_to_hbm [thread:$0]  %s1683, 16, %s1680, %s1670
        $region96: #{pathformer_forward.7} parent=91 // pred_fallthru
          _
      $region92: #{pathformer_forward.7} parent=5 // pred_fallthru
        _
      %p1686 = scmp.le.s32.totalorder 2, %s27
      // Predicated region
      $region97: #{pathformer_forward.7} parent=5 // pred_check
        %p1687 = pneg %p1686
      $region98: #{pathformer_forward.7} parent=5 // pred_check_branch
        %1689 = sbr.rel (%p1687) target = $region100
      $region99: #{pathformer_forward.7} parent=5 // pred_region
        %s1690 = ssub.s32 %s27, 2
        // Predicated region
        $region101: #{pathformer_forward.7} parent=99 // pred_check
          %p1691 = pneg %p439
        $region102: #{pathformer_forward.7} parent=99 // pred_check_branch
          %1693 = sbr.rel (%p1691) target = $region104
        $region103: #{pathformer_forward.7} parent=99 // pred_region
          %s1694 = sand.u32 %s424, 1
          %s1695 = scalar_lea.sflag [#allocation3], %s1694
          %s1696 = sand.u32 %s424, 1
          %s1697 = scalar_lea.vmem [#allocation2], %s1696
          %1698 = dma.done %s1695, 16
        $region104: #{pathformer_forward.7} parent=99 // pred_fallthru
          _
      $region100: #{pathformer_forward.7} parent=5 // pred_fallthru
        _
    $region6: #{pathformer_forward.7} parent=1 // loop_footer
      %s31 = sadd.s32 1, %s27
    $region7: #{pathformer_forward.7} parent=1 // loop_footer_branch
      %26 = sbr.rel target = $region3
    $region8: #{pathformer_forward.7} parent=1 // loop_exit
      _
    %1699 = vsyncpa [#allocation3], 1
    %s1700 = scalar_lea.sflag [#allocation3], 1
    %1701 = vsyncpa %s1700, 1

// kernel: pathformer_forward.5
$region0: #{pathformer_forward.5}
  #allocation0 [shape = 'u32[]', space=smem, size = 0x4, offset = 0x4, fixed_abs, tag = 'smem constant byte address 0x4 - core index']
  #allocation1 [shape = 'u32[144,128]{1,0:T(1,128)}', space=vmem, size = 0x12000, scoped, tag = 'internal scratch']
  %s0 = inlined_call_operand.vmem [shape: f32[16,32], index: 0, kind: input, shape index: {}]
  %s1 = inlined_call_operand.vmem [shape: f32[2,16,32], index: 1, kind: input, shape index: {}]
  %s2 = inlined_call_operand.vmem [shape: bf16[32,256], index: 2, kind: input, shape index: {}]
  %s3 = inlined_call_operand.vmem [shape: bf16[32,256], index: 3, kind: input, shape index: {}]
  %s4 = inlined_call_operand.vmem [shape: bf16[32,256], index: 4, kind: input, shape index: {}]
  %s5 = inlined_call_operand.vmem [shape: bf16[256,32], index: 5, kind: input, shape index: {}]
  %s6 = inlined_call_operand.vmem [shape: f32[1,32], index: 6, kind: input, shape index: {}]
  %s7 = inlined_call_operand.vmem [shape: bf16[64,266], index: 7, kind: input, shape index: {}]
  %s8 = inlined_call_operand.vmem [shape: f32[1,32], index: 8, kind: input, shape index: {}]
  %s9 = inlined_call_operand.vmem [shape: f32[1,32], index: 9, kind: input, shape index: {}]
  %s10 = inlined_call_operand.vmem [shape: bf16[32,64], index: 10, kind: input, shape index: {}]
  %s11 = inlined_call_operand.vmem [shape: f32[1,64], index: 11, kind: input, shape index: {}]
  %s12 = inlined_call_operand.vmem [shape: bf16[64,32], index: 12, kind: input, shape index: {}]
  %s13 = inlined_call_operand.vmem [shape: f32[1,32], index: 13, kind: input, shape index: {}]
  %s14 = inlined_call_operand.vmem [shape: f32[1,32], index: 14, kind: input, shape index: {}]
  %s15 = inlined_call_operand.vmem [shape: f32[1,32], index: 15, kind: input, shape index: {}]
  %s16 = inlined_call_operand.vmem [shape: f32[2,16,32], index: 16, kind: output, shape index: {}]
  %s17 = sld [smem:[#allocation0]]
  $region97: #{pathformer_forward.5} parent=0
    _
  %s19 = ssub.s32 1, %s17
  %s20 = scalar_select 0, %s19, %s17
  loop: start=0, step=1, limit=4
  $region2: #{pathformer_forward.5} parent=0 // loop_pre_header
    _
  $region3: #{pathformer_forward.5} parent=0 // loop_header
    %s22 = sphi 0, %s26
    %p23 = scmp.ge.s32.totalorder %s22, 4
    %s30 = sphi 0, %s30
    %s32 = sphi 0, %s30
    %s33 = sphi 0, %s32
    %s47 = sphi 0, %s33
    %s53 = sphi 0, %s55
    %s56 = sphi 0, %s53
    %s57 = sphi 0, %s56
    %s73 = sphi 0, %s57
    %s77 = sphi 0, %s77
    %s79 = sphi 0, %s77
    %s80 = sphi 0, %s79
    %s94 = sphi 0, %s80
    %s98 = sphi 0, %s98
    %s100 = sphi 0, %s98
    %s101 = sphi 0, %s100
    %s115 = sphi 0, %s101
    %s119 = sphi 0, %s119
    %s121 = sphi 0, %s119
    %s122 = sphi 0, %s121
    %s136 = sphi 0, %s122
    %s140 = sphi 0, %s140
    %s142 = sphi 0, %s140
    %s143 = sphi 0, %s142
    %s157 = sphi 0, %s143
    %s161 = sphi 0, %s161
    %s163 = sphi 0, %s161
    %s164 = sphi 0, %s163
    %s178 = sphi 0, %s164
    %s182 = sphi 0, %s182
    %s184 = sphi 0, %s182
    %s185 = sphi 0, %s184
    %s199 = sphi 0, %s185
    %s203 = sphi 0, %s203
    %s205 = sphi 0, %s203
    %s206 = sphi 0, %s205
    %s220 = sphi 0, %s206
    %s224 = sphi 0, %s224
    %s226 = sphi 0, %s224
    %s227 = sphi 0, %s226
    %s241 = sphi 0, %s227
    %s245 = sphi 0, %s245
    %s247 = sphi 0, %s245
    %s248 = sphi 0, %s247
    %s262 = sphi 0, %s248
    %s266 = sphi 0, %s266
    %s268 = sphi 0, %s266
    %s269 = sphi 0, %s268
    %s283 = sphi 0, %s269
    %s287 = sphi 0, %s287
    %s289 = sphi 0, %s287
    %s290 = sphi 0, %s289
    %s304 = sphi 0, %s290
    %s308 = sphi 0, %s308
    %s310 = sphi 0, %s308
    %s311 = sphi 0, %s310
    %s325 = sphi 0, %s311
    %s329 = sphi 0, %s329
    %s331 = sphi 0, %s329
    %s332 = sphi 0, %s331
    %s346 = sphi 0, %s332
    %s350 = sphi 0, %s350
    %s352 = sphi 0, %s350
    %s353 = sphi 0, %s352
    %s367 = sphi 0, %s353
    %s373 = sphi 0, %s375
    %s376 = sphi 0, %s373
    %s377 = sphi 0, %s376
    %s393 = sphi 0, %s377
  $region4: #{pathformer_forward.5} parent=0 // loop_header_branch
    %25 = sbr.rel (%p23) target = $region8
  $region5: #{pathformer_forward.5} parent=0 // loop_body
    %s27 = ssub.s32 %s22, 1
    %s28 = ssub.s32 %s22, 2
    %s29 = sadd.s32 %s22, 1
    %s31 = sadd.s32 %s30, 1
    %p34 = scmp.eq.s32.totalorder %s22, 1
    %p35 = scmp.ne.s32.totalorder %s30, %s32
    %p36 = scmp.eq.s32.totalorder %s22, 0
    %p37 = por %p35, %p36
    %p38 = scmp.ne.s32.totalorder %s30, %s32
    %p39 = scmp.eq.s32.totalorder %s27, 1
    %p40 = por %p38, %p39
    %p41 = scmp.ne.s32.totalorder %s32, %s33
    %p42 = scmp.eq.s32.totalorder %s27, 0
    %p43 = por %p41, %p42
    %p44 = scmp.ne.s32.totalorder %s32, %s33
    %p45 = scmp.eq.s32.totalorder %s28, 1
    %p46 = por %p44, %p45
    %p48 = scmp.ne.s32.totalorder %s33, %s47
    %p49 = scmp.eq.s32.totalorder %s28, 0
    %p50 = por %p48, %p49
    %s51 = ssub.s32 %s22, %s29
    %p52 = scmp.eq.s32.totalorder %s51, 0
    %s54 = sadd.s32 %s53, 1
    %s55 = scalar_select %p52, %s53, %s54
    %p58 = pneg %p52
    %p59 = scmp.eq.s32.totalorder %s22, 1
    %p60 = por %p58, %p59
    %p61 = scmp.ne.s32.totalorder %s53, %s56
    %p62 = scmp.eq.s32.totalorder %s22, 0
    %p63 = por %p61, %p62
    %p64 = scmp.ne.s32.totalorder %s53, %s56
    %p65 = scmp.eq.s32.totalorder %s27, 1
    %p66 = por %p64, %p65
    %p67 = scmp.ne.s32.totalorder %s56, %s57
    %p68 = scmp.eq.s32.totalorder %s27, 0
    %p69 = por %p67, %p68
    %p70 = scmp.ne.s32.totalorder %s56, %s57
    %p71 = scmp.eq.s32.totalorder %s28, 1
    %p72 = por %p70, %p71
    %p74 = scmp.ne.s32.totalorder %s57, %s73
    %p75 = scmp.eq.s32.totalorder %s28, 0
    %p76 = por %p74, %p75
    %s78 = sadd.s32 %s77, 1
    %p81 = scmp.eq.s32.totalorder %s22, 1
    %p82 = scmp.ne.s32.totalorder %s77, %s79
    %p83 = scmp.eq.s32.totalorder %s22, 0
    %p84 = por %p82, %p83
    %p85 = scmp.ne.s32.totalorder %s77, %s79
    %p86 = scmp.eq.s32.totalorder %s27, 1
    %p87 = por %p85, %p86
    %p88 = scmp.ne.s32.totalorder %s79, %s80
    %p89 = scmp.eq.s32.totalorder %s27, 0
    %p90 = por %p88, %p89
    %p91 = scmp.ne.s32.totalorder %s79, %s80
    %p92 = scmp.eq.s32.totalorder %s28, 1
    %p93 = por %p91, %p92
    %p95 = scmp.ne.s32.totalorder %s80, %s94
    %p96 = scmp.eq.s32.totalorder %s28, 0
    %p97 = por %p95, %p96
    %s99 = sadd.s32 %s98, 1
    %p102 = scmp.eq.s32.totalorder %s22, 1
    %p103 = scmp.ne.s32.totalorder %s98, %s100
    %p104 = scmp.eq.s32.totalorder %s22, 0
    %p105 = por %p103, %p104
    %p106 = scmp.ne.s32.totalorder %s98, %s100
    %p107 = scmp.eq.s32.totalorder %s27, 1
    %p108 = por %p106, %p107
    %p109 = scmp.ne.s32.totalorder %s100, %s101
    %p110 = scmp.eq.s32.totalorder %s27, 0
    %p111 = por %p109, %p110
    %p112 = scmp.ne.s32.totalorder %s100, %s101
    %p113 = scmp.eq.s32.totalorder %s28, 1
    %p114 = por %p112, %p113
    %p116 = scmp.ne.s32.totalorder %s101, %s115
    %p117 = scmp.eq.s32.totalorder %s28, 0
    %p118 = por %p116, %p117
    %s120 = sadd.s32 %s119, 1
    %p123 = scmp.eq.s32.totalorder %s22, 1
    %p124 = scmp.ne.s32.totalorder %s119, %s121
    %p125 = scmp.eq.s32.totalorder %s22, 0
    %p126 = por %p124, %p125
    %p127 = scmp.ne.s32.totalorder %s119, %s121
    %p128 = scmp.eq.s32.totalorder %s27, 1
    %p129 = por %p127, %p128
    %p130 = scmp.ne.s32.totalorder %s121, %s122
    %p131 = scmp.eq.s32.totalorder %s27, 0
    %p132 = por %p130, %p131
    %p133 = scmp.ne.s32.totalorder %s121, %s122
    %p134 = scmp.eq.s32.totalorder %s28, 1
    %p135 = por %p133, %p134
    %p137 = scmp.ne.s32.totalorder %s122, %s136
    %p138 = scmp.eq.s32.totalorder %s28, 0
    %p139 = por %p137, %p138
    %s141 = sadd.s32 %s140, 1
    %p144 = scmp.eq.s32.totalorder %s22, 1
    %p145 = scmp.ne.s32.totalorder %s140, %s142
    %p146 = scmp.eq.s32.totalorder %s22, 0
    %p147 = por %p145, %p146
    %p148 = scmp.ne.s32.totalorder %s140, %s142
    %p149 = scmp.eq.s32.totalorder %s27, 1
    %p150 = por %p148, %p149
    %p151 = scmp.ne.s32.totalorder %s142, %s143
    %p152 = scmp.eq.s32.totalorder %s27, 0
    %p153 = por %p151, %p152
    %p154 = scmp.ne.s32.totalorder %s142, %s143
    %p155 = scmp.eq.s32.totalorder %s28, 1
    %p156 = por %p154, %p155
    %p158 = scmp.ne.s32.totalorder %s143, %s157
    %p159 = scmp.eq.s32.totalorder %s28, 0
    %p160 = por %p158, %p159
    %s162 = sadd.s32 %s161, 1
    %p165 = scmp.eq.s32.totalorder %s22, 1
    %p166 = scmp.ne.s32.totalorder %s161, %s163
    %p167 = scmp.eq.s32.totalorder %s22, 0
    %p168 = por %p166, %p167
    %p169 = scmp.ne.s32.totalorder %s161, %s163
    %p170 = scmp.eq.s32.totalorder %s27, 1
    %p171 = por %p169, %p170
    %p172 = scmp.ne.s32.totalorder %s163, %s164
    %p173 = scmp.eq.s32.totalorder %s27, 0
    %p174 = por %p172, %p173
    %p175 = scmp.ne.s32.totalorder %s163, %s164
    %p176 = scmp.eq.s32.totalorder %s28, 1
    %p177 = por %p175, %p176
    %p179 = scmp.ne.s32.totalorder %s164, %s178
    %p180 = scmp.eq.s32.totalorder %s28, 0
    %p181 = por %p179, %p180
    %s183 = sadd.s32 %s182, 1
    %p186 = scmp.eq.s32.totalorder %s22, 1
    %p187 = scmp.ne.s32.totalorder %s182, %s184
    %p188 = scmp.eq.s32.totalorder %s22, 0
    %p189 = por %p187, %p188
    %p190 = scmp.ne.s32.totalorder %s182, %s184
    %p191 = scmp.eq.s32.totalorder %s27, 1
    %p192 = por %p190, %p191
    %p193 = scmp.ne.s32.totalorder %s184, %s185
    %p194 = scmp.eq.s32.totalorder %s27, 0
    %p195 = por %p193, %p194
    %p196 = scmp.ne.s32.totalorder %s184, %s185
    %p197 = scmp.eq.s32.totalorder %s28, 1
    %p198 = por %p196, %p197
    %p200 = scmp.ne.s32.totalorder %s185, %s199
    %p201 = scmp.eq.s32.totalorder %s28, 0
    %p202 = por %p200, %p201
    %s204 = sadd.s32 %s203, 1
    %p207 = scmp.eq.s32.totalorder %s22, 1
    %p208 = scmp.ne.s32.totalorder %s203, %s205
    %p209 = scmp.eq.s32.totalorder %s22, 0
    %p210 = por %p208, %p209
    %p211 = scmp.ne.s32.totalorder %s203, %s205
    %p212 = scmp.eq.s32.totalorder %s27, 1
    %p213 = por %p211, %p212
    %p214 = scmp.ne.s32.totalorder %s205, %s206
    %p215 = scmp.eq.s32.totalorder %s27, 0
    %p216 = por %p214, %p215
    %p217 = scmp.ne.s32.totalorder %s205, %s206
    %p218 = scmp.eq.s32.totalorder %s28, 1
    %p219 = por %p217, %p218
    %p221 = scmp.ne.s32.totalorder %s206, %s220
    %p222 = scmp.eq.s32.totalorder %s28, 0
    %p223 = por %p221, %p222
    %s225 = sadd.s32 %s224, 1
    %p228 = scmp.eq.s32.totalorder %s22, 1
    %p229 = scmp.ne.s32.totalorder %s224, %s226
    %p230 = scmp.eq.s32.totalorder %s22, 0
    %p231 = por %p229, %p230
    %p232 = scmp.ne.s32.totalorder %s224, %s226
    %p233 = scmp.eq.s32.totalorder %s27, 1
    %p234 = por %p232, %p233
    %p235 = scmp.ne.s32.totalorder %s226, %s227
    %p236 = scmp.eq.s32.totalorder %s27, 0
    %p237 = por %p235, %p236
    %p238 = scmp.ne.s32.totalorder %s226, %s227
    %p239 = scmp.eq.s32.totalorder %s28, 1
    %p240 = por %p238, %p239
    %p242 = scmp.ne.s32.totalorder %s227, %s241
    %p243 = scmp.eq.s32.totalorder %s28, 0
    %p244 = por %p242, %p243
    %s246 = sadd.s32 %s245, 1
    %p249 = scmp.eq.s32.totalorder %s22, 1
    %p250 = scmp.ne.s32.totalorder %s245, %s247
    %p251 = scmp.eq.s32.totalorder %s22, 0
    %p252 = por %p250, %p251
    %p253 = scmp.ne.s32.totalorder %s245, %s247
    %p254 = scmp.eq.s32.totalorder %s27, 1
    %p255 = por %p253, %p254
    %p256 = scmp.ne.s32.totalorder %s247, %s248
    %p257 = scmp.eq.s32.totalorder %s27, 0
    %p258 = por %p256, %p257
    %p259 = scmp.ne.s32.totalorder %s247, %s248
    %p260 = scmp.eq.s32.totalorder %s28, 1
    %p261 = por %p259, %p260
    %p263 = scmp.ne.s32.totalorder %s248, %s262
    %p264 = scmp.eq.s32.totalorder %s28, 0
    %p265 = por %p263, %p264
    %s267 = sadd.s32 %s266, 1
    %p270 = scmp.eq.s32.totalorder %s22, 1
    %p271 = scmp.ne.s32.totalorder %s266, %s268
    %p272 = scmp.eq.s32.totalorder %s22, 0
    %p273 = por %p271, %p272
    %p274 = scmp.ne.s32.totalorder %s266, %s268
    %p275 = scmp.eq.s32.totalorder %s27, 1
    %p276 = por %p274, %p275
    %p277 = scmp.ne.s32.totalorder %s268, %s269
    %p278 = scmp.eq.s32.totalorder %s27, 0
    %p279 = por %p277, %p278
    %p280 = scmp.ne.s32.totalorder %s268, %s269
    %p281 = scmp.eq.s32.totalorder %s28, 1
    %p282 = por %p280, %p281
    %p284 = scmp.ne.s32.totalorder %s269, %s283
    %p285 = scmp.eq.s32.totalorder %s28, 0
    %p286 = por %p284, %p285
    %s288 = sadd.s32 %s287, 1
    %p291 = scmp.eq.s32.totalorder %s22, 1
    %p292 = scmp.ne.s32.totalorder %s287, %s289
    %p293 = scmp.eq.s32.totalorder %s22, 0
    %p294 = por %p292, %p293
    %p295 = scmp.ne.s32.totalorder %s287, %s289
    %p296 = scmp.eq.s32.totalorder %s27, 1
    %p297 = por %p295, %p296
    %p298 = scmp.ne.s32.totalorder %s289, %s290
    %p299 = scmp.eq.s32.totalorder %s27, 0
    %p300 = por %p298, %p299
    %p301 = scmp.ne.s32.totalorder %s289, %s290
    %p302 = scmp.eq.s32.totalorder %s28, 1
    %p303 = por %p301, %p302
    %p305 = scmp.ne.s32.totalorder %s290, %s304
    %p306 = scmp.eq.s32.totalorder %s28, 0
    %p307 = por %p305, %p306
    %s309 = sadd.s32 %s308, 1
    %p312 = scmp.eq.s32.totalorder %s22, 1
    %p313 = scmp.ne.s32.totalorder %s308, %s310
    %p314 = scmp.eq.s32.totalorder %s22, 0
    %p315 = por %p313, %p314
    %p316 = scmp.ne.s32.totalorder %s308, %s310
    %p317 = scmp.eq.s32.totalorder %s27, 1
    %p318 = por %p316, %p317
    %p319 = scmp.ne.s32.totalorder %s310, %s311
    %p320 = scmp.eq.s32.totalorder %s27, 0
    %p321 = por %p319, %p320
    %p322 = scmp.ne.s32.totalorder %s310, %s311
    %p323 = scmp.eq.s32.totalorder %s28, 1
    %p324 = por %p322, %p323
    %p326 = scmp.ne.s32.totalorder %s311, %s325
    %p327 = scmp.eq.s32.totalorder %s28, 0
    %p328 = por %p326, %p327
    %s330 = sadd.s32 %s329, 1
    %p333 = scmp.eq.s32.totalorder %s22, 1
    %p334 = scmp.ne.s32.totalorder %s329, %s331
    %p335 = scmp.eq.s32.totalorder %s22, 0
    %p336 = por %p334, %p335
    %p337 = scmp.ne.s32.totalorder %s329, %s331
    %p338 = scmp.eq.s32.totalorder %s27, 1
    %p339 = por %p337, %p338
    %p340 = scmp.ne.s32.totalorder %s331, %s332
    %p341 = scmp.eq.s32.totalorder %s27, 0
    %p342 = por %p340, %p341
    %p343 = scmp.ne.s32.totalorder %s331, %s332
    %p344 = scmp.eq.s32.totalorder %s28, 1
    %p345 = por %p343, %p344
    %p347 = scmp.ne.s32.totalorder %s332, %s346
    %p348 = scmp.eq.s32.totalorder %s28, 0
    %p349 = por %p347, %p348
    %s351 = sadd.s32 %s350, 1
    %p354 = scmp.eq.s32.totalorder %s22, 1
    %p355 = scmp.ne.s32.totalorder %s350, %s352
    %p356 = scmp.eq.s32.totalorder %s22, 0
    %p357 = por %p355, %p356
    %p358 = scmp.ne.s32.totalorder %s350, %s352
    %p359 = scmp.eq.s32.totalorder %s27, 1
    %p360 = por %p358, %p359
    %p361 = scmp.ne.s32.totalorder %s352, %s353
    %p362 = scmp.eq.s32.totalorder %s27, 0
    %p363 = por %p361, %p362
    %p364 = scmp.ne.s32.totalorder %s352, %s353
    %p365 = scmp.eq.s32.totalorder %s28, 1
    %p366 = por %p364, %p365
    %p368 = scmp.ne.s32.totalorder %s353, %s367
    %p369 = scmp.eq.s32.totalorder %s28, 0
    %p370 = por %p368, %p369
    %s371 = ssub.s32 %s22, %s29
    %p372 = scmp.eq.s32.totalorder %s371, 0
    %s374 = sadd.s32 %s373, 1
    %s375 = scalar_select %p372, %s373, %s374
    %p378 = pneg %p372
    %p379 = scmp.eq.s32.totalorder %s22, 1
    %p380 = por %p378, %p379
    %p381 = scmp.ne.s32.totalorder %s373, %s376
    %p382 = scmp.eq.s32.totalorder %s22, 0
    %p383 = por %p381, %p382
    %p384 = scmp.ne.s32.totalorder %s373, %s376
    %p385 = scmp.eq.s32.totalorder %s27, 1
    %p386 = por %p384, %p385
    %p387 = scmp.ne.s32.totalorder %s376, %s377
    %p388 = scmp.eq.s32.totalorder %s27, 0
    %p389 = por %p387, %p388
    %p390 = scmp.ne.s32.totalorder %s376, %s377
    %p391 = scmp.eq.s32.totalorder %s28, 1
    %p392 = por %p390, %p391
    %p394 = scmp.ne.s32.totalorder %s377, %s393
    %p395 = scmp.eq.s32.totalorder %s28, 0
    %p396 = por %p394, %p395
    %p397 = scmp.le.s32.totalorder 1, %s22
    %p398 = scmp.lt.s32.totalorder %s22, 3
    %p399 = pnand %p397, %p398
    %p400 = pneg %p399
    // Predicated region
    $region9: #{pathformer_forward.5} parent=5 // pred_check
      _
    $region10: #{pathformer_forward.5} parent=5 // pred_check_branch
      %402 = sbr.rel (%p399) target = $region12
    $region11: #{pathformer_forward.5} parent=5 // pred_region
      %s403 = ssub.s32 %s22, 1
      // Predicated region
      $region13: #{pathformer_forward.5} parent=11 // pred_check
        %p404 = pneg %p43
      $region14: #{pathformer_forward.5} parent=11 // pred_check_branch
        %406 = sbr.rel (%p404) target = $region16
      $region15: #{pathformer_forward.5} parent=11 // pred_region
        _
      $region16: #{pathformer_forward.5} parent=11 // pred_fallthru
        _
      // Predicated region
      $region17: #{pathformer_forward.5} parent=11 // pred_check
        %p407 = pneg %p90
      $region18: #{pathformer_forward.5} parent=11 // pred_check_branch
        %409 = sbr.rel (%p407) target = $region20
      $region19: #{pathformer_forward.5} parent=11 // pred_region
        _
      $region20: #{pathformer_forward.5} parent=11 // pred_fallthru
        _
      // Predicated region
      $region21: #{pathformer_forward.5} parent=11 // pred_check
        %p410 = pneg %p111
      $region22: #{pathformer_forward.5} parent=11 // pred_check_branch
        %412 = sbr.rel (%p410) target = $region24
      $region23: #{pathformer_forward.5} parent=11 // pred_region
        _
      $region24: #{pathformer_forward.5} parent=11 // pred_fallthru
        _
      // Predicated region
      $region25: #{pathformer_forward.5} parent=11 // pred_check
        %p413 = pneg %p132
      $region26: #{pathformer_forward.5} parent=11 // pred_check_branch
        %415 = sbr.rel (%p413) target = $region28
      $region27: #{pathformer_forward.5} parent=11 // pred_region
        _
      $region28: #{pathformer_forward.5} parent=11 // pred_fallthru
        _
      // Predicated region
      $region29: #{pathformer_forward.5} parent=11 // pred_check
        %p416 = pneg %p153
      $region30: #{pathformer_forward.5} parent=11 // pred_check_branch
        %418 = sbr.rel (%p416) target = $region32
      $region31: #{pathformer_forward.5} parent=11 // pred_region
        _
      $region32: #{pathformer_forward.5} parent=11 // pred_fallthru
        _
      // Predicated region
      $region33: #{pathformer_forward.5} parent=11 // pred_check
        %p419 = pneg %p174
      $region34: #{pathformer_forward.5} parent=11 // pred_check_branch
        %421 = sbr.rel (%p419) target = $region36
      $region35: #{pathformer_forward.5} parent=11 // pred_region
        _
      $region36: #{pathformer_forward.5} parent=11 // pred_fallthru
        _
      // Predicated region
      $region37: #{pathformer_forward.5} parent=11 // pred_check
        %p422 = pneg %p195
      $region38: #{pathformer_forward.5} parent=11 // pred_check_branch
        %424 = sbr.rel (%p422) target = $region40
      $region39: #{pathformer_forward.5} parent=11 // pred_region
        _
      $region40: #{pathformer_forward.5} parent=11 // pred_fallthru
        _
      // Predicated region
      $region41: #{pathformer_forward.5} parent=11 // pred_check
        %p425 = pneg %p216
      $region42: #{pathformer_forward.5} parent=11 // pred_check_branch
        %427 = sbr.rel (%p425) target = $region44
      $region43: #{pathformer_forward.5} parent=11 // pred_region
        _
      $region44: #{pathformer_forward.5} parent=11 // pred_fallthru
        _
      // Predicated region
      $region45: #{pathformer_forward.5} parent=11 // pred_check
        %p428 = pneg %p237
      $region46: #{pathformer_forward.5} parent=11 // pred_check_branch
        %430 = sbr.rel (%p428) target = $region48
      $region47: #{pathformer_forward.5} parent=11 // pred_region
        _
      $region48: #{pathformer_forward.5} parent=11 // pred_fallthru
        _
      // Predicated region
      $region49: #{pathformer_forward.5} parent=11 // pred_check
        %p431 = pneg %p258
      $region50: #{pathformer_forward.5} parent=11 // pred_check_branch
        %433 = sbr.rel (%p431) target = $region52
      $region51: #{pathformer_forward.5} parent=11 // pred_region
        _
      $region52: #{pathformer_forward.5} parent=11 // pred_fallthru
        _
      // Predicated region
      $region53: #{pathformer_forward.5} parent=11 // pred_check
        %p434 = pneg %p279
      $region54: #{pathformer_forward.5} parent=11 // pred_check_branch
        %436 = sbr.rel (%p434) target = $region56
      $region55: #{pathformer_forward.5} parent=11 // pred_region
        _
      $region56: #{pathformer_forward.5} parent=11 // pred_fallthru
        _
      // Predicated region
      $region57: #{pathformer_forward.5} parent=11 // pred_check
        %p437 = pneg %p300
      $region58: #{pathformer_forward.5} parent=11 // pred_check_branch
        %439 = sbr.rel (%p437) target = $region60
      $region59: #{pathformer_forward.5} parent=11 // pred_region
        _
      $region60: #{pathformer_forward.5} parent=11 // pred_fallthru
        _
      // Predicated region
      $region61: #{pathformer_forward.5} parent=11 // pred_check
        %p440 = pneg %p321
      $region62: #{pathformer_forward.5} parent=11 // pred_check_branch
        %442 = sbr.rel (%p440) target = $region64
      $region63: #{pathformer_forward.5} parent=11 // pred_region
        _
      $region64: #{pathformer_forward.5} parent=11 // pred_fallthru
        _
      // Predicated region
      $region65: #{pathformer_forward.5} parent=11 // pred_check
        %p443 = pneg %p342
      $region66: #{pathformer_forward.5} parent=11 // pred_check_branch
        %445 = sbr.rel (%p443) target = $region68
      $region67: #{pathformer_forward.5} parent=11 // pred_region
        _
      $region68: #{pathformer_forward.5} parent=11 // pred_fallthru
        _
      // Predicated region
      $region69: #{pathformer_forward.5} parent=11 // pred_check
        %p446 = pneg %p363
      $region70: #{pathformer_forward.5} parent=11 // pred_check_branch
        %448 = sbr.rel (%p446) target = $region72
      $region71: #{pathformer_forward.5} parent=11 // pred_region
        _
      $region72: #{pathformer_forward.5} parent=11 // pred_fallthru
        _
    $region12: #{pathformer_forward.5} parent=5 // pred_fallthru
      _
    %p449 = scmp.lt.s32.totalorder %s22, 2
    // Predicated region
    $region73: #{pathformer_forward.5} parent=5 // pred_check
      %p450 = pneg %p449
    $region74: #{pathformer_forward.5} parent=5 // pred_check_branch
      %452 = sbr.rel (%p450) target = $region76
    $region75: #{pathformer_forward.5} parent=5 // pred_region
      // Predicated region
      $region77: #{pathformer_forward.5} parent=75 // pred_check
        %p453 = pneg %p63
      $region78: #{pathformer_forward.5} parent=75 // pred_check_branch
        %455 = sbr.rel (%p453) target = $region80
      $region79: #{pathformer_forward.5} parent=75 // pred_region
        %p456 = scmp.lt.s32.totalorder %s22, 1
        %s457 = scalar_select %p456, %s22, 1
        %s458 = smul.addr %s457, 2
        %s459 = smul.addr %s458, 8
        %s460 = scalar_lea.vmem %s1, %s459
      $region80: #{pathformer_forward.5} parent=75 // pred_fallthru
        _
    $region76: #{pathformer_forward.5} parent=5 // pred_fallthru
      _
    %p461 = scmp.le.s32.totalorder 1, %s22
    %p462 = scmp.lt.s32.totalorder %s22, 3
    %p463 = pnand %p461, %p462
    %p464 = pneg %p463
    // Predicated region
    $region81: #{pathformer_forward.5} parent=5 // pred_check
      _
    $region82: #{pathformer_forward.5} parent=5 // pred_check_branch
      %466 = sbr.rel (%p463) target = $region84
    $region83: #{pathformer_forward.5} parent=5 // pred_region
      %s467 = ssub.s32 %s22, 1
      %p468 = pneg %p43
      %p469 = pneg %p40
      %p470 = scmp.lt.s32.totalorder %s27, 1
      %s471 = scalar_select %p470, %s27, 1
      %s472 = smul.addr %s471, 2
      %s473 = smul.addr %s472, 8
      %s474 = scalar_lea.vmem %s1, %s473
      %p475 = pneg %p69
      %p476 = pneg %p66
      %p477 = pneg %p90
      %p478 = pneg %p87
      %p479 = pneg %p111
      %p480 = pneg %p108
      %p481 = pneg %p132
      %p482 = pneg %p129
      %p483 = pneg %p153
      %p484 = pneg %p150
      %p485 = pneg %p174
      %p486 = pneg %p171
      %p487 = pneg %p195
      %p488 = pneg %p192
      %p489 = pneg %p216
      %p490 = pneg %p213
      %p491 = pneg %p237
      %p492 = pneg %p234
      %p493 = pneg %p258
      %p494 = pneg %p255
      %p495 = pneg %p279
      %p496 = pneg %p276
      %p497 = pneg %p300
      %p498 = pneg %p297
      %p499 = pneg %p321
      %p500 = pneg %p318
      %p501 = pneg %p342
      %p502 = pneg %p339
      %p503 = pneg %p363
      %p504 = pneg %p360
      %p505 = pneg %p389
      %p506 = pneg %p386
      %p507 = scmp.lt.s32.totalorder %s27, 1
      %s508 = scalar_select %p507, %s27, 1
      %s509 = smul.addr %s508, 2
      %s510 = smul.addr %s509, 8
      %s511 = scalar_lea.vmem %s16, %s510
      %p512 = scmp.lt.s32.totalorder %s27, 1
      %s513 = scalar_select %p512, %s27, 1
      %s514 = smul.addr %s513, 2
      %s515 = smul.addr %s514, 8
      %s516 = scalar_lea.vmem %s1, %s515
      %p517 = scmp.lt.s32.totalorder %s27, 1
      %s518 = scalar_select %p517, %s27, 1
      %s519 = smul.addr %s518, 2
      %s520 = smul.addr %s519, 8
      %s521 = scalar_lea.vmem %s16, %s520
      %v523 = vld [vmem:[%s0] sm:$0xff]
      %v524 = vld [vmem:[%s0 + $0x8] sm:$0xff]
      %v525 = vld [vmem:[%s516] sm:$0xff]
      %v526 = vld [vmem:[%s516 + $0x8] sm:$0xff]
      %v527 = vld [vmem:[%s5] sm:$0xf]
      %v528 = vld [vmem:[%s5 + $0x4] sm:$0xf]
      %v529 = vld [vmem:[%s5 + $0x8] sm:$0xf]
      %v530 = vld [vmem:[%s5 + $0xc] sm:$0xf]
      %v531 = vld [vmem:[%s5 + $0x10] sm:$0xf]
      %v532 = vld [vmem:[%s5 + $0x14] sm:$0xf]
      %v533 = vld [vmem:[%s5 + $0x18] sm:$0xf]
      %v534 = vld [vmem:[%s5 + $0x1c] sm:$0xf]
      %v535 = vld [vmem:[%s5 + $0x20] sm:$0xf]
      %v536 = vld [vmem:[%s5 + $0x24] sm:$0xf]
      %v537 = vld [vmem:[%s5 + $0x28] sm:$0xf]
      %v538 = vld [vmem:[%s5 + $0x2c] sm:$0xf]
      %v539 = vld [vmem:[%s5 + $0x30] sm:$0xf]
      %v540 = vld [vmem:[%s5 + $0x34] sm:$0xf]
      %v541 = vld [vmem:[%s5 + $0x38] sm:$0xf]
      %v542 = vld [vmem:[%s5 + $0x3c] sm:$0xf]
      %v543 = vld [vmem:[%s5 + $0x40] sm:$0xf]
      %v544 = vld [vmem:[%s5 + $0x44] sm:$0xf]
      %v545 = vld [vmem:[%s5 + $0x48] sm:$0xf]
      %v546 = vld [vmem:[%s5 + $0x4c] sm:$0xf]
      %v547 = vld [vmem:[%s5 + $0x50] sm:$0xf]
      %v548 = vld [vmem:[%s5 + $0x54] sm:$0xf]
      %v549 = vld [vmem:[%s5 + $0x58] sm:$0xf]
      %v550 = vld [vmem:[%s5 + $0x5c] sm:$0xf]
      %v551 = vld [vmem:[%s5 + $0x60] sm:$0xf]
      %v552 = vld [vmem:[%s5 + $0x64] sm:$0xf]
      %v553 = vld [vmem:[%s5 + $0x68] sm:$0xf]
      %v554 = vld [vmem:[%s5 + $0x6c] sm:$0xf]
      %v555 = vld [vmem:[%s5 + $0x70] sm:$0xf]
      %v556 = vld [vmem:[%s5 + $0x74] sm:$0xf]
      %v557 = vld [vmem:[%s5 + $0x78] sm:$0xf]
      %v558 = vld [vmem:[%s5 + $0x7c] sm:$0xf]
      %v559 = vld [vmem:[%s7] sm:$0xff]
      %v560 = vld [vmem:[%s7 + $0x8] sm:$0xf]
      %v561 = vld [vmem:[%s7 + $0xc] sm:$0xff]
      %v562 = vld [vmem:[%s7 + $0x14] sm:$0xf]
      %v563 = vld [vmem:[%s7 + $0x18] sm:$0xff]
      %v564 = vld [vmem:[%s7 + $0x20] sm:$0xf]
      %v565 = vld [vmem:[%s7 + $0x24] sm:$0xff]
      %v566 = vld [vmem:[%s7 + $0x2c] sm:$0xf]
      %v567 = vld [vmem:[%s7 + $0x30] sm:$0xff]
      %v568 = vld [vmem:[%s7 + $0x38] sm:$0xf]
      %v569 = vld [vmem:[%s7 + $0x3c] sm:$0xff]
      %v570 = vld [vmem:[%s7 + $0x44] sm:$0xf]
      %v571 = vld [vmem:[%s7 + $0x48] sm:$0xff]
      %v572 = vld [vmem:[%s7 + $0x50] sm:$0xf]
      %v573 = vld [vmem:[%s7 + $0x54] sm:$0xff]
      %v574 = vld [vmem:[%s7 + $0x5c] sm:$0xf]
      %v575 = vpack.c.bf16 %v524, %v523
      %v576 = vpack.c.bf16 %v526, %v525
      %v577 = vld [vmem:[%s2] sm:$0xff]
      %v578 = vld [vmem:[%s2 + $0x8] sm:$0xff]
      %v579 = vld [vmem:[%s2 + $0x10] sm:$0xff]
      %v580 = vld [vmem:[%s2 + $0x18] sm:$0xff]
      %v585 = vunpack.c.l.b16 %v577
      %v586 = vunpack.c.h.b16 %v577
      %v587 = vunpack.c.l.b16 %v578
      %v588 = vunpack.c.h.b16 %v578
      %v589 = vunpack.c.l.b16 %v579
      %v590 = vunpack.c.h.b16 %v579
      %v591 = vunpack.c.l.b16 %v580
      %v592 = vunpack.c.h.b16 %v580
      %v593 = vpack.c.b16 %v587, %v585
      %v594 = vpack.c.b16 %v588, %v586
      %v595 = vpack.c.b16 %v591, %v589
      %v596 = vpack.c.b16 %v592, %v590
      %vm601 = vcmask 261120
      %v603 = vsel %vm601, %v575, 0
      %605 = vmatprep.subr.bf16.mxu0 0
      %606 = vmatpush1.bf16.msra.mxu0 0
      %607 = vmatprep.subr.bf16.mxu0 0
      %608 = vmatpush1.bf16.msra.mxu0 0
      %609 = vmatprep.subr.bf16.mxu0 0
      %610 = vmatpush1.bf16.msra.mxu0 0
      %611 = vmatprep.subr.bf16.mxu0 0
      %612 = vmatpush1.bf16.msra.mxu0 0
      %613 = vmatprep.subr.bf16.mxu0 0
      %614 = vmatpush1.bf16.msra.mxu0 0
      %615 = vmatprep.subr.bf16.mxu0 0
      %616 = vmatpush1.bf16.msra.mxu0 0
      %617 = vmatprep.subr.bf16.mxu0 %v596
      %618 = vmatpush1.bf16.msra.mxu0 %v595
      %619 = vmatprep.subr.bf16.mxu0 %v594
      %620 = vmatpush1.bf16.msra.mxu0 %v593
      %621 = vmatprep.subr.bf16.mxu0 0
      %622 = vmatpush2.bf16.msra.mxu0 0
      %623 = vmatprep.subr.bf16.mxu0 0
      %624 = vmatpush2.bf16.msra.mxu0 0
      %625 = vmatprep.subr.bf16.mxu0 0
      %626 = vmatpush2.bf16.msra.mxu0 0
      %627 = vmatprep.subr.bf16.mxu0 0
      %628 = vmatpush2.bf16.msra.mxu0 0
      %629 = vmatprep.subr.bf16.mxu0 0
      %630 = vmatpush2.bf16.msra.mxu0 0
      %631 = vmatprep.subr.bf16.mxu0 0
      %632 = vmatpush2.bf16.msra.mxu0 0
      %633 = vmatprep.subr.bf16.mxu0 0
      %634 = vmatpush2.bf16.msra.mxu0 0
      %635 = vmatprep.subr.bf16.mxu0 0
      %636 = vmatpush2.bf16.msra.mxu0 0
      %637 = vmatprep.mubr.bf16.mxu0 0
      %638 = vmatmul.mubr.bf16.gmra.mxu0 %v603
      %v639 = vpop.f32.mrf.mxu0
      %v640 = vadd.f32 0.0, %v639
      %v641 = vpop.f32.mrf.mxu0
      %v642 = vadd.f32 0.0, %v641
      %v643 = vpop.f32.mrf.mxu0
      %v644 = vadd.f32 0.0, %v643
      %v645 = vpop.f32.mrf.mxu0
      %v646 = vadd.f32 0.0, %v645
      %647 = vdwg.mxu0
      %v648 = vld [vmem:[%s3] sm:$0xff]
      %v649 = vld [vmem:[%s3 + $0x8] sm:$0xff]
      %v650 = vld [vmem:[%s3 + $0x10] sm:$0xff]
      %v651 = vld [vmem:[%s3 + $0x18] sm:$0xff]
      %v656 = vunpack.c.l.b16 %v648
      %v657 = vunpack.c.h.b16 %v648
      %v658 = vunpack.c.l.b16 %v649
      %v659 = vunpack.c.h.b16 %v649
      %v660 = vunpack.c.l.b16 %v650
      %v661 = vunpack.c.h.b16 %v650
      %v662 = vunpack.c.l.b16 %v651
      %v663 = vunpack.c.h.b16 %v651
      %v664 = vpack.c.b16 %v658, %v656
      %v665 = vpack.c.b16 %v659, %v657
      %v666 = vpack.c.b16 %v662, %v660
      %v667 = vpack.c.b16 %v663, %v661
      %v673 = vsel %vm601, %v576, 0
      %675 = vmatprep.subr.bf16.mxu0 0
      %676 = vmatpush1.bf16.msra.mxu0 0
      %677 = vmatprep.subr.bf16.mxu0 0
      %678 = vmatpush1.bf16.msra.mxu0 0
      %679 = vmatprep.subr.bf16.mxu0 0
      %680 = vmatpush1.bf16.msra.mxu0 0
      %681 = vmatprep.subr.bf16.mxu0 0
      %682 = vmatpush1.bf16.msra.mxu0 0
      %683 = vmatprep.subr.bf16.mxu0 0
      %684 = vmatpush1.bf16.msra.mxu0 0
      %685 = vmatprep.subr.bf16.mxu0 0
      %686 = vmatpush1.bf16.msra.mxu0 0
      %687 = vmatprep.subr.bf16.mxu0 %v667
      %688 = vmatpush1.bf16.msra.mxu0 %v666
      %689 = vmatprep.subr.bf16.mxu0 %v665
      %690 = vmatpush1.bf16.msra.mxu0 %v664
      %691 = vmatprep.subr.bf16.mxu0 0
      %692 = vmatpush2.bf16.msra.mxu0 0
      %693 = vmatprep.subr.bf16.mxu0 0
      %694 = vmatpush2.bf16.msra.mxu0 0
      %695 = vmatprep.subr.bf16.mxu0 0
      %696 = vmatpush2.bf16.msra.mxu0 0
      %697 = vmatprep.subr.bf16.mxu0 0
      %698 = vmatpush2.bf16.msra.mxu0 0
      %699 = vmatprep.subr.bf16.mxu0 0
      %700 = vmatpush2.bf16.msra.mxu0 0
      %701 = vmatprep.subr.bf16.mxu0 0
      %702 = vmatpush2.bf16.msra.mxu0 0
      %703 = vmatprep.subr.bf16.mxu0 0
      %704 = vmatpush2.bf16.msra.mxu0 0
      %705 = vmatprep.subr.bf16.mxu0 0
      %706 = vmatpush2.bf16.msra.mxu0 0
      %707 = vmatprep.mubr.bf16.mxu0 0
      %708 = vmatmul.mubr.bf16.gmra.mxu0 %v673
      %v709 = vpop.f32.mrf.mxu0
      %v710 = vadd.f32 0.0, %v709
      %v711 = vpop.f32.mrf.mxu0
      %v712 = vadd.f32 0.0, %v711
      %v713 = vpop.f32.mrf.mxu0
      %v714 = vadd.f32 0.0, %v713
      %v715 = vpop.f32.mrf.mxu0
      %v716 = vadd.f32 0.0, %v715
      %717 = vdwg.mxu0
      %v718 = vld [vmem:[%s4] sm:$0xff]
      %v719 = vld [vmem:[%s4 + $0x8] sm:$0xff]
      %v720 = vld [vmem:[%s4 + $0x10] sm:$0xff]
      %v721 = vld [vmem:[%s4 + $0x18] sm:$0xff]
      %v726 = vunpack.c.l.b16 %v718
      %v727 = vunpack.c.h.b16 %v718
      %v728 = vunpack.c.l.b16 %v719
      %v729 = vunpack.c.h.b16 %v719
      %v730 = vunpack.c.l.b16 %v720
      %v731 = vunpack.c.h.b16 %v720
      %v732 = vunpack.c.l.b16 %v721
      %v733 = vunpack.c.h.b16 %v721
      %v734 = vpack.c.b16 %v728, %v726
      %v735 = vpack.c.b16 %v729, %v727
      %v736 = vpack.c.b16 %v732, %v730
      %v737 = vpack.c.b16 %v733, %v731
      %742 = vmatprep.subr.bf16.mxu0 0
      %743 = vmatpush1.bf16.msra.mxu0 0
      %744 = vmatprep.subr.bf16.mxu0 0
      %745 = vmatpush1.bf16.msra.mxu0 0
      %746 = vmatprep.subr.bf16.mxu0 0
      %747 = vmatpush1.bf16.msra.mxu0 0
      %748 = vmatprep.subr.bf16.mxu0 0
      %749 = vmatpush1.bf16.msra.mxu0 0
      %750 = vmatprep.subr.bf16.mxu0 0
      %751 = vmatpush1.bf16.msra.mxu0 0
      %752 = vmatprep.subr.bf16.mxu0 0
      %753 = vmatpush1.bf16.msra.mxu0 0
      %754 = vmatprep.subr.bf16.mxu0 %v737
      %755 = vmatpush1.bf16.msra.mxu0 %v736
      %756 = vmatprep.subr.bf16.mxu0 %v735
      %757 = vmatpush1.bf16.msra.mxu0 %v734
      %758 = vmatprep.subr.bf16.mxu0 0
      %759 = vmatpush2.bf16.msra.mxu0 0
      %760 = vmatprep.subr.bf16.mxu0 0
      %761 = vmatpush2.bf16.msra.mxu0 0
      %762 = vmatprep.subr.bf16.mxu0 0
      %763 = vmatpush2.bf16.msra.mxu0 0
      %764 = vmatprep.subr.bf16.mxu0 0
      %765 = vmatpush2.bf16.msra.mxu0 0
      %766 = vmatprep.subr.bf16.mxu0 0
      %767 = vmatpush2.bf16.msra.mxu0 0
      %768 = vmatprep.subr.bf16.mxu0 0
      %769 = vmatpush2.bf16.msra.mxu0 0
      %770 = vmatprep.subr.bf16.mxu0 0
      %771 = vmatpush2.bf16.msra.mxu0 0
      %772 = vmatprep.subr.bf16.mxu0 0
      %773 = vmatpush2.bf16.msra.mxu0 0
      %774 = vmatprep.mubr.bf16.mxu0 0
      %775 = vmatmul.mubr.bf16.gmra.mxu0 %v673
      %v776 = vpop.f32.mrf.mxu0
      %v777 = vadd.f32 0.0, %v776
      %v778 = vpop.f32.mrf.mxu0
      %v779 = vadd.f32 0.0, %v778
      %v780 = vpop.f32.mrf.mxu0
      %v781 = vadd.f32 0.0, %v780
      %v782 = vpop.f32.mrf.mxu0
      %v783 = vadd.f32 0.0, %v782
      %784 = vdwg.mxu0
      %v785 = vmul.f32 %v640, 0.35355338
      %v786 = vmul.f32 %v644, 0.35355338
      %v787 = vpack.c.bf16 %v786, %v785
      %v804 = vunpack.c.l.b16 %v559
      %v805 = vunpack.c.h.b16 %v559
      %v806 = vunpack.c.l.b16 %v560
      %v807 = vunpack.c.l.b16 %v561
      %v808 = vunpack.c.h.b16 %v561
      %v809 = vunpack.c.l.b16 %v562
      %v810 = vunpack.c.l.b16 %v563
      %v811 = vunpack.c.h.b16 %v563
      %v812 = vunpack.c.l.b16 %v564
      %v813 = vunpack.c.l.b16 %v565
      %v814 = vunpack.c.h.b16 %v565
      %v815 = vunpack.c.l.b16 %v566
      %v816 = vunpack.c.l.b16 %v567
      %v817 = vunpack.c.h.b16 %v567
      %v818 = vunpack.c.l.b16 %v568
      %v819 = vunpack.c.l.b16 %v569
      %v820 = vunpack.c.h.b16 %v569
      %v821 = vunpack.c.l.b16 %v570
      %v822 = vunpack.c.l.b16 %v571
      %v823 = vunpack.c.h.b16 %v571
      %v824 = vunpack.c.l.b16 %v572
      %v825 = vunpack.c.l.b16 %v573
      %v826 = vunpack.c.h.b16 %v573
      %v827 = vunpack.c.l.b16 %v574
      %v828 = vpack.c.b16 %v807, %v804
      %v829 = vpack.c.b16 %v808, %v805
      %v830 = vpack.c.b16 %v809, %v806
      %v831 = vpack.c.b16 %v813, %v810
      %v832 = vpack.c.b16 %v814, %v811
      %v833 = vpack.c.b16 %v815, %v812
      %v834 = vpack.c.b16 %v819, %v816
      %v835 = vpack.c.b16 %v820, %v817
      %v836 = vpack.c.b16 %v821, %v818
      %v837 = vpack.c.b16 %v825, %v822
      %v838 = vpack.c.b16 %v826, %v823
      %v839 = vpack.c.b16 %v827, %v824
      %vm852 = vcmask 523264
      %v854 = vsel %vm852, %v787, 0
      %856 = vmatprep.subr.bf16.mxu0 0
      %857 = vmatpush1.bf16.msra.mxu0 0
      %858 = vmatprep.subr.bf16.mxu0 0
      %859 = vmatpush1.bf16.msra.mxu0 0
      %860 = vmatprep.subr.bf16.mxu0 0
      %861 = vmatpush1.bf16.msra.mxu0 0
      %862 = vmatprep.subr.bf16.mxu0 0
      %863 = vmatpush1.bf16.msra.mxu0 0
      %864 = vmatprep.subr.bf16.mxu0 %v838
      %865 = vmatpush1.bf16.msra.mxu0 %v837
      %866 = vmatprep.subr.bf16.mxu0 %v835
      %867 = vmatpush1.bf16.msra.mxu0 %v834
      %868 = vmatprep.subr.bf16.mxu0 %v832
      %869 = vmatpush1.bf16.msra.mxu0 %v831
      %870 = vmatprep.subr.bf16.mxu0 %v829
      %871 = vmatpush1.bf16.msra.mxu0 %v828
      %872 = vmatprep.subr.bf16.mxu0 0
      %873 = vmatpush2.bf16.msra.mxu0 0
      %874 = vmatprep.subr.bf16.mxu0 0
      %875 = vmatpush2.bf16.msra.mxu0 0
      %876 = vmatprep.subr.bf16.mxu0 0
      %877 = vmatpush2.bf16.msra.mxu0 0
      %878 = vmatprep.subr.bf16.mxu0 0
      %879 = vmatpush2.bf16.msra.mxu0 0
      %880 = vmatprep.subr.bf16.mxu0 0
      %881 = vmatpush2.bf16.msra.mxu0 0
      %882 = vmatprep.subr.bf16.mxu0 0
      %883 = vmatpush2.bf16.msra.mxu0 0
      %884 = vmatprep.subr.bf16.mxu0 0
      %885 = vmatpush2.bf16.msra.mxu0 0
      %886 = vmatprep.subr.bf16.mxu0 0
      %887 = vmatpush2.bf16.msra.mxu0 0
      %888 = vmatprep.mubr.bf16.mxu0 0
      %889 = vmatmul.mubr.bf16.gmra.mxu0 %v854
      %v890 = vpop.f32.mrf.mxu0
      %v891 = vadd.f32 0.0, %v890
      %v892 = vpop.f32.mrf.mxu0
      %v893 = vadd.f32 0.0, %v892
      %v894 = vpop.f32.mrf.mxu0
      %v895 = vadd.f32 0.0, %v894
      %v896 = vpop.f32.mrf.mxu0
      %v897 = vadd.f32 0.0, %v896
      %898 = vdwg.mxu0
      %899 = vmatprep.subr.bf16.mxu0 0
      %900 = vmatpush1.bf16.msra.mxu0 0
      %901 = vmatprep.subr.bf16.mxu0 0
      %902 = vmatpush1.bf16.msra.mxu0 0
      %903 = vmatprep.subr.bf16.mxu0 0
      %904 = vmatpush1.bf16.msra.mxu0 0
      %905 = vmatprep.subr.bf16.mxu0 0
      %906 = vmatpush1.bf16.msra.mxu0 0
      %907 = vmatprep.subr.bf16.mxu0 0
      %908 = vmatpush1.bf16.msra.mxu0 %v839
      %909 = vmatprep.subr.bf16.mxu0 0
      %910 = vmatpush1.bf16.msra.mxu0 %v836
      %911 = vmatprep.subr.bf16.mxu0 0
      %912 = vmatpush1.bf16.msra.mxu0 %v833
      %913 = vmatprep.subr.bf16.mxu0 0
      %914 = vmatpush1.bf16.msra.mxu0 %v830
      %915 = vmatprep.subr.bf16.mxu0 0
      %916 = vmatpush2.bf16.msra.mxu0 0
      %917 = vmatprep.subr.bf16.mxu0 0
      %918 = vmatpush2.bf16.msra.mxu0 0
      %919 = vmatprep.subr.bf16.mxu0 0
      %920 = vmatpush2.bf16.msra.mxu0 0
      %921 = vmatprep.subr.bf16.mxu0 0
      %922 = vmatpush2.bf16.msra.mxu0 0
      %923 = vmatprep.subr.bf16.mxu0 0
      %924 = vmatpush2.bf16.msra.mxu0 0
      %925 = vmatprep.subr.bf16.mxu0 0
      %926 = vmatpush2.bf16.msra.mxu0 0
      %927 = vmatprep.subr.bf16.mxu0 0
      %928 = vmatpush2.bf16.msra.mxu0 0
      %929 = vmatprep.subr.bf16.mxu0 0
      %930 = vmatpush2.bf16.msra.mxu0 0
      %931 = vmatprep.mubr.bf16.mxu0 0
      %932 = vmatmul.mubr.bf16.gmra.mxu0 %v854
      %v933 = vpop.f32.mrf.mxu0
      %v934 = vadd.f32 0.0, %v933
      %v935 = vpop.f32.mrf.mxu0
      %v936 = vpop.f32.mrf.mxu0
      %v937 = vadd.f32 0.0, %v936
      %v938 = vpop.f32.mrf.mxu0
      %939 = vdwg.mxu0
      %v940 = vmul.f32 %v710, 0.35355338
      %v941 = vmul.f32 %v714, 0.35355338
      %v942 = vpack.c.bf16 %v941, %v940
      %v944 = vsel %vm852, %v942, 0
      %946 = vmatprep.subr.bf16.mxu0 0
      %947 = vmatpush1.bf16.msra.mxu0 0
      %948 = vmatprep.subr.bf16.mxu0 0
      %949 = vmatpush1.bf16.msra.mxu0 0
      %950 = vmatprep.subr.bf16.mxu0 0
      %951 = vmatpush1.bf16.msra.mxu0 0
      %952 = vmatprep.subr.bf16.mxu0 0
      %953 = vmatpush1.bf16.msra.mxu0 0
      %954 = vmatprep.subr.bf16.mxu0 %v838
      %955 = vmatpush1.bf16.msra.mxu0 %v837
      %956 = vmatprep.subr.bf16.mxu0 %v835
      %957 = vmatpush1.bf16.msra.mxu0 %v834
      %958 = vmatprep.subr.bf16.mxu0 %v832
      %959 = vmatpush1.bf16.msra.mxu0 %v831
      %960 = vmatprep.subr.bf16.mxu0 %v829
      %961 = vmatpush1.bf16.msra.mxu0 %v828
      %962 = vmatprep.subr.bf16.mxu0 0
      %963 = vmatpush2.bf16.msra.mxu0 0
      %964 = vmatprep.subr.bf16.mxu0 0
      %965 = vmatpush2.bf16.msra.mxu0 0
      %966 = vmatprep.subr.bf16.mxu0 0
      %967 = vmatpush2.bf16.msra.mxu0 0
      %968 = vmatprep.subr.bf16.mxu0 0
      %969 = vmatpush2.bf16.msra.mxu0 0
      %970 = vmatprep.subr.bf16.mxu0 0
      %971 = vmatpush2.bf16.msra.mxu0 0
      %972 = vmatprep.subr.bf16.mxu0 0
      %973 = vmatpush2.bf16.msra.mxu0 0
      %974 = vmatprep.subr.bf16.mxu0 0
      %975 = vmatpush2.bf16.msra.mxu0 0
      %976 = vmatprep.subr.bf16.mxu0 0
      %977 = vmatpush2.bf16.msra.mxu0 0
      %978 = vmatprep.mubr.bf16.mxu0 0
      %979 = vmatmul.mubr.bf16.gmra.mxu0 %v944
      %v980 = vpop.f32.mrf.mxu0
      %v981 = vadd.f32 0.0, %v980
      %v982 = vpop.f32.mrf.mxu0
      %v983 = vadd.f32 0.0, %v982
      %v984 = vpop.f32.mrf.mxu0
      %v985 = vadd.f32 0.0, %v984
      %v986 = vpop.f32.mrf.mxu0
      %v987 = vadd.f32 0.0, %v986
      %988 = vdwg.mxu0
      %989 = vmatprep.subr.bf16.mxu0 0
      %990 = vmatpush1.bf16.msra.mxu0 0
      %991 = vmatprep.subr.bf16.mxu0 0
      %992 = vmatpush1.bf16.msra.mxu0 0
      %993 = vmatprep.subr.bf16.mxu0 0
      %994 = vmatpush1.bf16.msra.mxu0 0
      %995 = vmatprep.subr.bf16.mxu0 0
      %996 = vmatpush1.bf16.msra.mxu0 0
      %997 = vmatprep.subr.bf16.mxu0 0
      %998 = vmatpush1.bf16.msra.mxu0 %v839
      %999 = vmatprep.subr.bf16.mxu0 0
      %1000 = vmatpush1.bf16.msra.mxu0 %v836
      %1001 = vmatprep.subr.bf16.mxu0 0
      %1002 = vmatpush1.bf16.msra.mxu0 %v833
      %1003 = vmatprep.subr.bf16.mxu0 0
      %1004 = vmatpush1.bf16.msra.mxu0 %v830
      %1005 = vmatprep.subr.bf16.mxu0 0
      %1006 = vmatpush2.bf16.msra.mxu0 0
      %1007 = vmatprep.subr.bf16.mxu0 0
      %1008 = vmatpush2.bf16.msra.mxu0 0
      %1009 = vmatprep.subr.bf16.mxu0 0
      %1010 = vmatpush2.bf16.msra.mxu0 0
      %1011 = vmatprep.subr.bf16.mxu0 0
      %1012 = vmatpush2.bf16.msra.mxu0 0
      %1013 = vmatprep.subr.bf16.mxu0 0
      %1014 = vmatpush2.bf16.msra.mxu0 0
      %1015 = vmatprep.subr.bf16.mxu0 0
      %1016 = vmatpush2.bf16.msra.mxu0 0
      %1017 = vmatprep.subr.bf16.mxu0 0
      %1018 = vmatpush2.bf16.msra.mxu0 0
      %1019 = vmatprep.subr.bf16.mxu0 0
      %1020 = vmatpush2.bf16.msra.mxu0 0
      %1021 = vmatprep.mubr.bf16.mxu0 0
      %1022 = vmatmul.mubr.bf16.gmra.mxu0 %v944
      %v1023 = vpop.f32.mrf.mxu0
      %v1024 = vadd.f32 0.0, %v1023
      %v1025 = vpop.f32.mrf.mxu0
      %v1026 = vpop.f32.mrf.mxu0
      %v1027 = vadd.f32 0.0, %v1026
      %v1028 = vpop.f32.mrf.mxu0
      %1029 = vdwg.mxu0
      %v1030 = vmul.f32 %v640, %v640
      %v1031 = vmul.f32 %v644, %v644
      %v1032 = vsel %vm852, %v1030, 0.0
      %1033 = vadd.xlane.f32.xlu0 %v1032
      %v1034 = vpop.xlane.xlu0 %1033
      %v1035 = vsel %vm852, %v1031, 0.0
      %1036 = vadd.xlane.f32.xlu0 %v1035
      %v1037 = vpop.xlane.xlu0 %1036
      %v1038 = vmul.f32 %v1034, 0.0625
      %v1039 = vmul.f32 %v1037, 0.0625
      %v1040 = vmul.f32 %v710, %v710
      %v1041 = vmul.f32 %v714, %v714
      %v1042 = vsel %vm852, %v1040, 0.0
      %1043 = vadd.xlane.f32.xlu0 %v1042
      %v1044 = vpop.xlane.xlu0 %1043
      %v1045 = vsel %vm852, %v1041, 0.0
      %1046 = vadd.xlane.f32.xlu0 %v1045
      %v1047 = vpop.xlane.xlu0 %1046
      %v1048 = vmul.f32 %v1044, 0.0625
      %v1049 = vmul.f32 %v1047, 0.0625
      %v1050 = vsub.f32 %v891, %v1038
      %v1051 = vsub.f32 %v893, %v1038
      %v1052 = vsub.f32 %v934, %v1038
      %v1053 = vsub.f32 %v895, %v1039
      %v1054 = vsub.f32 %v897, %v1039
      %v1055 = vsub.f32 %v937, %v1039
      %vm1056 = vcmask 80896
      %v1057 = vsel %vm1056, %v934, -inf
      %v1058 = vmax.f32 %v891, %v1057
      %v1059 = vmax.f32 %v1058, %v893
      %1060 = vmax.xlane.f32.xlu0 %v1059
      %v1061 = vpop.xlane.xlu0 %1060
      %v1062 = vsel %vm1056, %v937, -inf
      %v1063 = vmax.f32 %v895, %v1062
      %v1064 = vmax.f32 %v1063, %v897
      %1065 = vmax.xlane.f32.xlu0 %v1064
      %v1066 = vpop.xlane.xlu0 %1065
      %v1067 = vsub.f32 %v1050, %v1061
      %v1068 = vsub.f32 %v1051, %v1061
      %v1069 = vsub.f32 %v1052, %v1061
      %v1070 = vsub.f32 %v1053, %v1066
      %v1071 = vsub.f32 %v1054, %v1066
      %v1072 = vsub.f32 %v1055, %v1066
      %v1073 = vmul.f32 %v1067, 1.442695
      %v1074 = vpow.pop %v1073
      %v1075 = vmul.f32 %v1068, 1.442695
      %v1076 = vpow.pop %v1075
      %v1077 = vmul.f32 %v1069, 1.442695
      %v1078 = vpow.pop %v1077
      %v1079 = vmul.f32 %v1070, 1.442695
      %v1080 = vpow.pop %v1079
      %v1081 = vmul.f32 %v1071, 1.442695
      %v1082 = vpow.pop %v1081
      %v1083 = vmul.f32 %v1072, 1.442695
      %v1084 = vpow.pop %v1083
      %v1085 = vadd.f32 %v1074, 0.0001
      %v1086 = vadd.f32 %v1076, 0.0001
      %v1087 = vadd.f32 %v1078, 0.0001
      %v1088 = vadd.f32 %v1080, 0.0001
      %v1089 = vadd.f32 %v1082, 0.0001
      %v1090 = vadd.f32 %v1084, 0.0001
      %v1091 = vmul.f32 %v1085, 0.061313935
      %v1092 = vmul.f32 %v1086, 0.061313935
      %v1093 = vmul.f32 %v1087, 0.061313935
      %v1094 = vmul.f32 %v1088, 0.061313935
      %v1095 = vmul.f32 %v1089, 0.061313935
      %v1096 = vmul.f32 %v1090, 0.061313935
      %v1097 = vsel %vm1056, %v1024, -inf
      %v1098 = vmax.f32 %v981, %v1097
      %v1099 = vmax.f32 %v1098, %v983
      %1100 = vmax.xlane.f32.xlu0 %v1099
      %v1101 = vpop.xlane.xlu0 %1100
      %v1102 = vsel %vm1056, %v1027, -inf
      %v1103 = vmax.f32 %v985, %v1102
      %v1104 = vmax.f32 %v1103, %v987
      %1105 = vmax.xlane.f32.xlu0 %v1104
      %v1106 = vpop.xlane.xlu0 %1105
      %v1107 = vmax.f32 %v1101, %v1106
      %v1108 = vrot.slane %v1107, 4
      %v1109 = vmax.f32 %v1107, %v1108
      %v1110 = vrot.slane %v1109, 2
      %v1111 = vmax.f32 %v1109, %v1110
      %v1112 = vrot.slane %v1111, 1
      %v1113 = vmax.f32 %v1111, %v1112
      %v1114 = vsub.f32 %v981, %v1048
      %v1115 = vsub.f32 %v983, %v1048
      %v1116 = vsub.f32 %v1024, %v1048
      %v1117 = vsub.f32 %v985, %v1049
      %v1118 = vsub.f32 %v987, %v1049
      %v1119 = vsub.f32 %v1027, %v1049
      %v1120 = vsub.f32 %v1114, %v1113
      %v1121 = vsub.f32 %v1115, %v1113
      %v1122 = vsub.f32 %v1116, %v1113
      %v1123 = vsub.f32 %v1117, %v1113
      %v1124 = vsub.f32 %v1118, %v1113
      %v1125 = vsub.f32 %v1119, %v1113
      %v1126 = vmul.f32 %v1120, 1.442695
      %v1127 = vpow.pop %v1126
      %v1128 = vmul.f32 %v1121, 1.442695
      %v1129 = vpow.pop %v1128
      %v1130 = vmul.f32 %v1122, 1.442695
      %v1131 = vpow.pop %v1130
      %v1132 = vmul.f32 %v1123, 1.442695
      %v1133 = vpow.pop %v1132
      %v1134 = vmul.f32 %v1124, 1.442695
      %v1135 = vpow.pop %v1134
      %v1136 = vmul.f32 %v1125, 1.442695
      %v1137 = vpow.pop %v1136
      %v1138 = vadd.f32 %v1127, 0.0001
      %v1139 = vadd.f32 %v1129, 0.0001
      %v1140 = vadd.f32 %v1131, 0.0001
      %v1141 = vadd.f32 %v1133, 0.0001
      %v1142 = vadd.f32 %v1135, 0.0001
      %v1143 = vadd.f32 %v1137, 0.0001
      %v1144 = vmul.f32 %v1138, 0.061313935
      %v1145 = vmul.f32 %v1139, 0.061313935
      %v1146 = vmul.f32 %v1140, 0.061313935
      %v1147 = vmul.f32 %v1141, 0.061313935
      %v1148 = vmul.f32 %v1142, 0.061313935
      %v1149 = vmul.f32 %v1143, 0.061313935
      %v1150 = vadd.f32 %v1144, %v1147
      %v1151 = vrot.slane %v1150, 4
      %v1152 = vadd.f32 %v1150, %v1151
      %v1153 = vrot.slane %v1152, 2
      %v1154 = vadd.f32 %v1152, %v1153
      %v1155 = vrot.slane %v1154, 1
      %v1156 = vadd.f32 %v1154, %v1155
      %v1157 = vadd.f32 %v1145, %v1148
      %v1158 = vrot.slane %v1157, 4
      %v1159 = vadd.f32 %v1157, %v1158
      %v1160 = vrot.slane %v1159, 2
      %v1161 = vadd.f32 %v1159, %v1160
      %v1162 = vrot.slane %v1161, 1
      %v1163 = vadd.f32 %v1161, %v1162
      %v1164 = vsel %vm1056, %v1146, 0.0
      %v1165 = vsel %vm1056, %v1149, 0.0
      %v1166 = vadd.f32 %v1164, %v1165
      %v1167 = vrot.slane %v1166, 4
      %v1168 = vadd.f32 %v1166, %v1167
      %v1169 = vrot.slane %v1168, 2
      %v1170 = vadd.f32 %v1168, %v1169
      %v1171 = vrot.slane %v1170, 1
      %v1172 = vadd.f32 %v1170, %v1171
      %v1173 = vmul.f32 %v1091, %v1156
      %v1174 = vmul.f32 %v1092, %v1163
      %v1175 = vmul.f32 %v1093, %v1172
      %v1176 = vmul.f32 %v1094, %v1156
      %v1177 = vmul.f32 %v1095, %v1163
      %v1178 = vmul.f32 %v1096, %v1172
      %v1179 = vadd.f32 %v1173, %v1174
      %v1180 = vsel %vm1056, %v1175, 0.0
      %v1181 = vadd.f32 %v1179, %v1180
      %1182 = vadd.xlane.f32.xlu0 %v1181
      %v1183 = vpop.xlane.xlu0 %1182
      %v1184 = vadd.f32 %v1176, %v1177
      %v1185 = vsel %vm1056, %v1178, 0.0
      %v1186 = vadd.f32 %v1184, %v1185
      %1187 = vadd.xlane.f32.xlu0 %v1186
      %v1188 = vpop.xlane.xlu0 %1187
      %v1189 = vpack.c.bf16 %v1147, %v1144
      %v1190 = vpack.c.bf16 %v1148, %v1145
      %v1191 = vpack.c.bf16 %v1149, %v1146
      %v1192 = vpack.c.bf16 %v781, %v777
      %1193 = vxpose.xlu0.c.b16.start [1/8] %v1189, 128
      %1194 = vxpose.xlu0.c.b16.cont [2/8] 0, 128
      %1195 = vxpose.xlu0.c.b16.cont [3/8] 0, 128
      %1196 = vxpose.xlu0.c.b16.cont [4/8] 0, 128
      %1197 = vxpose.xlu0.c.b16.cont [5/8] 0, 128
      %1198 = vxpose.xlu0.c.b16.cont [6/8] 0, 128
      %1199 = vxpose.xlu0.c.b16.cont [7/8] 0, 128
      %1200 = vxpose.xlu0.c.b16.end [8/8] 0, 128
      %v1201 = vpop.trf.xlu0
      %v1202 = vpop.trf.xlu0
      %v1203 = vpop.trf.xlu0
      %v1204 = vpop.trf.xlu0
      %v1205 = vpop.trf.xlu0
      %v1206 = vpop.trf.xlu0
      %v1207 = vpop.trf.xlu0
      %v1208 = vpop.trf.xlu0
      %1209 = vxpose.xlu0.c.b16.start [1/8] %v1190, 128
      %1210 = vxpose.xlu0.c.b16.cont [2/8] 0, 128
      %1211 = vxpose.xlu0.c.b16.cont [3/8] 0, 128
      %1212 = vxpose.xlu0.c.b16.cont [4/8] 0, 128
      %1213 = vxpose.xlu0.c.b16.cont [5/8] 0, 128
      %1214 = vxpose.xlu0.c.b16.cont [6/8] 0, 128
      %1215 = vxpose.xlu0.c.b16.cont [7/8] 0, 128
      %1216 = vxpose.xlu0.c.b16.end [8/8] 0, 128
      %v1217 = vpop.trf.xlu0
      %v1218 = vpop.trf.xlu0
      %v1219 = vpop.trf.xlu0
      %v1220 = vpop.trf.xlu0
      %v1221 = vpop.trf.xlu0
      %v1222 = vpop.trf.xlu0
      %v1223 = vpop.trf.xlu0
      %v1224 = vpop.trf.xlu0
      %1225 = vxpose.xlu0.c.b16.start [1/8] %v1191, 128
      %1226 = vxpose.xlu0.c.b16.cont [2/8] 0, 128
      %1227 = vxpose.xlu0.c.b16.cont [3/8] 0, 128
      %1228 = vxpose.xlu0.c.b16.cont [4/8] 0, 128
      %1229 = vxpose.xlu0.c.b16.cont [5/8] 0, 128
      %1230 = vxpose.xlu0.c.b16.cont [6/8] 0, 128
      %1231 = vxpose.xlu0.c.b16.cont [7/8] 0, 128
      %1232 = vxpose.xlu0.c.b16.end [8/8] 0, 128
      %v1233 = vpop.trf.xlu0
      %v1234 = vpop.trf.xlu0
      %v1235 = vpop.trf.xlu0
      %v1236 = vpop.trf.xlu0
      %v1237 = vpop.trf.xlu0
      %v1238 = vpop.trf.xlu0
      %v1239 = vpop.trf.xlu0
      %v1240 = vpop.trf.xlu0
      %vm1241 = vcmask 130048
      %v1243 = vsel %vm1241, %v1201, 0
      %v1246 = vsel %vm1241, %v1202, 0
      %v1249 = vsel %vm1241, %v1203, 0
      %v1252 = vsel %vm1241, %v1204, 0
      %v1255 = vsel %vm1241, %v1205, 0
      %v1258 = vsel %vm1241, %v1206, 0
      %v1261 = vsel %vm1241, %v1207, 0
      %v1264 = vsel %vm1241, %v1208, 0
      %v1267 = vsel %vm1241, %v1217, 0
      %v1270 = vsel %vm1241, %v1218, 0
      %v1273 = vsel %vm1241, %v1219, 0
      %v1276 = vsel %vm1241, %v1220, 0
      %v1279 = vsel %vm1241, %v1221, 0
      %v1282 = vsel %vm1241, %v1222, 0
      %v1285 = vsel %vm1241, %v1223, 0
      %v1288 = vsel %vm1241, %v1224, 0
      %v1291 = vsel %vm1241, %v1233, 0
      %1293 = vmatprep.subr.bf16.mxu0 0
      %1294 = vmatpush1.bf16.msra.mxu0 0
      %1295 = vmatprep.subr.bf16.mxu0 0
      %1296 = vmatpush1.bf16.msra.mxu0 0
      %1297 = vmatprep.subr.bf16.mxu0 0
      %1298 = vmatpush1.bf16.msra.mxu0 0
      %1299 = vmatprep.subr.bf16.mxu0 0
      %1300 = vmatpush1.bf16.msra.mxu0 0
      %1301 = vmatprep.subr.bf16.mxu0 0
      %1302 = vmatpush1.bf16.msra.mxu0 0
      %1303 = vmatprep.subr.bf16.mxu0 0
      %1304 = vmatpush1.bf16.msra.mxu0 0
      %1305 = vmatprep.subr.bf16.mxu0 0
      %1306 = vmatpush1.bf16.msra.mxu0 0
      %1307 = vmatprep.subr.bf16.mxu0 0
      %1308 = vmatpush1.bf16.msra.mxu0 %v1192
      %1309 = vmatprep.subr.bf16.mxu0 0
      %1310 = vmatpush2.bf16.msra.mxu0 0
      %1311 = vmatprep.subr.bf16.mxu0 0
      %1312 = vmatpush2.bf16.msra.mxu0 0
      %1313 = vmatprep.subr.bf16.mxu0 0
      %1314 = vmatpush2.bf16.msra.mxu0 0
      %1315 = vmatprep.subr.bf16.mxu0 0
      %1316 = vmatpush2.bf16.msra.mxu0 0
      %1317 = vmatprep.subr.bf16.mxu0 0
      %1318 = vmatpush2.bf16.msra.mxu0 0
      %1319 = vmatprep.subr.bf16.mxu0 0
      %1320 = vmatpush2.bf16.msra.mxu0 0
      %1321 = vmatprep.subr.bf16.mxu0 0
      %1322 = vmatpush2.bf16.msra.mxu0 0
      %1323 = vmatprep.subr.bf16.mxu0 0
      %1324 = vmatpush2.bf16.msra.mxu0 0
      %1325 = vmatprep.mubr.bf16.mxu0 0
      %1326 = vmatmul.mubr.bf16.gmra.mxu0 %v1243
      %v1327 = vpop.f32.mrf.mxu0
      %v1328 = vadd.f32 0.0, %v1327
      %v1329 = vpop.f32.mrf.mxu0
      %v1330 = vpop.f32.mrf.mxu0
      %v1331 = vadd.f32 0.0, %v1330
      %v1332 = vpop.f32.mrf.mxu0
      %1333 = vmatprep.mubr.bf16.mxu0 0
      %1334 = vmatmul.mubr.bf16.gmra.mxu0 %v1246
      %v1335 = vpop.f32.mrf.mxu0
      %v1336 = vadd.f32 0.0, %v1335
      %v1337 = vpop.f32.mrf.mxu0
      %v1338 = vpop.f32.mrf.mxu0
      %v1339 = vadd.f32 0.0, %v1338
      %v1340 = vpop.f32.mrf.mxu0
      %1341 = vmatprep.mubr.bf16.mxu0 0
      %1342 = vmatmul.mubr.bf16.gmra.mxu0 %v1249
      %v1343 = vpop.f32.mrf.mxu0
      %v1344 = vadd.f32 0.0, %v1343
      %v1345 = vpop.f32.mrf.mxu0
      %v1346 = vpop.f32.mrf.mxu0
      %v1347 = vadd.f32 0.0, %v1346
      %v1348 = vpop.f32.mrf.mxu0
      %1349 = vmatprep.mubr.bf16.mxu0 0
      %1350 = vmatmul.mubr.bf16.gmra.mxu0 %v1252
      %v1351 = vpop.f32.mrf.mxu0
      %v1352 = vadd.f32 0.0, %v1351
      %v1353 = vpop.f32.mrf.mxu0
      %v1354 = vpop.f32.mrf.mxu0
      %v1355 = vadd.f32 0.0, %v1354
      %v1356 = vpop.f32.mrf.mxu0
      %1357 = vmatprep.mubr.bf16.mxu0 0
      %1358 = vmatmul.mubr.bf16.gmra.mxu0 %v1255
      %v1359 = vpop.f32.mrf.mxu0
      %v1360 = vadd.f32 0.0, %v1359
      %v1361 = vpop.f32.mrf.mxu0
      %v1362 = vpop.f32.mrf.mxu0
      %v1363 = vadd.f32 0.0, %v1362
      %v1364 = vpop.f32.mrf.mxu0
      %1365 = vmatprep.mubr.bf16.mxu0 0
      %1366 = vmatmul.mubr.bf16.gmra.mxu0 %v1258
      %v1367 = vpop.f32.mrf.mxu0
      %v1368 = vadd.f32 0.0, %v1367
      %v1369 = vpop.f32.mrf.mxu0
      %v1370 = vpop.f32.mrf.mxu0
      %v1371 = vadd.f32 0.0, %v1370
      %v1372 = vpop.f32.mrf.mxu0
      %1373 = vmatprep.mubr.bf16.mxu0 0
      %1374 = vmatmul.mubr.bf16.gmra.mxu0 %v1261
      %v1375 = vpop.f32.mrf.mxu0
      %v1376 = vadd.f32 0.0, %v1375
      %v1377 = vpop.f32.mrf.mxu0
      %v1378 = vpop.f32.mrf.mxu0
      %v1379 = vadd.f32 0.0, %v1378
      %v1380 = vpop.f32.mrf.mxu0
      %1381 = vmatprep.mubr.bf16.mxu0 0
      %1382 = vmatmul.mubr.bf16.gmra.mxu0 %v1264
      %v1383 = vpop.f32.mrf.mxu0
      %v1384 = vadd.f32 0.0, %v1383
      %v1385 = vpop.f32.mrf.mxu0
      %v1386 = vpop.f32.mrf.mxu0
      %v1387 = vadd.f32 0.0, %v1386
      %v1388 = vpop.f32.mrf.mxu0
      %1389 = vmatprep.mubr.bf16.mxu0 0
      %1390 = vmatmul.mubr.bf16.gmra.mxu0 %v1267
      %v1391 = vpop.f32.mrf.mxu0
      %v1392 = vadd.f32 0.0, %v1391
      %v1393 = vpop.f32.mrf.mxu0
      %v1394 = vpop.f32.mrf.mxu0
      %v1395 = vadd.f32 0.0, %v1394
      %v1396 = vpop.f32.mrf.mxu0
      %1397 = vmatprep.mubr.bf16.mxu0 0
      %1398 = vmatmul.mubr.bf16.gmra.mxu0 %v1270
      %v1399 = vpop.f32.mrf.mxu0
      %v1400 = vadd.f32 0.0, %v1399
      %v1401 = vpop.f32.mrf.mxu0
      %v1402 = vpop.f32.mrf.mxu0
      %v1403 = vadd.f32 0.0, %v1402
      %v1404 = vpop.f32.mrf.mxu0
      %1405 = vmatprep.mubr.bf16.mxu0 0
      %1406 = vmatmul.mubr.bf16.gmra.mxu0 %v1273
      %v1407 = vpop.f32.mrf.mxu0
      %v1408 = vadd.f32 0.0, %v1407
      %v1409 = vpop.f32.mrf.mxu0
      %v1410 = vpop.f32.mrf.mxu0
      %v1411 = vadd.f32 0.0, %v1410
      %v1412 = vpop.f32.mrf.mxu0
      %1413 = vmatprep.mubr.bf16.mxu0 0
      %1414 = vmatmul.mubr.bf16.gmra.mxu0 %v1276
      %v1415 = vpop.f32.mrf.mxu0
      %v1416 = vadd.f32 0.0, %v1415
      %v1417 = vpop.f32.mrf.mxu0
      %v1418 = vpop.f32.mrf.mxu0
      %v1419 = vadd.f32 0.0, %v1418
      %v1420 = vpop.f32.mrf.mxu0
      %1421 = vmatprep.mubr.bf16.mxu0 0
      %1422 = vmatmul.mubr.bf16.gmra.mxu0 %v1279
      %v1423 = vpop.f32.mrf.mxu0
      %v1424 = vadd.f32 0.0, %v1423
      %v1425 = vpop.f32.mrf.mxu0
      %v1426 = vpop.f32.mrf.mxu0
      %v1427 = vadd.f32 0.0, %v1426
      %v1428 = vpop.f32.mrf.mxu0
      %1429 = vmatprep.mubr.bf16.mxu0 0
      %1430 = vmatmul.mubr.bf16.gmra.mxu0 %v1282
      %v1431 = vpop.f32.mrf.mxu0
      %v1432 = vadd.f32 0.0, %v1431
      %v1433 = vpop.f32.mrf.mxu0
      %v1434 = vpop.f32.mrf.mxu0
      %v1435 = vadd.f32 0.0, %v1434
      %v1436 = vpop.f32.mrf.mxu0
      %1437 = vmatprep.mubr.bf16.mxu0 0
      %1438 = vmatmul.mubr.bf16.gmra.mxu0 %v1285
      %v1439 = vpop.f32.mrf.mxu0
      %v1440 = vadd.f32 0.0, %v1439
      %v1441 = vpop.f32.mrf.mxu0
      %v1442 = vpop.f32.mrf.mxu0
      %v1443 = vadd.f32 0.0, %v1442
      %v1444 = vpop.f32.mrf.mxu0
      %1445 = vmatprep.mubr.bf16.mxu0 0
      %1446 = vmatmul.mubr.bf16.gmra.mxu0 %v1288
      %v1447 = vpop.f32.mrf.mxu0
      %v1448 = vadd.f32 0.0, %v1447
      %v1449 = vpop.f32.mrf.mxu0
      %v1450 = vpop.f32.mrf.mxu0
      %v1451 = vadd.f32 0.0, %v1450
      %v1452 = vpop.f32.mrf.mxu0
      %1453 = vmatprep.mubr.bf16.mxu0 0
      %1454 = vmatmul.mubr.bf16.gmra.mxu0 %v1291
      %v1455 = vpop.f32.mrf.mxu0
      %v1456 = vadd.f32 0.0, %v1455
      %v1457 = vpop.f32.mrf.mxu0
      %v1458 = vpop.f32.mrf.mxu0
      %v1459 = vadd.f32 0.0, %v1458
      %v1460 = vpop.f32.mrf.mxu0
      %1461 = vdwg.mxu0
      %v1462 = vpack.c.bf16 %v1094, %v1091
      %v1463 = vpack.c.bf16 %v1095, %v1092
      %v1464 = vpack.c.bf16 %v1096, %v1093
      %v1465 = vpack.c.bf16 %v1331, %v1328
      %v1466 = vpack.c.bf16 %v1339, %v1336
      %v1467 = vpack.c.bf16 %v1347, %v1344
      %v1468 = vpack.c.bf16 %v1355, %v1352
      %v1469 = vpack.c.bf16 %v1363, %v1360
      %v1470 = vpack.c.bf16 %v1371, %v1368
      %v1471 = vpack.c.bf16 %v1379, %v1376
      %v1472 = vpack.c.bf16 %v1387, %v1384
      %v1473 = vpack.c.bf16 %v1395, %v1392
      %v1474 = vpack.c.bf16 %v1403, %v1400
      %v1475 = vpack.c.bf16 %v1411, %v1408
      %v1476 = vpack.c.bf16 %v1419, %v1416
      %v1477 = vpack.c.bf16 %v1427, %v1424
      %v1478 = vpack.c.bf16 %v1435, %v1432
      %v1479 = vpack.c.bf16 %v1443, %v1440
      %v1480 = vpack.c.bf16 %v1451, %v1448
      %v1481 = vpack.c.bf16 %v1459, %v1456
      %v1483 = vsel %vm1056, %v1464, 0
      %vm1485 = vcmask 1044480
      %v1487 = vsel %vm1485, %v1481, 0
      %1489 = vmatprep.subr.bf16.mxu0 0
      %1490 = vmatpush1.bf16.msra.mxu0 %v1472
      %1491 = vmatprep.subr.bf16.mxu0 0
      %1492 = vmatpush1.bf16.msra.mxu0 %v1471
      %1493 = vmatprep.subr.bf16.mxu0 0
      %1494 = vmatpush1.bf16.msra.mxu0 %v1470
      %1495 = vmatprep.subr.bf16.mxu0 0
      %1496 = vmatpush1.bf16.msra.mxu0 %v1469
      %1497 = vmatprep.subr.bf16.mxu0 0
      %1498 = vmatpush1.bf16.msra.mxu0 %v1468
      %1499 = vmatprep.subr.bf16.mxu0 0
      %1500 = vmatpush1.bf16.msra.mxu0 %v1467
      %1501 = vmatprep.subr.bf16.mxu0 0
      %1502 = vmatpush1.bf16.msra.mxu0 %v1466
      %1503 = vmatprep.subr.bf16.mxu0 0
      %1504 = vmatpush1.bf16.msra.mxu0 %v1465
      %1505 = vmatprep.subr.bf16.mxu0 0
      %1506 = vmatpush2.bf16.msra.mxu0 %v1480
      %1507 = vmatprep.subr.bf16.mxu0 0
      %1508 = vmatpush2.bf16.msra.mxu0 %v1479
      %1509 = vmatprep.subr.bf16.mxu0 0
      %1510 = vmatpush2.bf16.msra.mxu0 %v1478
      %1511 = vmatprep.subr.bf16.mxu0 0
      %1512 = vmatpush2.bf16.msra.mxu0 %v1477
      %1513 = vmatprep.subr.bf16.mxu0 0
      %1514 = vmatpush2.bf16.msra.mxu0 %v1476
      %1515 = vmatprep.subr.bf16.mxu0 0
      %1516 = vmatpush2.bf16.msra.mxu0 %v1475
      %1517 = vmatprep.subr.bf16.mxu0 0
      %1518 = vmatpush2.bf16.msra.mxu0 %v1474
      %1519 = vmatprep.subr.bf16.mxu0 0
      %1520 = vmatpush2.bf16.msra.mxu0 %v1473
      %1521 = vmatprep.mubr.bf16.mxu0 %v1463
      %1522 = vmatmul.mubr.bf16.gmra.mxu0 %v1462
      %v1523 = vpop.f32.mrf.mxu0
      %v1524 = vadd.f32 0.0, %v1523
      %v1525 = vpop.f32.mrf.mxu0
      %v1526 = vpop.f32.mrf.mxu0
      %v1527 = vadd.f32 0.0, %v1526
      %v1528 = vpop.f32.mrf.mxu0
      %1529 = vdwg.mxu0
      %1530 = vmatprep.subr.bf16.mxu0 0
      %1531 = vmatpush1.bf16.msra.mxu0 0
      %1532 = vmatprep.subr.bf16.mxu0 0
      %1533 = vmatpush1.bf16.msra.mxu0 0
      %1534 = vmatprep.subr.bf16.mxu0 0
      %1535 = vmatpush1.bf16.msra.mxu0 0
      %1536 = vmatprep.subr.bf16.mxu0 0
      %1537 = vmatpush1.bf16.msra.mxu0 0
      %1538 = vmatprep.subr.bf16.mxu0 0
      %1539 = vmatpush1.bf16.msra.mxu0 0
      %1540 = vmatprep.subr.bf16.mxu0 0
      %1541 = vmatpush1.bf16.msra.mxu0 0
      %1542 = vmatprep.subr.bf16.mxu0 0
      %1543 = vmatpush1.bf16.msra.mxu0 0
      %1544 = vmatprep.subr.bf16.mxu0 0
      %1545 = vmatpush1.bf16.msra.mxu0 %v1487
      %1546 = vmatprep.subr.bf16.mxu0 0
      %1547 = vmatpush2.bf16.msra.mxu0 0
      %1548 = vmatprep.subr.bf16.mxu0 0
      %1549 = vmatpush2.bf16.msra.mxu0 0
      %1550 = vmatprep.subr.bf16.mxu0 0
      %1551 = vmatpush2.bf16.msra.mxu0 0
      %1552 = vmatprep.subr.bf16.mxu0 0
      %1553 = vmatpush2.bf16.msra.mxu0 0
      %1554 = vmatprep.subr.bf16.mxu0 0
      %1555 = vmatpush2.bf16.msra.mxu0 0
      %1556 = vmatprep.subr.bf16.mxu0 0
      %1557 = vmatpush2.bf16.msra.mxu0 0
      %1558 = vmatprep.subr.bf16.mxu0 0
      %1559 = vmatpush2.bf16.msra.mxu0 0
      %1560 = vmatprep.subr.bf16.mxu0 0
      %1561 = vmatpush2.bf16.msra.mxu0 0
      %1562 = vmatprep.mubr.bf16.mxu0 0
      %1563 = vmatmul.mubr.bf16.gmra.mxu0 %v1483
      %v1564 = vpop.f32.mrf.mxu0
      %v1565 = vadd.f32 %v1524, %v1564
      %v1566 = vpop.f32.mrf.mxu0
      %v1567 = vpop.f32.mrf.mxu0
      %v1568 = vadd.f32 %v1527, %v1567
      %v1569 = vpop.f32.mrf.mxu0
      %1570 = vdwg.mxu0
      %v1571 = vrcp.pop %v1183
      %v1572 = vrcp.pop %v1188
      %v1573 = vmul.f32 %v1565, %v1571
      %v1574 = vmul.f32 %v1568, %v1572
      %v1575 = vpack.c.bf16 %v1574, %v1573
      %1577 = vrot.lane.b32.xlu0 %v787, 64
      %v1578 = vpop.permute.xlu0 %1577
      %v1580 = vsel %vm852, %v1578, 0
      %1582 = vmatprep.subr.bf16.mxu0 0
      %1583 = vmatpush1.bf16.msra.mxu0 0
      %1584 = vmatprep.subr.bf16.mxu0 0
      %1585 = vmatpush1.bf16.msra.mxu0 0
      %1586 = vmatprep.subr.bf16.mxu0 0
      %1587 = vmatpush1.bf16.msra.mxu0 0
      %1588 = vmatprep.subr.bf16.mxu0 0
      %1589 = vmatpush1.bf16.msra.mxu0 0
      %1590 = vmatprep.subr.bf16.mxu0 %v838
      %1591 = vmatpush1.bf16.msra.mxu0 %v837
      %1592 = vmatprep.subr.bf16.mxu0 %v835
      %1593 = vmatpush1.bf16.msra.mxu0 %v834
      %1594 = vmatprep.subr.bf16.mxu0 %v832
      %1595 = vmatpush1.bf16.msra.mxu0 %v831
      %1596 = vmatprep.subr.bf16.mxu0 %v829
      %1597 = vmatpush1.bf16.msra.mxu0 %v828
      %1598 = vmatprep.subr.bf16.mxu0 0
      %1599 = vmatpush2.bf16.msra.mxu0 0
      %1600 = vmatprep.subr.bf16.mxu0 0
      %1601 = vmatpush2.bf16.msra.mxu0 0
      %1602 = vmatprep.subr.bf16.mxu0 0
      %1603 = vmatpush2.bf16.msra.mxu0 0
      %1604 = vmatprep.subr.bf16.mxu0 0
      %1605 = vmatpush2.bf16.msra.mxu0 0
      %1606 = vmatprep.subr.bf16.mxu0 0
      %1607 = vmatpush2.bf16.msra.mxu0 0
      %1608 = vmatprep.subr.bf16.mxu0 0
      %1609 = vmatpush2.bf16.msra.mxu0 0
      %1610 = vmatprep.subr.bf16.mxu0 0
      %1611 = vmatpush2.bf16.msra.mxu0 0
      %1612 = vmatprep.subr.bf16.mxu0 0
      %1613 = vmatpush2.bf16.msra.mxu0 0
      %1614 = vmatprep.mubr.bf16.mxu0 0
      %1615 = vmatmul.mubr.bf16.gmra.mxu0 %v1580
      %v1616 = vpop.f32.mrf.mxu0
      %v1617 = vadd.f32 0.0, %v1616
      %v1618 = vpop.f32.mrf.mxu0
      %v1619 = vadd.f32 0.0, %v1618
      %v1620 = vpop.f32.mrf.mxu0
      %v1621 = vadd.f32 0.0, %v1620
      %v1622 = vpop.f32.mrf.mxu0
      %v1623 = vadd.f32 0.0, %v1622
      %1624 = vdwg.mxu0
      %1625 = vmatprep.subr.bf16.mxu0 0
      %1626 = vmatpush1.bf16.msra.mxu0 0
      %1627 = vmatprep.subr.bf16.mxu0 0
      %1628 = vmatpush1.bf16.msra.mxu0 0
      %1629 = vmatprep.subr.bf16.mxu0 0
      %1630 = vmatpush1.bf16.msra.mxu0 0
      %1631 = vmatprep.subr.bf16.mxu0 0
      %1632 = vmatpush1.bf16.msra.mxu0 0
      %1633 = vmatprep.subr.bf16.mxu0 0
      %1634 = vmatpush1.bf16.msra.mxu0 %v839
      %1635 = vmatprep.subr.bf16.mxu0 0
      %1636 = vmatpush1.bf16.msra.mxu0 %v836
      %1637 = vmatprep.subr.bf16.mxu0 0
      %1638 = vmatpush1.bf16.msra.mxu0 %v833
      %1639 = vmatprep.subr.bf16.mxu0 0
      %1640 = vmatpush1.bf16.msra.mxu0 %v830
      %1641 = vmatprep.subr.bf16.mxu0 0
      %1642 = vmatpush2.bf16.msra.mxu0 0
      %1643 = vmatprep.subr.bf16.mxu0 0
      %1644 = vmatpush2.bf16.msra.mxu0 0
      %1645 = vmatprep.subr.bf16.mxu0 0
      %1646 = vmatpush2.bf16.msra.mxu0 0
      %1647 = vmatprep.subr.bf16.mxu0 0
      %1648 = vmatpush2.bf16.msra.mxu0 0
      %1649 = vmatprep.subr.bf16.mxu0 0
      %1650 = vmatpush2.bf16.msra.mxu0 0
      %1651 = vmatprep.subr.bf16.mxu0 0
      %1652 = vmatpush2.bf16.msra.mxu0 0
      %1653 = vmatprep.subr.bf16.mxu0 0
      %1654 = vmatpush2.bf16.msra.mxu0 0
      %1655 = vmatprep.subr.bf16.mxu0 0
      %1656 = vmatpush2.bf16.msra.mxu0 0
      %1657 = vmatprep.mubr.bf16.mxu0 0
      %1658 = vmatmul.mubr.bf16.gmra.mxu0 %v1580
      %v1659 = vpop.f32.mrf.mxu0
      %v1660 = vadd.f32 0.0, %v1659
      %v1661 = vpop.f32.mrf.mxu0
      %v1662 = vpop.f32.mrf.mxu0
      %v1663 = vadd.f32 0.0, %v1662
      %v1664 = vpop.f32.mrf.mxu0
      %1665 = vdwg.mxu0
      %1667 = vrot.lane.b32.xlu0 %v942, 64
      %v1668 = vpop.permute.xlu0 %1667
      %v1670 = vsel %vm852, %v1668, 0
      %1672 = vmatprep.subr.bf16.mxu0 0
      %1673 = vmatpush1.bf16.msra.mxu0 0
      %1674 = vmatprep.subr.bf16.mxu0 0
      %1675 = vmatpush1.bf16.msra.mxu0 0
      %1676 = vmatprep.subr.bf16.mxu0 0
      %1677 = vmatpush1.bf16.msra.mxu0 0
      %1678 = vmatprep.subr.bf16.mxu0 0
      %1679 = vmatpush1.bf16.msra.mxu0 0
      %1680 = vmatprep.subr.bf16.mxu0 %v838
      %1681 = vmatpush1.bf16.msra.mxu0 %v837
      %1682 = vmatprep.subr.bf16.mxu0 %v835
      %1683 = vmatpush1.bf16.msra.mxu0 %v834
      %1684 = vmatprep.subr.bf16.mxu0 %v832
      %1685 = vmatpush1.bf16.msra.mxu0 %v831
      %1686 = vmatprep.subr.bf16.mxu0 %v829
      %1687 = vmatpush1.bf16.msra.mxu0 %v828
      %1688 = vmatprep.subr.bf16.mxu0 0
      %1689 = vmatpush2.bf16.msra.mxu0 0
      %1690 = vmatprep.subr.bf16.mxu0 0
      %1691 = vmatpush2.bf16.msra.mxu0 0
      %1692 = vmatprep.subr.bf16.mxu0 0
      %1693 = vmatpush2.bf16.msra.mxu0 0
      %1694 = vmatprep.subr.bf16.mxu0 0
      %1695 = vmatpush2.bf16.msra.mxu0 0
      %1696 = vmatprep.subr.bf16.mxu0 0
      %1697 = vmatpush2.bf16.msra.mxu0 0
      %1698 = vmatprep.subr.bf16.mxu0 0
      %1699 = vmatpush2.bf16.msra.mxu0 0
      %1700 = vmatprep.subr.bf16.mxu0 0
      %1701 = vmatpush2.bf16.msra.mxu0 0
      %1702 = vmatprep.subr.bf16.mxu0 0
      %1703 = vmatpush2.bf16.msra.mxu0 0
      %1704 = vmatprep.mubr.bf16.mxu0 0
      %1705 = vmatmul.mubr.bf16.gmra.mxu0 %v1670
      %v1706 = vpop.f32.mrf.mxu0
      %v1707 = vadd.f32 0.0, %v1706
      %v1708 = vpop.f32.mrf.mxu0
      %v1709 = vadd.f32 0.0, %v1708
      %v1710 = vpop.f32.mrf.mxu0
      %v1711 = vadd.f32 0.0, %v1710
      %v1712 = vpop.f32.mrf.mxu0
      %v1713 = vadd.f32 0.0, %v1712
      %1714 = vdwg.mxu0
      %1715 = vmatprep.subr.bf16.mxu0 0
      %1716 = vmatpush1.bf16.msra.mxu0 0
      %1717 = vmatprep.subr.bf16.mxu0 0
      %1718 = vmatpush1.bf16.msra.mxu0 0
      %1719 = vmatprep.subr.bf16.mxu0 0
      %1720 = vmatpush1.bf16.msra.mxu0 0
      %1721 = vmatprep.subr.bf16.mxu0 0
      %1722 = vmatpush1.bf16.msra.mxu0 0
      %1723 = vmatprep.subr.bf16.mxu0 0
      %1724 = vmatpush1.bf16.msra.mxu0 %v839
      %1725 = vmatprep.subr.bf16.mxu0 0
      %1726 = vmatpush1.bf16.msra.mxu0 %v836
      %1727 = vmatprep.subr.bf16.mxu0 0
      %1728 = vmatpush1.bf16.msra.mxu0 %v833
      %1729 = vmatprep.subr.bf16.mxu0 0
      %1730 = vmatpush1.bf16.msra.mxu0 %v830
      %1731 = vmatprep.subr.bf16.mxu0 0
      %1732 = vmatpush2.bf16.msra.mxu0 0
      %1733 = vmatprep.subr.bf16.mxu0 0
      %1734 = vmatpush2.bf16.msra.mxu0 0
      %1735 = vmatprep.subr.bf16.mxu0 0
      %1736 = vmatpush2.bf16.msra.mxu0 0
      %1737 = vmatprep.subr.bf16.mxu0 0
      %1738 = vmatpush2.bf16.msra.mxu0 0
      %1739 = vmatprep.subr.bf16.mxu0 0
      %1740 = vmatpush2.bf16.msra.mxu0 0
      %1741 = vmatprep.subr.bf16.mxu0 0
      %1742 = vmatpush2.bf16.msra.mxu0 0
      %1743 = vmatprep.subr.bf16.mxu0 0
      %1744 = vmatpush2.bf16.msra.mxu0 0
      %1745 = vmatprep.subr.bf16.mxu0 0
      %1746 = vmatpush2.bf16.msra.mxu0 0
      %1747 = vmatprep.mubr.bf16.mxu0 0
      %1748 = vmatmul.mubr.bf16.gmra.mxu0 %v1670
      %v1749 = vpop.f32.mrf.mxu0
      %v1750 = vadd.f32 0.0, %v1749
      %v1751 = vpop.f32.mrf.mxu0
      %v1752 = vpop.f32.mrf.mxu0
      %v1753 = vadd.f32 0.0, %v1752
      %v1754 = vpop.f32.mrf.mxu0
      %1755 = vdwg.mxu0
      %1758 = vrot.lane.b32.xlu0 %v1030, 64
      %v1759 = vpop.permute.xlu0 %1758
      %1760 = vrot.lane.b32.xlu0 %v1031, 64
      %v1761 = vpop.permute.xlu0 %1760
      %v1764 = vsel %vm852, %v1759, 0.0
      %1765 = vadd.xlane.f32.xlu0 %v1764
      %v1766 = vpop.xlane.xlu0 %1765
      %v1767 = vsel %vm852, %v1761, 0.0
      %1768 = vadd.xlane.f32.xlu0 %v1767
      %v1769 = vpop.xlane.xlu0 %1768
      %v1770 = vmul.f32 %v1766, 0.0625
      %v1771 = vmul.f32 %v1769, 0.0625
      %1774 = vrot.lane.b32.xlu0 %v1040, 64
      %v1775 = vpop.permute.xlu0 %1774
      %1776 = vrot.lane.b32.xlu0 %v1041, 64
      %v1777 = vpop.permute.xlu0 %1776
      %v1780 = vsel %vm852, %v1775, 0.0
      %1781 = vadd.xlane.f32.xlu0 %v1780
      %v1782 = vpop.xlane.xlu0 %1781
      %v1783 = vsel %vm852, %v1777, 0.0
      %1784 = vadd.xlane.f32.xlu0 %v1783
      %v1785 = vpop.xlane.xlu0 %1784
      %v1786 = vmul.f32 %v1782, 0.0625
      %v1787 = vmul.f32 %v1785, 0.0625
      %v1788 = vsub.f32 %v1617, %v1770
      %v1789 = vsub.f32 %v1619, %v1770
      %v1790 = vsub.f32 %v1660, %v1770
      %v1791 = vsub.f32 %v1621, %v1771
      %v1792 = vsub.f32 %v1623, %v1771
      %v1793 = vsub.f32 %v1663, %v1771
      %v1794 = vsel %vm1056, %v1660, -inf
      %v1795 = vmax.f32 %v1617, %v1794
      %v1796 = vmax.f32 %v1795, %v1619
      %1797 = vmax.xlane.f32.xlu0 %v1796
      %v1798 = vpop.xlane.xlu0 %1797
      %v1799 = vsel %vm1056, %v1663, -inf
      %v1800 = vmax.f32 %v1621, %v1799
      %v1801 = vmax.f32 %v1800, %v1623
      %1802 = vmax.xlane.f32.xlu0 %v1801
      %v1803 = vpop.xlane.xlu0 %1802
      %v1804 = vsub.f32 %v1788, %v1798
      %v1805 = vsub.f32 %v1789, %v1798
      %v1806 = vsub.f32 %v1790, %v1798
      %v1807 = vsub.f32 %v1791, %v1803
      %v1808 = vsub.f32 %v1792, %v1803
      %v1809 = vsub.f32 %v1793, %v1803
      %v1810 = vmul.f32 %v1804, 1.442695
      %v1811 = vpow.pop %v1810
      %v1812 = vmul.f32 %v1805, 1.442695
      %v1813 = vpow.pop %v1812
      %v1814 = vmul.f32 %v1806, 1.442695
      %v1815 = vpow.pop %v1814
      %v1816 = vmul.f32 %v1807, 1.442695
      %v1817 = vpow.pop %v1816
      %v1818 = vmul.f32 %v1808, 1.442695
      %v1819 = vpow.pop %v1818
      %v1820 = vmul.f32 %v1809, 1.442695
      %v1821 = vpow.pop %v1820
      %v1822 = vadd.f32 %v1811, 0.0001
      %v1823 = vadd.f32 %v1813, 0.0001
      %v1824 = vadd.f32 %v1815, 0.0001
      %v1825 = vadd.f32 %v1817, 0.0001
      %v1826 = vadd.f32 %v1819, 0.0001
      %v1827 = vadd.f32 %v1821, 0.0001
      %v1828 = vmul.f32 %v1822, 0.061313935
      %v1829 = vmul.f32 %v1823, 0.061313935
      %v1830 = vmul.f32 %v1824, 0.061313935
      %v1831 = vmul.f32 %v1825, 0.061313935
      %v1832 = vmul.f32 %v1826, 0.061313935
      %v1833 = vmul.f32 %v1827, 0.061313935
      %v1834 = vsel %vm1056, %v1750, -inf
      %v1835 = vmax.f32 %v1707, %v1834
      %v1836 = vmax.f32 %v1835, %v1709
      %1837 = vmax.xlane.f32.xlu0 %v1836
      %v1838 = vpop.xlane.xlu0 %1837
      %v1839 = vsel %vm1056, %v1753, -inf
      %v1840 = vmax.f32 %v1711, %v1839
      %v1841 = vmax.f32 %v1840, %v1713
      %1842 = vmax.xlane.f32.xlu0 %v1841
      %v1843 = vpop.xlane.xlu0 %1842
      %v1844 = vmax.f32 %v1838, %v1843
      %v1845 = vrot.slane %v1844, 4
      %v1846 = vmax.f32 %v1844, %v1845
      %v1847 = vrot.slane %v1846, 2
      %v1848 = vmax.f32 %v1846, %v1847
      %v1849 = vrot.slane %v1848, 1
      %v1850 = vmax.f32 %v1848, %v1849
      %v1851 = vsub.f32 %v1707, %v1786
      %v1852 = vsub.f32 %v1709, %v1786
      %v1853 = vsub.f32 %v1750, %v1786
      %v1854 = vsub.f32 %v1711, %v1787
      %v1855 = vsub.f32 %v1713, %v1787
      %v1856 = vsub.f32 %v1753, %v1787
      %v1857 = vsub.f32 %v1851, %v1850
      %v1858 = vsub.f32 %v1852, %v1850
      %v1859 = vsub.f32 %v1853, %v1850
      %v1860 = vsub.f32 %v1854, %v1850
      %v1861 = vsub.f32 %v1855, %v1850
      %v1862 = vsub.f32 %v1856, %v1850
      %v1863 = vmul.f32 %v1857, 1.442695
      %v1864 = vpow.pop %v1863
      %v1865 = vmul.f32 %v1858, 1.442695
      %v1866 = vpow.pop %v1865
      %v1867 = vmul.f32 %v1859, 1.442695
      %v1868 = vpow.pop %v1867
      %v1869 = vmul.f32 %v1860, 1.442695
      %v1870 = vpow.pop %v1869
      %v1871 = vmul.f32 %v1861, 1.442695
      %v1872 = vpow.pop %v1871
      %v1873 = vmul.f32 %v1862, 1.442695
      %v1874 = vpow.pop %v1873
      %v1875 = vadd.f32 %v1864, 0.0001
      %v1876 = vadd.f32 %v1866, 0.0001
      %v1877 = vadd.f32 %v1868, 0.0001
      %v1878 = vadd.f32 %v1870, 0.0001
      %v1879 = vadd.f32 %v1872, 0.0001
      %v1880 = vadd.f32 %v1874, 0.0001
      %v1881 = vmul.f32 %v1875, 0.061313935
      %v1882 = vmul.f32 %v1876, 0.061313935
      %v1883 = vmul.f32 %v1877, 0.061313935
      %v1884 = vmul.f32 %v1878, 0.061313935
      %v1885 = vmul.f32 %v1879, 0.061313935
      %v1886 = vmul.f32 %v1880, 0.061313935
      %v1887 = vadd.f32 %v1881, %v1884
      %v1888 = vrot.slane %v1887, 4
      %v1889 = vadd.f32 %v1887, %v1888
      %v1890 = vrot.slane %v1889, 2
      %v1891 = vadd.f32 %v1889, %v1890
      %v1892 = vrot.slane %v1891, 1
      %v1893 = vadd.f32 %v1891, %v1892
      %v1894 = vadd.f32 %v1882, %v1885
      %v1895 = vrot.slane %v1894, 4
      %v1896 = vadd.f32 %v1894, %v1895
      %v1897 = vrot.slane %v1896, 2
      %v1898 = vadd.f32 %v1896, %v1897
      %v1899 = vrot.slane %v1898, 1
      %v1900 = vadd.f32 %v1898, %v1899
      %v1901 = vsel %vm1056, %v1883, 0.0
      %v1902 = vsel %vm1056, %v1886, 0.0
      %v1903 = vadd.f32 %v1901, %v1902
      %v1904 = vrot.slane %v1903, 4
      %v1905 = vadd.f32 %v1903, %v1904
      %v1906 = vrot.slane %v1905, 2
      %v1907 = vadd.f32 %v1905, %v1906
      %v1908 = vrot.slane %v1907, 1
      %v1909 = vadd.f32 %v1907, %v1908
      %v1910 = vmul.f32 %v1828, %v1893
      %v1911 = vmul.f32 %v1829, %v1900
      %v1912 = vmul.f32 %v1830, %v1909
      %v1913 = vmul.f32 %v1831, %v1893
      %v1914 = vmul.f32 %v1832, %v1900
      %v1915 = vmul.f32 %v1833, %v1909
      %v1916 = vadd.f32 %v1910, %v1911
      %v1917 = vsel %vm1056, %v1912, 0.0
      %v1918 = vadd.f32 %v1916, %v1917
      %1919 = vadd.xlane.f32.xlu0 %v1918
      %v1920 = vpop.xlane.xlu0 %1919
      %v1921 = vadd.f32 %v1913, %v1914
      %v1922 = vsel %vm1056, %v1915, 0.0
      %v1923 = vadd.f32 %v1921, %v1922
      %1924 = vadd.xlane.f32.xlu0 %v1923
      %v1925 = vpop.xlane.xlu0 %1924
      %v1926 = vpack.c.bf16 %v1884, %v1881
      %v1927 = vpack.c.bf16 %v1885, %v1882
      %v1928 = vpack.c.bf16 %v1886, %v1883
      %1929 = vxpose.xlu0.c.b16.start [1/8] %v1926, 128
      %1930 = vxpose.xlu0.c.b16.cont [2/8] 0, 128
      %1931 = vxpose.xlu0.c.b16.cont [3/8] 0, 128
      %1932 = vxpose.xlu0.c.b16.cont [4/8] 0, 128
      %1933 = vxpose.xlu0.c.b16.cont [5/8] 0, 128
      %1934 = vxpose.xlu0.c.b16.cont [6/8] 0, 128
      %1935 = vxpose.xlu0.c.b16.cont [7/8] 0, 128
      %1936 = vxpose.xlu0.c.b16.end [8/8] 0, 128
      %v1937 = vpop.trf.xlu0
      %v1938 = vpop.trf.xlu0
      %v1939 = vpop.trf.xlu0
      %v1940 = vpop.trf.xlu0
      %v1941 = vpop.trf.xlu0
      %v1942 = vpop.trf.xlu0
      %v1943 = vpop.trf.xlu0
      %v1944 = vpop.trf.xlu0
      %1945 = vxpose.xlu0.c.b16.start [1/8] %v1927, 128
      %1946 = vxpose.xlu0.c.b16.cont [2/8] 0, 128
      %1947 = vxpose.xlu0.c.b16.cont [3/8] 0, 128
      %1948 = vxpose.xlu0.c.b16.cont [4/8] 0, 128
      %1949 = vxpose.xlu0.c.b16.cont [5/8] 0, 128
      %1950 = vxpose.xlu0.c.b16.cont [6/8] 0, 128
      %1951 = vxpose.xlu0.c.b16.cont [7/8] 0, 128
      %1952 = vxpose.xlu0.c.b16.end [8/8] 0, 128
      %v1953 = vpop.trf.xlu0
      %v1954 = vpop.trf.xlu0
      %v1955 = vpop.trf.xlu0
      %v1956 = vpop.trf.xlu0
      %v1957 = vpop.trf.xlu0
      %v1958 = vpop.trf.xlu0
      %v1959 = vpop.trf.xlu0
      %v1960 = vpop.trf.xlu0
      %1961 = vxpose.xlu0.c.b16.start [1/8] %v1928, 128
      %1962 = vxpose.xlu0.c.b16.cont [2/8] 0, 128
      %1963 = vxpose.xlu0.c.b16.cont [3/8] 0, 128
      %1964 = vxpose.xlu0.c.b16.cont [4/8] 0, 128
      %1965 = vxpose.xlu0.c.b16.cont [5/8] 0, 128
      %1966 = vxpose.xlu0.c.b16.cont [6/8] 0, 128
      %1967 = vxpose.xlu0.c.b16.cont [7/8] 0, 128
      %1968 = vxpose.xlu0.c.b16.end [8/8] 0, 128
      %v1969 = vpop.trf.xlu0
      %v1970 = vpop.trf.xlu0
      %v1971 = vpop.trf.xlu0
      %v1972 = vpop.trf.xlu0
      %v1973 = vpop.trf.xlu0
      %v1974 = vpop.trf.xlu0
      %v1975 = vpop.trf.xlu0
      %v1976 = vpop.trf.xlu0
      %1978 = vrot.lane.b32.xlu0 %v1192, 64
      %v1979 = vpop.permute.xlu0 %1978
      %v1982 = vsel %vm1241, %v1937, 0
      %v1985 = vsel %vm1241, %v1938, 0
      %v1988 = vsel %vm1241, %v1939, 0
      %v1991 = vsel %vm1241, %v1940, 0
      %v1994 = vsel %vm1241, %v1941, 0
      %v1997 = vsel %vm1241, %v1942, 0
      %v2000 = vsel %vm1241, %v1943, 0
      %v2003 = vsel %vm1241, %v1944, 0
      %v2006 = vsel %vm1241, %v1953, 0
      %v2009 = vsel %vm1241, %v1954, 0
      %v2012 = vsel %vm1241, %v1955, 0
      %v2015 = vsel %vm1241, %v1956, 0
      %v2018 = vsel %vm1241, %v1957, 0
      %v2021 = vsel %vm1241, %v1958, 0
      %v2024 = vsel %vm1241, %v1959, 0
      %v2027 = vsel %vm1241, %v1960, 0
      %v2030 = vsel %vm1241, %v1969, 0
      %2032 = vmatprep.subr.bf16.mxu0 0
      %2033 = vmatpush1.bf16.msra.mxu0 0
      %2034 = vmatprep.subr.bf16.mxu0 0
      %2035 = vmatpush1.bf16.msra.mxu0 0
      %2036 = vmatprep.subr.bf16.mxu0 0
      %2037 = vmatpush1.bf16.msra.mxu0 0
      %2038 = vmatprep.subr.bf16.mxu0 0
      %2039 = vmatpush1.bf16.msra.mxu0 0
      %2040 = vmatprep.subr.bf16.mxu0 0
      %2041 = vmatpush1.bf16.msra.mxu0 0
      %2042 = vmatprep.subr.bf16.mxu0 0
      %2043 = vmatpush1.bf16.msra.mxu0 0
      %2044 = vmatprep.subr.bf16.mxu0 0
      %2045 = vmatpush1.bf16.msra.mxu0 0
      %2046 = vmatprep.subr.bf16.mxu0 0
      %2047 = vmatpush1.bf16.msra.mxu0 %v1979
      %2048 = vmatprep.subr.bf16.mxu0 0
      %2049 = vmatpush2.bf16.msra.mxu0 0
      %2050 = vmatprep.subr.bf16.mxu0 0
      %2051 = vmatpush2.bf16.msra.mxu0 0
      %2052 = vmatprep.subr.bf16.mxu0 0
      %2053 = vmatpush2.bf16.msra.mxu0 0
      %2054 = vmatprep.subr.bf16.mxu0 0
      %2055 = vmatpush2.bf16.msra.mxu0 0
      %2056 = vmatprep.subr.bf16.mxu0 0
      %2057 = vmatpush2.bf16.msra.mxu0 0
      %2058 = vmatprep.subr.bf16.mxu0 0
      %2059 = vmatpush2.bf16.msra.mxu0 0
      %2060 = vmatprep.subr.bf16.mxu0 0
      %2061 = vmatpush2.bf16.msra.mxu0 0
      %2062 = vmatprep.subr.bf16.mxu0 0
      %2063 = vmatpush2.bf16.msra.mxu0 0
      %2064 = vmatprep.mubr.bf16.mxu0 0
      %2065 = vmatmul.mubr.bf16.gmra.mxu0 %v1982
      %v2066 = vpop.f32.mrf.mxu0
      %v2067 = vadd.f32 0.0, %v2066
      %v2068 = vpop.f32.mrf.mxu0
      %v2069 = vpop.f32.mrf.mxu0
      %v2070 = vadd.f32 0.0, %v2069
      %v2071 = vpop.f32.mrf.mxu0
      %2072 = vmatprep.mubr.bf16.mxu0 0
      %2073 = vmatmul.mubr.bf16.gmra.mxu0 %v1985
      %v2074 = vpop.f32.mrf.mxu0
      %v2075 = vadd.f32 0.0, %v2074
      %v2076 = vpop.f32.mrf.mxu0
      %v2077 = vpop.f32.mrf.mxu0
      %v2078 = vadd.f32 0.0, %v2077
      %v2079 = vpop.f32.mrf.mxu0
      %2080 = vmatprep.mubr.bf16.mxu0 0
      %2081 = vmatmul.mubr.bf16.gmra.mxu0 %v1988
      %v2082 = vpop.f32.mrf.mxu0
      %v2083 = vadd.f32 0.0, %v2082
      %v2084 = vpop.f32.mrf.mxu0
      %v2085 = vpop.f32.mrf.mxu0
      %v2086 = vadd.f32 0.0, %v2085
      %v2087 = vpop.f32.mrf.mxu0
      %2088 = vmatprep.mubr.bf16.mxu0 0
      %2089 = vmatmul.mubr.bf16.gmra.mxu0 %v1991
      %v2090 = vpop.f32.mrf.mxu0
      %v2091 = vadd.f32 0.0, %v2090
      %v2092 = vpop.f32.mrf.mxu0
      %v2093 = vpop.f32.mrf.mxu0
      %v2094 = vadd.f32 0.0, %v2093
      %v2095 = vpop.f32.mrf.mxu0
      %2096 = vmatprep.mubr.bf16.mxu0 0
      %2097 = vmatmul.mubr.bf16.gmra.mxu0 %v1994
      %v2098 = vpop.f32.mrf.mxu0
      %v2099 = vadd.f32 0.0, %v2098
      %v2100 = vpop.f32.mrf.mxu0
      %v2101 = vpop.f32.mrf.mxu0
      %v2102 = vadd.f32 0.0, %v2101
      %v2103 = vpop.f32.mrf.mxu0
      %2104 = vmatprep.mubr.bf16.mxu0 0
      %2105 = vmatmul.mubr.bf16.gmra.mxu0 %v1997
      %v2106 = vpop.f32.mrf.mxu0
      %v2107 = vadd.f32 0.0, %v2106
      %v2108 = vpop.f32.mrf.mxu0
      %v2109 = vpop.f32.mrf.mxu0
      %v2110 = vadd.f32 0.0, %v2109
      %v2111 = vpop.f32.mrf.mxu0
      %2112 = vmatprep.mubr.bf16.mxu0 0
      %2113 = vmatmul.mubr.bf16.gmra.mxu0 %v2000
      %v2114 = vpop.f32.mrf.mxu0
      %v2115 = vadd.f32 0.0, %v2114
      %v2116 = vpop.f32.mrf.mxu0
      %v2117 = vpop.f32.mrf.mxu0
      %v2118 = vadd.f32 0.0, %v2117
      %v2119 = vpop.f32.mrf.mxu0
      %2120 = vmatprep.mubr.bf16.mxu0 0
      %2121 = vmatmul.mubr.bf16.gmra.mxu0 %v2003
      %v2122 = vpop.f32.mrf.mxu0
      %v2123 = vadd.f32 0.0, %v2122
      %v2124 = vpop.f32.mrf.mxu0
      %v2125 = vpop.f32.mrf.mxu0
      %v2126 = vadd.f32 0.0, %v2125
      %v2127 = vpop.f32.mrf.mxu0
      %2128 = vmatprep.mubr.bf16.mxu0 0
      %2129 = vmatmul.mubr.bf16.gmra.mxu0 %v2006
      %v2130 = vpop.f32.mrf.mxu0
      %v2131 = vadd.f32 0.0, %v2130
      %v2132 = vpop.f32.mrf.mxu0
      %v2133 = vpop.f32.mrf.mxu0
      %v2134 = vadd.f32 0.0, %v2133
      %v2135 = vpop.f32.mrf.mxu0
      %2136 = vmatprep.mubr.bf16.mxu0 0
      %2137 = vmatmul.mubr.bf16.gmra.mxu0 %v2009
      %v2138 = vpop.f32.mrf.mxu0
      %v2139 = vadd.f32 0.0, %v2138
      %v2140 = vpop.f32.mrf.mxu0
      %v2141 = vpop.f32.mrf.mxu0
      %v2142 = vadd.f32 0.0, %v2141
      %v2143 = vpop.f32.mrf.mxu0
      %2144 = vmatprep.mubr.bf16.mxu0 0
      %2145 = vmatmul.mubr.bf16.gmra.mxu0 %v2012
      %v2146 = vpop.f32.mrf.mxu0
      %v2147 = vadd.f32 0.0, %v2146
      %v2148 = vpop.f32.mrf.mxu0
      %v2149 = vpop.f32.mrf.mxu0
      %v2150 = vadd.f32 0.0, %v2149
      %v2151 = vpop.f32.mrf.mxu0
      %2152 = vmatprep.mubr.bf16.mxu0 0
      %2153 = vmatmul.mubr.bf16.gmra.mxu0 %v2015
      %v2154 = vpop.f32.mrf.mxu0
      %v2155 = vadd.f32 0.0, %v2154
      %v2156 = vpop.f32.mrf.mxu0
      %v2157 = vpop.f32.mrf.mxu0
      %v2158 = vadd.f32 0.0, %v2157
      %v2159 = vpop.f32.mrf.mxu0
      %2160 = vmatprep.mubr.bf16.mxu0 0
      %2161 = vmatmul.mubr.bf16.gmra.mxu0 %v2018
      %v2162 = vpop.f32.mrf.mxu0
      %v2163 = vadd.f32 0.0, %v2162
      %v2164 = vpop.f32.mrf.mxu0
      %v2165 = vpop.f32.mrf.mxu0
      %v2166 = vadd.f32 0.0, %v2165
      %v2167 = vpop.f32.mrf.mxu0
      %2168 = vmatprep.mubr.bf16.mxu0 0
      %2169 = vmatmul.mubr.bf16.gmra.mxu0 %v2021
      %v2170 = vpop.f32.mrf.mxu0
      %v2171 = vadd.f32 0.0, %v2170
      %v2172 = vpop.f32.mrf.mxu0
      %v2173 = vpop.f32.mrf.mxu0
      %v2174 = vadd.f32 0.0, %v2173
      %v2175 = vpop.f32.mrf.mxu0
      %2176 = vmatprep.mubr.bf16.mxu0 0
      %2177 = vmatmul.mubr.bf16.gmra.mxu0 %v2024
      %v2178 = vpop.f32.mrf.mxu0
      %v2179 = vadd.f32 0.0, %v2178
      %v2180 = vpop.f32.mrf.mxu0
      %v2181 = vpop.f32.mrf.mxu0
      %v2182 = vadd.f32 0.0, %v2181
      %v2183 = vpop.f32.mrf.mxu0
      %2184 = vmatprep.mubr.bf16.mxu0 0
      %2185 = vmatmul.mubr.bf16.gmra.mxu0 %v2027
      %v2186 = vpop.f32.mrf.mxu0
      %v2187 = vadd.f32 0.0, %v2186
      %v2188 = vpop.f32.mrf.mxu0
      %v2189 = vpop.f32.mrf.mxu0
      %v2190 = vadd.f32 0.0, %v2189
      %v2191 = vpop.f32.mrf.mxu0
      %2192 = vmatprep.mubr.bf16.mxu0 0
      %2193 = vmatmul.mubr.bf16.gmra.mxu0 %v2030
      %v2194 = vpop.f32.mrf.mxu0
      %v2195 = vadd.f32 0.0, %v2194
      %v2196 = vpop.f32.mrf.mxu0
      %v2197 = vpop.f32.mrf.mxu0
      %v2198 = vadd.f32 0.0, %v2197
      %v2199 = vpop.f32.mrf.mxu0
      %2200 = vdwg.mxu0
      %v2201 = vpack.c.bf16 %v1831, %v1828
      %v2202 = vpack.c.bf16 %v1832, %v1829
      %v2203 = vpack.c.bf16 %v1833, %v1830
      %v2204 = vpack.c.bf16 %v2070, %v2067
      %v2205 = vpack.c.bf16 %v2078, %v2075
      %v2206 = vpack.c.bf16 %v2086, %v2083
      %v2207 = vpack.c.bf16 %v2094, %v2091
      %v2208 = vpack.c.bf16 %v2102, %v2099
      %v2209 = vpack.c.bf16 %v2110, %v2107
      %v2210 = vpack.c.bf16 %v2118, %v2115
      %v2211 = vpack.c.bf16 %v2126, %v2123
      %v2212 = vpack.c.bf16 %v2134, %v2131
      %v2213 = vpack.c.bf16 %v2142, %v2139
      %v2214 = vpack.c.bf16 %v2150, %v2147
      %v2215 = vpack.c.bf16 %v2158, %v2155
      %v2216 = vpack.c.bf16 %v2166, %v2163
      %v2217 = vpack.c.bf16 %v2174, %v2171
      %v2218 = vpack.c.bf16 %v2182, %v2179
      %v2219 = vpack.c.bf16 %v2190, %v2187
      %v2220 = vpack.c.bf16 %v2198, %v2195
      %v2222 = vsel %vm1056, %v2203, 0
      %v2225 = vsel %vm1485, %v2220, 0
      %2227 = vmatprep.subr.bf16.mxu0 0
      %2228 = vmatpush1.bf16.msra.mxu0 %v2211
      %2229 = vmatprep.subr.bf16.mxu0 0
      %2230 = vmatpush1.bf16.msra.mxu0 %v2210
      %2231 = vmatprep.subr.bf16.mxu0 0
      %2232 = vmatpush1.bf16.msra.mxu0 %v2209
      %2233 = vmatprep.subr.bf16.mxu0 0
      %2234 = vmatpush1.bf16.msra.mxu0 %v2208
      %2235 = vmatprep.subr.bf16.mxu0 0
      %2236 = vmatpush1.bf16.msra.mxu0 %v2207
      %2237 = vmatprep.subr.bf16.mxu0 0
      %2238 = vmatpush1.bf16.msra.mxu0 %v2206
      %2239 = vmatprep.subr.bf16.mxu0 0
      %2240 = vmatpush1.bf16.msra.mxu0 %v2205
      %2241 = vmatprep.subr.bf16.mxu0 0
      %2242 = vmatpush1.bf16.msra.mxu0 %v2204
      %2243 = vmatprep.subr.bf16.mxu0 0
      %2244 = vmatpush2.bf16.msra.mxu0 %v2219
      %2245 = vmatprep.subr.bf16.mxu0 0
      %2246 = vmatpush2.bf16.msra.mxu0 %v2218
      %2247 = vmatprep.subr.bf16.mxu0 0
      %2248 = vmatpush2.bf16.msra.mxu0 %v2217
      %2249 = vmatprep.subr.bf16.mxu0 0
      %2250 = vmatpush2.bf16.msra.mxu0 %v2216
      %2251 = vmatprep.subr.bf16.mxu0 0
      %2252 = vmatpush2.bf16.msra.mxu0 %v2215
      %2253 = vmatprep.subr.bf16.mxu0 0
      %2254 = vmatpush2.bf16.msra.mxu0 %v2214
      %2255 = vmatprep.subr.bf16.mxu0 0
      %2256 = vmatpush2.bf16.msra.mxu0 %v2213
      %2257 = vmatprep.subr.bf16.mxu0 0
      %2258 = vmatpush2.bf16.msra.mxu0 %v2212
      %2259 = vmatprep.mubr.bf16.mxu0 %v2202
      %2260 = vmatmul.mubr.bf16.gmra.mxu0 %v2201
      %v2261 = vpop.f32.mrf.mxu0
      %v2262 = vadd.f32 0.0, %v2261
      %v2263 = vpop.f32.mrf.mxu0
      %v2264 = vpop.f32.mrf.mxu0
      %v2265 = vadd.f32 0.0, %v2264
      %v2266 = vpop.f32.mrf.mxu0
      %2267 = vdwg.mxu0
      %2268 = vmatprep.subr.bf16.mxu0 0
      %2269 = vmatpush1.bf16.msra.mxu0 0
      %2270 = vmatprep.subr.bf16.mxu0 0
      %2271 = vmatpush1.bf16.msra.mxu0 0
      %2272 = vmatprep.subr.bf16.mxu0 0
      %2273 = vmatpush1.bf16.msra.mxu0 0
      %2274 = vmatprep.subr.bf16.mxu0 0
      %2275 = vmatpush1.bf16.msra.mxu0 0
      %2276 = vmatprep.subr.bf16.mxu0 0
      %2277 = vmatpush1.bf16.msra.mxu0 0
      %2278 = vmatprep.subr.bf16.mxu0 0
      %2279 = vmatpush1.bf16.msra.mxu0 0
      %2280 = vmatprep.subr.bf16.mxu0 0
      %2281 = vmatpush1.bf16.msra.mxu0 0
      %2282 = vmatprep.subr.bf16.mxu0 0
      %2283 = vmatpush1.bf16.msra.mxu0 %v2225
      %2284 = vmatprep.subr.bf16.mxu0 0
      %2285 = vmatpush2.bf16.msra.mxu0 0
      %2286 = vmatprep.subr.bf16.mxu0 0
      %2287 = vmatpush2.bf16.msra.mxu0 0
      %2288 = vmatprep.subr.bf16.mxu0 0
      %2289 = vmatpush2.bf16.msra.mxu0 0
      %2290 = vmatprep.subr.bf16.mxu0 0
      %2291 = vmatpush2.bf16.msra.mxu0 0
      %2292 = vmatprep.subr.bf16.mxu0 0
      %2293 = vmatpush2.bf16.msra.mxu0 0
      %2294 = vmatprep.subr.bf16.mxu0 0
      %2295 = vmatpush2.bf16.msra.mxu0 0
      %2296 = vmatprep.subr.bf16.mxu0 0
      %2297 = vmatpush2.bf16.msra.mxu0 0
      %2298 = vmatprep.subr.bf16.mxu0 0
      %2299 = vmatpush2.bf16.msra.mxu0 0
      %2300 = vmatprep.mubr.bf16.mxu0 0
      %2301 = vmatmul.mubr.bf16.gmra.mxu0 %v2222
      %v2302 = vpop.f32.mrf.mxu0
      %v2303 = vadd.f32 %v2262, %v2302
      %v2304 = vpop.f32.mrf.mxu0
      %v2305 = vpop.f32.mrf.mxu0
      %v2306 = vadd.f32 %v2265, %v2305
      %v2307 = vpop.f32.mrf.mxu0
      %2308 = vdwg.mxu0
      %v2309 = vrcp.pop %v1920
      %v2310 = vrcp.pop %v1925
      %v2311 = vmul.f32 %v2303, %v2309
      %v2312 = vmul.f32 %v2306, %v2310
      %v2313 = vpack.c.bf16 %v2312, %v2311
      %v2322 = vunpack.c.l.b16 %v535
      %v2323 = vunpack.c.l.b16 %v536
      %v2324 = vunpack.c.l.b16 %v537
      %v2325 = vunpack.c.l.b16 %v538
      %v2326 = vunpack.c.l.b16 %v539
      %v2327 = vunpack.c.l.b16 %v540
      %v2328 = vunpack.c.l.b16 %v541
      %v2329 = vunpack.c.l.b16 %v542
      %v2330 = vpack.c.b16 %v2323, %v2322
      %v2331 = vpack.c.b16 %v2325, %v2324
      %v2332 = vpack.c.b16 %v2327, %v2326
      %v2333 = vpack.c.b16 %v2329, %v2328
      %v2339 = vsel %vm852, %v2313, 0
      %2341 = vmatprep.subr.bf16.mxu0 0
      %2342 = vmatpush1.bf16.msra.mxu0 0
      %2343 = vmatprep.subr.bf16.mxu0 0
      %2344 = vmatpush1.bf16.msra.mxu0 0
      %2345 = vmatprep.subr.bf16.mxu0 0
      %2346 = vmatpush1.bf16.msra.mxu0 0
      %2347 = vmatprep.subr.bf16.mxu0 0
      %2348 = vmatpush1.bf16.msra.mxu0 0
      %2349 = vmatprep.subr.bf16.mxu0 0
      %2350 = vmatpush1.bf16.msra.mxu0 %v2333
      %2351 = vmatprep.subr.bf16.mxu0 0
      %2352 = vmatpush1.bf16.msra.mxu0 %v2332
      %2353 = vmatprep.subr.bf16.mxu0 0
      %2354 = vmatpush1.bf16.msra.mxu0 %v2331
      %2355 = vmatprep.subr.bf16.mxu0 0
      %2356 = vmatpush1.bf16.msra.mxu0 %v2330
      %2357 = vmatprep.subr.bf16.mxu0 0
      %2358 = vmatpush2.bf16.msra.mxu0 0
      %2359 = vmatprep.subr.bf16.mxu0 0
      %2360 = vmatpush2.bf16.msra.mxu0 0
      %2361 = vmatprep.subr.bf16.mxu0 0
      %2362 = vmatpush2.bf16.msra.mxu0 0
      %2363 = vmatprep.subr.bf16.mxu0 0
      %2364 = vmatpush2.bf16.msra.mxu0 0
      %2365 = vmatprep.subr.bf16.mxu0 0
      %2366 = vmatpush2.bf16.msra.mxu0 0
      %2367 = vmatprep.subr.bf16.mxu0 0
      %2368 = vmatpush2.bf16.msra.mxu0 0
      %2369 = vmatprep.subr.bf16.mxu0 0
      %2370 = vmatpush2.bf16.msra.mxu0 0
      %2371 = vmatprep.subr.bf16.mxu0 0
      %2372 = vmatpush2.bf16.msra.mxu0 0
      %2373 = vmatprep.mubr.bf16.mxu0 0
      %2374 = vmatmul.mubr.bf16.gmra.mxu0 %v2339
      %v2375 = vpop.f32.mrf.mxu0
      %v2376 = vadd.f32 0.0, %v2375
      %v2377 = vpop.f32.mrf.mxu0
      %v2378 = vpop.f32.mrf.mxu0
      %v2379 = vadd.f32 0.0, %v2378
      %v2380 = vpop.f32.mrf.mxu0
      %2381 = vdwg.mxu0
      %v2390 = vunpack.c.l.b16 %v527
      %v2391 = vunpack.c.l.b16 %v528
      %v2392 = vunpack.c.l.b16 %v529
      %v2393 = vunpack.c.l.b16 %v530
      %v2394 = vunpack.c.l.b16 %v531
      %v2395 = vunpack.c.l.b16 %v532
      %v2396 = vunpack.c.l.b16 %v533
      %v2397 = vunpack.c.l.b16 %v534
      %v2398 = vpack.c.b16 %v2391, %v2390
      %v2399 = vpack.c.b16 %v2393, %v2392
      %v2400 = vpack.c.b16 %v2395, %v2394
      %v2401 = vpack.c.b16 %v2397, %v2396
      %v2407 = vsel %vm852, %v1575, 0
      %2409 = vmatprep.subr.bf16.mxu0 0
      %2410 = vmatpush1.bf16.msra.mxu0 0
      %2411 = vmatprep.subr.bf16.mxu0 0
      %2412 = vmatpush1.bf16.msra.mxu0 0
      %2413 = vmatprep.subr.bf16.mxu0 0
      %2414 = vmatpush1.bf16.msra.mxu0 0
      %2415 = vmatprep.subr.bf16.mxu0 0
      %2416 = vmatpush1.bf16.msra.mxu0 0
      %2417 = vmatprep.subr.bf16.mxu0 0
      %2418 = vmatpush1.bf16.msra.mxu0 %v2401
      %2419 = vmatprep.subr.bf16.mxu0 0
      %2420 = vmatpush1.bf16.msra.mxu0 %v2400
      %2421 = vmatprep.subr.bf16.mxu0 0
      %2422 = vmatpush1.bf16.msra.mxu0 %v2399
      %2423 = vmatprep.subr.bf16.mxu0 0
      %2424 = vmatpush1.bf16.msra.mxu0 %v2398
      %2425 = vmatprep.subr.bf16.mxu0 0
      %2426 = vmatpush2.bf16.msra.mxu0 0
      %2427 = vmatprep.subr.bf16.mxu0 0
      %2428 = vmatpush2.bf16.msra.mxu0 0
      %2429 = vmatprep.subr.bf16.mxu0 0
      %2430 = vmatpush2.bf16.msra.mxu0 0
      %2431 = vmatprep.subr.bf16.mxu0 0
      %2432 = vmatpush2.bf16.msra.mxu0 0
      %2433 = vmatprep.subr.bf16.mxu0 0
      %2434 = vmatpush2.bf16.msra.mxu0 0
      %2435 = vmatprep.subr.bf16.mxu0 0
      %2436 = vmatpush2.bf16.msra.mxu0 0
      %2437 = vmatprep.subr.bf16.mxu0 0
      %2438 = vmatpush2.bf16.msra.mxu0 0
      %2439 = vmatprep.subr.bf16.mxu0 0
      %2440 = vmatpush2.bf16.msra.mxu0 0
      %2441 = vmatprep.mubr.bf16.mxu0 0
      %2442 = vmatmul.mubr.bf16.gmra.mxu0 %v2407
      %v2443 = vpop.f32.mrf.mxu0
      %v2444 = vadd.f32 %v2376, %v2443
      %v2445 = vpop.f32.mrf.mxu0
      %v2446 = vpop.f32.mrf.mxu0
      %v2447 = vadd.f32 %v2379, %v2446
      %v2448 = vpop.f32.mrf.mxu0
      %2449 = vdwg.mxu0
      %v2450 = vmul.f32 %v642, 0.35355338
      %v2451 = vmul.f32 %v646, 0.35355338
      %v2452 = vpack.c.bf16 %v2451, %v2450
      %v2454 = vsel %vm852, %v2452, 0
      %2456 = vmatprep.subr.bf16.mxu0 0
      %2457 = vmatpush1.bf16.msra.mxu0 0
      %2458 = vmatprep.subr.bf16.mxu0 0
      %2459 = vmatpush1.bf16.msra.mxu0 0
      %2460 = vmatprep.subr.bf16.mxu0 0
      %2461 = vmatpush1.bf16.msra.mxu0 0
      %2462 = vmatprep.subr.bf16.mxu0 0
      %2463 = vmatpush1.bf16.msra.mxu0 0
      %2464 = vmatprep.subr.bf16.mxu0 %v838
      %2465 = vmatpush1.bf16.msra.mxu0 %v837
      %2466 = vmatprep.subr.bf16.mxu0 %v835
      %2467 = vmatpush1.bf16.msra.mxu0 %v834
      %2468 = vmatprep.subr.bf16.mxu0 %v832
      %2469 = vmatpush1.bf16.msra.mxu0 %v831
      %2470 = vmatprep.subr.bf16.mxu0 %v829
      %2471 = vmatpush1.bf16.msra.mxu0 %v828
      %2472 = vmatprep.subr.bf16.mxu0 0
      %2473 = vmatpush2.bf16.msra.mxu0 0
      %2474 = vmatprep.subr.bf16.mxu0 0
      %2475 = vmatpush2.bf16.msra.mxu0 0
      %2476 = vmatprep.subr.bf16.mxu0 0
      %2477 = vmatpush2.bf16.msra.mxu0 0
      %2478 = vmatprep.subr.bf16.mxu0 0
      %2479 = vmatpush2.bf16.msra.mxu0 0
      %2480 = vmatprep.subr.bf16.mxu0 0
      %2481 = vmatpush2.bf16.msra.mxu0 0
      %2482 = vmatprep.subr.bf16.mxu0 0
      %2483 = vmatpush2.bf16.msra.mxu0 0
      %2484 = vmatprep.subr.bf16.mxu0 0
      %2485 = vmatpush2.bf16.msra.mxu0 0
      %2486 = vmatprep.subr.bf16.mxu0 0
      %2487 = vmatpush2.bf16.msra.mxu0 0
      %2488 = vmatprep.mubr.bf16.mxu0 0
      %2489 = vmatmul.mubr.bf16.gmra.mxu0 %v2454
      %v2490 = vpop.f32.mrf.mxu0
      %v2491 = vadd.f32 0.0, %v2490
      %v2492 = vpop.f32.mrf.mxu0
      %v2493 = vadd.f32 0.0, %v2492
      %v2494 = vpop.f32.mrf.mxu0
      %v2495 = vadd.f32 0.0, %v2494
      %v2496 = vpop.f32.mrf.mxu0
      %v2497 = vadd.f32 0.0, %v2496
      %2498 = vdwg.mxu0
      %2499 = vmatprep.subr.bf16.mxu0 0
      %2500 = vmatpush1.bf16.msra.mxu0 0
      %2501 = vmatprep.subr.bf16.mxu0 0
      %2502 = vmatpush1.bf16.msra.mxu0 0
      %2503 = vmatprep.subr.bf16.mxu0 0
      %2504 = vmatpush1.bf16.msra.mxu0 0
      %2505 = vmatprep.subr.bf16.mxu0 0
      %2506 = vmatpush1.bf16.msra.mxu0 0
      %2507 = vmatprep.subr.bf16.mxu0 0
      %2508 = vmatpush1.bf16.msra.mxu0 %v839
      %2509 = vmatprep.subr.bf16.mxu0 0
      %2510 = vmatpush1.bf16.msra.mxu0 %v836
      %2511 = vmatprep.subr.bf16.mxu0 0
      %2512 = vmatpush1.bf16.msra.mxu0 %v833
      %2513 = vmatprep.subr.bf16.mxu0 0
      %2514 = vmatpush1.bf16.msra.mxu0 %v830
      %2515 = vmatprep.subr.bf16.mxu0 0
      %2516 = vmatpush2.bf16.msra.mxu0 0
      %2517 = vmatprep.subr.bf16.mxu0 0
      %2518 = vmatpush2.bf16.msra.mxu0 0
      %2519 = vmatprep.subr.bf16.mxu0 0
      %2520 = vmatpush2.bf16.msra.mxu0 0
      %2521 = vmatprep.subr.bf16.mxu0 0
      %2522 = vmatpush2.bf16.msra.mxu0 0
      %2523 = vmatprep.subr.bf16.mxu0 0
      %2524 = vmatpush2.bf16.msra.mxu0 0
      %2525 = vmatprep.subr.bf16.mxu0 0
      %2526 = vmatpush2.bf16.msra.mxu0 0
      %2527 = vmatprep.subr.bf16.mxu0 0
      %2528 = vmatpush2.bf16.msra.mxu0 0
      %2529 = vmatprep.subr.bf16.mxu0 0
      %2530 = vmatpush2.bf16.msra.mxu0 0
      %2531 = vmatprep.mubr.bf16.mxu0 0
      %2532 = vmatmul.mubr.bf16.gmra.mxu0 %v2454
      %v2533 = vpop.f32.mrf.mxu0
      %v2534 = vadd.f32 0.0, %v2533
      %v2535 = vpop.f32.mrf.mxu0
      %v2536 = vpop.f32.mrf.mxu0
      %v2537 = vadd.f32 0.0, %v2536
      %v2538 = vpop.f32.mrf.mxu0
      %2539 = vdwg.mxu0
      %v2540 = vmul.f32 %v712, 0.35355338
      %v2541 = vmul.f32 %v716, 0.35355338
      %v2542 = vpack.c.bf16 %v2541, %v2540
      %v2544 = vsel %vm852, %v2542, 0
      %2546 = vmatprep.subr.bf16.mxu0 0
      %2547 = vmatpush1.bf16.msra.mxu0 0
      %2548 = vmatprep.subr.bf16.mxu0 0
      %2549 = vmatpush1.bf16.msra.mxu0 0
      %2550 = vmatprep.subr.bf16.mxu0 0
      %2551 = vmatpush1.bf16.msra.mxu0 0
      %2552 = vmatprep.subr.bf16.mxu0 0
      %2553 = vmatpush1.bf16.msra.mxu0 0
      %2554 = vmatprep.subr.bf16.mxu0 %v838
      %2555 = vmatpush1.bf16.msra.mxu0 %v837
      %2556 = vmatprep.subr.bf16.mxu0 %v835
      %2557 = vmatpush1.bf16.msra.mxu0 %v834
      %2558 = vmatprep.subr.bf16.mxu0 %v832
      %2559 = vmatpush1.bf16.msra.mxu0 %v831
      %2560 = vmatprep.subr.bf16.mxu0 %v829
      %2561 = vmatpush1.bf16.msra.mxu0 %v828
      %2562 = vmatprep.subr.bf16.mxu0 0
      %2563 = vmatpush2.bf16.msra.mxu0 0
      %2564 = vmatprep.subr.bf16.mxu0 0
      %2565 = vmatpush2.bf16.msra.mxu0 0
      %2566 = vmatprep.subr.bf16.mxu0 0
      %2567 = vmatpush2.bf16.msra.mxu0 0
      %2568 = vmatprep.subr.bf16.mxu0 0
      %2569 = vmatpush2.bf16.msra.mxu0 0
      %2570 = vmatprep.subr.bf16.mxu0 0
      %2571 = vmatpush2.bf16.msra.mxu0 0
      %2572 = vmatprep.subr.bf16.mxu0 0
      %2573 = vmatpush2.bf16.msra.mxu0 0
      %2574 = vmatprep.subr.bf16.mxu0 0
      %2575 = vmatpush2.bf16.msra.mxu0 0
      %2576 = vmatprep.subr.bf16.mxu0 0
      %2577 = vmatpush2.bf16.msra.mxu0 0
      %2578 = vmatprep.mubr.bf16.mxu0 0
      %2579 = vmatmul.mubr.bf16.gmra.mxu0 %v2544
      %v2580 = vpop.f32.mrf.mxu0
      %v2581 = vadd.f32 0.0, %v2580
      %v2582 = vpop.f32.mrf.mxu0
      %v2583 = vadd.f32 0.0, %v2582
      %v2584 = vpop.f32.mrf.mxu0
      %v2585 = vadd.f32 0.0, %v2584
      %v2586 = vpop.f32.mrf.mxu0
      %v2587 = vadd.f32 0.0, %v2586
      %2588 = vdwg.mxu0
      %2589 = vmatprep.subr.bf16.mxu0 0
      %2590 = vmatpush1.bf16.msra.mxu0 0
      %2591 = vmatprep.subr.bf16.mxu0 0
      %2592 = vmatpush1.bf16.msra.mxu0 0
      %2593 = vmatprep.subr.bf16.mxu0 0
      %2594 = vmatpush1.bf16.msra.mxu0 0
      %2595 = vmatprep.subr.bf16.mxu0 0
      %2596 = vmatpush1.bf16.msra.mxu0 0
      %2597 = vmatprep.subr.bf16.mxu0 0
      %2598 = vmatpush1.bf16.msra.mxu0 %v839
      %2599 = vmatprep.subr.bf16.mxu0 0
      %2600 = vmatpush1.bf16.msra.mxu0 %v836
      %2601 = vmatprep.subr.bf16.mxu0 0
      %2602 = vmatpush1.bf16.msra.mxu0 %v833
      %2603 = vmatprep.subr.bf16.mxu0 0
      %2604 = vmatpush1.bf16.msra.mxu0 %v830
      %2605 = vmatprep.subr.bf16.mxu0 0
      %2606 = vmatpush2.bf16.msra.mxu0 0
      %2607 = vmatprep.subr.bf16.mxu0 0
      %2608 = vmatpush2.bf16.msra.mxu0 0
      %2609 = vmatprep.subr.bf16.mxu0 0
      %2610 = vmatpush2.bf16.msra.mxu0 0
      %2611 = vmatprep.subr.bf16.mxu0 0
      %2612 = vmatpush2.bf16.msra.mxu0 0
      %2613 = vmatprep.subr.bf16.mxu0 0
      %2614 = vmatpush2.bf16.msra.mxu0 0
      %2615 = vmatprep.subr.bf16.mxu0 0
      %2616 = vmatpush2.bf16.msra.mxu0 0
      %2617 = vmatprep.subr.bf16.mxu0 0
      %2618 = vmatpush2.bf16.msra.mxu0 0
      %2619 = vmatprep.subr.bf16.mxu0 0
      %2620 = vmatpush2.bf16.msra.mxu0 0
      %2621 = vmatprep.mubr.bf16.mxu0 0
      %2622 = vmatmul.mubr.bf16.gmra.mxu0 %v2544
      %v2623 = vpop.f32.mrf.mxu0
      %v2624 = vadd.f32 0.0, %v2623
      %v2625 = vpop.f32.mrf.mxu0
      %v2626 = vpop.f32.mrf.mxu0
      %v2627 = vadd.f32 0.0, %v2626
      %v2628 = vpop.f32.mrf.mxu0
      %2629 = vdwg.mxu0
      %v2630 = vmul.f32 %v642, %v642
      %v2631 = vmul.f32 %v646, %v646
      %v2632 = vsel %vm852, %v2630, 0.0
      %2633 = vadd.xlane.f32.xlu0 %v2632
      %v2634 = vpop.xlane.xlu0 %2633
      %v2635 = vsel %vm852, %v2631, 0.0
      %2636 = vadd.xlane.f32.xlu0 %v2635
      %v2637 = vpop.xlane.xlu0 %2636
      %v2638 = vmul.f32 %v2634, 0.0625
      %v2639 = vmul.f32 %v2637, 0.0625
      %v2640 = vmul.f32 %v712, %v712
      %v2641 = vmul.f32 %v716, %v716
      %v2642 = vsel %vm852, %v2640, 0.0
      %2643 = vadd.xlane.f32.xlu0 %v2642
      %v2644 = vpop.xlane.xlu0 %2643
      %v2645 = vsel %vm852, %v2641, 0.0
      %2646 = vadd.xlane.f32.xlu0 %v2645
      %v2647 = vpop.xlane.xlu0 %2646
      %v2648 = vmul.f32 %v2644, 0.0625
      %v2649 = vmul.f32 %v2647, 0.0625
      %v2650 = vsub.f32 %v2491, %v2638
      %v2651 = vsub.f32 %v2493, %v2638
      %v2652 = vsub.f32 %v2534, %v2638
      %v2653 = vsub.f32 %v2495, %v2639
      %v2654 = vsub.f32 %v2497, %v2639
      %v2655 = vsub.f32 %v2537, %v2639
      %v2656 = vsel %vm1056, %v2534, -inf
      %v2657 = vmax.f32 %v2491, %v2656
      %v2658 = vmax.f32 %v2657, %v2493
      %2659 = vmax.xlane.f32.xlu0 %v2658
      %v2660 = vpop.xlane.xlu0 %2659
      %v2661 = vsel %vm1056, %v2537, -inf
      %v2662 = vmax.f32 %v2495, %v2661
      %v2663 = vmax.f32 %v2662, %v2497
      %2664 = vmax.xlane.f32.xlu0 %v2663
      %v2665 = vpop.xlane.xlu0 %2664
      %v2666 = vsub.f32 %v2650, %v2660
      %v2667 = vsub.f32 %v2651, %v2660
      %v2668 = vsub.f32 %v2652, %v2660
      %v2669 = vsub.f32 %v2653, %v2665
      %v2670 = vsub.f32 %v2654, %v2665
      %v2671 = vsub.f32 %v2655, %v2665
      %v2672 = vmul.f32 %v2666, 1.442695
      %v2673 = vpow.pop %v2672
      %v2674 = vmul.f32 %v2667, 1.442695
      %v2675 = vpow.pop %v2674
      %v2676 = vmul.f32 %v2668, 1.442695
      %v2677 = vpow.pop %v2676
      %v2678 = vmul.f32 %v2669, 1.442695
      %v2679 = vpow.pop %v2678
      %v2680 = vmul.f32 %v2670, 1.442695
      %v2681 = vpow.pop %v2680
      %v2682 = vmul.f32 %v2671, 1.442695
      %v2683 = vpow.pop %v2682
      %v2684 = vadd.f32 %v2673, 0.0001
      %v2685 = vadd.f32 %v2675, 0.0001
      %v2686 = vadd.f32 %v2677, 0.0001
      %v2687 = vadd.f32 %v2679, 0.0001
      %v2688 = vadd.f32 %v2681, 0.0001
      %v2689 = vadd.f32 %v2683, 0.0001
      %v2690 = vmul.f32 %v2684, 0.061313935
      %v2691 = vmul.f32 %v2685, 0.061313935
      %v2692 = vmul.f32 %v2686, 0.061313935
      %v2693 = vmul.f32 %v2687, 0.061313935
      %v2694 = vmul.f32 %v2688, 0.061313935
      %v2695 = vmul.f32 %v2689, 0.061313935
      %v2696 = vsel %vm1056, %v2624, -inf
      %v2697 = vmax.f32 %v2581, %v2696
      %v2698 = vmax.f32 %v2697, %v2583
      %2699 = vmax.xlane.f32.xlu0 %v2698
      %v2700 = vpop.xlane.xlu0 %2699
      %v2701 = vsel %vm1056, %v2627, -inf
      %v2702 = vmax.f32 %v2585, %v2701
      %v2703 = vmax.f32 %v2702, %v2587
      %2704 = vmax.xlane.f32.xlu0 %v2703
      %v2705 = vpop.xlane.xlu0 %2704
      %v2706 = vmax.f32 %v2700, %v2705
      %v2707 = vrot.slane %v2706, 4
      %v2708 = vmax.f32 %v2706, %v2707
      %v2709 = vrot.slane %v2708, 2
      %v2710 = vmax.f32 %v2708, %v2709
      %v2711 = vrot.slane %v2710, 1
      %v2712 = vmax.f32 %v2710, %v2711
      %v2713 = vsub.f32 %v2581, %v2648
      %v2714 = vsub.f32 %v2583, %v2648
      %v2715 = vsub.f32 %v2624, %v2648
      %v2716 = vsub.f32 %v2585, %v2649
      %v2717 = vsub.f32 %v2587, %v2649
      %v2718 = vsub.f32 %v2627, %v2649
      %v2719 = vsub.f32 %v2713, %v2712
      %v2720 = vsub.f32 %v2714, %v2712
      %v2721 = vsub.f32 %v2715, %v2712
      %v2722 = vsub.f32 %v2716, %v2712
      %v2723 = vsub.f32 %v2717, %v2712
      %v2724 = vsub.f32 %v2718, %v2712
      %v2725 = vmul.f32 %v2719, 1.442695
      %v2726 = vpow.pop %v2725
      %v2727 = vmul.f32 %v2720, 1.442695
      %v2728 = vpow.pop %v2727
      %v2729 = vmul.f32 %v2721, 1.442695
      %v2730 = vpow.pop %v2729
      %v2731 = vmul.f32 %v2722, 1.442695
      %v2732 = vpow.pop %v2731
      %v2733 = vmul.f32 %v2723, 1.442695
      %v2734 = vpow.pop %v2733
      %v2735 = vmul.f32 %v2724, 1.442695
      %v2736 = vpow.pop %v2735
      %v2737 = vadd.f32 %v2726, 0.0001
      %v2738 = vadd.f32 %v2728, 0.0001
      %v2739 = vadd.f32 %v2730, 0.0001
      %v2740 = vadd.f32 %v2732, 0.0001
      %v2741 = vadd.f32 %v2734, 0.0001
      %v2742 = vadd.f32 %v2736, 0.0001
      %v2743 = vmul.f32 %v2737, 0.061313935
      %v2744 = vmul.f32 %v2738, 0.061313935
      %v2745 = vmul.f32 %v2739, 0.061313935
      %v2746 = vmul.f32 %v2740, 0.061313935
      %v2747 = vmul.f32 %v2741, 0.061313935
      %v2748 = vmul.f32 %v2742, 0.061313935
      %v2749 = vadd.f32 %v2743, %v2746
      %v2750 = vrot.slane %v2749, 4
      %v2751 = vadd.f32 %v2749, %v2750
      %v2752 = vrot.slane %v2751, 2
      %v2753 = vadd.f32 %v2751, %v2752
      %v2754 = vrot.slane %v2753, 1
      %v2755 = vadd.f32 %v2753, %v2754
      %v2756 = vadd.f32 %v2744, %v2747
      %v2757 = vrot.slane %v2756, 4
      %v2758 = vadd.f32 %v2756, %v2757
      %v2759 = vrot.slane %v2758, 2
      %v2760 = vadd.f32 %v2758, %v2759
      %v2761 = vrot.slane %v2760, 1
      %v2762 = vadd.f32 %v2760, %v2761
      %v2763 = vsel %vm1056, %v2745, 0.0
      %v2764 = vsel %vm1056, %v2748, 0.0
      %v2765 = vadd.f32 %v2763, %v2764
      %v2766 = vrot.slane %v2765, 4
      %v2767 = vadd.f32 %v2765, %v2766
      %v2768 = vrot.slane %v2767, 2
      %v2769 = vadd.f32 %v2767, %v2768
      %v2770 = vrot.slane %v2769, 1
      %v2771 = vadd.f32 %v2769, %v2770
      %v2772 = vmul.f32 %v2690, %v2755
      %v2773 = vmul.f32 %v2691, %v2762
      %v2774 = vmul.f32 %v2692, %v2771
      %v2775 = vmul.f32 %v2693, %v2755
      %v2776 = vmul.f32 %v2694, %v2762
      %v2777 = vmul.f32 %v2695, %v2771
      %v2778 = vadd.f32 %v2772, %v2773
      %v2779 = vsel %vm1056, %v2774, 0.0
      %v2780 = vadd.f32 %v2778, %v2779
      %2781 = vadd.xlane.f32.xlu0 %v2780
      %v2782 = vpop.xlane.xlu0 %2781
      %v2783 = vadd.f32 %v2775, %v2776
      %v2784 = vsel %vm1056, %v2777, 0.0
      %v2785 = vadd.f32 %v2783, %v2784
      %2786 = vadd.xlane.f32.xlu0 %v2785
      %v2787 = vpop.xlane.xlu0 %2786
      %v2788 = vpack.c.bf16 %v2746, %v2743
      %v2789 = vpack.c.bf16 %v2747, %v2744
      %v2790 = vpack.c.bf16 %v2748, %v2745
      %v2791 = vpack.c.bf16 %v783, %v779
      %2792 = vxpose.xlu0.c.b16.start [1/8] %v2788, 128
      %2793 = vxpose.xlu0.c.b16.cont [2/8] 0, 128
      %2794 = vxpose.xlu0.c.b16.cont [3/8] 0, 128
      %2795 = vxpose.xlu0.c.b16.cont [4/8] 0, 128
      %2796 = vxpose.xlu0.c.b16.cont [5/8] 0, 128
      %2797 = vxpose.xlu0.c.b16.cont [6/8] 0, 128
      %2798 = vxpose.xlu0.c.b16.cont [7/8] 0, 128
      %2799 = vxpose.xlu0.c.b16.end [8/8] 0, 128
      %v2800 = vpop.trf.xlu0
      %v2801 = vpop.trf.xlu0
      %v2802 = vpop.trf.xlu0
      %v2803 = vpop.trf.xlu0
      %v2804 = vpop.trf.xlu0
      %v2805 = vpop.trf.xlu0
      %v2806 = vpop.trf.xlu0
      %v2807 = vpop.trf.xlu0
      %2808 = vxpose.xlu0.c.b16.start [1/8] %v2789, 128
      %2809 = vxpose.xlu0.c.b16.cont [2/8] 0, 128
      %2810 = vxpose.xlu0.c.b16.cont [3/8] 0, 128
      %2811 = vxpose.xlu0.c.b16.cont [4/8] 0, 128
      %2812 = vxpose.xlu0.c.b16.cont [5/8] 0, 128
      %2813 = vxpose.xlu0.c.b16.cont [6/8] 0, 128
      %2814 = vxpose.xlu0.c.b16.cont [7/8] 0, 128
      %2815 = vxpose.xlu0.c.b16.end [8/8] 0, 128
      %v2816 = vpop.trf.xlu0
      %v2817 = vpop.trf.xlu0
      %v2818 = vpop.trf.xlu0
      %v2819 = vpop.trf.xlu0
      %v2820 = vpop.trf.xlu0
      %v2821 = vpop.trf.xlu0
      %v2822 = vpop.trf.xlu0
      %v2823 = vpop.trf.xlu0
      %2824 = vxpose.xlu0.c.b16.start [1/8] %v2790, 128
      %2825 = vxpose.xlu0.c.b16.cont [2/8] 0, 128
      %2826 = vxpose.xlu0.c.b16.cont [3/8] 0, 128
      %2827 = vxpose.xlu0.c.b16.cont [4/8] 0, 128
      %2828 = vxpose.xlu0.c.b16.cont [5/8] 0, 128
      %2829 = vxpose.xlu0.c.b16.cont [6/8] 0, 128
      %2830 = vxpose.xlu0.c.b16.cont [7/8] 0, 128
      %2831 = vxpose.xlu0.c.b16.end [8/8] 0, 128
      %v2832 = vpop.trf.xlu0
      %v2833 = vpop.trf.xlu0
      %v2834 = vpop.trf.xlu0
      %v2835 = vpop.trf.xlu0
      %v2836 = vpop.trf.xlu0
      %v2837 = vpop.trf.xlu0
      %v2838 = vpop.trf.xlu0
      %v2839 = vpop.trf.xlu0
      %v2841 = vsel %vm1241, %v2800, 0
      %v2844 = vsel %vm1241, %v2801, 0
      %v2847 = vsel %vm1241, %v2802, 0
      %v2850 = vsel %vm1241, %v2803, 0
      %v2853 = vsel %vm1241, %v2804, 0
      %v2856 = vsel %vm1241, %v2805, 0
      %v2859 = vsel %vm1241, %v2806, 0
      %v2862 = vsel %vm1241, %v2807, 0
      %v2865 = vsel %vm1241, %v2816, 0
      %v2868 = vsel %vm1241, %v2817, 0
      %v2871 = vsel %vm1241, %v2818, 0
      %v2874 = vsel %vm1241, %v2819, 0
      %v2877 = vsel %vm1241, %v2820, 0
      %v2880 = vsel %vm1241, %v2821, 0
      %v2883 = vsel %vm1241, %v2822, 0
      %v2886 = vsel %vm1241, %v2823, 0
      %v2889 = vsel %vm1241, %v2832, 0
      %2891 = vmatprep.subr.bf16.mxu0 0
      %2892 = vmatpush1.bf16.msra.mxu0 0
      %2893 = vmatprep.subr.bf16.mxu0 0
      %2894 = vmatpush1.bf16.msra.mxu0 0
      %2895 = vmatprep.subr.bf16.mxu0 0
      %2896 = vmatpush1.bf16.msra.mxu0 0
      %2897 = vmatprep.subr.bf16.mxu0 0
      %2898 = vmatpush1.bf16.msra.mxu0 0
      %2899 = vmatprep.subr.bf16.mxu0 0
      %2900 = vmatpush1.bf16.msra.mxu0 0
      %2901 = vmatprep.subr.bf16.mxu0 0
      %2902 = vmatpush1.bf16.msra.mxu0 0
      %2903 = vmatprep.subr.bf16.mxu0 0
      %2904 = vmatpush1.bf16.msra.mxu0 0
      %2905 = vmatprep.subr.bf16.mxu0 0
      %2906 = vmatpush1.bf16.msra.mxu0 %v2791
      %2907 = vmatprep.subr.bf16.mxu0 0
      %2908 = vmatpush2.bf16.msra.mxu0 0
      %2909 = vmatprep.subr.bf16.mxu0 0
      %2910 = vmatpush2.bf16.msra.mxu0 0
      %2911 = vmatprep.subr.bf16.mxu0 0
      %2912 = vmatpush2.bf16.msra.mxu0 0
      %2913 = vmatprep.subr.bf16.mxu0 0
      %2914 = vmatpush2.bf16.msra.mxu0 0
      %2915 = vmatprep.subr.bf16.mxu0 0
      %2916 = vmatpush2.bf16.msra.mxu0 0
      %2917 = vmatprep.subr.bf16.mxu0 0
      %2918 = vmatpush2.bf16.msra.mxu0 0
      %2919 = vmatprep.subr.bf16.mxu0 0
      %2920 = vmatpush2.bf16.msra.mxu0 0
      %2921 = vmatprep.subr.bf16.mxu0 0
      %2922 = vmatpush2.bf16.msra.mxu0 0
      %2923 = vmatprep.mubr.bf16.mxu0 0
      %2924 = vmatmul.mubr.bf16.gmra.mxu0 %v2841
      %v2925 = vpop.f32.mrf.mxu0
      %v2926 = vadd.f32 0.0, %v2925
      %v2927 = vpop.f32.mrf.mxu0
      %v2928 = vpop.f32.mrf.mxu0
      %v2929 = vadd.f32 0.0, %v2928
      %v2930 = vpop.f32.mrf.mxu0
      %2931 = vmatprep.mubr.bf16.mxu0 0
      %2932 = vmatmul.mubr.bf16.gmra.mxu0 %v2844
      %v2933 = vpop.f32.mrf.mxu0
      %v2934 = vadd.f32 0.0, %v2933
      %v2935 = vpop.f32.mrf.mxu0
      %v2936 = vpop.f32.mrf.mxu0
      %v2937 = vadd.f32 0.0, %v2936
      %v2938 = vpop.f32.mrf.mxu0
      %2939 = vmatprep.mubr.bf16.mxu0 0
      %2940 = vmatmul.mubr.bf16.gmra.mxu0 %v2847
      %v2941 = vpop.f32.mrf.mxu0
      %v2942 = vadd.f32 0.0, %v2941
      %v2943 = vpop.f32.mrf.mxu0
      %v2944 = vpop.f32.mrf.mxu0
      %v2945 = vadd.f32 0.0, %v2944
      %v2946 = vpop.f32.mrf.mxu0
      %2947 = vmatprep.mubr.bf16.mxu0 0
      %2948 = vmatmul.mubr.bf16.gmra.mxu0 %v2850
      %v2949 = vpop.f32.mrf.mxu0
      %v2950 = vadd.f32 0.0, %v2949
      %v2951 = vpop.f32.mrf.mxu0
      %v2952 = vpop.f32.mrf.mxu0
      %v2953 = vadd.f32 0.0, %v2952
      %v2954 = vpop.f32.mrf.mxu0
      %2955 = vmatprep.mubr.bf16.mxu0 0
      %2956 = vmatmul.mubr.bf16.gmra.mxu0 %v2853
      %v2957 = vpop.f32.mrf.mxu0
      %v2958 = vadd.f32 0.0, %v2957
      %v2959 = vpop.f32.mrf.mxu0
      %v2960 = vpop.f32.mrf.mxu0
      %v2961 = vadd.f32 0.0, %v2960
      %v2962 = vpop.f32.mrf.mxu0
      %2963 = vmatprep.mubr.bf16.mxu0 0
      %2964 = vmatmul.mubr.bf16.gmra.mxu0 %v2856
      %v2965 = vpop.f32.mrf.mxu0
      %v2966 = vadd.f32 0.0, %v2965
      %v2967 = vpop.f32.mrf.mxu0
      %v2968 = vpop.f32.mrf.mxu0
      %v2969 = vadd.f32 0.0, %v2968
      %v2970 = vpop.f32.mrf.mxu0
      %2971 = vmatprep.mubr.bf16.mxu0 0
      %2972 = vmatmul.mubr.bf16.gmra.mxu0 %v2859
      %v2973 = vpop.f32.mrf.mxu0
      %v2974 = vadd.f32 0.0, %v2973
      %v2975 = vpop.f32.mrf.mxu0
      %v2976 = vpop.f32.mrf.mxu0
      %v2977 = vadd.f32 0.0, %v2976
      %v2978 = vpop.f32.mrf.mxu0
      %2979 = vmatprep.mubr.bf16.mxu0 0
      %2980 = vmatmul.mubr.bf16.gmra.mxu0 %v2862
      %v2981 = vpop.f32.mrf.mxu0
      %v2982 = vadd.f32 0.0, %v2981
      %v2983 = vpop.f32.mrf.mxu0
      %v2984 = vpop.f32.mrf.mxu0
      %v2985 = vadd.f32 0.0, %v2984
      %v2986 = vpop.f32.mrf.mxu0
      %2987 = vmatprep.mubr.bf16.mxu0 0
      %2988 = vmatmul.mubr.bf16.gmra.mxu0 %v2865
      %v2989 = vpop.f32.mrf.mxu0
      %v2990 = vadd.f32 0.0, %v2989
      %v2991 = vpop.f32.mrf.mxu0
      %v2992 = vpop.f32.mrf.mxu0
      %v2993 = vadd.f32 0.0, %v2992
      %v2994 = vpop.f32.mrf.mxu0
      %2995 = vmatprep.mubr.bf16.mxu0 0
      %2996 = vmatmul.mubr.bf16.gmra.mxu0 %v2868
      %v2997 = vpop.f32.mrf.mxu0
      %v2998 = vadd.f32 0.0, %v2997
      %v2999 = vpop.f32.mrf.mxu0
      %v3000 = vpop.f32.mrf.mxu0
      %v3001 = vadd.f32 0.0, %v3000
      %v3002 = vpop.f32.mrf.mxu0
      %3003 = vmatprep.mubr.bf16.mxu0 0
      %3004 = vmatmul.mubr.bf16.gmra.mxu0 %v2871
      %v3005 = vpop.f32.mrf.mxu0
      %v3006 = vadd.f32 0.0, %v3005
      %v3007 = vpop.f32.mrf.mxu0
      %v3008 = vpop.f32.mrf.mxu0
      %v3009 = vadd.f32 0.0, %v3008
      %v3010 = vpop.f32.mrf.mxu0
      %3011 = vmatprep.mubr.bf16.mxu0 0
      %3012 = vmatmul.mubr.bf16.gmra.mxu0 %v2874
      %v3013 = vpop.f32.mrf.mxu0
      %v3014 = vadd.f32 0.0, %v3013
      %v3015 = vpop.f32.mrf.mxu0
      %v3016 = vpop.f32.mrf.mxu0
      %v3017 = vadd.f32 0.0, %v3016
      %v3018 = vpop.f32.mrf.mxu0
      %3019 = vmatprep.mubr.bf16.mxu0 0
      %3020 = vmatmul.mubr.bf16.gmra.mxu0 %v2877
      %v3021 = vpop.f32.mrf.mxu0
      %v3022 = vadd.f32 0.0, %v3021
      %v3023 = vpop.f32.mrf.mxu0
      %v3024 = vpop.f32.mrf.mxu0
      %v3025 = vadd.f32 0.0, %v3024
      %v3026 = vpop.f32.mrf.mxu0
      %3027 = vmatprep.mubr.bf16.mxu0 0
      %3028 = vmatmul.mubr.bf16.gmra.mxu0 %v2880
      %v3029 = vpop.f32.mrf.mxu0
      %v3030 = vadd.f32 0.0, %v3029
      %v3031 = vpop.f32.mrf.mxu0
      %v3032 = vpop.f32.mrf.mxu0
      %v3033 = vadd.f32 0.0, %v3032
      %v3034 = vpop.f32.mrf.mxu0
      %3035 = vmatprep.mubr.bf16.mxu0 0
      %3036 = vmatmul.mubr.bf16.gmra.mxu0 %v2883
      %v3037 = vpop.f32.mrf.mxu0
      %v3038 = vadd.f32 0.0, %v3037
      %v3039 = vpop.f32.mrf.mxu0
      %v3040 = vpop.f32.mrf.mxu0
      %v3041 = vadd.f32 0.0, %v3040
      %v3042 = vpop.f32.mrf.mxu0
      %3043 = vmatprep.mubr.bf16.mxu0 0
      %3044 = vmatmul.mubr.bf16.gmra.mxu0 %v2886
      %v3045 = vpop.f32.mrf.mxu0
      %v3046 = vadd.f32 0.0, %v3045
      %v3047 = vpop.f32.mrf.mxu0
      %v3048 = vpop.f32.mrf.mxu0
      %v3049 = vadd.f32 0.0, %v3048
      %v3050 = vpop.f32.mrf.mxu0
      %3051 = vmatprep.mubr.bf16.mxu0 0
      %3052 = vmatmul.mubr.bf16.gmra.mxu0 %v2889
      %v3053 = vpop.f32.mrf.mxu0
      %v3054 = vadd.f32 0.0, %v3053
      %v3055 = vpop.f32.mrf.mxu0
      %v3056 = vpop.f32.mrf.mxu0
      %v3057 = vadd.f32 0.0, %v3056
      %v3058 = vpop.f32.mrf.mxu0
      %3059 = vdwg.mxu0
      %v3060 = vpack.c.bf16 %v2693, %v2690
      %v3061 = vpack.c.bf16 %v2694, %v2691
      %v3062 = vpack.c.bf16 %v2695, %v2692
      %v3063 = vpack.c.bf16 %v2929, %v2926
      %v3064 = vpack.c.bf16 %v2937, %v2934
      %v3065 = vpack.c.bf16 %v2945, %v2942
      %v3066 = vpack.c.bf16 %v2953, %v2950
      %v3067 = vpack.c.bf16 %v2961, %v2958
      %v3068 = vpack.c.bf16 %v2969, %v2966
      %v3069 = vpack.c.bf16 %v2977, %v2974
      %v3070 = vpack.c.bf16 %v2985, %v2982
      %v3071 = vpack.c.bf16 %v2993, %v2990
      %v3072 = vpack.c.bf16 %v3001, %v2998
      %v3073 = vpack.c.bf16 %v3009, %v3006
      %v3074 = vpack.c.bf16 %v3017, %v3014
      %v3075 = vpack.c.bf16 %v3025, %v3022
      %v3076 = vpack.c.bf16 %v3033, %v3030
      %v3077 = vpack.c.bf16 %v3041, %v3038
      %v3078 = vpack.c.bf16 %v3049, %v3046
      %v3079 = vpack.c.bf16 %v3057, %v3054
      %v3081 = vsel %vm1056, %v3062, 0
      %v3084 = vsel %vm1485, %v3079, 0
      %3086 = vmatprep.subr.bf16.mxu0 0
      %3087 = vmatpush1.bf16.msra.mxu0 %v3070
      %3088 = vmatprep.subr.bf16.mxu0 0
      %3089 = vmatpush1.bf16.msra.mxu0 %v3069
      %3090 = vmatprep.subr.bf16.mxu0 0
      %3091 = vmatpush1.bf16.msra.mxu0 %v3068
      %3092 = vmatprep.subr.bf16.mxu0 0
      %3093 = vmatpush1.bf16.msra.mxu0 %v3067
      %3094 = vmatprep.subr.bf16.mxu0 0
      %3095 = vmatpush1.bf16.msra.mxu0 %v3066
      %3096 = vmatprep.subr.bf16.mxu0 0
      %3097 = vmatpush1.bf16.msra.mxu0 %v3065
      %3098 = vmatprep.subr.bf16.mxu0 0
      %3099 = vmatpush1.bf16.msra.mxu0 %v3064
      %3100 = vmatprep.subr.bf16.mxu0 0
      %3101 = vmatpush1.bf16.msra.mxu0 %v3063
      %3102 = vmatprep.subr.bf16.mxu0 0
      %3103 = vmatpush2.bf16.msra.mxu0 %v3078
      %3104 = vmatprep.subr.bf16.mxu0 0
      %3105 = vmatpush2.bf16.msra.mxu0 %v3077
      %3106 = vmatprep.subr.bf16.mxu0 0
      %3107 = vmatpush2.bf16.msra.mxu0 %v3076
      %3108 = vmatprep.subr.bf16.mxu0 0
      %3109 = vmatpush2.bf16.msra.mxu0 %v3075
      %3110 = vmatprep.subr.bf16.mxu0 0
      %3111 = vmatpush2.bf16.msra.mxu0 %v3074
      %3112 = vmatprep.subr.bf16.mxu0 0
      %3113 = vmatpush2.bf16.msra.mxu0 %v3073
      %3114 = vmatprep.subr.bf16.mxu0 0
      %3115 = vmatpush2.bf16.msra.mxu0 %v3072
      %3116 = vmatprep.subr.bf16.mxu0 0
      %3117 = vmatpush2.bf16.msra.mxu0 %v3071
      %3118 = vmatprep.mubr.bf16.mxu0 %v3061
      %3119 = vmatmul.mubr.bf16.gmra.mxu0 %v3060
      %v3120 = vpop.f32.mrf.mxu0
      %v3121 = vadd.f32 0.0, %v3120
      %v3122 = vpop.f32.mrf.mxu0
      %v3123 = vpop.f32.mrf.mxu0
      %v3124 = vadd.f32 0.0, %v3123
      %v3125 = vpop.f32.mrf.mxu0
      %3126 = vdwg.mxu0
      %3127 = vmatprep.subr.bf16.mxu0 0
      %3128 = vmatpush1.bf16.msra.mxu0 0
      %3129 = vmatprep.subr.bf16.mxu0 0
      %3130 = vmatpush1.bf16.msra.mxu0 0
      %3131 = vmatprep.subr.bf16.mxu0 0
      %3132 = vmatpush1.bf16.msra.mxu0 0
      %3133 = vmatprep.subr.bf16.mxu0 0
      %3134 = vmatpush1.bf16.msra.mxu0 0
      %3135 = vmatprep.subr.bf16.mxu0 0
      %3136 = vmatpush1.bf16.msra.mxu0 0
      %3137 = vmatprep.subr.bf16.mxu0 0
      %3138 = vmatpush1.bf16.msra.mxu0 0
      %3139 = vmatprep.subr.bf16.mxu0 0
      %3140 = vmatpush1.bf16.msra.mxu0 0
      %3141 = vmatprep.subr.bf16.mxu0 0
      %3142 = vmatpush1.bf16.msra.mxu0 %v3084
      %3143 = vmatprep.subr.bf16.mxu0 0
      %3144 = vmatpush2.bf16.msra.mxu0 0
      %3145 = vmatprep.subr.bf16.mxu0 0
      %3146 = vmatpush2.bf16.msra.mxu0 0
      %3147 = vmatprep.subr.bf16.mxu0 0
      %3148 = vmatpush2.bf16.msra.mxu0 0
      %3149 = vmatprep.subr.bf16.mxu0 0
      %3150 = vmatpush2.bf16.msra.mxu0 0
      %3151 = vmatprep.subr.bf16.mxu0 0
      %3152 = vmatpush2.bf16.msra.mxu0 0
      %3153 = vmatprep.subr.bf16.mxu0 0
      %3154 = vmatpush2.bf16.msra.mxu0 0
      %3155 = vmatprep.subr.bf16.mxu0 0
      %3156 = vmatpush2.bf16.msra.mxu0 0
      %3157 = vmatprep.subr.bf16.mxu0 0
      %3158 = vmatpush2.bf16.msra.mxu0 0
      %3159 = vmatprep.mubr.bf16.mxu0 0
      %3160 = vmatmul.mubr.bf16.gmra.mxu0 %v3081
      %v3161 = vpop.f32.mrf.mxu0
      %v3162 = vadd.f32 %v3121, %v3161
      %v3163 = vpop.f32.mrf.mxu0
      %v3164 = vpop.f32.mrf.mxu0
      %v3165 = vadd.f32 %v3124, %v3164
      %v3166 = vpop.f32.mrf.mxu0
      %3167 = vdwg.mxu0
      %v3168 = vrcp.pop %v2782
      %v3169 = vrcp.pop %v2787
      %v3170 = vmul.f32 %v3162, %v3168
      %v3171 = vmul.f32 %v3165, %v3169
      %v3172 = vpack.c.bf16 %v3171, %v3170
      %v3181 = vunpack.c.l.b16 %v543
      %v3182 = vunpack.c.l.b16 %v544
      %v3183 = vunpack.c.l.b16 %v545
      %v3184 = vunpack.c.l.b16 %v546
      %v3185 = vunpack.c.l.b16 %v547
      %v3186 = vunpack.c.l.b16 %v548
      %v3187 = vunpack.c.l.b16 %v549
      %v3188 = vunpack.c.l.b16 %v550
      %v3189 = vpack.c.b16 %v3182, %v3181
      %v3190 = vpack.c.b16 %v3184, %v3183
      %v3191 = vpack.c.b16 %v3186, %v3185
      %v3192 = vpack.c.b16 %v3188, %v3187
      %v3198 = vsel %vm852, %v3172, 0
      %3200 = vmatprep.subr.bf16.mxu0 0
      %3201 = vmatpush1.bf16.msra.mxu0 0
      %3202 = vmatprep.subr.bf16.mxu0 0
      %3203 = vmatpush1.bf16.msra.mxu0 0
      %3204 = vmatprep.subr.bf16.mxu0 0
      %3205 = vmatpush1.bf16.msra.mxu0 0
      %3206 = vmatprep.subr.bf16.mxu0 0
      %3207 = vmatpush1.bf16.msra.mxu0 0
      %3208 = vmatprep.subr.bf16.mxu0 0
      %3209 = vmatpush1.bf16.msra.mxu0 %v3192
      %3210 = vmatprep.subr.bf16.mxu0 0
      %3211 = vmatpush1.bf16.msra.mxu0 %v3191
      %3212 = vmatprep.subr.bf16.mxu0 0
      %3213 = vmatpush1.bf16.msra.mxu0 %v3190
      %3214 = vmatprep.subr.bf16.mxu0 0
      %3215 = vmatpush1.bf16.msra.mxu0 %v3189
      %3216 = vmatprep.subr.bf16.mxu0 0
      %3217 = vmatpush2.bf16.msra.mxu0 0
      %3218 = vmatprep.subr.bf16.mxu0 0
      %3219 = vmatpush2.bf16.msra.mxu0 0
      %3220 = vmatprep.subr.bf16.mxu0 0
      %3221 = vmatpush2.bf16.msra.mxu0 0
      %3222 = vmatprep.subr.bf16.mxu0 0
      %3223 = vmatpush2.bf16.msra.mxu0 0
      %3224 = vmatprep.subr.bf16.mxu0 0
      %3225 = vmatpush2.bf16.msra.mxu0 0
      %3226 = vmatprep.subr.bf16.mxu0 0
      %3227 = vmatpush2.bf16.msra.mxu0 0
      %3228 = vmatprep.subr.bf16.mxu0 0
      %3229 = vmatpush2.bf16.msra.mxu0 0
      %3230 = vmatprep.subr.bf16.mxu0 0
      %3231 = vmatpush2.bf16.msra.mxu0 0
      %3232 = vmatprep.mubr.bf16.mxu0 0
      %3233 = vmatmul.mubr.bf16.gmra.mxu0 %v3198
      %v3234 = vpop.f32.mrf.mxu0
      %v3235 = vadd.f32 0.0, %v3234
      %v3236 = vpop.f32.mrf.mxu0
      %v3237 = vpop.f32.mrf.mxu0
      %v3238 = vadd.f32 0.0, %v3237
      %v3239 = vpop.f32.mrf.mxu0
      %3240 = vdwg.mxu0
      %v3241 = vadd.f32 %v2444, %v3235
      %v3242 = vadd.f32 %v2447, %v3238
      %3244 = vrot.lane.b32.xlu0 %v2452, 64
      %v3245 = vpop.permute.xlu0 %3244
      %v3247 = vsel %vm852, %v3245, 0
      %3249 = vmatprep.subr.bf16.mxu0 0
      %3250 = vmatpush1.bf16.msra.mxu0 0
      %3251 = vmatprep.subr.bf16.mxu0 0
      %3252 = vmatpush1.bf16.msra.mxu0 0
      %3253 = vmatprep.subr.bf16.mxu0 0
      %3254 = vmatpush1.bf16.msra.mxu0 0
      %3255 = vmatprep.subr.bf16.mxu0 0
      %3256 = vmatpush1.bf16.msra.mxu0 0
      %3257 = vmatprep.subr.bf16.mxu0 %v838
      %3258 = vmatpush1.bf16.msra.mxu0 %v837
      %3259 = vmatprep.subr.bf16.mxu0 %v835
      %3260 = vmatpush1.bf16.msra.mxu0 %v834
      %3261 = vmatprep.subr.bf16.mxu0 %v832
      %3262 = vmatpush1.bf16.msra.mxu0 %v831
      %3263 = vmatprep.subr.bf16.mxu0 %v829
      %3264 = vmatpush1.bf16.msra.mxu0 %v828
      %3265 = vmatprep.subr.bf16.mxu0 0
      %3266 = vmatpush2.bf16.msra.mxu0 0
      %3267 = vmatprep.subr.bf16.mxu0 0
      %3268 = vmatpush2.bf16.msra.mxu0 0
      %3269 = vmatprep.subr.bf16.mxu0 0
      %3270 = vmatpush2.bf16.msra.mxu0 0
      %3271 = vmatprep.subr.bf16.mxu0 0
      %3272 = vmatpush2.bf16.msra.mxu0 0
      %3273 = vmatprep.subr.bf16.mxu0 0
      %3274 = vmatpush2.bf16.msra.mxu0 0
      %3275 = vmatprep.subr.bf16.mxu0 0
      %3276 = vmatpush2.bf16.msra.mxu0 0
      %3277 = vmatprep.subr.bf16.mxu0 0
      %3278 = vmatpush2.bf16.msra.mxu0 0
      %3279 = vmatprep.subr.bf16.mxu0 0
      %3280 = vmatpush2.bf16.msra.mxu0 0
      %3281 = vmatprep.mubr.bf16.mxu0 0
      %3282 = vmatmul.mubr.bf16.gmra.mxu0 %v3247
      %v3283 = vpop.f32.mrf.mxu0
      %v3284 = vadd.f32 0.0, %v3283
      %v3285 = vpop.f32.mrf.mxu0
      %v3286 = vadd.f32 0.0, %v3285
      %v3287 = vpop.f32.mrf.mxu0
      %v3288 = vadd.f32 0.0, %v3287
      %v3289 = vpop.f32.mrf.mxu0
      %v3290 = vadd.f32 0.0, %v3289
      %3291 = vdwg.mxu0
      %3292 = vmatprep.subr.bf16.mxu0 0
      %3293 = vmatpush1.bf16.msra.mxu0 0
      %3294 = vmatprep.subr.bf16.mxu0 0
      %3295 = vmatpush1.bf16.msra.mxu0 0
      %3296 = vmatprep.subr.bf16.mxu0 0
      %3297 = vmatpush1.bf16.msra.mxu0 0
      %3298 = vmatprep.subr.bf16.mxu0 0
      %3299 = vmatpush1.bf16.msra.mxu0 0
      %3300 = vmatprep.subr.bf16.mxu0 0
      %3301 = vmatpush1.bf16.msra.mxu0 %v839
      %3302 = vmatprep.subr.bf16.mxu0 0
      %3303 = vmatpush1.bf16.msra.mxu0 %v836
      %3304 = vmatprep.subr.bf16.mxu0 0
      %3305 = vmatpush1.bf16.msra.mxu0 %v833
      %3306 = vmatprep.subr.bf16.mxu0 0
      %3307 = vmatpush1.bf16.msra.mxu0 %v830
      %3308 = vmatprep.subr.bf16.mxu0 0
      %3309 = vmatpush2.bf16.msra.mxu0 0
      %3310 = vmatprep.subr.bf16.mxu0 0
      %3311 = vmatpush2.bf16.msra.mxu0 0
      %3312 = vmatprep.subr.bf16.mxu0 0
      %3313 = vmatpush2.bf16.msra.mxu0 0
      %3314 = vmatprep.subr.bf16.mxu0 0
      %3315 = vmatpush2.bf16.msra.mxu0 0
      %3316 = vmatprep.subr.bf16.mxu0 0
      %3317 = vmatpush2.bf16.msra.mxu0 0
      %3318 = vmatprep.subr.bf16.mxu0 0
      %3319 = vmatpush2.bf16.msra.mxu0 0
      %3320 = vmatprep.subr.bf16.mxu0 0
      %3321 = vmatpush2.bf16.msra.mxu0 0
      %3322 = vmatprep.subr.bf16.mxu0 0
      %3323 = vmatpush2.bf16.msra.mxu0 0
      %3324 = vmatprep.mubr.bf16.mxu0 0
      %3325 = vmatmul.mubr.bf16.gmra.mxu0 %v3247
      %v3326 = vpop.f32.mrf.mxu0
      %v3327 = vadd.f32 0.0, %v3326
      %v3328 = vpop.f32.mrf.mxu0
      %v3329 = vpop.f32.mrf.mxu0
      %v3330 = vadd.f32 0.0, %v3329
      %v3331 = vpop.f32.mrf.mxu0
      %3332 = vdwg.mxu0
      %3334 = vrot.lane.b32.xlu0 %v2542, 64
      %v3335 = vpop.permute.xlu0 %3334
      %v3337 = vsel %vm852, %v3335, 0
      %3339 = vmatprep.subr.bf16.mxu0 0
      %3340 = vmatpush1.bf16.msra.mxu0 0
      %3341 = vmatprep.subr.bf16.mxu0 0
      %3342 = vmatpush1.bf16.msra.mxu0 0
      %3343 = vmatprep.subr.bf16.mxu0 0
      %3344 = vmatpush1.bf16.msra.mxu0 0
      %3345 = vmatprep.subr.bf16.mxu0 0
      %3346 = vmatpush1.bf16.msra.mxu0 0
      %3347 = vmatprep.subr.bf16.mxu0 %v838
      %3348 = vmatpush1.bf16.msra.mxu0 %v837
      %3349 = vmatprep.subr.bf16.mxu0 %v835
      %3350 = vmatpush1.bf16.msra.mxu0 %v834
      %3351 = vmatprep.subr.bf16.mxu0 %v832
      %3352 = vmatpush1.bf16.msra.mxu0 %v831
      %3353 = vmatprep.subr.bf16.mxu0 %v829
      %3354 = vmatpush1.bf16.msra.mxu0 %v828
      %3355 = vmatprep.subr.bf16.mxu0 0
      %3356 = vmatpush2.bf16.msra.mxu0 0
      %3357 = vmatprep.subr.bf16.mxu0 0
      %3358 = vmatpush2.bf16.msra.mxu0 0
      %3359 = vmatprep.subr.bf16.mxu0 0
      %3360 = vmatpush2.bf16.msra.mxu0 0
      %3361 = vmatprep.subr.bf16.mxu0 0
      %3362 = vmatpush2.bf16.msra.mxu0 0
      %3363 = vmatprep.subr.bf16.mxu0 0
      %3364 = vmatpush2.bf16.msra.mxu0 0
      %3365 = vmatprep.subr.bf16.mxu0 0
      %3366 = vmatpush2.bf16.msra.mxu0 0
      %3367 = vmatprep.subr.bf16.mxu0 0
      %3368 = vmatpush2.bf16.msra.mxu0 0
      %3369 = vmatprep.subr.bf16.mxu0 0
      %3370 = vmatpush2.bf16.msra.mxu0 0
      %3371 = vmatprep.mubr.bf16.mxu0 0
      %3372 = vmatmul.mubr.bf16.gmra.mxu0 %v3337
      %v3373 = vpop.f32.mrf.mxu0
      %v3374 = vadd.f32 0.0, %v3373
      %v3375 = vpop.f32.mrf.mxu0
      %v3376 = vadd.f32 0.0, %v3375
      %v3377 = vpop.f32.mrf.mxu0
      %v3378 = vadd.f32 0.0, %v3377
      %v3379 = vpop.f32.mrf.mxu0
      %v3380 = vadd.f32 0.0, %v3379
      %3381 = vdwg.mxu0
      %3382 = vmatprep.subr.bf16.mxu0 0
      %3383 = vmatpush1.bf16.msra.mxu0 0
      %3384 = vmatprep.subr.bf16.mxu0 0
      %3385 = vmatpush1.bf16.msra.mxu0 0
      %3386 = vmatprep.subr.bf16.mxu0 0
      %3387 = vmatpush1.bf16.msra.mxu0 0
      %3388 = vmatprep.subr.bf16.mxu0 0
      %3389 = vmatpush1.bf16.msra.mxu0 0
      %3390 = vmatprep.subr.bf16.mxu0 0
      %3391 = vmatpush1.bf16.msra.mxu0 %v839
      %3392 = vmatprep.subr.bf16.mxu0 0
      %3393 = vmatpush1.bf16.msra.mxu0 %v836
      %3394 = vmatprep.subr.bf16.mxu0 0
      %3395 = vmatpush1.bf16.msra.mxu0 %v833
      %3396 = vmatprep.subr.bf16.mxu0 0
      %3397 = vmatpush1.bf16.msra.mxu0 %v830
      %3398 = vmatprep.subr.bf16.mxu0 0
      %3399 = vmatpush2.bf16.msra.mxu0 0
      %3400 = vmatprep.subr.bf16.mxu0 0
      %3401 = vmatpush2.bf16.msra.mxu0 0
      %3402 = vmatprep.subr.bf16.mxu0 0
      %3403 = vmatpush2.bf16.msra.mxu0 0
      %3404 = vmatprep.subr.bf16.mxu0 0
      %3405 = vmatpush2.bf16.msra.mxu0 0
      %3406 = vmatprep.subr.bf16.mxu0 0
      %3407 = vmatpush2.bf16.msra.mxu0 0
      %3408 = vmatprep.subr.bf16.mxu0 0
      %3409 = vmatpush2.bf16.msra.mxu0 0
      %3410 = vmatprep.subr.bf16.mxu0 0
      %3411 = vmatpush2.bf16.msra.mxu0 0
      %3412 = vmatprep.subr.bf16.mxu0 0
      %3413 = vmatpush2.bf16.msra.mxu0 0
      %3414 = vmatprep.mubr.bf16.mxu0 0
      %3415 = vmatmul.mubr.bf16.gmra.mxu0 %v3337
      %v3416 = vpop.f32.mrf.mxu0
      %v3417 = vadd.f32 0.0, %v3416
      %v3418 = vpop.f32.mrf.mxu0
      %v3419 = vpop.f32.mrf.mxu0
      %v3420 = vadd.f32 0.0, %v3419
      %v3421 = vpop.f32.mrf.mxu0
      %3422 = vdwg.mxu0
      %3425 = vrot.lane.b32.xlu0 %v2630, 64
      %v3426 = vpop.permute.xlu0 %3425
      %3427 = vrot.lane.b32.xlu0 %v2631, 64
      %v3428 = vpop.permute.xlu0 %3427
      %v3431 = vsel %vm852, %v3426, 0.0
      %3432 = vadd.xlane.f32.xlu0 %v3431
      %v3433 = vpop.xlane.xlu0 %3432
      %v3434 = vsel %vm852, %v3428, 0.0
      %3435 = vadd.xlane.f32.xlu0 %v3434
      %v3436 = vpop.xlane.xlu0 %3435
      %v3437 = vmul.f32 %v3433, 0.0625
      %v3438 = vmul.f32 %v3436, 0.0625
      %3441 = vrot.lane.b32.xlu0 %v2640, 64
      %v3442 = vpop.permute.xlu0 %3441
      %3443 = vrot.lane.b32.xlu0 %v2641, 64
      %v3444 = vpop.permute.xlu0 %3443
      %v3447 = vsel %vm852, %v3442, 0.0
      %3448 = vadd.xlane.f32.xlu0 %v3447
      %v3449 = vpop.xlane.xlu0 %3448
      %v3450 = vsel %vm852, %v3444, 0.0
      %3451 = vadd.xlane.f32.xlu0 %v3450
      %v3452 = vpop.xlane.xlu0 %3451
      %v3453 = vmul.f32 %v3449, 0.0625
      %v3454 = vmul.f32 %v3452, 0.0625
      %v3455 = vsub.f32 %v3284, %v3437
      %v3456 = vsub.f32 %v3286, %v3437
      %v3457 = vsub.f32 %v3327, %v3437
      %v3458 = vsub.f32 %v3288, %v3438
      %v3459 = vsub.f32 %v3290, %v3438
      %v3460 = vsub.f32 %v3330, %v3438
      %v3461 = vsel %vm1056, %v3327, -inf
      %v3462 = vmax.f32 %v3284, %v3461
      %v3463 = vmax.f32 %v3462, %v3286
      %3464 = vmax.xlane.f32.xlu0 %v3463
      %v3465 = vpop.xlane.xlu0 %3464
      %v3466 = vsel %vm1056, %v3330, -inf
      %v3467 = vmax.f32 %v3288, %v3466
      %v3468 = vmax.f32 %v3467, %v3290
      %3469 = vmax.xlane.f32.xlu0 %v3468
      %v3470 = vpop.xlane.xlu0 %3469
      %v3471 = vsub.f32 %v3455, %v3465
      %v3472 = vsub.f32 %v3456, %v3465
      %v3473 = vsub.f32 %v3457, %v3465
      %v3474 = vsub.f32 %v3458, %v3470
      %v3475 = vsub.f32 %v3459, %v3470
      %v3476 = vsub.f32 %v3460, %v3470
      %v3477 = vmul.f32 %v3471, 1.442695
      %v3478 = vpow.pop %v3477
      %v3479 = vmul.f32 %v3472, 1.442695
      %v3480 = vpow.pop %v3479
      %v3481 = vmul.f32 %v3473, 1.442695
      %v3482 = vpow.pop %v3481
      %v3483 = vmul.f32 %v3474, 1.442695
      %v3484 = vpow.pop %v3483
      %v3485 = vmul.f32 %v3475, 1.442695
      %v3486 = vpow.pop %v3485
      %v3487 = vmul.f32 %v3476, 1.442695
      %v3488 = vpow.pop %v3487
      %v3489 = vadd.f32 %v3478, 0.0001
      %v3490 = vadd.f32 %v3480, 0.0001
      %v3491 = vadd.f32 %v3482, 0.0001
      %v3492 = vadd.f32 %v3484, 0.0001
      %v3493 = vadd.f32 %v3486, 0.0001
      %v3494 = vadd.f32 %v3488, 0.0001
      %v3495 = vmul.f32 %v3489, 0.061313935
      %v3496 = vmul.f32 %v3490, 0.061313935
      %v3497 = vmul.f32 %v3491, 0.061313935
      %v3498 = vmul.f32 %v3492, 0.061313935
      %v3499 = vmul.f32 %v3493, 0.061313935
      %v3500 = vmul.f32 %v3494, 0.061313935
      %v3501 = vsel %vm1056, %v3417, -inf
      %v3502 = vmax.f32 %v3374, %v3501
      %v3503 = vmax.f32 %v3502, %v3376
      %3504 = vmax.xlane.f32.xlu0 %v3503
      %v3505 = vpop.xlane.xlu0 %3504
      %v3506 = vsel %vm1056, %v3420, -inf
      %v3507 = vmax.f32 %v3378, %v3506
      %v3508 = vmax.f32 %v3507, %v3380
      %3509 = vmax.xlane.f32.xlu0 %v3508
      %v3510 = vpop.xlane.xlu0 %3509
      %v3511 = vmax.f32 %v3505, %v3510
      %v3512 = vrot.slane %v3511, 4
      %v3513 = vmax.f32 %v3511, %v3512
      %v3514 = vrot.slane %v3513, 2
      %v3515 = vmax.f32 %v3513, %v3514
      %v3516 = vrot.slane %v3515, 1
      %v3517 = vmax.f32 %v3515, %v3516
      %v3518 = vsub.f32 %v3374, %v3453
      %v3519 = vsub.f32 %v3376, %v3453
      %v3520 = vsub.f32 %v3417, %v3453
      %v3521 = vsub.f32 %v3378, %v3454
      %v3522 = vsub.f32 %v3380, %v3454
      %v3523 = vsub.f32 %v3420, %v3454
      %v3524 = vsub.f32 %v3518, %v3517
      %v3525 = vsub.f32 %v3519, %v3517
      %v3526 = vsub.f32 %v3520, %v3517
      %v3527 = vsub.f32 %v3521, %v3517
      %v3528 = vsub.f32 %v3522, %v3517
      %v3529 = vsub.f32 %v3523, %v3517
      %v3530 = vmul.f32 %v3524, 1.442695
      %v3531 = vpow.pop %v3530
      %v3532 = vmul.f32 %v3525, 1.442695
      %v3533 = vpow.pop %v3532
      %v3534 = vmul.f32 %v3526, 1.442695
      %v3535 = vpow.pop %v3534
      %v3536 = vmul.f32 %v3527, 1.442695
      %v3537 = vpow.pop %v3536
      %v3538 = vmul.f32 %v3528, 1.442695
      %v3539 = vpow.pop %v3538
      %v3540 = vmul.f32 %v3529, 1.442695
      %v3541 = vpow.pop %v3540
      %v3542 = vadd.f32 %v3531, 0.0001
      %v3543 = vadd.f32 %v3533, 0.0001
      %v3544 = vadd.f32 %v3535, 0.0001
      %v3545 = vadd.f32 %v3537, 0.0001
      %v3546 = vadd.f32 %v3539, 0.0001
      %v3547 = vadd.f32 %v3541, 0.0001
      %v3548 = vmul.f32 %v3542, 0.061313935
      %v3549 = vmul.f32 %v3543, 0.061313935
      %v3550 = vmul.f32 %v3544, 0.061313935
      %v3551 = vmul.f32 %v3545, 0.061313935
      %v3552 = vmul.f32 %v3546, 0.061313935
      %v3553 = vmul.f32 %v3547, 0.061313935
      %v3554 = vadd.f32 %v3548, %v3551
      %v3555 = vrot.slane %v3554, 4
      %v3556 = vadd.f32 %v3554, %v3555
      %v3557 = vrot.slane %v3556, 2
      %v3558 = vadd.f32 %v3556, %v3557
      %v3559 = vrot.slane %v3558, 1
      %v3560 = vadd.f32 %v3558, %v3559
      %v3561 = vadd.f32 %v3549, %v3552
      %v3562 = vrot.slane %v3561, 4
      %v3563 = vadd.f32 %v3561, %v3562
      %v3564 = vrot.slane %v3563, 2
      %v3565 = vadd.f32 %v3563, %v3564
      %v3566 = vrot.slane %v3565, 1
      %v3567 = vadd.f32 %v3565, %v3566
      %v3568 = vsel %vm1056, %v3550, 0.0
      %v3569 = vsel %vm1056, %v3553, 0.0
      %v3570 = vadd.f32 %v3568, %v3569
      %v3571 = vrot.slane %v3570, 4
      %v3572 = vadd.f32 %v3570, %v3571
      %v3573 = vrot.slane %v3572, 2
      %v3574 = vadd.f32 %v3572, %v3573
      %v3575 = vrot.slane %v3574, 1
      %v3576 = vadd.f32 %v3574, %v3575
      %v3577 = vmul.f32 %v3495, %v3560
      %v3578 = vmul.f32 %v3496, %v3567
      %v3579 = vmul.f32 %v3497, %v3576
      %v3580 = vmul.f32 %v3498, %v3560
      %v3581 = vmul.f32 %v3499, %v3567
      %v3582 = vmul.f32 %v3500, %v3576
      %v3583 = vadd.f32 %v3577, %v3578
      %v3584 = vsel %vm1056, %v3579, 0.0
      %v3585 = vadd.f32 %v3583, %v3584
      %3586 = vadd.xlane.f32.xlu0 %v3585
      %v3587 = vpop.xlane.xlu0 %3586
      %v3588 = vadd.f32 %v3580, %v3581
      %v3589 = vsel %vm1056, %v3582, 0.0
      %v3590 = vadd.f32 %v3588, %v3589
      %3591 = vadd.xlane.f32.xlu0 %v3590
      %v3592 = vpop.xlane.xlu0 %3591
      %v3593 = vpack.c.bf16 %v3551, %v3548
      %v3594 = vpack.c.bf16 %v3552, %v3549
      %v3595 = vpack.c.bf16 %v3553, %v3550
      %3596 = vxpose.xlu0.c.b16.start [1/8] %v3593, 128
      %3597 = vxpose.xlu0.c.b16.cont [2/8] 0, 128
      %3598 = vxpose.xlu0.c.b16.cont [3/8] 0, 128
      %3599 = vxpose.xlu0.c.b16.cont [4/8] 0, 128
      %3600 = vxpose.xlu0.c.b16.cont [5/8] 0, 128
      %3601 = vxpose.xlu0.c.b16.cont [6/8] 0, 128
      %3602 = vxpose.xlu0.c.b16.cont [7/8] 0, 128
      %3603 = vxpose.xlu0.c.b16.end [8/8] 0, 128
      %v3604 = vpop.trf.xlu0
      %v3605 = vpop.trf.xlu0
      %v3606 = vpop.trf.xlu0
      %v3607 = vpop.trf.xlu0
      %v3608 = vpop.trf.xlu0
      %v3609 = vpop.trf.xlu0
      %v3610 = vpop.trf.xlu0
      %v3611 = vpop.trf.xlu0
      %3612 = vxpose.xlu0.c.b16.start [1/8] %v3594, 128
      %3613 = vxpose.xlu0.c.b16.cont [2/8] 0, 128
      %3614 = vxpose.xlu0.c.b16.cont [3/8] 0, 128
      %3615 = vxpose.xlu0.c.b16.cont [4/8] 0, 128
      %3616 = vxpose.xlu0.c.b16.cont [5/8] 0, 128
      %3617 = vxpose.xlu0.c.b16.cont [6/8] 0, 128
      %3618 = vxpose.xlu0.c.b16.cont [7/8] 0, 128
      %3619 = vxpose.xlu0.c.b16.end [8/8] 0, 128
      %v3620 = vpop.trf.xlu0
      %v3621 = vpop.trf.xlu0
      %v3622 = vpop.trf.xlu0
      %v3623 = vpop.trf.xlu0
      %v3624 = vpop.trf.xlu0
      %v3625 = vpop.trf.xlu0
      %v3626 = vpop.trf.xlu0
      %v3627 = vpop.trf.xlu0
      %3628 = vxpose.xlu0.c.b16.start [1/8] %v3595, 128
      %3629 = vxpose.xlu0.c.b16.cont [2/8] 0, 128
      %3630 = vxpose.xlu0.c.b16.cont [3/8] 0, 128
      %3631 = vxpose.xlu0.c.b16.cont [4/8] 0, 128
      %3632 = vxpose.xlu0.c.b16.cont [5/8] 0, 128
      %3633 = vxpose.xlu0.c.b16.cont [6/8] 0, 128
      %3634 = vxpose.xlu0.c.b16.cont [7/8] 0, 128
      %3635 = vxpose.xlu0.c.b16.end [8/8] 0, 128
      %v3636 = vpop.trf.xlu0
      %v3637 = vpop.trf.xlu0
      %v3638 = vpop.trf.xlu0
      %v3639 = vpop.trf.xlu0
      %v3640 = vpop.trf.xlu0
      %v3641 = vpop.trf.xlu0
      %v3642 = vpop.trf.xlu0
      %v3643 = vpop.trf.xlu0
      %3645 = vrot.lane.b32.xlu0 %v2791, 64
      %v3646 = vpop.permute.xlu0 %3645
      %v3649 = vsel %vm1241, %v3604, 0
      %v3652 = vsel %vm1241, %v3605, 0
      %v3655 = vsel %vm1241, %v3606, 0
      %v3658 = vsel %vm1241, %v3607, 0
      %v3661 = vsel %vm1241, %v3608, 0
      %v3664 = vsel %vm1241, %v3609, 0
      %v3667 = vsel %vm1241, %v3610, 0
      %v3670 = vsel %vm1241, %v3611, 0
      %v3673 = vsel %vm1241, %v3620, 0
      %v3676 = vsel %vm1241, %v3621, 0
      %v3679 = vsel %vm1241, %v3622, 0
      %v3682 = vsel %vm1241, %v3623, 0
      %v3685 = vsel %vm1241, %v3624, 0
      %v3688 = vsel %vm1241, %v3625, 0
      %v3691 = vsel %vm1241, %v3626, 0
      %v3694 = vsel %vm1241, %v3627, 0
      %v3697 = vsel %vm1241, %v3636, 0
      %3699 = vmatprep.subr.bf16.mxu0 0
      %3700 = vmatpush1.bf16.msra.mxu0 0
      %3701 = vmatprep.subr.bf16.mxu0 0
      %3702 = vmatpush1.bf16.msra.mxu0 0
      %3703 = vmatprep.subr.bf16.mxu0 0
      %3704 = vmatpush1.bf16.msra.mxu0 0
      %3705 = vmatprep.subr.bf16.mxu0 0
      %3706 = vmatpush1.bf16.msra.mxu0 0
      %3707 = vmatprep.subr.bf16.mxu0 0
      %3708 = vmatpush1.bf16.msra.mxu0 0
      %3709 = vmatprep.subr.bf16.mxu0 0
      %3710 = vmatpush1.bf16.msra.mxu0 0
      %3711 = vmatprep.subr.bf16.mxu0 0
      %3712 = vmatpush1.bf16.msra.mxu0 0
      %3713 = vmatprep.subr.bf16.mxu0 0
      %3714 = vmatpush1.bf16.msra.mxu0 %v3646
      %3715 = vmatprep.subr.bf16.mxu0 0
      %3716 = vmatpush2.bf16.msra.mxu0 0
      %3717 = vmatprep.subr.bf16.mxu0 0
      %3718 = vmatpush2.bf16.msra.mxu0 0
      %3719 = vmatprep.subr.bf16.mxu0 0
      %3720 = vmatpush2.bf16.msra.mxu0 0
      %3721 = vmatprep.subr.bf16.mxu0 0
      %3722 = vmatpush2.bf16.msra.mxu0 0
      %3723 = vmatprep.subr.bf16.mxu0 0
      %3724 = vmatpush2.bf16.msra.mxu0 0
      %3725 = vmatprep.subr.bf16.mxu0 0
      %3726 = vmatpush2.bf16.msra.mxu0 0
      %3727 = vmatprep.subr.bf16.mxu0 0
      %3728 = vmatpush2.bf16.msra.mxu0 0
      %3729 = vmatprep.subr.bf16.mxu0 0
      %3730 = vmatpush2.bf16.msra.mxu0 0
      %3731 = vmatprep.mubr.bf16.mxu0 0
      %3732 = vmatmul.mubr.bf16.gmra.mxu0 %v3649
      %v3733 = vpop.f32.mrf.mxu0
      %v3734 = vadd.f32 0.0, %v3733
      %v3735 = vpop.f32.mrf.mxu0
      %v3736 = vpop.f32.mrf.mxu0
      %v3737 = vadd.f32 0.0, %v3736
      %v3738 = vpop.f32.mrf.mxu0
      %3739 = vmatprep.mubr.bf16.mxu0 0
      %3740 = vmatmul.mubr.bf16.gmra.mxu0 %v3652
      %v3741 = vpop.f32.mrf.mxu0
      %v3742 = vadd.f32 0.0, %v3741
      %v3743 = vpop.f32.mrf.mxu0
      %v3744 = vpop.f32.mrf.mxu0
      %v3745 = vadd.f32 0.0, %v3744
      %v3746 = vpop.f32.mrf.mxu0
      %3747 = vmatprep.mubr.bf16.mxu0 0
      %3748 = vmatmul.mubr.bf16.gmra.mxu0 %v3655
      %v3749 = vpop.f32.mrf.mxu0
      %v3750 = vadd.f32 0.0, %v3749
      %v3751 = vpop.f32.mrf.mxu0
      %v3752 = vpop.f32.mrf.mxu0
      %v3753 = vadd.f32 0.0, %v3752
      %v3754 = vpop.f32.mrf.mxu0
      %3755 = vmatprep.mubr.bf16.mxu0 0
      %3756 = vmatmul.mubr.bf16.gmra.mxu0 %v3658
      %v3757 = vpop.f32.mrf.mxu0
      %v3758 = vadd.f32 0.0, %v3757
      %v3759 = vpop.f32.mrf.mxu0
      %v3760 = vpop.f32.mrf.mxu0
      %v3761 = vadd.f32 0.0, %v3760
      %v3762 = vpop.f32.mrf.mxu0
      %3763 = vmatprep.mubr.bf16.mxu0 0
      %3764 = vmatmul.mubr.bf16.gmra.mxu0 %v3661
      %v3765 = vpop.f32.mrf.mxu0
      %v3766 = vadd.f32 0.0, %v3765
      %v3767 = vpop.f32.mrf.mxu0
      %v3768 = vpop.f32.mrf.mxu0
      %v3769 = vadd.f32 0.0, %v3768
      %v3770 = vpop.f32.mrf.mxu0
      %3771 = vmatprep.mubr.bf16.mxu0 0
      %3772 = vmatmul.mubr.bf16.gmra.mxu0 %v3664
      %v3773 = vpop.f32.mrf.mxu0
      %v3774 = vadd.f32 0.0, %v3773
      %v3775 = vpop.f32.mrf.mxu0
      %v3776 = vpop.f32.mrf.mxu0
      %v3777 = vadd.f32 0.0, %v3776
      %v3778 = vpop.f32.mrf.mxu0
      %3779 = vmatprep.mubr.bf16.mxu0 0
      %3780 = vmatmul.mubr.bf16.gmra.mxu0 %v3667
      %v3781 = vpop.f32.mrf.mxu0
      %v3782 = vadd.f32 0.0, %v3781
      %v3783 = vpop.f32.mrf.mxu0
      %v3784 = vpop.f32.mrf.mxu0
      %v3785 = vadd.f32 0.0, %v3784
      %v3786 = vpop.f32.mrf.mxu0
      %3787 = vmatprep.mubr.bf16.mxu0 0
      %3788 = vmatmul.mubr.bf16.gmra.mxu0 %v3670
      %v3789 = vpop.f32.mrf.mxu0
      %v3790 = vadd.f32 0.0, %v3789
      %v3791 = vpop.f32.mrf.mxu0
      %v3792 = vpop.f32.mrf.mxu0
      %v3793 = vadd.f32 0.0, %v3792
      %v3794 = vpop.f32.mrf.mxu0
      %3795 = vmatprep.mubr.bf16.mxu0 0
      %3796 = vmatmul.mubr.bf16.gmra.mxu0 %v3673
      %v3797 = vpop.f32.mrf.mxu0
      %v3798 = vadd.f32 0.0, %v3797
      %v3799 = vpop.f32.mrf.mxu0
      %v3800 = vpop.f32.mrf.mxu0
      %v3801 = vadd.f32 0.0, %v3800
      %v3802 = vpop.f32.mrf.mxu0
      %3803 = vmatprep.mubr.bf16.mxu0 0
      %3804 = vmatmul.mubr.bf16.gmra.mxu0 %v3676
      %v3805 = vpop.f32.mrf.mxu0
      %v3806 = vadd.f32 0.0, %v3805
      %v3807 = vpop.f32.mrf.mxu0
      %v3808 = vpop.f32.mrf.mxu0
      %v3809 = vadd.f32 0.0, %v3808
      %v3810 = vpop.f32.mrf.mxu0
      %3811 = vmatprep.mubr.bf16.mxu0 0
      %3812 = vmatmul.mubr.bf16.gmra.mxu0 %v3679
      %v3813 = vpop.f32.mrf.mxu0
      %v3814 = vadd.f32 0.0, %v3813
      %v3815 = vpop.f32.mrf.mxu0
      %v3816 = vpop.f32.mrf.mxu0
      %v3817 = vadd.f32 0.0, %v3816
      %v3818 = vpop.f32.mrf.mxu0
      %3819 = vmatprep.mubr.bf16.mxu0 0
      %3820 = vmatmul.mubr.bf16.gmra.mxu0 %v3682
      %v3821 = vpop.f32.mrf.mxu0
      %v3822 = vadd.f32 0.0, %v3821
      %v3823 = vpop.f32.mrf.mxu0
      %v3824 = vpop.f32.mrf.mxu0
      %v3825 = vadd.f32 0.0, %v3824
      %v3826 = vpop.f32.mrf.mxu0
      %3827 = vmatprep.mubr.bf16.mxu0 0
      %3828 = vmatmul.mubr.bf16.gmra.mxu0 %v3685
      %v3829 = vpop.f32.mrf.mxu0
      %v3830 = vadd.f32 0.0, %v3829
      %v3831 = vpop.f32.mrf.mxu0
      %v3832 = vpop.f32.mrf.mxu0
      %v3833 = vadd.f32 0.0, %v3832
      %v3834 = vpop.f32.mrf.mxu0
      %3835 = vmatprep.mubr.bf16.mxu0 0
      %3836 = vmatmul.mubr.bf16.gmra.mxu0 %v3688
      %v3837 = vpop.f32.mrf.mxu0
      %v3838 = vadd.f32 0.0, %v3837
      %v3839 = vpop.f32.mrf.mxu0
      %v3840 = vpop.f32.mrf.mxu0
      %v3841 = vadd.f32 0.0, %v3840
      %v3842 = vpop.f32.mrf.mxu0
      %3843 = vmatprep.mubr.bf16.mxu0 0
      %3844 = vmatmul.mubr.bf16.gmra.mxu0 %v3691
      %v3845 = vpop.f32.mrf.mxu0
      %v3846 = vadd.f32 0.0, %v3845
      %v3847 = vpop.f32.mrf.mxu0
      %v3848 = vpop.f32.mrf.mxu0
      %v3849 = vadd.f32 0.0, %v3848
      %v3850 = vpop.f32.mrf.mxu0
      %3851 = vmatprep.mubr.bf16.mxu0 0
      %3852 = vmatmul.mubr.bf16.gmra.mxu0 %v3694
      %v3853 = vpop.f32.mrf.mxu0
      %v3854 = vadd.f32 0.0, %v3853
      %v3855 = vpop.f32.mrf.mxu0
      %v3856 = vpop.f32.mrf.mxu0
      %v3857 = vadd.f32 0.0, %v3856
      %v3858 = vpop.f32.mrf.mxu0
      %3859 = vmatprep.mubr.bf16.mxu0 0
      %3860 = vmatmul.mubr.bf16.gmra.mxu0 %v3697
      %v3861 = vpop.f32.mrf.mxu0
      %v3862 = vadd.f32 0.0, %v3861
      %v3863 = vpop.f32.mrf.mxu0
      %v3864 = vpop.f32.mrf.mxu0
      %v3865 = vadd.f32 0.0, %v3864
      %v3866 = vpop.f32.mrf.mxu0
      %3867 = vdwg.mxu0
      %v3868 = vpack.c.bf16 %v3498, %v3495
      %v3869 = vpack.c.bf16 %v3499, %v3496
      %v3870 = vpack.c.bf16 %v3500, %v3497
      %v3871 = vpack.c.bf16 %v3737, %v3734
      %v3872 = vpack.c.bf16 %v3745, %v3742
      %v3873 = vpack.c.bf16 %v3753, %v3750
      %v3874 = vpack.c.bf16 %v3761, %v3758
      %v3875 = vpack.c.bf16 %v3769, %v3766
      %v3876 = vpack.c.bf16 %v3777, %v3774
      %v3877 = vpack.c.bf16 %v3785, %v3782
      %v3878 = vpack.c.bf16 %v3793, %v3790
      %v3879 = vpack.c.bf16 %v3801, %v3798
      %v3880 = vpack.c.bf16 %v3809, %v3806
      %v3881 = vpack.c.bf16 %v3817, %v3814
      %v3882 = vpack.c.bf16 %v3825, %v3822
      %v3883 = vpack.c.bf16 %v3833, %v3830
      %v3884 = vpack.c.bf16 %v3841, %v3838
      %v3885 = vpack.c.bf16 %v3849, %v3846
      %v3886 = vpack.c.bf16 %v3857, %v3854
      %v3887 = vpack.c.bf16 %v3865, %v3862
      %v3889 = vsel %vm1056, %v3870, 0
      %v3892 = vsel %vm1485, %v3887, 0
      %3894 = vmatprep.subr.bf16.mxu0 0
      %3895 = vmatpush1.bf16.msra.mxu0 %v3878
      %3896 = vmatprep.subr.bf16.mxu0 0
      %3897 = vmatpush1.bf16.msra.mxu0 %v3877
      %3898 = vmatprep.subr.bf16.mxu0 0
      %3899 = vmatpush1.bf16.msra.mxu0 %v3876
      %3900 = vmatprep.subr.bf16.mxu0 0
      %3901 = vmatpush1.bf16.msra.mxu0 %v3875
      %3902 = vmatprep.subr.bf16.mxu0 0
      %3903 = vmatpush1.bf16.msra.mxu0 %v3874
      %3904 = vmatprep.subr.bf16.mxu0 0
      %3905 = vmatpush1.bf16.msra.mxu0 %v3873
      %3906 = vmatprep.subr.bf16.mxu0 0
      %3907 = vmatpush1.bf16.msra.mxu0 %v3872
      %3908 = vmatprep.subr.bf16.mxu0 0
      %3909 = vmatpush1.bf16.msra.mxu0 %v3871
      %3910 = vmatprep.subr.bf16.mxu0 0
      %3911 = vmatpush2.bf16.msra.mxu0 %v3886
      %3912 = vmatprep.subr.bf16.mxu0 0
      %3913 = vmatpush2.bf16.msra.mxu0 %v3885
      %3914 = vmatprep.subr.bf16.mxu0 0
      %3915 = vmatpush2.bf16.msra.mxu0 %v3884
      %3916 = vmatprep.subr.bf16.mxu0 0
      %3917 = vmatpush2.bf16.msra.mxu0 %v3883
      %3918 = vmatprep.subr.bf16.mxu0 0
      %3919 = vmatpush2.bf16.msra.mxu0 %v3882
      %3920 = vmatprep.subr.bf16.mxu0 0
      %3921 = vmatpush2.bf16.msra.mxu0 %v3881
      %3922 = vmatprep.subr.bf16.mxu0 0
      %3923 = vmatpush2.bf16.msra.mxu0 %v3880
      %3924 = vmatprep.subr.bf16.mxu0 0
      %3925 = vmatpush2.bf16.msra.mxu0 %v3879
      %3926 = vmatprep.mubr.bf16.mxu0 %v3869
      %3927 = vmatmul.mubr.bf16.gmra.mxu0 %v3868
      %v3928 = vpop.f32.mrf.mxu0
      %v3929 = vadd.f32 0.0, %v3928
      %v3930 = vpop.f32.mrf.mxu0
      %v3931 = vpop.f32.mrf.mxu0
      %v3932 = vadd.f32 0.0, %v3931
      %v3933 = vpop.f32.mrf.mxu0
      %3934 = vdwg.mxu0
      %3935 = vmatprep.subr.bf16.mxu0 0
      %3936 = vmatpush1.bf16.msra.mxu0 0
      %3937 = vmatprep.subr.bf16.mxu0 0
      %3938 = vmatpush1.bf16.msra.mxu0 0
      %3939 = vmatprep.subr.bf16.mxu0 0
      %3940 = vmatpush1.bf16.msra.mxu0 0
      %3941 = vmatprep.subr.bf16.mxu0 0
      %3942 = vmatpush1.bf16.msra.mxu0 0
      %3943 = vmatprep.subr.bf16.mxu0 0
      %3944 = vmatpush1.bf16.msra.mxu0 0
      %3945 = vmatprep.subr.bf16.mxu0 0
      %3946 = vmatpush1.bf16.msra.mxu0 0
      %3947 = vmatprep.subr.bf16.mxu0 0
      %3948 = vmatpush1.bf16.msra.mxu0 0
      %3949 = vmatprep.subr.bf16.mxu0 0
      %3950 = vmatpush1.bf16.msra.mxu0 %v3892
      %3951 = vmatprep.subr.bf16.mxu0 0
      %3952 = vmatpush2.bf16.msra.mxu0 0
      %3953 = vmatprep.subr.bf16.mxu0 0
      %3954 = vmatpush2.bf16.msra.mxu0 0
      %3955 = vmatprep.subr.bf16.mxu0 0
      %3956 = vmatpush2.bf16.msra.mxu0 0
      %3957 = vmatprep.subr.bf16.mxu0 0
      %3958 = vmatpush2.bf16.msra.mxu0 0
      %3959 = vmatprep.subr.bf16.mxu0 0
      %3960 = vmatpush2.bf16.msra.mxu0 0
      %3961 = vmatprep.subr.bf16.mxu0 0
      %3962 = vmatpush2.bf16.msra.mxu0 0
      %3963 = vmatprep.subr.bf16.mxu0 0
      %3964 = vmatpush2.bf16.msra.mxu0 0
      %3965 = vmatprep.subr.bf16.mxu0 0
      %3966 = vmatpush2.bf16.msra.mxu0 0
      %3967 = vmatprep.mubr.bf16.mxu0 0
      %3968 = vmatmul.mubr.bf16.gmra.mxu0 %v3889
      %v3969 = vpop.f32.mrf.mxu0
      %v3970 = vadd.f32 %v3929, %v3969
      %v3971 = vpop.f32.mrf.mxu0
      %v3972 = vpop.f32.mrf.mxu0
      %v3973 = vadd.f32 %v3932, %v3972
      %v3974 = vpop.f32.mrf.mxu0
      %3975 = vdwg.mxu0
      %v3976 = vrcp.pop %v3587
      %v3977 = vrcp.pop %v3592
      %v3978 = vmul.f32 %v3970, %v3976
      %v3979 = vmul.f32 %v3973, %v3977
      %v3980 = vpack.c.bf16 %v3979, %v3978
      %v3989 = vunpack.c.l.b16 %v551
      %v3990 = vunpack.c.l.b16 %v552
      %v3991 = vunpack.c.l.b16 %v553
      %v3992 = vunpack.c.l.b16 %v554
      %v3993 = vunpack.c.l.b16 %v555
      %v3994 = vunpack.c.l.b16 %v556
      %v3995 = vunpack.c.l.b16 %v557
      %v3996 = vunpack.c.l.b16 %v558
      %v3997 = vpack.c.b16 %v3990, %v3989
      %v3998 = vpack.c.b16 %v3992, %v3991
      %v3999 = vpack.c.b16 %v3994, %v3993
      %v4000 = vpack.c.b16 %v3996, %v3995
      %v4006 = vsel %vm852, %v3980, 0
      %4008 = vmatprep.subr.bf16.mxu0 0
      %4009 = vmatpush1.bf16.msra.mxu0 0
      %4010 = vmatprep.subr.bf16.mxu0 0
      %4011 = vmatpush1.bf16.msra.mxu0 0
      %4012 = vmatprep.subr.bf16.mxu0 0
      %4013 = vmatpush1.bf16.msra.mxu0 0
      %4014 = vmatprep.subr.bf16.mxu0 0
      %4015 = vmatpush1.bf16.msra.mxu0 0
      %4016 = vmatprep.subr.bf16.mxu0 0
      %4017 = vmatpush1.bf16.msra.mxu0 %v4000
      %4018 = vmatprep.subr.bf16.mxu0 0
      %4019 = vmatpush1.bf16.msra.mxu0 %v3999
      %4020 = vmatprep.subr.bf16.mxu0 0
      %4021 = vmatpush1.bf16.msra.mxu0 %v3998
      %4022 = vmatprep.subr.bf16.mxu0 0
      %4023 = vmatpush1.bf16.msra.mxu0 %v3997
      %4024 = vmatprep.subr.bf16.mxu0 0
      %4025 = vmatpush2.bf16.msra.mxu0 0
      %4026 = vmatprep.subr.bf16.mxu0 0
      %4027 = vmatpush2.bf16.msra.mxu0 0
      %4028 = vmatprep.subr.bf16.mxu0 0
      %4029 = vmatpush2.bf16.msra.mxu0 0
      %4030 = vmatprep.subr.bf16.mxu0 0
      %4031 = vmatpush2.bf16.msra.mxu0 0
      %4032 = vmatprep.subr.bf16.mxu0 0
      %4033 = vmatpush2.bf16.msra.mxu0 0
      %4034 = vmatprep.subr.bf16.mxu0 0
      %4035 = vmatpush2.bf16.msra.mxu0 0
      %4036 = vmatprep.subr.bf16.mxu0 0
      %4037 = vmatpush2.bf16.msra.mxu0 0
      %4038 = vmatprep.subr.bf16.mxu0 0
      %4039 = vmatpush2.bf16.msra.mxu0 0
      %4040 = vmatprep.mubr.bf16.mxu0 0
      %4041 = vmatmul.mubr.bf16.gmra.mxu0 %v4006
      %v4042 = vpop.f32.mrf.mxu0
      %v4043 = vadd.f32 0.0, %v4042
      %v4044 = vpop.f32.mrf.mxu0
      %v4045 = vpop.f32.mrf.mxu0
      %v4046 = vadd.f32 0.0, %v4045
      %v4047 = vpop.f32.mrf.mxu0
      %4048 = vdwg.mxu0
      %v4049 = vadd.f32 %v3241, %v4043
      %v4050 = vadd.f32 %v3242, %v4046
      %v4051 = vld [vmem:[%s6] sm:$0x1]
      %v4053 = vlaneseq
      %v4054 = vshrl.u32 %v4053, 7
      %v4055 = vsub.s32 0, %v4054
      %v4056 = vrot.slane %v4051, %v4055
      %v4058 = vadd.f32 %v4049, %v4056
      %v4059 = vadd.f32 %v4050, %v4056
      %v4060 = vadd.f32 %v523, %v4058
      %v4061 = vadd.f32 %v524, %v4059
      %v4062 = vld [vmem:[%s8] sm:$0x1]
      %v4063 = vld [vmem:[%s9] sm:$0x1]
      %v4064 = vsel %vm601, %v4060, 0.0
      %4065 = vadd.xlane.f32.xlu0 %v4064
      %v4066 = vpop.xlane.xlu0 %4065
      %v4067 = vsel %vm601, %v4061, 0.0
      %4068 = vadd.xlane.f32.xlu0 %v4067
      %v4069 = vpop.xlane.xlu0 %4068
      %v4070 = vrcp.pop 32.0
      %v4071 = vmul.f32 %v4066, %v4070
      %v4072 = vmul.f32 %v4069, %v4070
      %v4073 = vsub.f32 %v4060, %v4071
      %v4074 = vsub.f32 %v4061, %v4072
      %v4075 = vmul.f32 %v4073, %v4073
      %v4076 = vmul.f32 %v4074, %v4074
      %v4077 = vsel %vm601, %v4075, 0.0
      %4078 = vadd.xlane.f32.xlu0 %v4077
      %v4079 = vpop.xlane.xlu0 %4078
      %v4080 = vsel %vm601, %v4076, 0.0
      %4081 = vadd.xlane.f32.xlu0 %v4080
      %v4082 = vpop.xlane.xlu0 %4081
      %v4083 = vmul.f32 %v4079, %v4070
      %v4084 = vmul.f32 %v4082, %v4070
      %v4085 = vadd.f32 %v4083, 1e-05
      %v4086 = vadd.f32 %v4084, 1e-05
      %v4087 = vrsqrt.pop %v4085
      %v4088 = vrsqrt.pop %v4086
      %v4089 = vmul.f32 %v4073, %v4087
      %v4090 = vmul.f32 %v4074, %v4088
      %v4092 = vlaneseq
      %v4093 = vshrl.u32 %v4092, 7
      %v4094 = vsub.s32 0, %v4093
      %v4095 = vrot.slane %v4062, %v4094
      %v4097 = vmul.f32 %v4089, %v4095
      %v4098 = vmul.f32 %v4090, %v4095
      %v4100 = vlaneseq
      %v4101 = vshrl.u32 %v4100, 7
      %v4102 = vsub.s32 0, %v4101
      %v4103 = vrot.slane %v4063, %v4102
      %v4105 = vadd.f32 %v4097, %v4103
      %v4106 = vadd.f32 %v4098, %v4103
      %v4107 = vld [vmem:[%s10] sm:$0xf]
      %v4108 = vld [vmem:[%s10 + $0x4] sm:$0xf]
      %v4109 = vld [vmem:[%s10 + $0x8] sm:$0xf]
      %v4110 = vld [vmem:[%s10 + $0xc] sm:$0xf]
      %v4111 = vld [vmem:[%s11] sm:$0x1]
      %v4112 = vld [vmem:[%s12] sm:$0xf]
      %v4113 = vld [vmem:[%s12 + $0x4] sm:$0xf]
      %v4114 = vld [vmem:[%s12 + $0x8] sm:$0xf]
      %v4115 = vld [vmem:[%s12 + $0xc] sm:$0xf]
      %v4116 = vld [vmem:[%s12 + $0x10] sm:$0xf]
      %v4117 = vld [vmem:[%s12 + $0x14] sm:$0xf]
      %v4118 = vld [vmem:[%s12 + $0x18] sm:$0xf]
      %v4119 = vld [vmem:[%s12 + $0x1c] sm:$0xf]
      %v4120 = vld [vmem:[%s13] sm:$0x1]
      %v4121 = vpack.c.bf16 %v4106, %v4105
      %v4123 = vlaneseq
      %v4124 = vshrl.u32 %v4123, 7
      %v4125 = vsub.s32 0, %v4124
      %v4126 = vrot.slane %v4111, %v4125
      %v4132 = vunpack.c.l.b16 %v4107
      %v4133 = vunpack.c.l.b16 %v4108
      %v4134 = vunpack.c.l.b16 %v4109
      %v4135 = vunpack.c.l.b16 %v4110
      %v4136 = vpack.c.b16 %v4133, %v4132
      %v4137 = vpack.c.b16 %v4135, %v4134
      %v4141 = vsel %vm601, %v4121, 0
      %4143 = vmatprep.subr.bf16.mxu0 0
      %4144 = vmatpush1.bf16.msra.mxu0 0
      %4145 = vmatprep.subr.bf16.mxu0 0
      %4146 = vmatpush1.bf16.msra.mxu0 0
      %4147 = vmatprep.subr.bf16.mxu0 0
      %4148 = vmatpush1.bf16.msra.mxu0 0
      %4149 = vmatprep.subr.bf16.mxu0 0
      %4150 = vmatpush1.bf16.msra.mxu0 0
      %4151 = vmatprep.subr.bf16.mxu0 0
      %4152 = vmatpush1.bf16.msra.mxu0 0
      %4153 = vmatprep.subr.bf16.mxu0 0
      %4154 = vmatpush1.bf16.msra.mxu0 0
      %4155 = vmatprep.subr.bf16.mxu0 0
      %4156 = vmatpush1.bf16.msra.mxu0 %v4137
      %4157 = vmatprep.subr.bf16.mxu0 0
      %4158 = vmatpush1.bf16.msra.mxu0 %v4136
      %4159 = vmatprep.subr.bf16.mxu0 0
      %4160 = vmatpush2.bf16.msra.mxu0 0
      %4161 = vmatprep.subr.bf16.mxu0 0
      %4162 = vmatpush2.bf16.msra.mxu0 0
      %4163 = vmatprep.subr.bf16.mxu0 0
      %4164 = vmatpush2.bf16.msra.mxu0 0
      %4165 = vmatprep.subr.bf16.mxu0 0
      %4166 = vmatpush2.bf16.msra.mxu0 0
      %4167 = vmatprep.subr.bf16.mxu0 0
      %4168 = vmatpush2.bf16.msra.mxu0 0
      %4169 = vmatprep.subr.bf16.mxu0 0
      %4170 = vmatpush2.bf16.msra.mxu0 0
      %4171 = vmatprep.subr.bf16.mxu0 0
      %4172 = vmatpush2.bf16.msra.mxu0 0
      %4173 = vmatprep.subr.bf16.mxu0 0
      %4174 = vmatpush2.bf16.msra.mxu0 0
      %4175 = vmatprep.mubr.bf16.mxu0 0
      %4176 = vmatmul.mubr.bf16.gmra.mxu0 %v4141
      %v4177 = vpop.f32.mrf.mxu0
      %v4178 = vadd.f32 %v4126, %v4177
      %v4179 = vpop.f32.mrf.mxu0
      %v4180 = vpop.f32.mrf.mxu0
      %v4181 = vadd.f32 %v4126, %v4180
      %v4182 = vpop.f32.mrf.mxu0
      %4183 = vdwg.mxu0
      %v4184 = vmul.f32 %v4178, 0.5
      %v4185 = vmul.f32 %v4181, 0.5
      %v4186 = vmul.f32 %v4178, 0.70710677
      %v4187 = vmul.f32 %v4181, 0.70710677
      %vm4188 = vcmp.ge.f32.partialorder %v4186, 0.0
      %vm4189 = vcmp.ge.f32.partialorder %v4187, 0.0
      %v4190 = vsel %vm4188, 1.0, -1.0
      %v4191 = vsel %vm4189, 1.0, -1.0
      %v4192 = vand.u32 2147483647, %v4186
      %v4193 = vand.u32 2147483647, %v4187
      %v4194 = vmul.f32 %v4192, 0.3275911
      %v4195 = vmul.f32 %v4193, 0.3275911
      %v4196 = vadd.f32 %v4194, 1.0
      %v4197 = vadd.f32 %v4195, 1.0
      %v4198 = vrcp.pop %v4196
      %v4199 = vmul.f32 1.0, %v4198
      %v4200 = vrcp.pop %v4197
      %v4201 = vmul.f32 1.0, %v4200
      %v4202 = vmul.f32 %v4199, 1.0614054
      %v4203 = vmul.f32 %v4201, 1.0614054
      %v4204 = vadd.f32 %v4202, -1.4531521
      %v4205 = vadd.f32 %v4203, -1.4531521
      %v4206 = vmul.f32 %v4204, %v4199
      %v4207 = vmul.f32 %v4205, %v4201
      %v4208 = vadd.f32 %v4206, 1.4214138
      %v4209 = vadd.f32 %v4207, 1.4214138
      %v4210 = vmul.f32 %v4208, %v4199
      %v4211 = vmul.f32 %v4209, %v4201
      %v4212 = vadd.f32 %v4210, -0.28449672
      %v4213 = vadd.f32 %v4211, -0.28449672
      %v4214 = vmul.f32 %v4212, %v4199
      %v4215 = vmul.f32 %v4213, %v4201
      %v4216 = vadd.f32 %v4214, 0.2548296
      %v4217 = vadd.f32 %v4215, 0.2548296
      %v4218 = vmul.f32 %v4216, %v4199
      %v4219 = vmul.f32 %v4217, %v4201
      %v4220 = vsub.f32 0.0, %v4192
      %v4221 = vsub.f32 0.0, %v4193
      %v4222 = vmul.f32 %v4220, %v4192
      %v4223 = vmul.f32 %v4221, %v4193
      %v4224 = vmul.f32 %v4222, 1.442695
      %v4225 = vpow.pop %v4224
      %v4226 = vmul.f32 %v4223, 1.442695
      %v4227 = vpow.pop %v4226
      %v4228 = vmul.f32 %v4218, %v4225
      %v4229 = vmul.f32 %v4219, %v4227
      %v4230 = vsub.f32 1.0, %v4228
      %v4231 = vsub.f32 1.0, %v4229
      %v4232 = vmul.f32 %v4190, %v4230
      %v4233 = vmul.f32 %v4191, %v4231
      %v4234 = vadd.f32 %v4232, 1.0
      %v4235 = vadd.f32 %v4233, 1.0
      %v4236 = vmul.f32 %v4184, %v4234
      %v4237 = vmul.f32 %v4185, %v4235
      %v4238 = vpack.c.bf16 %v4237, %v4236
      %v4240 = vlaneseq
      %v4241 = vshrl.u32 %v4240, 7
      %v4242 = vsub.s32 0, %v4241
      %v4243 = vrot.slane %v4120, %v4242
      %v4253 = vunpack.c.l.b16 %v4112
      %v4254 = vunpack.c.l.b16 %v4113
      %v4255 = vunpack.c.l.b16 %v4114
      %v4256 = vunpack.c.l.b16 %v4115
      %v4257 = vunpack.c.l.b16 %v4116
      %v4258 = vunpack.c.l.b16 %v4117
      %v4259 = vunpack.c.l.b16 %v4118
      %v4260 = vunpack.c.l.b16 %v4119
      %v4261 = vpack.c.b16 %v4254, %v4253
      %v4262 = vpack.c.b16 %v4256, %v4255
      %v4263 = vpack.c.b16 %v4258, %v4257
      %v4264 = vpack.c.b16 %v4260, %v4259
      %v4270 = vsel %vm852, %v4238, 0
      %4272 = vmatprep.subr.bf16.mxu0 0
      %4273 = vmatpush1.bf16.msra.mxu0 0
      %4274 = vmatprep.subr.bf16.mxu0 0
      %4275 = vmatpush1.bf16.msra.mxu0 0
      %4276 = vmatprep.subr.bf16.mxu0 0
      %4277 = vmatpush1.bf16.msra.mxu0 0
      %4278 = vmatprep.subr.bf16.mxu0 0
      %4279 = vmatpush1.bf16.msra.mxu0 0
      %4280 = vmatprep.subr.bf16.mxu0 0
      %4281 = vmatpush1.bf16.msra.mxu0 %v4264
      %4282 = vmatprep.subr.bf16.mxu0 0
      %4283 = vmatpush1.bf16.msra.mxu0 %v4263
      %4284 = vmatprep.subr.bf16.mxu0 0
      %4285 = vmatpush1.bf16.msra.mxu0 %v4262
      %4286 = vmatprep.subr.bf16.mxu0 0
      %4287 = vmatpush1.bf16.msra.mxu0 %v4261
      %4288 = vmatprep.subr.bf16.mxu0 0
      %4289 = vmatpush2.bf16.msra.mxu0 0
      %4290 = vmatprep.subr.bf16.mxu0 0
      %4291 = vmatpush2.bf16.msra.mxu0 0
      %4292 = vmatprep.subr.bf16.mxu0 0
      %4293 = vmatpush2.bf16.msra.mxu0 0
      %4294 = vmatprep.subr.bf16.mxu0 0
      %4295 = vmatpush2.bf16.msra.mxu0 0
      %4296 = vmatprep.subr.bf16.mxu0 0
      %4297 = vmatpush2.bf16.msra.mxu0 0
      %4298 = vmatprep.subr.bf16.mxu0 0
      %4299 = vmatpush2.bf16.msra.mxu0 0
      %4300 = vmatprep.subr.bf16.mxu0 0
      %4301 = vmatpush2.bf16.msra.mxu0 0
      %4302 = vmatprep.subr.bf16.mxu0 0
      %4303 = vmatpush2.bf16.msra.mxu0 0
      %4304 = vmatprep.mubr.bf16.mxu0 0
      %4305 = vmatmul.mubr.bf16.gmra.mxu0 %v4270
      %v4306 = vpop.f32.mrf.mxu0
      %v4307 = vadd.f32 %v4243, %v4306
      %v4308 = vpop.f32.mrf.mxu0
      %v4309 = vpop.f32.mrf.mxu0
      %v4310 = vadd.f32 %v4243, %v4309
      %v4311 = vpop.f32.mrf.mxu0
      %4312 = vdwg.mxu0
      %v4313 = vadd.f32 %v4105, %v4307
      %v4314 = vadd.f32 %v4106, %v4310
      %v4315 = vld [vmem:[%s14] sm:$0x1]
      %v4316 = vld [vmem:[%s15] sm:$0x1]
      %v4317 = vsel %vm601, %v4313, 0.0
      %4318 = vadd.xlane.f32.xlu0 %v4317
      %v4319 = vpop.xlane.xlu0 %4318
      %v4320 = vsel %vm601, %v4314, 0.0
      %4321 = vadd.xlane.f32.xlu0 %v4320
      %v4322 = vpop.xlane.xlu0 %4321
      %v4323 = vmul.f32 %v4319, %v4070
      %v4324 = vmul.f32 %v4322, %v4070
      %v4325 = vsub.f32 %v4313, %v4323
      %v4326 = vsub.f32 %v4314, %v4324
      %v4327 = vmul.f32 %v4325, %v4325
      %v4328 = vmul.f32 %v4326, %v4326
      %v4329 = vsel %vm601, %v4327, 0.0
      %4330 = vadd.xlane.f32.xlu0 %v4329
      %v4331 = vpop.xlane.xlu0 %4330
      %v4332 = vsel %vm601, %v4328, 0.0
      %4333 = vadd.xlane.f32.xlu0 %v4332
      %v4334 = vpop.xlane.xlu0 %4333
      %v4335 = vmul.f32 %v4331, %v4070
      %v4336 = vmul.f32 %v4334, %v4070
      %v4337 = vadd.f32 %v4335, 1e-05
      %v4338 = vadd.f32 %v4336, 1e-05
      %v4339 = vrsqrt.pop %v4337
      %v4340 = vrsqrt.pop %v4338
      %v4341 = vmul.f32 %v4325, %v4339
      %v4342 = vmul.f32 %v4326, %v4340
      %v4344 = vlaneseq
      %v4345 = vshrl.u32 %v4344, 7
      %v4346 = vsub.s32 0, %v4345
      %v4347 = vrot.slane %v4315, %v4346
      %v4349 = vmul.f32 %v4341, %v4347
      %v4350 = vmul.f32 %v4342, %v4347
      %v4352 = vlaneseq
      %v4353 = vshrl.u32 %v4352, 7
      %v4354 = vsub.s32 0, %v4353
      %v4355 = vrot.slane %v4316, %v4354
      %v4357 = vadd.f32 %v4349, %v4355
      %v4358 = vadd.f32 %v4350, %v4355
      %4359 = vst.msk [vmem:[%s521] sm:$0xff] %vm601, %v4357
      %4360 = vst.msk [vmem:[%s521 + $0x8] sm:$0xff] %vm601, %v4358
      %p4361 = scmp.lt.s32.totalorder %s27, 1
      %s4362 = scalar_select %p4361, %s27, 1
      %s4363 = smul.addr %s4362, 2
      %s4364 = smul.addr %s4363, 8
      %s4365 = scalar_lea.vmem %s16, %s4364
      // Predicated region
      $region85: #{pathformer_forward.5} parent=83 // pred_check
        %p4366 = pneg %p386
      $region86: #{pathformer_forward.5} parent=83 // pred_check_branch
        %4368 = sbr.rel (%p4366) target = $region88
      $region87: #{pathformer_forward.5} parent=83 // pred_region
        _
      $region88: #{pathformer_forward.5} parent=83 // pred_fallthru
        _
    $region84: #{pathformer_forward.5} parent=5 // pred_fallthru
      _
    %p4369 = scmp.le.s32.totalorder 2, %s22
    // Predicated region
    $region89: #{pathformer_forward.5} parent=5 // pred_check
      %p4370 = pneg %p4369
    $region90: #{pathformer_forward.5} parent=5 // pred_check_branch
      %4372 = sbr.rel (%p4370) target = $region92
    $region91: #{pathformer_forward.5} parent=5 // pred_region
      %s4373 = ssub.s32 %s22, 2
      // Predicated region
      $region93: #{pathformer_forward.5} parent=91 // pred_check
        %p4374 = pneg %p392
      $region94: #{pathformer_forward.5} parent=91 // pred_check_branch
        %4376 = sbr.rel (%p4374) target = $region96
      $region95: #{pathformer_forward.5} parent=91 // pred_region
        %p4377 = scmp.lt.s32.totalorder %s28, 1
        %s4378 = scalar_select %p4377, %s28, 1
        %s4379 = smul.addr %s4378, 2
        %s4380 = smul.addr %s4379, 8
        %s4381 = scalar_lea.vmem %s16, %s4380
      $region96: #{pathformer_forward.5} parent=91 // pred_fallthru
        _
    $region92: #{pathformer_forward.5} parent=5 // pred_fallthru
      _
  $region6: #{pathformer_forward.5} parent=0 // loop_footer
    %s26 = sadd.s32 1, %s22
  $region7: #{pathformer_forward.5} parent=0 // loop_footer_branch
    %21 = sbr.rel target = $region3
  $region8: #{pathformer_forward.5} parent=0 // loop_exit
    _

</llo_original>
